<compile_context>
chip_gen: v7x
topology: tpu7x:2x2x1
jax: 0.10.0
libtpu: 0.0.40
codegen_flags: <defaults>
</compile_context>

<pallas_src>
import functools

import jax
import jax.numpy as jnp
import numpy as np
from jax import lax
from jax.experimental import pallas as pl
from jax.experimental.pallas import tpu as pltpu

LN_EPS = 1e-5                      # PyTorch nn.LayerNorm default
NEG_INF = -1.0e30                  # finite "masked" value: avoids inf-inf -> NaN in online softmax


def _layernorm(x, gamma, beta):
    # x: (T, C) f32, gamma/beta: (1, C) f32 -- statistics kept in f32
    mean = jnp.mean(x, axis=-1, keepdims=True)
    var = jnp.mean((x - mean) ** 2, axis=-1, keepdims=True)
    return (x - mean) * lax.rsqrt(var + LN_EPS) * gamma + beta


def _gelu_exact(x):
    # matches torch.nn.functional.gelu default (erf-based), evaluated in f32
    return 0.5 * x * (1.0 + lax.erf(x * jnp.float32(0.7071067811865476)))


def transformer_block_kernel(
    # inputs
    x_ref,                                   # (1, TQ, C) f32 : query tile (also this tile's K/V source)
    g1_ref, be1_ref,                         # LN1 (1, C) f32
    wq_ref,                                  # (C, C) bf16, 1/sqrt(dh) folded in
    wkT_ref,                                 # (C, C) bf16, = Wk^T (produces K^T directly)
    wv_ref,                                  # (C, C) bf16
    wo_ref, bo_ref,                          # (C, C) bf16, (1, C) f32
    g2_ref, be2_ref,                         # LN2 (1, C) f32
    w1_ref, b1_ref, w2_ref, b2_ref,          # MLP weights (bf16) / biases (f32)
    # outputs
    out_ref,                                 # (1, TQ, C) f32
    # scratch
    kT_scr,                                  # (C, T) bf16 : K^T prefix cache (lane-dense T writes)
    v_scr,                                   # (T, C) bf16 : V  prefix cache (lane-dense C writes)
    *, n_heads, compute_dtype,
):
    qi = pl.program_id(1)
    x = x_ref[0]                             # (TQ, C) f32
    TQ, C = x.shape
    dh = C // n_heads

    # ---- LN1 + fused full-C projections for this tile (MXU-friendly) ----
    xn = _layernorm(x, g1_ref[...], be1_ref[...])
    xnc = xn.astype(compute_dtype)                                           # (TQ, C)
    xnT = jnp.transpose(xn).astype(compute_dtype)                            # (C, TQ)

    q = jnp.dot(xnc, wq_ref[...],
                preferred_element_type=jnp.float32).astype(compute_dtype)    # (TQ, C)
    kT_chunk = jnp.dot(wkT_ref[...], xnT,
                       preferred_element_type=jnp.float32).astype(compute_dtype)  # (C, TQ)
    v_chunk = jnp.dot(xnc, wv_ref[...],
                      preferred_element_type=jnp.float32).astype(compute_dtype)   # (TQ, C)

    # Append this tile's K/V to the resident prefix cache.  Written before any read of
    # chunk qi; earlier chunks were written by earlier (sequential, "arbitrary") q-tiles
    # of the same batch element, so the causal loop below never reads stale rows.
    col0 = pl.multiple_of(qi * TQ, TQ)
    kT_scr[:, pl.ds(col0, TQ)] = kT_chunk
    v_scr[pl.ds(col0, TQ), :] = v_chunk

    # Tile-local position difference, hoisted out of the head/chunk loops.
    # Global causal mask  q_pos >= k_pos  <=>  d >= (j - qi) * TQ  with d = row - col,
    # which is all-True for every non-diagonal (j < qi) chunk.
    r = lax.broadcasted_iota(jnp.int32, (TQ, TQ), 0)
    c = lax.broadcasted_iota(jnp.int32, (TQ, TQ), 1)
    d = r - c

    num_kv = qi + 1                          # causal: only the already-built prefix

    # Per-head flash-style online softmax over the prefix chunks.  The head loop is a
    # small static unroll; score/prob temporaries are (TQ, TQ) and live only inside the
    # chunk fori_loop, so live ranges stay bounded.
    head_outs = []
    for h in range(n_heads):
        qh = q[:, h * dh:(h + 1) * dh]                                       # (TQ, dh)

        def kv_body(j, carry, _qh=qh, _h=h):
            m, l, acc = carry
            j0 = pl.multiple_of(j * TQ, TQ)
            kT_hj = kT_scr[pl.ds(_h * dh, dh), pl.ds(j0, TQ)]                # (dh, TQ)
            v_hj = v_scr[pl.ds(j0, TQ), pl.ds(_h * dh, dh)]                  # (TQ, dh)
            s = jnp.dot(_qh, kT_hj, preferred_element_type=jnp.float32)      # (TQ, TQ)
            s = jnp.where(d >= (j - qi) * TQ, s, jnp.float32(NEG_INF))
            m_new = jnp.maximum(m, jnp.max(s, axis=-1, keepdims=True))
            alpha = jnp.exp(m - m_new)
            p = jnp.exp(s - m_new)
            l_new = alpha * l + jnp.sum(p, axis=-1, keepdims=True)
            acc_new = alpha * acc + jnp.dot(
                p.astype(compute_dtype), v_hj, preferred_element_type=jnp.float32)
            return m_new, l_new, acc_new

        m0 = jnp.full((TQ, 1), NEG_INF, jnp.float32)
        l0 = jnp.zeros((TQ, 1), jnp.float32)
        a0 = jnp.zeros((TQ, dh), jnp.float32)
        _, l_f, acc_f = lax.fori_loop(0, num_kv, kv_body, (m0, l0, a0))
        head_outs.append(acc_f * pl.reciprocal(l_f, approx=True))            # (TQ, dh)

    # concat_h(o_h) @ Wo as one lane-dense full-C matmul
    attn_cat = jnp.concatenate(head_outs, axis=-1).astype(compute_dtype)     # (TQ, C)
    attn = jnp.dot(attn_cat, wo_ref[...],
                   preferred_element_type=jnp.float32) + bo_ref[...]
    # attn_dropout / resid_dropout are identity in eval mode
    x1 = x + attn

    # ---- MLP branch ----
    x1n = _layernorm(x1, g2_ref[...], be2_ref[...]).astype(compute_dtype)
    hid = jnp.dot(x1n, w1_ref[...], preferred_element_type=jnp.float32) + b1_ref[...]
    hid = _gelu_exact(hid).astype(compute_dtype)
    mlp = jnp.dot(hid, w2_ref[...], preferred_element_type=jnp.float32) + b2_ref[...]
    # MLP dropout is identity in eval mode
    out_ref[0] = x1 + mlp


def transformer_block(x, params, n_heads, compute_dtype=jnp.bfloat16):
    B, T, C = x.shape
    assert C % n_heads == 0
    dh = C // n_heads

    # ---- per-generation tile & VMEM budget ----
    try:
        vmem_cap = pltpu.get_tpu_info().vmem_capacity_bytes
    except Exception:
        vmem_cap = 64 << 20
    # v5e/v6e (128 MiB VMEM): 256-row query tiles; v7x (64 MiB): 128-row tiles.
    q_tile = 256 if (vmem_cap >= (96 << 20) and T >= 256) else 128
    # Pad T to a multiple of the tile (padded rows are finite garbage, sliced off below).
    T_pad = ((T + q_tile - 1) // q_tile) * q_tile
    n_qt = T_pad // q_tile
    x_in = jnp.pad(x, ((0, 0), (0, T_pad - T), (0, 0))) if T_pad != T else x

    # ---- host-side weight preparation (keeps all relayouts out of the kernel) ----
    wqkv = params["wqkv"]                                    # (C, 3C), "x @ W" orientation
    scale = np.float32(1.0 / np.sqrt(dh))
    wq = (wqkv[:, :C] * scale).astype(compute_dtype)         # fold 1/sqrt(dh) into Wq
    wkT = jnp.transpose(wqkv[:, C:2 * C]).astype(compute_dtype)   # Wk^T -> kernel builds K^T
    wv = wqkv[:, 2 * C:].astype(compute_dtype)
    wo = params["wo"].astype(compute_dtype)
    w1 = params["w1"].astype(compute_dtype)
    w2 = params["w2"].astype(compute_dtype)

    weights = [
        params["g1"], params["be1"],                         # LN1 (f32)
        wq, wkT, wv, wo, params["bo"],                       # attention (bf16 weights, f32 bias)
        params["g2"], params["be2"],                         # LN2 (f32)
        w1, params["b1"], w2, params["b2"],                  # MLP
    ]

    # ---- VMEM limit from the actual footprint (not min(100 MiB, 3/4*cap)) ----
    Hm = w1.shape[1]
    bpe = jnp.dtype(compute_dtype).itemsize
    weight_bytes = (4 * C * C + 2 * C * Hm) * bpe + (6 * C + Hm) * 4   # single-buffered weights
    io_bytes = 2 * 2 * q_tile * C * 4                                  # x tile + out tile, double-buffered
    scratch_bytes = 2 * T_pad * C * bpe                                # K^T + V prefix caches
    temp_bytes = (q_tile * Hm) * (4 + bpe)                             # MLP hidden (f32 + bf16)
    temp_bytes += 8 * q_tile * C * 4                                   # LN / proj / residual temporaries
    temp_bytes += 4 * q_tile * q_tile * 4                              # per-head scores / probs / mask
    footprint = weight_bytes + io_bytes + scratch_bytes + temp_bytes
    vmem_limit = int(min(int(vmem_cap * 0.9),
                         max(32 << 20, footprint + (16 << 20))))

    def const_spec(a, single_buffer):
        nd = a.ndim
        idx = lambda b, qi, _nd=nd: (0,) * _nd   # constant block index -> fetched once
        if single_buffer:
            return pl.BlockSpec(a.shape, idx, pipeline_mode=pl.Buffered(1))
        return pl.BlockSpec(a.shape, idx)

    kernel = functools.partial(
        transformer_block_kernel, n_heads=n_heads, compute_dtype=compute_dtype)

    def build(single_buffer_weights):
        in_specs = (
            [pl.BlockSpec((1, q_tile, C), lambda b, qi: (b, qi, 0))]   # query tile of x
            + [const_spec(w, single_buffer_weights) for w in weights]
        )
        return pl.pallas_call(
            kernel,
            out_shape=jax.ShapeDtypeStruct((B, T_pad, C), jnp.float32),
            grid_spec=pltpu.PrefetchScalarGridSpec(
                num_scalar_prefetch=0,
                grid=(B, n_qt),
                in_specs=in_specs,
                out_specs=pl.BlockSpec((1, q_tile, C), lambda b, qi: (b, qi, 0)),
                scratch_shapes=[
                    pltpu.VMEM((C, T_pad), compute_dtype),   # K^T prefix cache
                    pltpu.VMEM((T_pad, C), compute_dtype),   # V  prefix cache
                ],
            ),
            compiler_params=pltpu.CompilerParams(
                # Batch axis parallel (megacore); q-tile axis must stay "arbitrary"
                # because the K/V prefix scratch is carried across q-tiles.
                dimension_semantics=("parallel", "arbitrary"),
                vmem_limit_bytes=vmem_limit,
            ),
        )

    try:
        out = build(True)(x_in, *weights)
    except Exception:
        # Fallback for JAX versions that reject pl.Buffered(1) on pallas_call BlockSpecs.
        out = build(False)(x_in, *weights)

    return out[:, :T, :] if T_pad != T else out


def reference_block(x, p, n_heads):
    # pure-JAX f32 reference mirroring the PyTorch forward (eval mode)
    def ln(x, g, b):
        m = x.mean(-1, keepdims=True)
        v = ((x - m) ** 2).mean(-1, keepdims=True)
        return (x - m) / jnp.sqrt(v + LN_EPS) * g + b

    B, T, C = x.shape
    dh = C // n_heads
    xn = ln(x, p["g1"], p["be1"])
    qkv = xn @ p["wqkv"]
    q, k, v = jnp.split(qkv, 3, axis=-1)
    q = q.reshape(B, T, n_heads, dh).transpose(0, 2, 1, 3)
    k = k.reshape(B, T, n_heads, dh).transpose(0, 2, 1, 3)
    v = v.reshape(B, T, n_heads, dh).transpose(0, 2, 1, 3)
    scores = (q @ k.transpose(0, 1, 3, 2)) / np.sqrt(dh)
    mask = jnp.tril(jnp.ones((T, T)))[None, None]
    scores = jnp.where(mask == 0, -jnp.inf, scores)
    probs = jax.nn.softmax(scores, axis=-1)
    av = (probs @ v).transpose(0, 2, 1, 3).reshape(B, T, C)
    attn = av @ p["wo"] + p["bo"]
    x1 = x + attn
    x1n = ln(x1, p["g2"], p["be2"])
    hid = jax.nn.gelu(x1n @ p["w1"] + p["b1"], approximate=False)
    mlp = hid @ p["w2"] + p["b2"]
    return x1 + mlp


def make_params(key, d_model, d_mlp):
    H = d_model * d_mlp
    ks = jax.random.split(key, 4)
    s = 0.02
    return {
        "g1": jnp.ones((1, d_model), jnp.float32),
        "be1": jnp.zeros((1, d_model), jnp.float32),
        "wqkv": s * jax.random.normal(ks[0], (d_model, 3 * d_model), jnp.float32),
        "wo": s * jax.random.normal(ks[1], (d_model, d_model), jnp.float32),
        "bo": jnp.zeros((1, d_model), jnp.float32),
        "g2": jnp.ones((1, d_model), jnp.float32),
        "be2": jnp.zeros((1, d_model), jnp.float32),
        "w1": s * jax.random.normal(ks[2], (d_model, H), jnp.float32),
        "b1": jnp.zeros((1, H), jnp.float32),
        "w2": s * jax.random.normal(ks[3], (H, d_model), jnp.float32),
        "b2": jnp.zeros((1, d_model), jnp.float32),
    }


if __name__ == "__main__":
    B, n_ctx, d_model, n_heads, d_mlp = 2, 8, 32, 4, 4
    key = jax.random.PRNGKey(0)
    kx, kp = jax.random.split(key)
    x = jax.random.normal(kx, (B, n_ctx, d_model), jnp.float32)
    params = make_params(kp, d_model, d_mlp)

    out = jax.block_until_ready(transformer_block(x, params, n_heads))

    ref = reference_block(x, params, n_heads)
    # bf16 MXU inputs (f32 accumulation / f32 LN & softmax stats) => relaxed tolerance
    np.testing.assert_allclose(np.asarray(out), np.asarray(ref), rtol=2e-2, atol=2e-2)
    print("KERNEL_OK")
</pallas_src>

<mosaic_0001>
module attributes {stable_mosaic.version = 11 : i64} {
  func.func @transformer_block_kernel(%arg0: i32, %arg1: i32, %arg2: memref<1x128x32xf32, #tpu.memory_space<vmem>>, %arg3: memref<1x32xf32, #tpu.memory_space<vmem>>, %arg4: memref<1x32xf32, #tpu.memory_space<vmem>>, %arg5: memref<32x32xbf16, #tpu.memory_space<vmem>>, %arg6: memref<32x32xbf16, #tpu.memory_space<vmem>>, %arg7: memref<32x32xbf16, #tpu.memory_space<vmem>>, %arg8: memref<32x32xbf16, #tpu.memory_space<vmem>>, %arg9: memref<1x32xf32, #tpu.memory_space<vmem>>, %arg10: memref<1x32xf32, #tpu.memory_space<vmem>>, %arg11: memref<1x32xf32, #tpu.memory_space<vmem>>, %arg12: memref<32x128xbf16, #tpu.memory_space<vmem>>, %arg13: memref<1x128xf32, #tpu.memory_space<vmem>>, %arg14: memref<128x32xbf16, #tpu.memory_space<vmem>>, %arg15: memref<1x32xf32, #tpu.memory_space<vmem>>, %arg16: memref<1x128x32xf32, #tpu.memory_space<vmem>>, %arg17: memref<32x128xbf16, #tpu.memory_space<vmem>>, %arg18: memref<128x32xbf16, #tpu.memory_space<vmem>>) attributes {dimension_semantics = [#tpu.dimension_semantics<parallel>, #tpu.dimension_semantics<arbitrary>], iteration_bounds = array<i64: 2, 1>, scalar_prefetch = 0 : i64, scratch_operands = 2 : i64, tpu.core_type = #tpu.core_type<tc>, window_params = [{transform_indices = @transform_0, window_bounds = array<i64: 1, 128, 32>}, {pipeline_mode = #tpu.pipeline_mode<synchronous>, transform_indices = @transform_1, window_bounds = array<i64: 1, 32>}, {pipeline_mode = #tpu.pipeline_mode<synchronous>, transform_indices = @transform_2, window_bounds = array<i64: 1, 32>}, {pipeline_mode = #tpu.pipeline_mode<synchronous>, transform_indices = @transform_3, window_bounds = array<i64: 32, 32>}, {pipeline_mode = #tpu.pipeline_mode<synchronous>, transform_indices = @transform_4, window_bounds = array<i64: 32, 32>}, {pipeline_mode = #tpu.pipeline_mode<synchronous>, transform_indices = @transform_5, window_bounds = array<i64: 32, 32>}, {pipeline_mode = #tpu.pipeline_mode<synchronous>, transform_indices = @transform_6, window_bounds = array<i64: 32, 32>}, {pipeline_mode = #tpu.pipeline_mode<synchronous>, transform_indices = @transform_7, window_bounds = array<i64: 1, 32>}, {pipeline_mode = #tpu.pipeline_mode<synchronous>, transform_indices = @transform_8, window_bounds = array<i64: 1, 32>}, {pipeline_mode = #tpu.pipeline_mode<synchronous>, transform_indices = @transform_9, window_bounds = array<i64: 1, 32>}, {pipeline_mode = #tpu.pipeline_mode<synchronous>, transform_indices = @transform_10, window_bounds = array<i64: 32, 128>}, {pipeline_mode = #tpu.pipeline_mode<synchronous>, transform_indices = @transform_11, window_bounds = array<i64: 1, 128>}, {pipeline_mode = #tpu.pipeline_mode<synchronous>, transform_indices = @transform_12, window_bounds = array<i64: 128, 32>}, {pipeline_mode = #tpu.pipeline_mode<synchronous>, transform_indices = @transform_13, window_bounds = array<i64: 1, 32>}, {transform_indices = @transform_14, window_bounds = array<i64: 1, 128, 32>}]} {
    %c0 = arith.constant 0 : index
    %c0_0 = arith.constant 0 : index
    %c0_1 = arith.constant 0 : index
    %0 = vector.load %arg2[%c0, %c0_0, %c0_1] : memref<1x128x32xf32, #tpu.memory_space<vmem>>, vector<1x128x32xf32>
    %1 = vector.shape_cast %0 : vector<1x128x32xf32> to vector<128x32xf32>
    %c0_2 = arith.constant 0 : index
    %c0_3 = arith.constant 0 : index
    %2 = vector.load %arg3[%c0_2, %c0_3] : memref<1x32xf32, #tpu.memory_space<vmem>>, vector<1x32xf32>
    %c0_4 = arith.constant 0 : index
    %c0_5 = arith.constant 0 : index
    %3 = vector.load %arg4[%c0_4, %c0_5] : memref<1x32xf32, #tpu.memory_space<vmem>>, vector<1x32xf32>
    %cst = arith.constant dense<0.000000e+00> : vector<128xf32>
    %4 = vector.multi_reduction <add>, %1, %cst [1] : vector<128x32xf32> to vector<128xf32>
    %5 = vector.shape_cast %4 : vector<128xf32> to vector<128x1xf32>
    %cst_6 = arith.constant 3.200000e+01 : f32
    %6 = vector.broadcast %cst_6 : f32 to vector<128x1xf32>
    %7 = arith.divf %5, %6 : vector<128x1xf32>
    %8 = vector.broadcast %7 : vector<128x1xf32> to vector<128x32xf32>
    %9 = arith.subf %1, %8 : vector<128x32xf32>
    %10 = arith.mulf %9, %9 : vector<128x32xf32>
    %cst_7 = arith.constant dense<0.000000e+00> : vector<128xf32>
    %11 = vector.multi_reduction <add>, %10, %cst_7 [1] : vector<128x32xf32> to vector<128xf32>
    %12 = vector.shape_cast %11 : vector<128xf32> to vector<128x1xf32>
    %cst_8 = arith.constant 3.200000e+01 : f32
    %13 = vector.broadcast %cst_8 : f32 to vector<128x1xf32>
    %14 = arith.divf %12, %13 : vector<128x1xf32>
    %15 = vector.broadcast %7 : vector<128x1xf32> to vector<128x32xf32>
    %16 = arith.subf %1, %15 : vector<128x32xf32>
    %cst_9 = arith.constant 9.99999974E-6 : f32
    %17 = vector.broadcast %cst_9 : f32 to vector<128x1xf32>
    %18 = arith.addf %14, %17 : vector<128x1xf32>
    %19 = math.rsqrt %18 : vector<128x1xf32>
    %20 = vector.broadcast %19 : vector<128x1xf32> to vector<128x32xf32>
    %21 = arith.mulf %16, %20 : vector<128x32xf32>
    %22 = vector.broadcast %2 : vector<1x32xf32> to vector<128x32xf32>
    %23 = arith.mulf %21, %22 : vector<128x32xf32>
    %24 = vector.broadcast %3 : vector<1x32xf32> to vector<128x32xf32>
    %25 = arith.addf %23, %24 : vector<128x32xf32>
    %26 = arith.truncf %25 : vector<128x32xf32> to vector<128x32xbf16>
    %27 = tpu.transpose %25, [1, 0] : vector<128x32xf32> -> vector<32x128xf32>
    %28 = arith.truncf %27 : vector<32x128xf32> to vector<32x128xbf16>
    %c0_10 = arith.constant 0 : index
    %c0_11 = arith.constant 0 : index
    %29 = vector.load %arg5[%c0_10, %c0_11] : memref<32x32xbf16, #tpu.memory_space<vmem>>, vector<32x32xbf16>
    %cst_12 = arith.constant dense<0.000000e+00> : vector<128x32xf32>
    %30 = tpu.matmul %26, %29, %cst_12 {dimension_numbers = #tpu.dot_dimension_numbers<[1], [0], [0], [1], [0, 0, 1, 1], [], []>} : vector<128x32xbf16>, vector<32x32xbf16>, vector<128x32xf32> -> vector<128x32xf32>
    %31 = arith.truncf %30 : vector<128x32xf32> to vector<128x32xbf16>
    %c0_13 = arith.constant 0 : index
    %c0_14 = arith.constant 0 : index
    %32 = vector.load %arg6[%c0_13, %c0_14] : memref<32x32xbf16, #tpu.memory_space<vmem>>, vector<32x32xbf16>
    %cst_15 = arith.constant dense<0.000000e+00> : vector<32x128xf32>
    %33 = tpu.matmul %32, %28, %cst_15 {dimension_numbers = #tpu.dot_dimension_numbers<[1], [0], [0], [1], [0, 0, 1, 1], [], []>} : vector<32x32xbf16>, vector<32x128xbf16>, vector<32x128xf32> -> vector<32x128xf32>
    %34 = arith.truncf %33 : vector<32x128xf32> to vector<32x128xbf16>
    %c0_16 = arith.constant 0 : index
    %c0_17 = arith.constant 0 : index
    %35 = vector.load %arg7[%c0_16, %c0_17] : memref<32x32xbf16, #tpu.memory_space<vmem>>, vector<32x32xbf16>
    %cst_18 = arith.constant dense<0.000000e+00> : vector<128x32xf32>
    %36 = tpu.matmul %26, %35, %cst_18 {dimension_numbers = #tpu.dot_dimension_numbers<[1], [0], [0], [1], [0, 0, 1, 1], [], []>} : vector<128x32xbf16>, vector<32x32xbf16>, vector<128x32xf32> -> vector<128x32xf32>
    %37 = arith.truncf %36 : vector<128x32xf32> to vector<128x32xbf16>
    %c128_i32 = arith.constant 128 : i32
    %38 = arith.muli %arg1, %c128_i32 : i32
    %39 = tpu.assume_multiple %38, 128 : i32
    %c0_19 = arith.constant 0 : index
    %40 = arith.index_cast %39 : i32 to index
    %41 = vector.load %arg17[%c0_19, %40] : memref<32x128xbf16, #tpu.memory_space<vmem>>, vector<32x128xbf16>
    tpu.vector_store %arg17[%c0_19, %40], %34 {strides = array<i32>} : memref<32x128xbf16, #tpu.memory_space<vmem>>, vector<32x128xbf16>,
    %42 = arith.index_cast %39 : i32 to index
    %c0_20 = arith.constant 0 : index
    %43 = vector.load %arg18[%42, %c0_20] : memref<128x32xbf16, #tpu.memory_space<vmem>>, vector<128x32xbf16>
    tpu.vector_store %arg18[%42, %c0_20], %37 {strides = array<i32>} : memref<128x32xbf16, #tpu.memory_space<vmem>>, vector<128x32xbf16>,
    %44 = tpu.iota {dimensions = array<i32: 0>} : vector<128x128xi32>
    %45 = tpu.iota {dimensions = array<i32: 1>} : vector<128x128xi32>
    %46 = arith.subi %44, %45 : vector<128x128xi32>
    %c1_i32 = arith.constant 1 : i32
    %47 = arith.addi %arg1, %c1_i32 : i32
    %48 = vector.extract_strided_slice %31 {offsets = [0, 0], sizes = [128, 8], strides = [1, 1]} : vector<128x32xbf16> to vector<128x8xbf16>
    %cst_21 = arith.constant -1.000000e+30 : f32
    %49 = vector.broadcast %cst_21 : f32 to vector<128x1xf32>
    %cst_22 = arith.constant 0.000000e+00 : f32
    %50 = vector.broadcast %cst_22 : f32 to vector<128x1xf32>
    %cst_23 = arith.constant 0.000000e+00 : f32
    %51 = vector.broadcast %cst_23 : f32 to vector<128x8xf32>
    %c0_i32 = arith.constant 0 : i32
    %52 = arith.subi %47, %c0_i32 : i32
    %53 = arith.addi %c0_i32, %52 : i32
    %c1_i32_24 = arith.constant 1 : i32
    %54:3 = scf.for %arg19 = %c0_i32 to %53 step %c1_i32_24 iter_args(%arg20 = %49, %arg21 = %50, %arg22 = %51) -> (vector<128x1xf32>, vector<128x1xf32>, vector<128x8xf32>)  : i32 {
      %c128_i32_70 = arith.constant 128 : i32
      %144 = arith.muli %arg19, %c128_i32_70 : i32
      %145 = tpu.assume_multiple %144, 128 : i32
      %c0_71 = arith.constant 0 : index
      %146 = arith.index_cast %145 : i32 to index
      %147 = vector.load %arg17[%c0_71, %146] : memref<32x128xbf16, #tpu.memory_space<vmem>>, vector<8x128xbf16>
      %148 = arith.index_cast %145 : i32 to index
      %c0_72 = arith.constant 0 : index
      %149 = vector.load %arg18[%148, %c0_72] : memref<128x32xbf16, #tpu.memory_space<vmem>>, vector<128x8xbf16>
      %cst_73 = arith.constant dense<0.000000e+00> : vector<128x128xf32>
      %150 = tpu.matmul %48, %147, %cst_73 {dimension_numbers = #tpu.dot_dimension_numbers<[1], [0], [0], [1], [0, 0, 1, 1], [], []>} : vector<128x8xbf16>, vector<8x128xbf16>, vector<128x128xf32> -> vector<128x128xf32>
      %151 = arith.subi %arg19, %arg1 : i32
      %c128_i32_74 = arith.constant 128 : i32
      %152 = arith.muli %151, %c128_i32_74 : i32
      %153 = vector.broadcast %152 : i32 to vector<128x128xi32>
      %154 = arith.cmpi sge, %46, %153 : vector<128x128xi32>
      %cst_75 = arith.constant -1.000000e+30 : f32
      %155 = vector.broadcast %cst_75 : f32 to vector<128x128xf32>
      %156 = arith.select %154, %150, %155 : vector<128x128xi1>, vector<128x128xf32>
      %cst_76 = arith.constant dense<0xFF800000> : vector<128xf32>
      %157 = vector.multi_reduction <maximumf>, %156, %cst_76 [1] : vector<128x128xf32> to vector<128xf32>
      %158 = vector.shape_cast %157 : vector<128xf32> to vector<128x1xf32>
      %159 = arith.maximumf %arg20, %158 : vector<128x1xf32>
      %160 = arith.subf %arg20, %159 : vector<128x1xf32>
      %161 = math.exp %160 : vector<128x1xf32>
      %162 = vector.broadcast %159 : vector<128x1xf32> to vector<128x128xf32>
      %163 = arith.subf %156, %162 : vector<128x128xf32>
      %164 = math.exp %163 : vector<128x128xf32>
      %165 = arith.mulf %161, %arg21 : vector<128x1xf32>
      %cst_77 = arith.constant dense<0.000000e+00> : vector<128xf32>
      %166 = vector.multi_reduction <add>, %164, %cst_77 [1] : vector<128x128xf32> to vector<128xf32>
      %167 = vector.shape_cast %166 : vector<128xf32> to vector<128x1xf32>
      %168 = arith.addf %165, %167 : vector<128x1xf32>
      %169 = vector.broadcast %161 : vector<128x1xf32> to vector<128x8xf32>
      %170 = arith.mulf %169, %arg22 : vector<128x8xf32>
      %171 = arith.truncf %164 : vector<128x128xf32> to vector<128x128xbf16>
      %cst_78 = arith.constant dense<0.000000e+00> : vector<128x8xf32>
      %172 = tpu.matmul %171, %149, %cst_78 {dimension_numbers = #tpu.dot_dimension_numbers<[1], [0], [0], [1], [0, 0, 1, 1], [], []>} : vector<128x128xbf16>, vector<128x8xbf16>, vector<128x8xf32> -> vector<128x8xf32>
      %173 = arith.addf %170, %172 : vector<128x8xf32>
      scf.yield %159, %168, %173 : vector<128x1xf32>, vector<128x1xf32>, vector<128x8xf32>
    }
    %55 = tpu.reciprocal %54#1 {approx = true} : vector<128x1xf32> -> vector<128x1xf32>
    %56 = vector.broadcast %55 : vector<128x1xf32> to vector<128x8xf32>
    %57 = arith.mulf %54#2, %56 : vector<128x8xf32>
    %58 = vector.extract_strided_slice %31 {offsets = [0, 8], sizes = [128, 8], strides = [1, 1]} : vector<128x32xbf16> to vector<128x8xbf16>
    %cst_25 = arith.constant -1.000000e+30 : f32
    %59 = vector.broadcast %cst_25 : f32 to vector<128x1xf32>
    %cst_26 = arith.constant 0.000000e+00 : f32
    %60 = vector.broadcast %cst_26 : f32 to vector<128x1xf32>
    %cst_27 = arith.constant 0.000000e+00 : f32
    %61 = vector.broadcast %cst_27 : f32 to vector<128x8xf32>
    %c0_i32_28 = arith.constant 0 : i32
    %62 = arith.subi %47, %c0_i32_28 : i32
    %63 = arith.addi %c0_i32_28, %62 : i32
    %c1_i32_29 = arith.constant 1 : i32
    %64:3 = scf.for %arg19 = %c0_i32_28 to %63 step %c1_i32_29 iter_args(%arg20 = %59, %arg21 = %60, %arg22 = %61) -> (vector<128x1xf32>, vector<128x1xf32>, vector<128x8xf32>)  : i32 {
      %c128_i32_70 = arith.constant 128 : i32
      %144 = arith.muli %arg19, %c128_i32_70 : i32
      %145 = tpu.assume_multiple %144, 128 : i32
      %c8 = arith.constant 8 : index
      %146 = arith.index_cast %145 : i32 to index
      %147 = vector.load %arg17[%c8, %146] : memref<32x128xbf16, #tpu.memory_space<vmem>>, vector<8x128xbf16>
      %148 = arith.index_cast %145 : i32 to index
      %c8_71 = arith.constant 8 : index
      %149 = vector.load %arg18[%148, %c8_71] : memref<128x32xbf16, #tpu.memory_space<vmem>>, vector<128x8xbf16>
      %cst_72 = arith.constant dense<0.000000e+00> : vector<128x128xf32>
      %150 = tpu.matmul %58, %147, %cst_72 {dimension_numbers = #tpu.dot_dimension_numbers<[1], [0], [0], [1], [0, 0, 1, 1], [], []>} : vector<128x8xbf16>, vector<8x128xbf16>, vector<128x128xf32> -> vector<128x128xf32>
      %151 = arith.subi %arg19, %arg1 : i32
      %c128_i32_73 = arith.constant 128 : i32
      %152 = arith.muli %151, %c128_i32_73 : i32
      %153 = vector.broadcast %152 : i32 to vector<128x128xi32>
      %154 = arith.cmpi sge, %46, %153 : vector<128x128xi32>
      %cst_74 = arith.constant -1.000000e+30 : f32
      %155 = vector.broadcast %cst_74 : f32 to vector<128x128xf32>
      %156 = arith.select %154, %150, %155 : vector<128x128xi1>, vector<128x128xf32>
      %cst_75 = arith.constant dense<0xFF800000> : vector<128xf32>
      %157 = vector.multi_reduction <maximumf>, %156, %cst_75 [1] : vector<128x128xf32> to vector<128xf32>
      %158 = vector.shape_cast %157 : vector<128xf32> to vector<128x1xf32>
      %159 = arith.maximumf %arg20, %158 : vector<128x1xf32>
      %160 = arith.subf %arg20, %159 : vector<128x1xf32>
      %161 = math.exp %160 : vector<128x1xf32>
      %162 = vector.broadcast %159 : vector<128x1xf32> to vector<128x128xf32>
      %163 = arith.subf %156, %162 : vector<128x128xf32>
      %164 = math.exp %163 : vector<128x128xf32>
      %165 = arith.mulf %161, %arg21 : vector<128x1xf32>
      %cst_76 = arith.constant dense<0.000000e+00> : vector<128xf32>
      %166 = vector.multi_reduction <add>, %164, %cst_76 [1] : vector<128x128xf32> to vector<128xf32>
      %167 = vector.shape_cast %166 : vector<128xf32> to vector<128x1xf32>
      %168 = arith.addf %165, %167 : vector<128x1xf32>
      %169 = vector.broadcast %161 : vector<128x1xf32> to vector<128x8xf32>
      %170 = arith.mulf %169, %arg22 : vector<128x8xf32>
      %171 = arith.truncf %164 : vector<128x128xf32> to vector<128x128xbf16>
      %cst_77 = arith.constant dense<0.000000e+00> : vector<128x8xf32>
      %172 = tpu.matmul %171, %149, %cst_77 {dimension_numbers = #tpu.dot_dimension_numbers<[1], [0], [0], [1], [0, 0, 1, 1], [], []>} : vector<128x128xbf16>, vector<128x8xbf16>, vector<128x8xf32> -> vector<128x8xf32>
      %173 = arith.addf %170, %172 : vector<128x8xf32>
      scf.yield %159, %168, %173 : vector<128x1xf32>, vector<128x1xf32>, vector<128x8xf32>
    }
    %65 = tpu.reciprocal %64#1 {approx = true} : vector<128x1xf32> -> vector<128x1xf32>
    %66 = vector.broadcast %65 : vector<128x1xf32> to vector<128x8xf32>
    %67 = arith.mulf %64#2, %66 : vector<128x8xf32>
    %68 = vector.extract_strided_slice %31 {offsets = [0, 16], sizes = [128, 8], strides = [1, 1]} : vector<128x32xbf16> to vector<128x8xbf16>
    %cst_30 = arith.constant -1.000000e+30 : f32
    %69 = vector.broadcast %cst_30 : f32 to vector<128x1xf32>
    %cst_31 = arith.constant 0.000000e+00 : f32
    %70 = vector.broadcast %cst_31 : f32 to vector<128x1xf32>
    %cst_32 = arith.constant 0.000000e+00 : f32
    %71 = vector.broadcast %cst_32 : f32 to vector<128x8xf32>
    %c0_i32_33 = arith.constant 0 : i32
    %72 = arith.subi %47, %c0_i32_33 : i32
    %73 = arith.addi %c0_i32_33, %72 : i32
    %c1_i32_34 = arith.constant 1 : i32
    %74:3 = scf.for %arg19 = %c0_i32_33 to %73 step %c1_i32_34 iter_args(%arg20 = %69, %arg21 = %70, %arg22 = %71) -> (vector<128x1xf32>, vector<128x1xf32>, vector<128x8xf32>)  : i32 {
      %c128_i32_70 = arith.constant 128 : i32
      %144 = arith.muli %arg19, %c128_i32_70 : i32
      %145 = tpu.assume_multiple %144, 128 : i32
      %c16 = arith.constant 16 : index
      %146 = arith.index_cast %145 : i32 to index
      %147 = vector.load %arg17[%c16, %146] : memref<32x128xbf16, #tpu.memory_space<vmem>>, vector<8x128xbf16>
      %148 = arith.index_cast %145 : i32 to index
      %c16_71 = arith.constant 16 : index
      %149 = vector.load %arg18[%148, %c16_71] : memref<128x32xbf16, #tpu.memory_space<vmem>>, vector<128x8xbf16>
      %cst_72 = arith.constant dense<0.000000e+00> : vector<128x128xf32>
      %150 = tpu.matmul %68, %147, %cst_72 {dimension_numbers = #tpu.dot_dimension_numbers<[1], [0], [0], [1], [0, 0, 1, 1], [], []>} : vector<128x8xbf16>, vector<8x128xbf16>, vector<128x128xf32> -> vector<128x128xf32>
      %151 = arith.subi %arg19, %arg1 : i32
      %c128_i32_73 = arith.constant 128 : i32
      %152 = arith.muli %151, %c128_i32_73 : i32
      %153 = vector.broadcast %152 : i32 to vector<128x128xi32>
      %154 = arith.cmpi sge, %46, %153 : vector<128x128xi32>
      %cst_74 = arith.constant -1.000000e+30 : f32
      %155 = vector.broadcast %cst_74 : f32 to vector<128x128xf32>
      %156 = arith.select %154, %150, %155 : vector<128x128xi1>, vector<128x128xf32>
      %cst_75 = arith.constant dense<0xFF800000> : vector<128xf32>
      %157 = vector.multi_reduction <maximumf>, %156, %cst_75 [1] : vector<128x128xf32> to vector<128xf32>
      %158 = vector.shape_cast %157 : vector<128xf32> to vector<128x1xf32>
      %159 = arith.maximumf %arg20, %158 : vector<128x1xf32>
      %160 = arith.subf %arg20, %159 : vector<128x1xf32>
      %161 = math.exp %160 : vector<128x1xf32>
      %162 = vector.broadcast %159 : vector<128x1xf32> to vector<128x128xf32>
      %163 = arith.subf %156, %162 : vector<128x128xf32>
      %164 = math.exp %163 : vector<128x128xf32>
      %165 = arith.mulf %161, %arg21 : vector<128x1xf32>
      %cst_76 = arith.constant dense<0.000000e+00> : vector<128xf32>
      %166 = vector.multi_reduction <add>, %164, %cst_76 [1] : vector<128x128xf32> to vector<128xf32>
      %167 = vector.shape_cast %166 : vector<128xf32> to vector<128x1xf32>
      %168 = arith.addf %165, %167 : vector<128x1xf32>
      %169 = vector.broadcast %161 : vector<128x1xf32> to vector<128x8xf32>
      %170 = arith.mulf %169, %arg22 : vector<128x8xf32>
      %171 = arith.truncf %164 : vector<128x128xf32> to vector<128x128xbf16>
      %cst_77 = arith.constant dense<0.000000e+00> : vector<128x8xf32>
      %172 = tpu.matmul %171, %149, %cst_77 {dimension_numbers = #tpu.dot_dimension_numbers<[1], [0], [0], [1], [0, 0, 1, 1], [], []>} : vector<128x128xbf16>, vector<128x8xbf16>, vector<128x8xf32> -> vector<128x8xf32>
      %173 = arith.addf %170, %172 : vector<128x8xf32>
      scf.yield %159, %168, %173 : vector<128x1xf32>, vector<128x1xf32>, vector<128x8xf32>
    }
    %75 = tpu.reciprocal %74#1 {approx = true} : vector<128x1xf32> -> vector<128x1xf32>
    %76 = vector.broadcast %75 : vector<128x1xf32> to vector<128x8xf32>
    %77 = arith.mulf %74#2, %76 : vector<128x8xf32>
    %78 = vector.extract_strided_slice %31 {offsets = [0, 24], sizes = [128, 8], strides = [1, 1]} : vector<128x32xbf16> to vector<128x8xbf16>
    %cst_35 = arith.constant -1.000000e+30 : f32
    %79 = vector.broadcast %cst_35 : f32 to vector<128x1xf32>
    %cst_36 = arith.constant 0.000000e+00 : f32
    %80 = vector.broadcast %cst_36 : f32 to vector<128x1xf32>
    %cst_37 = arith.constant 0.000000e+00 : f32
    %81 = vector.broadcast %cst_37 : f32 to vector<128x8xf32>
    %c0_i32_38 = arith.constant 0 : i32
    %82 = arith.subi %47, %c0_i32_38 : i32
    %83 = arith.addi %c0_i32_38, %82 : i32
    %c1_i32_39 = arith.constant 1 : i32
    %84:3 = scf.for %arg19 = %c0_i32_38 to %83 step %c1_i32_39 iter_args(%arg20 = %79, %arg21 = %80, %arg22 = %81) -> (vector<128x1xf32>, vector<128x1xf32>, vector<128x8xf32>)  : i32 {
      %c128_i32_70 = arith.constant 128 : i32
      %144 = arith.muli %arg19, %c128_i32_70 : i32
      %145 = tpu.assume_multiple %144, 128 : i32
      %c24 = arith.constant 24 : index
      %146 = arith.index_cast %145 : i32 to index
      %147 = vector.load %arg17[%c24, %146] : memref<32x128xbf16, #tpu.memory_space<vmem>>, vector<8x128xbf16>
      %148 = arith.index_cast %145 : i32 to index
      %c24_71 = arith.constant 24 : index
      %149 = vector.load %arg18[%148, %c24_71] : memref<128x32xbf16, #tpu.memory_space<vmem>>, vector<128x8xbf16>
      %cst_72 = arith.constant dense<0.000000e+00> : vector<128x128xf32>
      %150 = tpu.matmul %78, %147, %cst_72 {dimension_numbers = #tpu.dot_dimension_numbers<[1], [0], [0], [1], [0, 0, 1, 1], [], []>} : vector<128x8xbf16>, vector<8x128xbf16>, vector<128x128xf32> -> vector<128x128xf32>
      %151 = arith.subi %arg19, %arg1 : i32
      %c128_i32_73 = arith.constant 128 : i32
      %152 = arith.muli %151, %c128_i32_73 : i32
      %153 = vector.broadcast %152 : i32 to vector<128x128xi32>
      %154 = arith.cmpi sge, %46, %153 : vector<128x128xi32>
      %cst_74 = arith.constant -1.000000e+30 : f32
      %155 = vector.broadcast %cst_74 : f32 to vector<128x128xf32>
      %156 = arith.select %154, %150, %155 : vector<128x128xi1>, vector<128x128xf32>
      %cst_75 = arith.constant dense<0xFF800000> : vector<128xf32>
      %157 = vector.multi_reduction <maximumf>, %156, %cst_75 [1] : vector<128x128xf32> to vector<128xf32>
      %158 = vector.shape_cast %157 : vector<128xf32> to vector<128x1xf32>
      %159 = arith.maximumf %arg20, %158 : vector<128x1xf32>
      %160 = arith.subf %arg20, %159 : vector<128x1xf32>
      %161 = math.exp %160 : vector<128x1xf32>
      %162 = vector.broadcast %159 : vector<128x1xf32> to vector<128x128xf32>
      %163 = arith.subf %156, %162 : vector<128x128xf32>
      %164 = math.exp %163 : vector<128x128xf32>
      %165 = arith.mulf %161, %arg21 : vector<128x1xf32>
      %cst_76 = arith.constant dense<0.000000e+00> : vector<128xf32>
      %166 = vector.multi_reduction <add>, %164, %cst_76 [1] : vector<128x128xf32> to vector<128xf32>
      %167 = vector.shape_cast %166 : vector<128xf32> to vector<128x1xf32>
      %168 = arith.addf %165, %167 : vector<128x1xf32>
      %169 = vector.broadcast %161 : vector<128x1xf32> to vector<128x8xf32>
      %170 = arith.mulf %169, %arg22 : vector<128x8xf32>
      %171 = arith.truncf %164 : vector<128x128xf32> to vector<128x128xbf16>
      %cst_77 = arith.constant dense<0.000000e+00> : vector<128x8xf32>
      %172 = tpu.matmul %171, %149, %cst_77 {dimension_numbers = #tpu.dot_dimension_numbers<[1], [0], [0], [1], [0, 0, 1, 1], [], []>} : vector<128x128xbf16>, vector<128x8xbf16>, vector<128x8xf32> -> vector<128x8xf32>
      %173 = arith.addf %170, %172 : vector<128x8xf32>
      scf.yield %159, %168, %173 : vector<128x1xf32>, vector<128x1xf32>, vector<128x8xf32>
    }
    %85 = tpu.reciprocal %84#1 {approx = true} : vector<128x1xf32> -> vector<128x1xf32>
    %86 = vector.broadcast %85 : vector<128x1xf32> to vector<128x8xf32>
    %87 = arith.mulf %84#2, %86 : vector<128x8xf32>
    %88 = tpu.concatenate %57, %67, %77, %87 in 1 : vector<128x8xf32>, vector<128x8xf32>, vector<128x8xf32>, vector<128x8xf32> -> vector<128x32xf32>
    %89 = arith.truncf %88 : vector<128x32xf32> to vector<128x32xbf16>
    %c0_40 = arith.constant 0 : index
    %c0_41 = arith.constant 0 : index
    %90 = vector.load %arg8[%c0_40, %c0_41] : memref<32x32xbf16, #tpu.memory_space<vmem>>, vector<32x32xbf16>
    %cst_42 = arith.constant dense<0.000000e+00> : vector<128x32xf32>
    %91 = tpu.matmul %89, %90, %cst_42 {dimension_numbers = #tpu.dot_dimension_numbers<[1], [0], [0], [1], [0, 0, 1, 1], [], []>} : vector<128x32xbf16>, vector<32x32xbf16>, vector<128x32xf32> -> vector<128x32xf32>
    %c0_43 = arith.constant 0 : index
    %c0_44 = arith.constant 0 : index
    %92 = vector.load %arg9[%c0_43, %c0_44] : memref<1x32xf32, #tpu.memory_space<vmem>>, vector<1x32xf32>
    %93 = vector.broadcast %92 : vector<1x32xf32> to vector<128x32xf32>
    %94 = arith.addf %91, %93 : vector<128x32xf32>
    %95 = arith.addf %1, %94 : vector<128x32xf32>
    %c0_45 = arith.constant 0 : index
    %c0_46 = arith.constant 0 : index
    %96 = vector.load %arg10[%c0_45, %c0_46] : memref<1x32xf32, #tpu.memory_space<vmem>>, vector<1x32xf32>
    %c0_47 = arith.constant 0 : index
    %c0_48 = arith.constant 0 : index
    %97 = vector.load %arg11[%c0_47, %c0_48] : memref<1x32xf32, #tpu.memory_space<vmem>>, vector<1x32xf32>
    %cst_49 = arith.constant dense<0.000000e+00> : vector<128xf32>
    %98 = vector.multi_reduction <add>, %95, %cst_49 [1] : vector<128x32xf32> to vector<128xf32>
    %99 = vector.shape_cast %98 : vector<128xf32> to vector<128x1xf32>
    %cst_50 = arith.constant 3.200000e+01 : f32
    %100 = vector.broadcast %cst_50 : f32 to vector<128x1xf32>
    %101 = arith.divf %99, %100 : vector<128x1xf32>
    %102 = vector.broadcast %101 : vector<128x1xf32> to vector<128x32xf32>
    %103 = arith.subf %95, %102 : vector<128x32xf32>
    %104 = arith.mulf %103, %103 : vector<128x32xf32>
    %cst_51 = arith.constant dense<0.000000e+00> : vector<128xf32>
    %105 = vector.multi_reduction <add>, %104, %cst_51 [1] : vector<128x32xf32> to vector<128xf32>
    %106 = vector.shape_cast %105 : vector<128xf32> to vector<128x1xf32>
    %cst_52 = arith.constant 3.200000e+01 : f32
    %107 = vector.broadcast %cst_52 : f32 to vector<128x1xf32>
    %108 = arith.divf %106, %107 : vector<128x1xf32>
    %109 = vector.broadcast %101 : vector<128x1xf32> to vector<128x32xf32>
    %110 = arith.subf %95, %109 : vector<128x32xf32>
    %cst_53 = arith.constant 9.99999974E-6 : f32
    %111 = vector.broadcast %cst_53 : f32 to vector<128x1xf32>
    %112 = arith.addf %108, %111 : vector<128x1xf32>
    %113 = math.rsqrt %112 : vector<128x1xf32>
    %114 = vector.broadcast %113 : vector<128x1xf32> to vector<128x32xf32>
    %115 = arith.mulf %110, %114 : vector<128x32xf32>
    %116 = vector.broadcast %96 : vector<1x32xf32> to vector<128x32xf32>
    %117 = arith.mulf %115, %116 : vector<128x32xf32>
    %118 = vector.broadcast %97 : vector<1x32xf32> to vector<128x32xf32>
    %119 = arith.addf %117, %118 : vector<128x32xf32>
    %120 = arith.truncf %119 : vector<128x32xf32> to vector<128x32xbf16>
    %c0_54 = arith.constant 0 : index
    %c0_55 = arith.constant 0 : index
    %121 = vector.load %arg12[%c0_54, %c0_55] : memref<32x128xbf16, #tpu.memory_space<vmem>>, vector<32x128xbf16>
    %cst_56 = arith.constant dense<0.000000e+00> : vector<128x128xf32>
    %122 = tpu.matmul %120, %121, %cst_56 {dimension_numbers = #tpu.dot_dimension_numbers<[1], [0], [0], [1], [0, 0, 1, 1], [], []>} : vector<128x32xbf16>, vector<32x128xbf16>, vector<128x128xf32> -> vector<128x128xf32>
    %c0_57 = arith.constant 0 : index
    %c0_58 = arith.constant 0 : index
    %123 = vector.load %arg13[%c0_57, %c0_58] : memref<1x128xf32, #tpu.memory_space<vmem>>, vector<1x128xf32>
    %124 = vector.broadcast %123 : vector<1x128xf32> to vector<128x128xf32>
    %125 = arith.addf %122, %124 : vector<128x128xf32>
    %cst_59 = arith.constant 5.000000e-01 : f32
    %126 = vector.broadcast %cst_59 : f32 to vector<128x128xf32>
    %127 = arith.mulf %126, %125 : vector<128x128xf32>
    %cst_60 = arith.constant 0.707106769 : f32
    %128 = vector.broadcast %cst_60 : f32 to vector<128x128xf32>
    %129 = arith.mulf %125, %128 : vector<128x128xf32>
    %130 = math.erf %129 : vector<128x128xf32>
    %cst_61 = arith.constant 1.000000e+00 : f32
    %131 = vector.broadcast %cst_61 : f32 to vector<128x128xf32>
    %132 = arith.addf %131, %130 : vector<128x128xf32>
    %133 = arith.mulf %127, %132 : vector<128x128xf32>
    %134 = arith.truncf %133 : vector<128x128xf32> to vector<128x128xbf16>
    %c0_62 = arith.constant 0 : index
    %c0_63 = arith.constant 0 : index
    %135 = vector.load %arg14[%c0_62, %c0_63] : memref<128x32xbf16, #tpu.memory_space<vmem>>, vector<128x32xbf16>
    %cst_64 = arith.constant dense<0.000000e+00> : vector<128x32xf32>
    %136 = tpu.matmul %134, %135, %cst_64 {dimension_numbers = #tpu.dot_dimension_numbers<[1], [0], [0], [1], [0, 0, 1, 1], [], []>} : vector<128x128xbf16>, vector<128x32xbf16>, vector<128x32xf32> -> vector<128x32xf32>
    %c0_65 = arith.constant 0 : index
    %c0_66 = arith.constant 0 : index
    %137 = vector.load %arg15[%c0_65, %c0_66] : memref<1x32xf32, #tpu.memory_space<vmem>>, vector<1x32xf32>
    %138 = vector.broadcast %137 : vector<1x32xf32> to vector<128x32xf32>
    %139 = arith.addf %136, %138 : vector<128x32xf32>
    %140 = arith.addf %95, %139 : vector<128x32xf32>
    %c0_67 = arith.constant 0 : index
    %c0_68 = arith.constant 0 : index
    %c0_69 = arith.constant 0 : index
    %141 = vector.load %arg16[%c0_67, %c0_68, %c0_69] : memref<1x128x32xf32, #tpu.memory_space<vmem>>, vector<1x128x32xf32>
    %142 = vector.shape_cast %141 : vector<1x128x32xf32> to vector<128x32xf32>
    %143 = vector.shape_cast %140 : vector<128x32xf32> to vector<1x128x32xf32>
    tpu.vector_store %arg16[%c0_67, %c0_68, %c0_69], %143 {strides = array<i32>} : memref<1x128x32xf32, #tpu.memory_space<vmem>>, vector<1x128x32xf32>,
    return
  }
  func.func @transform_0(%arg0: i32, %arg1: i32) -> (i32, i32, i32) {
    %c0_i32 = arith.constant 0 : i32
    %c0_i32_0 = arith.constant 0 : i32
    return %arg0, %arg1, %c0_i32 : i32, i32, i32
  }
  func.func @transform_1(%arg0: i32, %arg1: i32) -> (i32, i32) {
    %c0_i32 = arith.constant 0 : i32
    %c0_i32_0 = arith.constant 0 : i32
    %c0_i32_1 = arith.constant 0 : i32
    return %c0_i32, %c0_i32_0 : i32, i32
  }
  func.func @transform_2(%arg0: i32, %arg1: i32) -> (i32, i32) {
    %c0_i32 = arith.constant 0 : i32
    %c0_i32_0 = arith.constant 0 : i32
    %c0_i32_1 = arith.constant 0 : i32
    return %c0_i32, %c0_i32_0 : i32, i32
  }
  func.func @transform_3(%arg0: i32, %arg1: i32) -> (i32, i32) {
    %c0_i32 = arith.constant 0 : i32
    %c0_i32_0 = arith.constant 0 : i32
    %c0_i32_1 = arith.constant 0 : i32
    return %c0_i32, %c0_i32_0 : i32, i32
  }
  func.func @transform_4(%arg0: i32, %arg1: i32) -> (i32, i32) {
    %c0_i32 = arith.constant 0 : i32
    %c0_i32_0 = arith.constant 0 : i32
    %c0_i32_1 = arith.constant 0 : i32
    return %c0_i32, %c0_i32_0 : i32, i32
  }
  func.func @transform_5(%arg0: i32, %arg1: i32) -> (i32, i32) {
    %c0_i32 = arith.constant 0 : i32
    %c0_i32_0 = arith.constant 0 : i32
    %c0_i32_1 = arith.constant 0 : i32
    return %c0_i32, %c0_i32_0 : i32, i32
  }
  func.func @transform_6(%arg0: i32, %arg1: i32) -> (i32, i32) {
    %c0_i32 = arith.constant 0 : i32
    %c0_i32_0 = arith.constant 0 : i32
    %c0_i32_1 = arith.constant 0 : i32
    return %c0_i32, %c0_i32_0 : i32, i32
  }
  func.func @transform_7(%arg0: i32, %arg1: i32) -> (i32, i32) {
    %c0_i32 = arith.constant 0 : i32
    %c0_i32_0 = arith.constant 0 : i32
    %c0_i32_1 = arith.constant 0 : i32
    return %c0_i32, %c0_i32_0 : i32, i32
  }
  func.func @transform_8(%arg0: i32, %arg1: i32) -> (i32, i32) {
    %c0_i32 = arith.constant 0 : i32
    %c0_i32_0 = arith.constant 0 : i32
    %c0_i32_1 = arith.constant 0 : i32
    return %c0_i32, %c0_i32_0 : i32, i32
  }
  func.func @transform_9(%arg0: i32, %arg1: i32) -> (i32, i32) {
    %c0_i32 = arith.constant 0 : i32
    %c0_i32_0 = arith.constant 0 : i32
    %c0_i32_1 = arith.constant 0 : i32
    return %c0_i32, %c0_i32_0 : i32, i32
  }
  func.func @transform_10(%arg0: i32, %arg1: i32) -> (i32, i32) {
    %c0_i32 = arith.constant 0 : i32
    %c0_i32_0 = arith.constant 0 : i32
    %c0_i32_1 = arith.constant 0 : i32
    return %c0_i32, %c0_i32_0 : i32, i32
  }
  func.func @transform_11(%arg0: i32, %arg1: i32) -> (i32, i32) {
    %c0_i32 = arith.constant 0 : i32
    %c0_i32_0 = arith.constant 0 : i32
    %c0_i32_1 = arith.constant 0 : i32
    return %c0_i32, %c0_i32_0 : i32, i32
  }
  func.func @transform_12(%arg0: i32, %arg1: i32) -> (i32, i32) {
    %c0_i32 = arith.constant 0 : i32
    %c0_i32_0 = arith.constant 0 : i32
    %c0_i32_1 = arith.constant 0 : i32
    return %c0_i32, %c0_i32_0 : i32, i32
  }
  func.func @transform_13(%arg0: i32, %arg1: i32) -> (i32, i32) {
    %c0_i32 = arith.constant 0 : i32
    %c0_i32_0 = arith.constant 0 : i32
    %c0_i32_1 = arith.constant 0 : i32
    return %c0_i32, %c0_i32_0 : i32, i32
  }
  func.func @transform_14(%arg0: i32, %arg1: i32) -> (i32, i32, i32) {
    %c0_i32 = arith.constant 0 : i32
    %c0_i32_0 = arith.constant 0 : i32
    return %arg0, %arg1, %c0_i32 : i32, i32, i32
  }
}

module attributes {stable_mosaic.version = 11 : i64} {
  func.func @transformer_block_kernel(%arg0: i32, %arg1: i32, %arg2: memref<1x128x32xf32, #tpu.memory_space<vmem>>, %arg3: memref<1x32xf32, #tpu.memory_space<vmem>>, %arg4: memref<1x32xf32, #tpu.memory_space<vmem>>, %arg5: memref<32x32xbf16, #tpu.memory_space<vmem>>, %arg6: memref<32x32xbf16, #tpu.memory_space<vmem>>, %arg7: memref<32x32xbf16, #tpu.memory_space<vmem>>, %arg8: memref<32x32xbf16, #tpu.memory_space<vmem>>, %arg9: memref<1x32xf32, #tpu.memory_space<vmem>>, %arg10: memref<1x32xf32, #tpu.memory_space<vmem>>, %arg11: memref<1x32xf32, #tpu.memory_space<vmem>>, %arg12: memref<32x128xbf16, #tpu.memory_space<vmem>>, %arg13: memref<1x128xf32, #tpu.memory_space<vmem>>, %arg14: memref<128x32xbf16, #tpu.memory_space<vmem>>, %arg15: memref<1x32xf32, #tpu.memory_space<vmem>>, %arg16: memref<1x128x32xf32, #tpu.memory_space<vmem>>, %arg17: memref<32x128xbf16, #tpu.memory_space<vmem>>, %arg18: memref<128x32xbf16, #tpu.memory_space<vmem>>) attributes {dimension_semantics = [#tpu.dimension_semantics<parallel>, #tpu.dimension_semantics<arbitrary>], iteration_bounds = array<i64: 2, 1>, scalar_prefetch = 0 : i64, scratch_operands = 2 : i64, tpu.core_type = #tpu.core_type<tc>, window_params = [{transform_indices = @transform_0, window_bounds = array<i64: 1, 128, 32>}, {pipeline_mode = #tpu.pipeline_mode<synchronous>, transform_indices = @transform_1, window_bounds = array<i64: 1, 32>}, {pipeline_mode = #tpu.pipeline_mode<synchronous>, transform_indices = @transform_2, window_bounds = array<i64: 1, 32>}, {pipeline_mode = #tpu.pipeline_mode<synchronous>, transform_indices = @transform_3, window_bounds = array<i64: 32, 32>}, {pipeline_mode = #tpu.pipeline_mode<synchronous>, transform_indices = @transform_4, window_bounds = array<i64: 32, 32>}, {pipeline_mode = #tpu.pipeline_mode<synchronous>, transform_indices = @transform_5, window_bounds = array<i64: 32, 32>}, {pipeline_mode = #tpu.pipeline_mode<synchronous>, transform_indices = @transform_6, window_bounds = array<i64: 32, 32>}, {pipeline_mode = #tpu.pipeline_mode<synchronous>, transform_indices = @transform_7, window_bounds = array<i64: 1, 32>}, {pipeline_mode = #tpu.pipeline_mode<synchronous>, transform_indices = @transform_8, window_bounds = array<i64: 1, 32>}, {pipeline_mode = #tpu.pipeline_mode<synchronous>, transform_indices = @transform_9, window_bounds = array<i64: 1, 32>}, {pipeline_mode = #tpu.pipeline_mode<synchronous>, transform_indices = @transform_10, window_bounds = array<i64: 32, 128>}, {pipeline_mode = #tpu.pipeline_mode<synchronous>, transform_indices = @transform_11, window_bounds = array<i64: 1, 128>}, {pipeline_mode = #tpu.pipeline_mode<synchronous>, transform_indices = @transform_12, window_bounds = array<i64: 128, 32>}, {pipeline_mode = #tpu.pipeline_mode<synchronous>, transform_indices = @transform_13, window_bounds = array<i64: 1, 32>}, {transform_indices = @transform_14, window_bounds = array<i64: 1, 128, 32>}]} {
    %c0 = arith.constant 0 : index
    %c0_0 = arith.constant 0 : index
    %c0_1 = arith.constant 0 : index
    %0 = vector.load %arg2[%c0, %c0_0, %c0_1] : memref<1x128x32xf32, #tpu.memory_space<vmem>>, vector<1x128x32xf32>
    %1 = vector.shape_cast %0 : vector<1x128x32xf32> to vector<128x32xf32>
    %c0_2 = arith.constant 0 : index
    %c0_3 = arith.constant 0 : index
    %2 = vector.load %arg3[%c0_2, %c0_3] : memref<1x32xf32, #tpu.memory_space<vmem>>, vector<1x32xf32>
    %c0_4 = arith.constant 0 : index
    %c0_5 = arith.constant 0 : index
    %3 = vector.load %arg4[%c0_4, %c0_5] : memref<1x32xf32, #tpu.memory_space<vmem>>, vector<1x32xf32>
    %cst = arith.constant dense<0.000000e+00> : vector<128xf32>
    %4 = vector.multi_reduction <add>, %1, %cst [1] : vector<128x32xf32> to vector<128xf32>
    %5 = vector.shape_cast %4 : vector<128xf32> to vector<128x1xf32>
    %cst_6 = arith.constant 3.200000e+01 : f32
    %6 = vector.broadcast %cst_6 : f32 to vector<128x1xf32>
    %7 = arith.divf %5, %6 : vector<128x1xf32>
    %8 = vector.broadcast %7 : vector<128x1xf32> to vector<128x32xf32>
    %9 = arith.subf %1, %8 : vector<128x32xf32>
    %10 = arith.mulf %9, %9 : vector<128x32xf32>
    %cst_7 = arith.constant dense<0.000000e+00> : vector<128xf32>
    %11 = vector.multi_reduction <add>, %10, %cst_7 [1] : vector<128x32xf32> to vector<128xf32>
    %12 = vector.shape_cast %11 : vector<128xf32> to vector<128x1xf32>
    %cst_8 = arith.constant 3.200000e+01 : f32
    %13 = vector.broadcast %cst_8 : f32 to vector<128x1xf32>
    %14 = arith.divf %12, %13 : vector<128x1xf32>
    %15 = vector.broadcast %7 : vector<128x1xf32> to vector<128x32xf32>
    %16 = arith.subf %1, %15 : vector<128x32xf32>
    %cst_9 = arith.constant 9.99999974E-6 : f32
    %17 = vector.broadcast %cst_9 : f32 to vector<128x1xf32>
    %18 = arith.addf %14, %17 : vector<128x1xf32>
    %19 = math.rsqrt %18 : vector<128x1xf32>
    %20 = vector.broadcast %19 : vector<128x1xf32> to vector<128x32xf32>
    %21 = arith.mulf %16, %20 : vector<128x32xf32>
    %22 = vector.broadcast %2 : vector<1x32xf32> to vector<128x32xf32>
    %23 = arith.mulf %21, %22 : vector<128x32xf32>
    %24 = vector.broadcast %3 : vector<1x32xf32> to vector<128x32xf32>
    %25 = arith.addf %23, %24 : vector<128x32xf32>
    %26 = arith.truncf %25 : vector<128x32xf32> to vector<128x32xbf16>
    %27 = tpu.transpose %25, [1, 0] : vector<128x32xf32> -> vector<32x128xf32>
    %28 = arith.truncf %27 : vector<32x128xf32> to vector<32x128xbf16>
    %c0_10 = arith.constant 0 : index
    %c0_11 = arith.constant 0 : index
    %29 = vector.load %arg5[%c0_10, %c0_11] : memref<32x32xbf16, #tpu.memory_space<vmem>>, vector<32x32xbf16>
    %cst_12 = arith.constant dense<0.000000e+00> : vector<128x32xf32>
    %30 = tpu.matmul %26, %29, %cst_12 {dimension_numbers = #tpu.dot_dimension_numbers<[1], [0], [0], [1], [0, 0, 1, 1], [], []>} : vector<128x32xbf16>, vector<32x32xbf16>, vector<128x32xf32> -> vector<128x32xf32>
    %31 = arith.truncf %30 : vector<128x32xf32> to vector<128x32xbf16>
    %c0_13 = arith.constant 0 : index
    %c0_14 = arith.constant 0 : index
    %32 = vector.load %arg6[%c0_13, %c0_14] : memref<32x32xbf16, #tpu.memory_space<vmem>>, vector<32x32xbf16>
    %cst_15 = arith.constant dense<0.000000e+00> : vector<32x128xf32>
    %33 = tpu.matmul %32, %28, %cst_15 {dimension_numbers = #tpu.dot_dimension_numbers<[1], [0], [0], [1], [0, 0, 1, 1], [], []>} : vector<32x32xbf16>, vector<32x128xbf16>, vector<32x128xf32> -> vector<32x128xf32>
    %34 = arith.truncf %33 : vector<32x128xf32> to vector<32x128xbf16>
    %c0_16 = arith.constant 0 : index
    %c0_17 = arith.constant 0 : index
    %35 = vector.load %arg7[%c0_16, %c0_17] : memref<32x32xbf16, #tpu.memory_space<vmem>>, vector<32x32xbf16>
    %cst_18 = arith.constant dense<0.000000e+00> : vector<128x32xf32>
    %36 = tpu.matmul %26, %35, %cst_18 {dimension_numbers = #tpu.dot_dimension_numbers<[1], [0], [0], [1], [0, 0, 1, 1], [], []>} : vector<128x32xbf16>, vector<32x32xbf16>, vector<128x32xf32> -> vector<128x32xf32>
    %37 = arith.truncf %36 : vector<128x32xf32> to vector<128x32xbf16>
    %c128_i32 = arith.constant 128 : i32
    %38 = arith.muli %arg1, %c128_i32 : i32
    %39 = tpu.assume_multiple %38, 128 : i32
    %c0_19 = arith.constant 0 : index
    %40 = arith.index_cast %39 : i32 to index
    %41 = vector.load %arg17[%c0_19, %40] : memref<32x128xbf16, #tpu.memory_space<vmem>>, vector<32x128xbf16>
    tpu.vector_store %arg17[%c0_19, %40], %34 {strides = array<i32>} : memref<32x128xbf16, #tpu.memory_space<vmem>>, vector<32x128xbf16>,
    %42 = arith.index_cast %39 : i32 to index
    %c0_20 = arith.constant 0 : index
    %43 = vector.load %arg18[%42, %c0_20] : memref<128x32xbf16, #tpu.memory_space<vmem>>, vector<128x32xbf16>
    tpu.vector_store %arg18[%42, %c0_20], %37 {strides = array<i32>} : memref<128x32xbf16, #tpu.memory_space<vmem>>, vector<128x32xbf16>,
    %44 = tpu.iota {dimensions = array<i32: 0>} : vector<128x128xi32>
    %45 = tpu.iota {dimensions = array<i32: 1>} : vector<128x128xi32>
    %46 = arith.subi %44, %45 : vector<128x128xi32>
    %c1_i32 = arith.constant 1 : i32
    %47 = arith.addi %arg1, %c1_i32 : i32
    %48 = vector.extract_strided_slice %31 {offsets = [0, 0], sizes = [128, 8], strides = [1, 1]} : vector<128x32xbf16> to vector<128x8xbf16>
    %cst_21 = arith.constant -1.000000e+30 : f32
    %49 = vector.broadcast %cst_21 : f32 to vector<128x1xf32>
    %cst_22 = arith.constant 0.000000e+00 : f32
    %50 = vector.broadcast %cst_22 : f32 to vector<128x1xf32>
    %cst_23 = arith.constant 0.000000e+00 : f32
    %51 = vector.broadcast %cst_23 : f32 to vector<128x8xf32>
    %c0_i32 = arith.constant 0 : i32
    %52 = arith.subi %47, %c0_i32 : i32
    %53 = arith.addi %c0_i32, %52 : i32
    %c1_i32_24 = arith.constant 1 : i32
    %54:3 = scf.for %arg19 = %c0_i32 to %53 step %c1_i32_24 iter_args(%arg20 = %49, %arg21 = %50, %arg22 = %51) -> (vector<128x1xf32>, vector<128x1xf32>, vector<128x8xf32>)  : i32 {
      %c128_i32_70 = arith.constant 128 : i32
      %144 = arith.muli %arg19, %c128_i32_70 : i32
      %145 = tpu.assume_multiple %144, 128 : i32
      %c0_71 = arith.constant 0 : index
      %146 = arith.index_cast %145 : i32 to index
      %147 = vector.load %arg17[%c0_71, %146] : memref<32x128xbf16, #tpu.memory_space<vmem>>, vector<8x128xbf16>
      %148 = arith.index_cast %145 : i32 to index
      %c0_72 = arith.constant 0 : index
      %149 = vector.load %arg18[%148, %c0_72] : memref<128x32xbf16, #tpu.memory_space<vmem>>, vector<128x8xbf16>
      %cst_73 = arith.constant dense<0.000000e+00> : vector<128x128xf32>
      %150 = tpu.matmul %48, %147, %cst_73 {dimension_numbers = #tpu.dot_dimension_numbers<[1], [0], [0], [1], [0, 0, 1, 1], [], []>} : vector<128x8xbf16>, vector<8x128xbf16>, vector<128x128xf32> -> vector<128x128xf32>
      %151 = arith.subi %arg19, %arg1 : i32
      %c128_i32_74 = arith.constant 128 : i32
      %152 = arith.muli %151, %c128_i32_74 : i32
      %153 = vector.broadcast %152 : i32 to vector<128x128xi32>
      %154 = arith.cmpi sge, %46, %153 : vector<128x128xi32>
      %cst_75 = arith.constant -1.000000e+30 : f32
      %155 = vector.broadcast %cst_75 : f32 to vector<128x128xf32>
      %156 = arith.select %154, %150, %155 : vector<128x128xi1>, vector<128x128xf32>
      %cst_76 = arith.constant dense<0xFF800000> : vector<128xf32>
      %157 = vector.multi_reduction <maximumf>, %156, %cst_76 [1] : vector<128x128xf32> to vector<128xf32>
      %158 = vector.shape_cast %157 : vector<128xf32> to vector<128x1xf32>
      %159 = arith.maximumf %arg20, %158 : vector<128x1xf32>
      %160 = arith.subf %arg20, %159 : vector<128x1xf32>
      %161 = math.exp %160 : vector<128x1xf32>
      %162 = vector.broadcast %159 : vector<128x1xf32> to vector<128x128xf32>
      %163 = arith.subf %156, %162 : vector<128x128xf32>
      %164 = math.exp %163 : vector<128x128xf32>
      %165 = arith.mulf %161, %arg21 : vector<128x1xf32>
      %cst_77 = arith.constant dense<0.000000e+00> : vector<128xf32>
      %166 = vector.multi_reduction <add>, %164, %cst_77 [1] : vector<128x128xf32> to vector<128xf32>
      %167 = vector.shape_cast %166 : vector<128xf32> to vector<128x1xf32>
      %168 = arith.addf %165, %167 : vector<128x1xf32>
      %169 = vector.broadcast %161 : vector<128x1xf32> to vector<128x8xf32>
      %170 = arith.mulf %169, %arg22 : vector<128x8xf32>
      %171 = arith.truncf %164 : vector<128x128xf32> to vector<128x128xbf16>
      %cst_78 = arith.constant dense<0.000000e+00> : vector<128x8xf32>
      %172 = tpu.matmul %171, %149, %cst_78 {dimension_numbers = #tpu.dot_dimension_numbers<[1], [0], [0], [1], [0, 0, 1, 1], [], []>} : vector<128x128xbf16>, vector<128x8xbf16>, vector<128x8xf32> -> vector<128x8xf32>
      %173 = arith.addf %170, %172 : vector<128x8xf32>
      scf.yield %159, %168, %173 : vector<128x1xf32>, vector<128x1xf32>, vector<128x8xf32>
    }
    %55 = tpu.reciprocal %54#1 {approx = true} : vector<128x1xf32> -> vector<128x1xf32>
    %56 = vector.broadcast %55 : vector<128x1xf32> to vector<128x8xf32>
    %57 = arith.mulf %54#2, %56 : vector<128x8xf32>
    %58 = vector.extract_strided_slice %31 {offsets = [0, 8], sizes = [128, 8], strides = [1, 1]} : vector<128x32xbf16> to vector<128x8xbf16>
    %cst_25 = arith.constant -1.000000e+30 : f32
    %59 = vector.broadcast %cst_25 : f32 to vector<128x1xf32>
    %cst_26 = arith.constant 0.000000e+00 : f32
    %60 = vector.broadcast %cst_26 : f32 to vector<128x1xf32>
    %cst_27 = arith.constant 0.000000e+00 : f32
    %61 = vector.broadcast %cst_27 : f32 to vector<128x8xf32>
    %c0_i32_28 = arith.constant 0 : i32
    %62 = arith.subi %47, %c0_i32_28 : i32
    %63 = arith.addi %c0_i32_28, %62 : i32
    %c1_i32_29 = arith.constant 1 : i32
    %64:3 = scf.for %arg19 = %c0_i32_28 to %63 step %c1_i32_29 iter_args(%arg20 = %59, %arg21 = %60, %arg22 = %61) -> (vector<128x1xf32>, vector<128x1xf32>, vector<128x8xf32>)  : i32 {
      %c128_i32_70 = arith.constant 128 : i32
      %144 = arith.muli %arg19, %c128_i32_70 : i32
      %145 = tpu.assume_multiple %144, 128 : i32
      %c8 = arith.constant 8 : index
      %146 = arith.index_cast %145 : i32 to index
      %147 = vector.load %arg17[%c8, %146] : memref<32x128xbf16, #tpu.memory_space<vmem>>, vector<8x128xbf16>
      %148 = arith.index_cast %145 : i32 to index
      %c8_71 = arith.constant 8 : index
      %149 = vector.load %arg18[%148, %c8_71] : memref<128x32xbf16, #tpu.memory_space<vmem>>, vector<128x8xbf16>
      %cst_72 = arith.constant dense<0.000000e+00> : vector<128x128xf32>
      %150 = tpu.matmul %58, %147, %cst_72 {dimension_numbers = #tpu.dot_dimension_numbers<[1], [0], [0], [1], [0, 0, 1, 1], [], []>} : vector<128x8xbf16>, vector<8x128xbf16>, vector<128x128xf32> -> vector<128x128xf32>
      %151 = arith.subi %arg19, %arg1 : i32
      %c128_i32_73 = arith.constant 128 : i32
      %152 = arith.muli %151, %c128_i32_73 : i32
      %153 = vector.broadcast %152 : i32 to vector<128x128xi32>
      %154 = arith.cmpi sge, %46, %153 : vector<128x128xi32>
      %cst_74 = arith.constant -1.000000e+30 : f32
      %155 = vector.broadcast %cst_74 : f32 to vector<128x128xf32>
      %156 = arith.select %154, %150, %155 : vector<128x128xi1>, vector<128x128xf32>
      %cst_75 = arith.constant dense<0xFF800000> : vector<128xf32>
      %157 = vector.multi_reduction <maximumf>, %156, %cst_75 [1] : vector<128x128xf32> to vector<128xf32>
      %158 = vector.shape_cast %157 : vector<128xf32> to vector<128x1xf32>
      %159 = arith.maximumf %arg20, %158 : vector<128x1xf32>
      %160 = arith.subf %arg20, %159 : vector<128x1xf32>
      %161 = math.exp %160 : vector<128x1xf32>
      %162 = vector.broadcast %159 : vector<128x1xf32> to vector<128x128xf32>
      %163 = arith.subf %156, %162 : vector<128x128xf32>
      %164 = math.exp %163 : vector<128x128xf32>
      %165 = arith.mulf %161, %arg21 : vector<128x1xf32>
      %cst_76 = arith.constant dense<0.000000e+00> : vector<128xf32>
      %166 = vector.multi_reduction <add>, %164, %cst_76 [1] : vector<128x128xf32> to vector<128xf32>
      %167 = vector.shape_cast %166 : vector<128xf32> to vector<128x1xf32>
      %168 = arith.addf %165, %167 : vector<128x1xf32>
      %169 = vector.broadcast %161 : vector<128x1xf32> to vector<128x8xf32>
      %170 = arith.mulf %169, %arg22 : vector<128x8xf32>
      %171 = arith.truncf %164 : vector<128x128xf32> to vector<128x128xbf16>
      %cst_77 = arith.constant dense<0.000000e+00> : vector<128x8xf32>
      %172 = tpu.matmul %171, %149, %cst_77 {dimension_numbers = #tpu.dot_dimension_numbers<[1], [0], [0], [1], [0, 0, 1, 1], [], []>} : vector<128x128xbf16>, vector<128x8xbf16>, vector<128x8xf32> -> vector<128x8xf32>
      %173 = arith.addf %170, %172 : vector<128x8xf32>
      scf.yield %159, %168, %173 : vector<128x1xf32>, vector<128x1xf32>, vector<128x8xf32>
    }
    %65 = tpu.reciprocal %64#1 {approx = true} : vector<128x1xf32> -> vector<128x1xf32>
    %66 = vector.broadcast %65 : vector<128x1xf32> to vector<128x8xf32>
    %67 = arith.mulf %64#2, %66 : vector<128x8xf32>
    %68 = vector.extract_strided_slice %31 {offsets = [0, 16], sizes = [128, 8], strides = [1, 1]} : vector<128x32xbf16> to vector<128x8xbf16>
    %cst_30 = arith.constant -1.000000e+30 : f32
    %69 = vector.broadcast %cst_30 : f32 to vector<128x1xf32>
    %cst_31 = arith.constant 0.000000e+00 : f32
    %70 = vector.broadcast %cst_31 : f32 to vector<128x1xf32>
    %cst_32 = arith.constant 0.000000e+00 : f32
    %71 = vector.broadcast %cst_32 : f32 to vector<128x8xf32>
    %c0_i32_33 = arith.constant 0 : i32
    %72 = arith.subi %47, %c0_i32_33 : i32
    %73 = arith.addi %c0_i32_33, %72 : i32
    %c1_i32_34 = arith.constant 1 : i32
    %74:3 = scf.for %arg19 = %c0_i32_33 to %73 step %c1_i32_34 iter_args(%arg20 = %69, %arg21 = %70, %arg22 = %71) -> (vector<128x1xf32>, vector<128x1xf32>, vector<128x8xf32>)  : i32 {
      %c128_i32_70 = arith.constant 128 : i32
      %144 = arith.muli %arg19, %c128_i32_70 : i32
      %145 = tpu.assume_multiple %144, 128 : i32
      %c16 = arith.constant 16 : index
      %146 = arith.index_cast %145 : i32 to index
      %147 = vector.load %arg17[%c16, %146] : memref<32x128xbf16, #tpu.memory_space<vmem>>, vector<8x128xbf16>
      %148 = arith.index_cast %145 : i32 to index
      %c16_71 = arith.constant 16 : index
      %149 = vector.load %arg18[%148, %c16_71] : memref<128x32xbf16, #tpu.memory_space<vmem>>, vector<128x8xbf16>
      %cst_72 = arith.constant dense<0.000000e+00> : vector<128x128xf32>
      %150 = tpu.matmul %68, %147, %cst_72 {dimension_numbers = #tpu.dot_dimension_numbers<[1], [0], [0], [1], [0, 0, 1, 1], [], []>} : vector<128x8xbf16>, vector<8x128xbf16>, vector<128x128xf32> -> vector<128x128xf32>
      %151 = arith.subi %arg19, %arg1 : i32
      %c128_i32_73 = arith.constant 128 : i32
      %152 = arith.muli %151, %c128_i32_73 : i32
      %153 = vector.broadcast %152 : i32 to vector<128x128xi32>
      %154 = arith.cmpi sge, %46, %153 : vector<128x128xi32>
      %cst_74 = arith.constant -1.000000e+30 : f32
      %155 = vector.broadcast %cst_74 : f32 to vector<128x128xf32>
      %156 = arith.select %154, %150, %155 : vector<128x128xi1>, vector<128x128xf32>
      %cst_75 = arith.constant dense<0xFF800000> : vector<128xf32>
      %157 = vector.multi_reduction <maximumf>, %156, %cst_75 [1] : vector<128x128xf32> to vector<128xf32>
      %158 = vector.shape_cast %157 : vector<128xf32> to vector<128x1xf32>
      %159 = arith.maximumf %arg20, %158 : vector<128x1xf32>
      %160 = arith.subf %arg20, %159 : vector<128x1xf32>
      %161 = math.exp %160 : vector<128x1xf32>
      %162 = vector.broadcast %159 : vector<128x1xf32> to vector<128x128xf32>
      %163 = arith.subf %156, %162 : vector<128x128xf32>
      %164 = math.exp %163 : vector<128x128xf32>
      %165 = arith.mulf %161, %arg21 : vector<128x1xf32>
      %cst_76 = arith.constant dense<0.000000e+00> : vector<128xf32>
      %166 = vector.multi_reduction <add>, %164, %cst_76 [1] : vector<128x128xf32> to vector<128xf32>
      %167 = vector.shape_cast %166 : vector<128xf32> to vector<128x1xf32>
      %168 = arith.addf %165, %167 : vector<128x1xf32>
      %169 = vector.broadcast %161 : vector<128x1xf32> to vector<128x8xf32>
      %170 = arith.mulf %169, %arg22 : vector<128x8xf32>
      %171 = arith.truncf %164 : vector<128x128xf32> to vector<128x128xbf16>
      %cst_77 = arith.constant dense<0.000000e+00> : vector<128x8xf32>
      %172 = tpu.matmul %171, %149, %cst_77 {dimension_numbers = #tpu.dot_dimension_numbers<[1], [0], [0], [1], [0, 0, 1, 1], [], []>} : vector<128x128xbf16>, vector<128x8xbf16>, vector<128x8xf32> -> vector<128x8xf32>
      %173 = arith.addf %170, %172 : vector<128x8xf32>
      scf.yield %159, %168, %173 : vector<128x1xf32>, vector<128x1xf32>, vector<128x8xf32>
    }
    %75 = tpu.reciprocal %74#1 {approx = true} : vector<128x1xf32> -> vector<128x1xf32>
    %76 = vector.broadcast %75 : vector<128x1xf32> to vector<128x8xf32>
    %77 = arith.mulf %74#2, %76 : vector<128x8xf32>
    %78 = vector.extract_strided_slice %31 {offsets = [0, 24], sizes = [128, 8], strides = [1, 1]} : vector<128x32xbf16> to vector<128x8xbf16>
    %cst_35 = arith.constant -1.000000e+30 : f32
    %79 = vector.broadcast %cst_35 : f32 to vector<128x1xf32>
    %cst_36 = arith.constant 0.000000e+00 : f32
    %80 = vector.broadcast %cst_36 : f32 to vector<128x1xf32>
    %cst_37 = arith.constant 0.000000e+00 : f32
    %81 = vector.broadcast %cst_37 : f32 to vector<128x8xf32>
    %c0_i32_38 = arith.constant 0 : i32
    %82 = arith.subi %47, %c0_i32_38 : i32
    %83 = arith.addi %c0_i32_38, %82 : i32
    %c1_i32_39 = arith.constant 1 : i32
    %84:3 = scf.for %arg19 = %c0_i32_38 to %83 step %c1_i32_39 iter_args(%arg20 = %79, %arg21 = %80, %arg22 = %81) -> (vector<128x1xf32>, vector<128x1xf32>, vector<128x8xf32>)  : i32 {
      %c128_i32_70 = arith.constant 128 : i32
      %144 = arith.muli %arg19, %c128_i32_70 : i32
      %145 = tpu.assume_multiple %144, 128 : i32
      %c24 = arith.constant 24 : index
      %146 = arith.index_cast %145 : i32 to index
      %147 = vector.load %arg17[%c24, %146] : memref<32x128xbf16, #tpu.memory_space<vmem>>, vector<8x128xbf16>
      %148 = arith.index_cast %145 : i32 to index
      %c24_71 = arith.constant 24 : index
      %149 = vector.load %arg18[%148, %c24_71] : memref<128x32xbf16, #tpu.memory_space<vmem>>, vector<128x8xbf16>
      %cst_72 = arith.constant dense<0.000000e+00> : vector<128x128xf32>
      %150 = tpu.matmul %78, %147, %cst_72 {dimension_numbers = #tpu.dot_dimension_numbers<[1], [0], [0], [1], [0, 0, 1, 1], [], []>} : vector<128x8xbf16>, vector<8x128xbf16>, vector<128x128xf32> -> vector<128x128xf32>
      %151 = arith.subi %arg19, %arg1 : i32
      %c128_i32_73 = arith.constant 128 : i32
      %152 = arith.muli %151, %c128_i32_73 : i32
      %153 = vector.broadcast %152 : i32 to vector<128x128xi32>
      %154 = arith.cmpi sge, %46, %153 : vector<128x128xi32>
      %cst_74 = arith.constant -1.000000e+30 : f32
      %155 = vector.broadcast %cst_74 : f32 to vector<128x128xf32>
      %156 = arith.select %154, %150, %155 : vector<128x128xi1>, vector<128x128xf32>
      %cst_75 = arith.constant dense<0xFF800000> : vector<128xf32>
      %157 = vector.multi_reduction <maximumf>, %156, %cst_75 [1] : vector<128x128xf32> to vector<128xf32>
      %158 = vector.shape_cast %157 : vector<128xf32> to vector<128x1xf32>
      %159 = arith.maximumf %arg20, %158 : vector<128x1xf32>
      %160 = arith.subf %arg20, %159 : vector<128x1xf32>
      %161 = math.exp %160 : vector<128x1xf32>
      %162 = vector.broadcast %159 : vector<128x1xf32> to vector<128x128xf32>
      %163 = arith.subf %156, %162 : vector<128x128xf32>
      %164 = math.exp %163 : vector<128x128xf32>
      %165 = arith.mulf %161, %arg21 : vector<128x1xf32>
      %cst_76 = arith.constant dense<0.000000e+00> : vector<128xf32>
      %166 = vector.multi_reduction <add>, %164, %cst_76 [1] : vector<128x128xf32> to vector<128xf32>
      %167 = vector.shape_cast %166 : vector<128xf32> to vector<128x1xf32>
      %168 = arith.addf %165, %167 : vector<128x1xf32>
      %169 = vector.broadcast %161 : vector<128x1xf32> to vector<128x8xf32>
      %170 = arith.mulf %169, %arg22 : vector<128x8xf32>
      %171 = arith.truncf %164 : vector<128x128xf32> to vector<128x128xbf16>
      %cst_77 = arith.constant dense<0.000000e+00> : vector<128x8xf32>
      %172 = tpu.matmul %171, %149, %cst_77 {dimension_numbers = #tpu.dot_dimension_numbers<[1], [0], [0], [1], [0, 0, 1, 1], [], []>} : vector<128x128xbf16>, vector<128x8xbf16>, vector<128x8xf32> -> vector<128x8xf32>
      %173 = arith.addf %170, %172 : vector<128x8xf32>
      scf.yield %159, %168, %173 : vector<128x1xf32>, vector<128x1xf32>, vector<128x8xf32>
    }
    %85 = tpu.reciprocal %84#1 {approx = true} : vector<128x1xf32> -> vector<128x1xf32>
    %86 = vector.broadcast %85 : vector<128x1xf32> to vector<128x8xf32>
    %87 = arith.mulf %84#2, %86 : vector<128x8xf32>
    %88 = tpu.concatenate %57, %67, %77, %87 in 1 : vector<128x8xf32>, vector<128x8xf32>, vector<128x8xf32>, vector<128x8xf32> -> vector<128x32xf32>
    %89 = arith.truncf %88 : vector<128x32xf32> to vector<128x32xbf16>
    %c0_40 = arith.constant 0 : index
    %c0_41 = arith.constant 0 : index
    %90 = vector.load %arg8[%c0_40, %c0_41] : memref<32x32xbf16, #tpu.memory_space<vmem>>, vector<32x32xbf16>
    %cst_42 = arith.constant dense<0.000000e+00> : vector<128x32xf32>
    %91 = tpu.matmul %89, %90, %cst_42 {dimension_numbers = #tpu.dot_dimension_numbers<[1], [0], [0], [1], [0, 0, 1, 1], [], []>} : vector<128x32xbf16>, vector<32x32xbf16>, vector<128x32xf32> -> vector<128x32xf32>
    %c0_43 = arith.constant 0 : index
    %c0_44 = arith.constant 0 : index
    %92 = vector.load %arg9[%c0_43, %c0_44] : memref<1x32xf32, #tpu.memory_space<vmem>>, vector<1x32xf32>
    %93 = vector.broadcast %92 : vector<1x32xf32> to vector<128x32xf32>
    %94 = arith.addf %91, %93 : vector<128x32xf32>
    %95 = arith.addf %1, %94 : vector<128x32xf32>
    %c0_45 = arith.constant 0 : index
    %c0_46 = arith.constant 0 : index
    %96 = vector.load %arg10[%c0_45, %c0_46] : memref<1x32xf32, #tpu.memory_space<vmem>>, vector<1x32xf32>
    %c0_47 = arith.constant 0 : index
    %c0_48 = arith.constant 0 : index
    %97 = vector.load %arg11[%c0_47, %c0_48] : memref<1x32xf32, #tpu.memory_space<vmem>>, vector<1x32xf32>
    %cst_49 = arith.constant dense<0.000000e+00> : vector<128xf32>
    %98 = vector.multi_reduction <add>, %95, %cst_49 [1] : vector<128x32xf32> to vector<128xf32>
    %99 = vector.shape_cast %98 : vector<128xf32> to vector<128x1xf32>
    %cst_50 = arith.constant 3.200000e+01 : f32
    %100 = vector.broadcast %cst_50 : f32 to vector<128x1xf32>
    %101 = arith.divf %99, %100 : vector<128x1xf32>
    %102 = vector.broadcast %101 : vector<128x1xf32> to vector<128x32xf32>
    %103 = arith.subf %95, %102 : vector<128x32xf32>
    %104 = arith.mulf %103, %103 : vector<128x32xf32>
    %cst_51 = arith.constant dense<0.000000e+00> : vector<128xf32>
    %105 = vector.multi_reduction <add>, %104, %cst_51 [1] : vector<128x32xf32> to vector<128xf32>
    %106 = vector.shape_cast %105 : vector<128xf32> to vector<128x1xf32>
    %cst_52 = arith.constant 3.200000e+01 : f32
    %107 = vector.broadcast %cst_52 : f32 to vector<128x1xf32>
    %108 = arith.divf %106, %107 : vector<128x1xf32>
    %109 = vector.broadcast %101 : vector<128x1xf32> to vector<128x32xf32>
    %110 = arith.subf %95, %109 : vector<128x32xf32>
    %cst_53 = arith.constant 9.99999974E-6 : f32
    %111 = vector.broadcast %cst_53 : f32 to vector<128x1xf32>
    %112 = arith.addf %108, %111 : vector<128x1xf32>
    %113 = math.rsqrt %112 : vector<128x1xf32>
    %114 = vector.broadcast %113 : vector<128x1xf32> to vector<128x32xf32>
    %115 = arith.mulf %110, %114 : vector<128x32xf32>
    %116 = vector.broadcast %96 : vector<1x32xf32> to vector<128x32xf32>
    %117 = arith.mulf %115, %116 : vector<128x32xf32>
    %118 = vector.broadcast %97 : vector<1x32xf32> to vector<128x32xf32>
    %119 = arith.addf %117, %118 : vector<128x32xf32>
    %120 = arith.truncf %119 : vector<128x32xf32> to vector<128x32xbf16>
    %c0_54 = arith.constant 0 : index
    %c0_55 = arith.constant 0 : index
    %121 = vector.load %arg12[%c0_54, %c0_55] : memref<32x128xbf16, #tpu.memory_space<vmem>>, vector<32x128xbf16>
    %cst_56 = arith.constant dense<0.000000e+00> : vector<128x128xf32>
    %122 = tpu.matmul %120, %121, %cst_56 {dimension_numbers = #tpu.dot_dimension_numbers<[1], [0], [0], [1], [0, 0, 1, 1], [], []>} : vector<128x32xbf16>, vector<32x128xbf16>, vector<128x128xf32> -> vector<128x128xf32>
    %c0_57 = arith.constant 0 : index
    %c0_58 = arith.constant 0 : index
    %123 = vector.load %arg13[%c0_57, %c0_58] : memref<1x128xf32, #tpu.memory_space<vmem>>, vector<1x128xf32>
    %124 = vector.broadcast %123 : vector<1x128xf32> to vector<128x128xf32>
    %125 = arith.addf %122, %124 : vector<128x128xf32>
    %cst_59 = arith.constant 5.000000e-01 : f32
    %126 = vector.broadcast %cst_59 : f32 to vector<128x128xf32>
    %127 = arith.mulf %126, %125 : vector<128x128xf32>
    %cst_60 = arith.constant 0.707106769 : f32
    %128 = vector.broadcast %cst_60 : f32 to vector<128x128xf32>
    %129 = arith.mulf %125, %128 : vector<128x128xf32>
    %130 = math.erf %129 : vector<128x128xf32>
    %cst_61 = arith.constant 1.000000e+00 : f32
    %131 = vector.broadcast %cst_61 : f32 to vector<128x128xf32>
    %132 = arith.addf %131, %130 : vector<128x128xf32>
    %133 = arith.mulf %127, %132 : vector<128x128xf32>
    %134 = arith.truncf %133 : vector<128x128xf32> to vector<128x128xbf16>
    %c0_62 = arith.constant 0 : index
    %c0_63 = arith.constant 0 : index
    %135 = vector.load %arg14[%c0_62, %c0_63] : memref<128x32xbf16, #tpu.memory_space<vmem>>, vector<128x32xbf16>
    %cst_64 = arith.constant dense<0.000000e+00> : vector<128x32xf32>
    %136 = tpu.matmul %134, %135, %cst_64 {dimension_numbers = #tpu.dot_dimension_numbers<[1], [0], [0], [1], [0, 0, 1, 1], [], []>} : vector<128x128xbf16>, vector<128x32xbf16>, vector<128x32xf32> -> vector<128x32xf32>
    %c0_65 = arith.constant 0 : index
    %c0_66 = arith.constant 0 : index
    %137 = vector.load %arg15[%c0_65, %c0_66] : memref<1x32xf32, #tpu.memory_space<vmem>>, vector<1x32xf32>
    %138 = vector.broadcast %137 : vector<1x32xf32> to vector<128x32xf32>
    %139 = arith.addf %136, %138 : vector<128x32xf32>
    %140 = arith.addf %95, %139 : vector<128x32xf32>
    %c0_67 = arith.constant 0 : index
    %c0_68 = arith.constant 0 : index
    %c0_69 = arith.constant 0 : index
    %141 = vector.load %arg16[%c0_67, %c0_68, %c0_69] : memref<1x128x32xf32, #tpu.memory_space<vmem>>, vector<1x128x32xf32>
    %142 = vector.shape_cast %141 : vector<1x128x32xf32> to vector<128x32xf32>
    %143 = vector.shape_cast %140 : vector<128x32xf32> to vector<1x128x32xf32>
    tpu.vector_store %arg16[%c0_67, %c0_68, %c0_69], %143 {strides = array<i32>} : memref<1x128x32xf32, #tpu.memory_space<vmem>>, vector<1x128x32xf32>,
    return
  }
  func.func @transform_0(%arg0: i32, %arg1: i32) -> (i32, i32, i32) {
    %c0_i32 = arith.constant 0 : i32
    %c0_i32_0 = arith.constant 0 : i32
    return %arg0, %arg1, %c0_i32 : i32, i32, i32
  }
  func.func @transform_1(%arg0: i32, %arg1: i32) -> (i32, i32) {
    %c0_i32 = arith.constant 0 : i32
    %c0_i32_0 = arith.constant 0 : i32
    %c0_i32_1 = arith.constant 0 : i32
    return %c0_i32, %c0_i32_0 : i32, i32
  }
  func.func @transform_2(%arg0: i32, %arg1: i32) -> (i32, i32) {
    %c0_i32 = arith.constant 0 : i32
    %c0_i32_0 = arith.constant 0 : i32
    %c0_i32_1 = arith.constant 0 : i32
    return %c0_i32, %c0_i32_0 : i32, i32
  }
  func.func @transform_3(%arg0: i32, %arg1: i32) -> (i32, i32) {
    %c0_i32 = arith.constant 0 : i32
    %c0_i32_0 = arith.constant 0 : i32
    %c0_i32_1 = arith.constant 0 : i32
    return %c0_i32, %c0_i32_0 : i32, i32
  }
  func.func @transform_4(%arg0: i32, %arg1: i32) -> (i32, i32) {
    %c0_i32 = arith.constant 0 : i32
    %c0_i32_0 = arith.constant 0 : i32
    %c0_i32_1 = arith.constant 0 : i32
    return %c0_i32, %c0_i32_0 : i32, i32
  }
  func.func @transform_5(%arg0: i32, %arg1: i32) -> (i32, i32) {
    %c0_i32 = arith.constant 0 : i32
    %c0_i32_0 = arith.constant 0 : i32
    %c0_i32_1 = arith.constant 0 : i32
    return %c0_i32, %c0_i32_0 : i32, i32
  }
  func.func @transform_6(%arg0: i32, %arg1: i32) -> (i32, i32) {
    %c0_i32 = arith.constant 0 : i32
    %c0_i32_0 = arith.constant 0 : i32
    %c0_i32_1 = arith.constant 0 : i32
    return %c0_i32, %c0_i32_0 : i32, i32
  }
  func.func @transform_7(%arg0: i32, %arg1: i32) -> (i32, i32) {
    %c0_i32 = arith.constant 0 : i32
    %c0_i32_0 = arith.constant 0 : i32
    %c0_i32_1 = arith.constant 0 : i32
    return %c0_i32, %c0_i32_0 : i32, i32
  }
  func.func @transform_8(%arg0: i32, %arg1: i32) -> (i32, i32) {
    %c0_i32 = arith.constant 0 : i32
    %c0_i32_0 = arith.constant 0 : i32
    %c0_i32_1 = arith.constant 0 : i32
    return %c0_i32, %c0_i32_0 : i32, i32
  }
  func.func @transform_9(%arg0: i32, %arg1: i32) -> (i32, i32) {
    %c0_i32 = arith.constant 0 : i32
    %c0_i32_0 = arith.constant 0 : i32
    %c0_i32_1 = arith.constant 0 : i32
    return %c0_i32, %c0_i32_0 : i32, i32
  }
  func.func @transform_10(%arg0: i32, %arg1: i32) -> (i32, i32) {
    %c0_i32 = arith.constant 0 : i32
    %c0_i32_0 = arith.constant 0 : i32
    %c0_i32_1 = arith.constant 0 : i32
    return %c0_i32, %c0_i32_0 : i32, i32
  }
  func.func @transform_11(%arg0: i32, %arg1: i32) -> (i32, i32) {
    %c0_i32 = arith.constant 0 : i32
    %c0_i32_0 = arith.constant 0 : i32
    %c0_i32_1 = arith.constant 0 : i32
    return %c0_i32, %c0_i32_0 : i32, i32
  }
  func.func @transform_12(%arg0: i32, %arg1: i32) -> (i32, i32) {
    %c0_i32 = arith.constant 0 : i32
    %c0_i32_0 = arith.constant 0 : i32
    %c0_i32_1 = arith.constant 0 : i32
    return %c0_i32, %c0_i32_0 : i32, i32
  }
  func.func @transform_13(%arg0: i32, %arg1: i32) -> (i32, i32) {
    %c0_i32 = arith.constant 0 : i32
    %c0_i32_0 = arith.constant 0 : i32
    %c0_i32_1 = arith.constant 0 : i32
    return %c0_i32, %c0_i32_0 : i32, i32
  }
  func.func @transform_14(%arg0: i32, %arg1: i32) -> (i32, i32, i32) {
    %c0_i32 = arith.constant 0 : i32
    %c0_i32_0 = arith.constant 0 : i32
    return %arg0, %arg1, %c0_i32 : i32, i32, i32
  }
}

</mosaic_0001>

<llo_original>
// kernel: tpu_custom_call.1
$region0: #{tpu_custom_call.1}
  #allocation0 [shape = 'u32[]', space=smem, size = 0x4, offset = 0x4, fixed_abs, tag = 'smem constant byte address 0x4 - core index']
  #allocation1 [shape = 'u32[144,128]{1,0:T(1,128)}', space=vmem, size = 0x12000, scoped, tag = 'internal scratch']
  #allocation2 [shape = 'bf16[32,128]{1,0:T(16,128)(2,1)}', space=vmem, size = 0x2000, scoped, tag = 'scratch operand']
  #allocation3 [shape = 'bf16[128,32]{1,0:T(16,128)(2,1)}', space=vmem, size = 0x8000, scoped, tag = 'scratch operand']
  %s0 = inlined_call_operand.vmem [shape: f32[2,128,32], index: 0, kind: input, shape index: {}]
  %s1 = inlined_call_operand.vmem [shape: f32[1,32], index: 1, kind: input, shape index: {}]
  %s2 = inlined_call_operand.vmem [shape: f32[1,32], index: 2, kind: input, shape index: {}]
  %s3 = inlined_call_operand.vmem [shape: bf16[32,32], index: 3, kind: input, shape index: {}]
  %s4 = inlined_call_operand.vmem [shape: bf16[32,32], index: 4, kind: input, shape index: {}]
  %s5 = inlined_call_operand.vmem [shape: bf16[32,32], index: 5, kind: input, shape index: {}]
  %s6 = inlined_call_operand.vmem [shape: bf16[32,32], index: 6, kind: input, shape index: {}]
  %s7 = inlined_call_operand.vmem [shape: f32[1,32], index: 7, kind: input, shape index: {}]
  %s8 = inlined_call_operand.vmem [shape: f32[1,32], index: 8, kind: input, shape index: {}]
  %s9 = inlined_call_operand.vmem [shape: f32[1,32], index: 9, kind: input, shape index: {}]
  %s10 = inlined_call_operand.vmem [shape: bf16[32,128], index: 10, kind: input, shape index: {}]
  %s11 = inlined_call_operand.vmem [shape: f32[1,128], index: 11, kind: input, shape index: {}]
  %s12 = inlined_call_operand.vmem [shape: bf16[128,32], index: 12, kind: input, shape index: {}]
  %s13 = inlined_call_operand.vmem [shape: f32[1,32], index: 13, kind: input, shape index: {}]
  %s14 = inlined_call_operand.vmem [shape: f32[2,128,32], index: 14, kind: output, shape index: {}]
  %s15 = sld [smem:[#allocation0]]
  $region117: #{tpu_custom_call.1} parent=0
    _
  %s17 = ssub.s32 1, %s15
  %s18 = scalar_select 0, %s17, %s15
  loop: start=0, step=1, limit=4
  $region2: #{tpu_custom_call.1} parent=0 // loop_pre_header
    _
  $region3: #{tpu_custom_call.1} parent=0 // loop_header
    %s20 = sphi 0, %s24
    %p21 = scmp.ge.s32.totalorder %s20, 4
    %s27 = sphi 0, %s39
    %s28 = sphi 0, %s35
    %s29 = sphi 0, %s27
    %s30 = sphi 0, %s28
    %s31 = sphi 0, %s29
    %s32 = sphi 0, %s30
    %s44 = sphi 0, %s46
    %s47 = sphi 0, %s44
    %s48 = sphi 0, %s47
    %s64 = sphi 0, %s48
    %s68 = sphi 0, %s68
    %s70 = sphi 0, %s68
    %s71 = sphi 0, %s70
    %s85 = sphi 0, %s71
    %s89 = sphi 0, %s89
    %s91 = sphi 0, %s89
    %s92 = sphi 0, %s91
    %s106 = sphi 0, %s92
    %s110 = sphi 0, %s110
    %s112 = sphi 0, %s110
    %s113 = sphi 0, %s112
    %s127 = sphi 0, %s113
    %s131 = sphi 0, %s131
    %s133 = sphi 0, %s131
    %s134 = sphi 0, %s133
    %s148 = sphi 0, %s134
    %s152 = sphi 0, %s152
    %s154 = sphi 0, %s152
    %s155 = sphi 0, %s154
    %s169 = sphi 0, %s155
    %s173 = sphi 0, %s173
    %s175 = sphi 0, %s173
    %s176 = sphi 0, %s175
    %s190 = sphi 0, %s176
    %s194 = sphi 0, %s194
    %s196 = sphi 0, %s194
    %s197 = sphi 0, %s196
    %s211 = sphi 0, %s197
    %s215 = sphi 0, %s215
    %s217 = sphi 0, %s215
    %s218 = sphi 0, %s217
    %s232 = sphi 0, %s218
    %s236 = sphi 0, %s236
    %s238 = sphi 0, %s236
    %s239 = sphi 0, %s238
    %s253 = sphi 0, %s239
    %s257 = sphi 0, %s257
    %s259 = sphi 0, %s257
    %s260 = sphi 0, %s259
    %s274 = sphi 0, %s260
    %s278 = sphi 0, %s278
    %s280 = sphi 0, %s278
    %s281 = sphi 0, %s280
    %s295 = sphi 0, %s281
    %s299 = sphi 0, %s299
    %s301 = sphi 0, %s299
    %s302 = sphi 0, %s301
    %s316 = sphi 0, %s302
    %s320 = sphi 0, %s320
    %s322 = sphi 0, %s320
    %s323 = sphi 0, %s322
    %s337 = sphi 0, %s323
    %s345 = sphi 0, %s347
    %s348 = sphi 0, %s345
    %s349 = sphi 0, %s348
    %s365 = sphi 0, %s349
  $region4: #{tpu_custom_call.1} parent=0 // loop_header_branch
    %23 = sbr.rel (%p21) target = $region8
  $region5: #{tpu_custom_call.1} parent=0 // loop_body
    %s25 = ssub.s32 %s20, 1
    %s26 = ssub.s32 %s20, 2
    %s33 = sadd.s32 1, %s28
    %p34 = scmp.ge.s32.totalorder %s33, 1
    %s35 = scalar_select %p34, 0, %s33
    %s36 = sadd.s32 1, %s27
    %s37 = scalar_select %p34, %s36, %s27
    %p38 = scmp.ge.s32.totalorder %s37, 2
    %s39 = scalar_select %p38, 0, %s37
    %s40 = ssub.s32 %s27, %s39
    %s41 = ssub.s32 %s28, %s35
    %s42 = sor.u32 %s40, %s41
    %p43 = scmp.eq.s32.totalorder %s42, 0
    %s45 = sadd.s32 %s44, 1
    %s46 = scalar_select %p43, %s44, %s45
    %p49 = pneg %p43
    %p50 = scmp.eq.s32.totalorder %s20, 1
    %p51 = por %p49, %p50
    %p52 = scmp.ne.s32.totalorder %s44, %s47
    %p53 = scmp.eq.s32.totalorder %s20, 0
    %p54 = por %p52, %p53
    %p55 = scmp.ne.s32.totalorder %s44, %s47
    %p56 = scmp.eq.s32.totalorder %s25, 1
    %p57 = por %p55, %p56
    %p58 = scmp.ne.s32.totalorder %s47, %s48
    %p59 = scmp.eq.s32.totalorder %s25, 0
    %p60 = por %p58, %p59
    %p61 = scmp.ne.s32.totalorder %s47, %s48
    %p62 = scmp.eq.s32.totalorder %s26, 1
    %p63 = por %p61, %p62
    %p65 = scmp.ne.s32.totalorder %s48, %s64
    %p66 = scmp.eq.s32.totalorder %s26, 0
    %p67 = por %p65, %p66
    %s69 = sadd.s32 %s68, 1
    %p72 = scmp.eq.s32.totalorder %s20, 1
    %p73 = scmp.ne.s32.totalorder %s68, %s70
    %p74 = scmp.eq.s32.totalorder %s20, 0
    %p75 = por %p73, %p74
    %p76 = scmp.ne.s32.totalorder %s68, %s70
    %p77 = scmp.eq.s32.totalorder %s25, 1
    %p78 = por %p76, %p77
    %p79 = scmp.ne.s32.totalorder %s70, %s71
    %p80 = scmp.eq.s32.totalorder %s25, 0
    %p81 = por %p79, %p80
    %p82 = scmp.ne.s32.totalorder %s70, %s71
    %p83 = scmp.eq.s32.totalorder %s26, 1
    %p84 = por %p82, %p83
    %p86 = scmp.ne.s32.totalorder %s71, %s85
    %p87 = scmp.eq.s32.totalorder %s26, 0
    %p88 = por %p86, %p87
    %s90 = sadd.s32 %s89, 1
    %p93 = scmp.eq.s32.totalorder %s20, 1
    %p94 = scmp.ne.s32.totalorder %s89, %s91
    %p95 = scmp.eq.s32.totalorder %s20, 0
    %p96 = por %p94, %p95
    %p97 = scmp.ne.s32.totalorder %s89, %s91
    %p98 = scmp.eq.s32.totalorder %s25, 1
    %p99 = por %p97, %p98
    %p100 = scmp.ne.s32.totalorder %s91, %s92
    %p101 = scmp.eq.s32.totalorder %s25, 0
    %p102 = por %p100, %p101
    %p103 = scmp.ne.s32.totalorder %s91, %s92
    %p104 = scmp.eq.s32.totalorder %s26, 1
    %p105 = por %p103, %p104
    %p107 = scmp.ne.s32.totalorder %s92, %s106
    %p108 = scmp.eq.s32.totalorder %s26, 0
    %p109 = por %p107, %p108
    %s111 = sadd.s32 %s110, 1
    %p114 = scmp.eq.s32.totalorder %s20, 1
    %p115 = scmp.ne.s32.totalorder %s110, %s112
    %p116 = scmp.eq.s32.totalorder %s20, 0
    %p117 = por %p115, %p116
    %p118 = scmp.ne.s32.totalorder %s110, %s112
    %p119 = scmp.eq.s32.totalorder %s25, 1
    %p120 = por %p118, %p119
    %p121 = scmp.ne.s32.totalorder %s112, %s113
    %p122 = scmp.eq.s32.totalorder %s25, 0
    %p123 = por %p121, %p122
    %p124 = scmp.ne.s32.totalorder %s112, %s113
    %p125 = scmp.eq.s32.totalorder %s26, 1
    %p126 = por %p124, %p125
    %p128 = scmp.ne.s32.totalorder %s113, %s127
    %p129 = scmp.eq.s32.totalorder %s26, 0
    %p130 = por %p128, %p129
    %s132 = sadd.s32 %s131, 1
    %p135 = scmp.eq.s32.totalorder %s20, 1
    %p136 = scmp.ne.s32.totalorder %s131, %s133
    %p137 = scmp.eq.s32.totalorder %s20, 0
    %p138 = por %p136, %p137
    %p139 = scmp.ne.s32.totalorder %s131, %s133
    %p140 = scmp.eq.s32.totalorder %s25, 1
    %p141 = por %p139, %p140
    %p142 = scmp.ne.s32.totalorder %s133, %s134
    %p143 = scmp.eq.s32.totalorder %s25, 0
    %p144 = por %p142, %p143
    %p145 = scmp.ne.s32.totalorder %s133, %s134
    %p146 = scmp.eq.s32.totalorder %s26, 1
    %p147 = por %p145, %p146
    %p149 = scmp.ne.s32.totalorder %s134, %s148
    %p150 = scmp.eq.s32.totalorder %s26, 0
    %p151 = por %p149, %p150
    %s153 = sadd.s32 %s152, 1
    %p156 = scmp.eq.s32.totalorder %s20, 1
    %p157 = scmp.ne.s32.totalorder %s152, %s154
    %p158 = scmp.eq.s32.totalorder %s20, 0
    %p159 = por %p157, %p158
    %p160 = scmp.ne.s32.totalorder %s152, %s154
    %p161 = scmp.eq.s32.totalorder %s25, 1
    %p162 = por %p160, %p161
    %p163 = scmp.ne.s32.totalorder %s154, %s155
    %p164 = scmp.eq.s32.totalorder %s25, 0
    %p165 = por %p163, %p164
    %p166 = scmp.ne.s32.totalorder %s154, %s155
    %p167 = scmp.eq.s32.totalorder %s26, 1
    %p168 = por %p166, %p167
    %p170 = scmp.ne.s32.totalorder %s155, %s169
    %p171 = scmp.eq.s32.totalorder %s26, 0
    %p172 = por %p170, %p171
    %s174 = sadd.s32 %s173, 1
    %p177 = scmp.eq.s32.totalorder %s20, 1
    %p178 = scmp.ne.s32.totalorder %s173, %s175
    %p179 = scmp.eq.s32.totalorder %s20, 0
    %p180 = por %p178, %p179
    %p181 = scmp.ne.s32.totalorder %s173, %s175
    %p182 = scmp.eq.s32.totalorder %s25, 1
    %p183 = por %p181, %p182
    %p184 = scmp.ne.s32.totalorder %s175, %s176
    %p185 = scmp.eq.s32.totalorder %s25, 0
    %p186 = por %p184, %p185
    %p187 = scmp.ne.s32.totalorder %s175, %s176
    %p188 = scmp.eq.s32.totalorder %s26, 1
    %p189 = por %p187, %p188
    %p191 = scmp.ne.s32.totalorder %s176, %s190
    %p192 = scmp.eq.s32.totalorder %s26, 0
    %p193 = por %p191, %p192
    %s195 = sadd.s32 %s194, 1
    %p198 = scmp.eq.s32.totalorder %s20, 1
    %p199 = scmp.ne.s32.totalorder %s194, %s196
    %p200 = scmp.eq.s32.totalorder %s20, 0
    %p201 = por %p199, %p200
    %p202 = scmp.ne.s32.totalorder %s194, %s196
    %p203 = scmp.eq.s32.totalorder %s25, 1
    %p204 = por %p202, %p203
    %p205 = scmp.ne.s32.totalorder %s196, %s197
    %p206 = scmp.eq.s32.totalorder %s25, 0
    %p207 = por %p205, %p206
    %p208 = scmp.ne.s32.totalorder %s196, %s197
    %p209 = scmp.eq.s32.totalorder %s26, 1
    %p210 = por %p208, %p209
    %p212 = scmp.ne.s32.totalorder %s197, %s211
    %p213 = scmp.eq.s32.totalorder %s26, 0
    %p214 = por %p212, %p213
    %s216 = sadd.s32 %s215, 1
    %p219 = scmp.eq.s32.totalorder %s20, 1
    %p220 = scmp.ne.s32.totalorder %s215, %s217
    %p221 = scmp.eq.s32.totalorder %s20, 0
    %p222 = por %p220, %p221
    %p223 = scmp.ne.s32.totalorder %s215, %s217
    %p224 = scmp.eq.s32.totalorder %s25, 1
    %p225 = por %p223, %p224
    %p226 = scmp.ne.s32.totalorder %s217, %s218
    %p227 = scmp.eq.s32.totalorder %s25, 0
    %p228 = por %p226, %p227
    %p229 = scmp.ne.s32.totalorder %s217, %s218
    %p230 = scmp.eq.s32.totalorder %s26, 1
    %p231 = por %p229, %p230
    %p233 = scmp.ne.s32.totalorder %s218, %s232
    %p234 = scmp.eq.s32.totalorder %s26, 0
    %p235 = por %p233, %p234
    %s237 = sadd.s32 %s236, 1
    %p240 = scmp.eq.s32.totalorder %s20, 1
    %p241 = scmp.ne.s32.totalorder %s236, %s238
    %p242 = scmp.eq.s32.totalorder %s20, 0
    %p243 = por %p241, %p242
    %p244 = scmp.ne.s32.totalorder %s236, %s238
    %p245 = scmp.eq.s32.totalorder %s25, 1
    %p246 = por %p244, %p245
    %p247 = scmp.ne.s32.totalorder %s238, %s239
    %p248 = scmp.eq.s32.totalorder %s25, 0
    %p249 = por %p247, %p248
    %p250 = scmp.ne.s32.totalorder %s238, %s239
    %p251 = scmp.eq.s32.totalorder %s26, 1
    %p252 = por %p250, %p251
    %p254 = scmp.ne.s32.totalorder %s239, %s253
    %p255 = scmp.eq.s32.totalorder %s26, 0
    %p256 = por %p254, %p255
    %s258 = sadd.s32 %s257, 1
    %p261 = scmp.eq.s32.totalorder %s20, 1
    %p262 = scmp.ne.s32.totalorder %s257, %s259
    %p263 = scmp.eq.s32.totalorder %s20, 0
    %p264 = por %p262, %p263
    %p265 = scmp.ne.s32.totalorder %s257, %s259
    %p266 = scmp.eq.s32.totalorder %s25, 1
    %p267 = por %p265, %p266
    %p268 = scmp.ne.s32.totalorder %s259, %s260
    %p269 = scmp.eq.s32.totalorder %s25, 0
    %p270 = por %p268, %p269
    %p271 = scmp.ne.s32.totalorder %s259, %s260
    %p272 = scmp.eq.s32.totalorder %s26, 1
    %p273 = por %p271, %p272
    %p275 = scmp.ne.s32.totalorder %s260, %s274
    %p276 = scmp.eq.s32.totalorder %s26, 0
    %p277 = por %p275, %p276
    %s279 = sadd.s32 %s278, 1
    %p282 = scmp.eq.s32.totalorder %s20, 1
    %p283 = scmp.ne.s32.totalorder %s278, %s280
    %p284 = scmp.eq.s32.totalorder %s20, 0
    %p285 = por %p283, %p284
    %p286 = scmp.ne.s32.totalorder %s278, %s280
    %p287 = scmp.eq.s32.totalorder %s25, 1
    %p288 = por %p286, %p287
    %p289 = scmp.ne.s32.totalorder %s280, %s281
    %p290 = scmp.eq.s32.totalorder %s25, 0
    %p291 = por %p289, %p290
    %p292 = scmp.ne.s32.totalorder %s280, %s281
    %p293 = scmp.eq.s32.totalorder %s26, 1
    %p294 = por %p292, %p293
    %p296 = scmp.ne.s32.totalorder %s281, %s295
    %p297 = scmp.eq.s32.totalorder %s26, 0
    %p298 = por %p296, %p297
    %s300 = sadd.s32 %s299, 1
    %p303 = scmp.eq.s32.totalorder %s20, 1
    %p304 = scmp.ne.s32.totalorder %s299, %s301
    %p305 = scmp.eq.s32.totalorder %s20, 0
    %p306 = por %p304, %p305
    %p307 = scmp.ne.s32.totalorder %s299, %s301
    %p308 = scmp.eq.s32.totalorder %s25, 1
    %p309 = por %p307, %p308
    %p310 = scmp.ne.s32.totalorder %s301, %s302
    %p311 = scmp.eq.s32.totalorder %s25, 0
    %p312 = por %p310, %p311
    %p313 = scmp.ne.s32.totalorder %s301, %s302
    %p314 = scmp.eq.s32.totalorder %s26, 1
    %p315 = por %p313, %p314
    %p317 = scmp.ne.s32.totalorder %s302, %s316
    %p318 = scmp.eq.s32.totalorder %s26, 0
    %p319 = por %p317, %p318
    %s321 = sadd.s32 %s320, 1
    %p324 = scmp.eq.s32.totalorder %s20, 1
    %p325 = scmp.ne.s32.totalorder %s320, %s322
    %p326 = scmp.eq.s32.totalorder %s20, 0
    %p327 = por %p325, %p326
    %p328 = scmp.ne.s32.totalorder %s320, %s322
    %p329 = scmp.eq.s32.totalorder %s25, 1
    %p330 = por %p328, %p329
    %p331 = scmp.ne.s32.totalorder %s322, %s323
    %p332 = scmp.eq.s32.totalorder %s25, 0
    %p333 = por %p331, %p332
    %p334 = scmp.ne.s32.totalorder %s322, %s323
    %p335 = scmp.eq.s32.totalorder %s26, 1
    %p336 = por %p334, %p335
    %p338 = scmp.ne.s32.totalorder %s323, %s337
    %p339 = scmp.eq.s32.totalorder %s26, 0
    %p340 = por %p338, %p339
    %s341 = ssub.s32 %s27, %s39
    %s342 = ssub.s32 %s28, %s35
    %s343 = sor.u32 %s341, %s342
    %p344 = scmp.eq.s32.totalorder %s343, 0
    %s346 = sadd.s32 %s345, 1
    %s347 = scalar_select %p344, %s345, %s346
    %p350 = pneg %p344
    %p351 = scmp.eq.s32.totalorder %s20, 1
    %p352 = por %p350, %p351
    %p353 = scmp.ne.s32.totalorder %s345, %s348
    %p354 = scmp.eq.s32.totalorder %s20, 0
    %p355 = por %p353, %p354
    %p356 = scmp.ne.s32.totalorder %s345, %s348
    %p357 = scmp.eq.s32.totalorder %s25, 1
    %p358 = por %p356, %p357
    %p359 = scmp.ne.s32.totalorder %s348, %s349
    %p360 = scmp.eq.s32.totalorder %s25, 0
    %p361 = por %p359, %p360
    %p362 = scmp.ne.s32.totalorder %s348, %s349
    %p363 = scmp.eq.s32.totalorder %s26, 1
    %p364 = por %p362, %p363
    %p366 = scmp.ne.s32.totalorder %s349, %s365
    %p367 = scmp.eq.s32.totalorder %s26, 0
    %p368 = por %p366, %p367
    %p369 = scmp.le.s32.totalorder 1, %s20
    %p370 = scmp.lt.s32.totalorder %s20, 3
    %p371 = pnand %p369, %p370
    %p372 = pneg %p371
    // Predicated region
    $region9: #{tpu_custom_call.1} parent=5 // pred_check
      _
    $region10: #{tpu_custom_call.1} parent=5 // pred_check_branch
      %374 = sbr.rel (%p371) target = $region12
    $region11: #{tpu_custom_call.1} parent=5 // pred_region
      %s375 = ssub.s32 %s20, 1
      // Predicated region
      $region13: #{tpu_custom_call.1} parent=11 // pred_check
        %p376 = pneg %p81
      $region14: #{tpu_custom_call.1} parent=11 // pred_check_branch
        %378 = sbr.rel (%p376) target = $region16
      $region15: #{tpu_custom_call.1} parent=11 // pred_region
        _
      $region16: #{tpu_custom_call.1} parent=11 // pred_fallthru
        _
      // Predicated region
      $region17: #{tpu_custom_call.1} parent=11 // pred_check
        %p379 = pneg %p102
      $region18: #{tpu_custom_call.1} parent=11 // pred_check_branch
        %381 = sbr.rel (%p379) target = $region20
      $region19: #{tpu_custom_call.1} parent=11 // pred_region
        _
      $region20: #{tpu_custom_call.1} parent=11 // pred_fallthru
        _
      // Predicated region
      $region21: #{tpu_custom_call.1} parent=11 // pred_check
        %p382 = pneg %p123
      $region22: #{tpu_custom_call.1} parent=11 // pred_check_branch
        %384 = sbr.rel (%p382) target = $region24
      $region23: #{tpu_custom_call.1} parent=11 // pred_region
        _
      $region24: #{tpu_custom_call.1} parent=11 // pred_fallthru
        _
      // Predicated region
      $region25: #{tpu_custom_call.1} parent=11 // pred_check
        %p385 = pneg %p144
      $region26: #{tpu_custom_call.1} parent=11 // pred_check_branch
        %387 = sbr.rel (%p385) target = $region28
      $region27: #{tpu_custom_call.1} parent=11 // pred_region
        _
      $region28: #{tpu_custom_call.1} parent=11 // pred_fallthru
        _
      // Predicated region
      $region29: #{tpu_custom_call.1} parent=11 // pred_check
        %p388 = pneg %p165
      $region30: #{tpu_custom_call.1} parent=11 // pred_check_branch
        %390 = sbr.rel (%p388) target = $region32
      $region31: #{tpu_custom_call.1} parent=11 // pred_region
        _
      $region32: #{tpu_custom_call.1} parent=11 // pred_fallthru
        _
      // Predicated region
      $region33: #{tpu_custom_call.1} parent=11 // pred_check
        %p391 = pneg %p186
      $region34: #{tpu_custom_call.1} parent=11 // pred_check_branch
        %393 = sbr.rel (%p391) target = $region36
      $region35: #{tpu_custom_call.1} parent=11 // pred_region
        _
      $region36: #{tpu_custom_call.1} parent=11 // pred_fallthru
        _
      // Predicated region
      $region37: #{tpu_custom_call.1} parent=11 // pred_check
        %p394 = pneg %p207
      $region38: #{tpu_custom_call.1} parent=11 // pred_check_branch
        %396 = sbr.rel (%p394) target = $region40
      $region39: #{tpu_custom_call.1} parent=11 // pred_region
        _
      $region40: #{tpu_custom_call.1} parent=11 // pred_fallthru
        _
      // Predicated region
      $region41: #{tpu_custom_call.1} parent=11 // pred_check
        %p397 = pneg %p228
      $region42: #{tpu_custom_call.1} parent=11 // pred_check_branch
        %399 = sbr.rel (%p397) target = $region44
      $region43: #{tpu_custom_call.1} parent=11 // pred_region
        _
      $region44: #{tpu_custom_call.1} parent=11 // pred_fallthru
        _
      // Predicated region
      $region45: #{tpu_custom_call.1} parent=11 // pred_check
        %p400 = pneg %p249
      $region46: #{tpu_custom_call.1} parent=11 // pred_check_branch
        %402 = sbr.rel (%p400) target = $region48
      $region47: #{tpu_custom_call.1} parent=11 // pred_region
        _
      $region48: #{tpu_custom_call.1} parent=11 // pred_fallthru
        _
      // Predicated region
      $region49: #{tpu_custom_call.1} parent=11 // pred_check
        %p403 = pneg %p270
      $region50: #{tpu_custom_call.1} parent=11 // pred_check_branch
        %405 = sbr.rel (%p403) target = $region52
      $region51: #{tpu_custom_call.1} parent=11 // pred_region
        _
      $region52: #{tpu_custom_call.1} parent=11 // pred_fallthru
        _
      // Predicated region
      $region53: #{tpu_custom_call.1} parent=11 // pred_check
        %p406 = pneg %p291
      $region54: #{tpu_custom_call.1} parent=11 // pred_check_branch
        %408 = sbr.rel (%p406) target = $region56
      $region55: #{tpu_custom_call.1} parent=11 // pred_region
        _
      $region56: #{tpu_custom_call.1} parent=11 // pred_fallthru
        _
      // Predicated region
      $region57: #{tpu_custom_call.1} parent=11 // pred_check
        %p409 = pneg %p312
      $region58: #{tpu_custom_call.1} parent=11 // pred_check_branch
        %411 = sbr.rel (%p409) target = $region60
      $region59: #{tpu_custom_call.1} parent=11 // pred_region
        _
      $region60: #{tpu_custom_call.1} parent=11 // pred_fallthru
        _
      // Predicated region
      $region61: #{tpu_custom_call.1} parent=11 // pred_check
        %p412 = pneg %p333
      $region62: #{tpu_custom_call.1} parent=11 // pred_check_branch
        %414 = sbr.rel (%p412) target = $region64
      $region63: #{tpu_custom_call.1} parent=11 // pred_region
        _
      $region64: #{tpu_custom_call.1} parent=11 // pred_fallthru
        _
    $region12: #{tpu_custom_call.1} parent=5 // pred_fallthru
      _
    %p415 = scmp.lt.s32.totalorder %s20, 2
    // Predicated region
    $region65: #{tpu_custom_call.1} parent=5 // pred_check
      %p416 = pneg %p415
    $region66: #{tpu_custom_call.1} parent=5 // pred_check_branch
      %418 = sbr.rel (%p416) target = $region68
    $region67: #{tpu_custom_call.1} parent=5 // pred_region
      // Predicated region
      $region69: #{tpu_custom_call.1} parent=67 // pred_check
        %p419 = pneg %p54
      $region70: #{tpu_custom_call.1} parent=67 // pred_check_branch
        %421 = sbr.rel (%p419) target = $region72
      $region71: #{tpu_custom_call.1} parent=67 // pred_region
        %s422 = smul.u32 16, %s28
        %p423 = scmp.lt.s32.totalorder %s27, 1
        %s424 = scalar_select %p423, %s27, 1
        %p425 = scmp.lt.s32.totalorder %s422, 15
        %s426 = scalar_select %p425, %s422, 15
        %s427 = smul.addr %s424, 16
        %s428 = sadd.s32 %s426, %s427
        %s429 = smul.addr %s428, 8
        %s430 = scalar_lea.vmem %s0, %s429
        %s431 = smul.u32 16, %s28
      $region72: #{tpu_custom_call.1} parent=67 // pred_fallthru
        _
    $region68: #{tpu_custom_call.1} parent=5 // pred_fallthru
      _
    %p432 = scmp.le.s32.totalorder 1, %s20
    %p433 = scmp.lt.s32.totalorder %s20, 3
    %p434 = pnand %p432, %p433
    %p435 = pneg %p434
    // Predicated region
    $region73: #{tpu_custom_call.1} parent=5 // pred_check
      _
    $region74: #{tpu_custom_call.1} parent=5 // pred_check_branch
      %437 = sbr.rel (%p434) target = $region76
    $region75: #{tpu_custom_call.1} parent=5 // pred_region
      %s438 = ssub.s32 %s20, 1
      %s439 = smul.u32 16, %s30
      %p440 = scmp.lt.s32.totalorder %s29, 1
      %s441 = scalar_select %p440, %s29, 1
      %p442 = scmp.lt.s32.totalorder %s439, 15
      %s443 = scalar_select %p442, %s439, 15
      %s444 = smul.addr %s441, 16
      %s445 = sadd.s32 %s443, %s444
      %s446 = smul.addr %s445, 8
      %s447 = scalar_lea.vmem %s0, %s446
      %p448 = pneg %p60
      %p449 = pneg %p57
      %p450 = pneg %p81
      %p451 = pneg %p78
      %p452 = pneg %p102
      %p453 = pneg %p99
      %p454 = pneg %p123
      %p455 = pneg %p120
      %p456 = pneg %p144
      %p457 = pneg %p141
      %p458 = pneg %p165
      %p459 = pneg %p162
      %p460 = pneg %p186
      %p461 = pneg %p183
      %p462 = pneg %p207
      %p463 = pneg %p204
      %p464 = pneg %p228
      %p465 = pneg %p225
      %p466 = pneg %p249
      %p467 = pneg %p246
      %p468 = pneg %p270
      %p469 = pneg %p267
      %p470 = pneg %p291
      %p471 = pneg %p288
      %p472 = pneg %p312
      %p473 = pneg %p309
      %p474 = pneg %p333
      %p475 = pneg %p330
      %p476 = pneg %p361
      %p477 = pneg %p358
      %s478 = smul.u32 16, %s30
      %p479 = scmp.lt.s32.totalorder %s29, 1
      %s480 = scalar_select %p479, %s29, 1
      %p481 = scmp.lt.s32.totalorder %s478, 15
      %s482 = scalar_select %p481, %s478, 15
      %s483 = smul.addr %s480, 16
      %s484 = sadd.s32 %s482, %s483
      %s485 = smul.addr %s484, 8
      %s486 = scalar_lea.vmem %s14, %s485
      %s487 = smul.u32 16, %s30
      %p488 = scmp.lt.s32.totalorder %s29, 1
      %s489 = scalar_select %p488, %s29, 1
      %p490 = scmp.lt.s32.totalorder %s487, 15
      %s491 = scalar_select %p490, %s487, 15
      %s492 = smul.addr %s489, 16
      %s493 = sadd.s32 %s491, %s492
      %s494 = smul.addr %s493, 8
      %s495 = scalar_lea.vmem %s0, %s494
      %s496 = smul.u32 16, %s30
      %s497 = smul.u32 16, %s30
      %p498 = scmp.lt.s32.totalorder %s29, 1
      %s499 = scalar_select %p498, %s29, 1
      %p500 = scmp.lt.s32.totalorder %s497, 15
      %s501 = scalar_select %p500, %s497, 15
      %s502 = smul.addr %s499, 16
      %s503 = sadd.s32 %s501, %s502
      %s504 = smul.addr %s503, 8
      %s505 = scalar_lea.vmem %s14, %s504
      %s506 = smul.u32 16, %s30
      %v508 = vld [vmem:[%s495] sm:$0xff]
      %v509 = vld [vmem:[%s495 + $0x8] sm:$0xff]
      %v510 = vld [vmem:[%s495 + $0x10] sm:$0xff]
      %v511 = vld [vmem:[%s495 + $0x18] sm:$0xff]
      %v512 = vld [vmem:[%s495 + $0x20] sm:$0xff]
      %v513 = vld [vmem:[%s495 + $0x28] sm:$0xff]
      %v514 = vld [vmem:[%s495 + $0x30] sm:$0xff]
      %v515 = vld [vmem:[%s495 + $0x38] sm:$0xff]
      %v516 = vld [vmem:[%s495 + $0x40] sm:$0xff]
      %v517 = vld [vmem:[%s495 + $0x48] sm:$0xff]
      %v518 = vld [vmem:[%s495 + $0x50] sm:$0xff]
      %v519 = vld [vmem:[%s495 + $0x58] sm:$0xff]
      %v520 = vld [vmem:[%s495 + $0x60] sm:$0xff]
      %v521 = vld [vmem:[%s495 + $0x68] sm:$0xff]
      %v522 = vld [vmem:[%s495 + $0x70] sm:$0xff]
      %v523 = vld [vmem:[%s495 + $0x78] sm:$0xff]
      %v524 = vld [vmem:[%s1] sm:$0x1]
      %v525 = vld [vmem:[%s2] sm:$0x1]
      %vm526 = vcmask 261120
      %v527 = vsel %vm526, %v508, 0.0
      %528 = vadd.xlane.f32.xlu0 %v527
      %v529 = vpop.xlane.xlu0 %528
      %v530 = vsel %vm526, %v509, 0.0
      %531 = vadd.xlane.f32.xlu0 %v530
      %v532 = vpop.xlane.xlu0 %531
      %v533 = vsel %vm526, %v510, 0.0
      %534 = vadd.xlane.f32.xlu0 %v533
      %v535 = vpop.xlane.xlu0 %534
      %v536 = vsel %vm526, %v511, 0.0
      %537 = vadd.xlane.f32.xlu0 %v536
      %v538 = vpop.xlane.xlu0 %537
      %v539 = vsel %vm526, %v512, 0.0
      %540 = vadd.xlane.f32.xlu0 %v539
      %v541 = vpop.xlane.xlu0 %540
      %v542 = vsel %vm526, %v513, 0.0
      %543 = vadd.xlane.f32.xlu0 %v542
      %v544 = vpop.xlane.xlu0 %543
      %v545 = vsel %vm526, %v514, 0.0
      %546 = vadd.xlane.f32.xlu0 %v545
      %v547 = vpop.xlane.xlu0 %546
      %v548 = vsel %vm526, %v515, 0.0
      %549 = vadd.xlane.f32.xlu0 %v548
      %v550 = vpop.xlane.xlu0 %549
      %v551 = vsel %vm526, %v516, 0.0
      %552 = vadd.xlane.f32.xlu0 %v551
      %v553 = vpop.xlane.xlu0 %552
      %v554 = vsel %vm526, %v517, 0.0
      %555 = vadd.xlane.f32.xlu0 %v554
      %v556 = vpop.xlane.xlu0 %555
      %v557 = vsel %vm526, %v518, 0.0
      %558 = vadd.xlane.f32.xlu0 %v557
      %v559 = vpop.xlane.xlu0 %558
      %v560 = vsel %vm526, %v519, 0.0
      %561 = vadd.xlane.f32.xlu0 %v560
      %v562 = vpop.xlane.xlu0 %561
      %v563 = vsel %vm526, %v520, 0.0
      %564 = vadd.xlane.f32.xlu0 %v563
      %v565 = vpop.xlane.xlu0 %564
      %v566 = vsel %vm526, %v521, 0.0
      %567 = vadd.xlane.f32.xlu0 %v566
      %v568 = vpop.xlane.xlu0 %567
      %v569 = vsel %vm526, %v522, 0.0
      %570 = vadd.xlane.f32.xlu0 %v569
      %v571 = vpop.xlane.xlu0 %570
      %v572 = vsel %vm526, %v523, 0.0
      %573 = vadd.xlane.f32.xlu0 %v572
      %v574 = vpop.xlane.xlu0 %573
      %v575 = vrcp.pop 32.0
      %v576 = vmul.f32 %v529, %v575
      %v577 = vmul.f32 %v532, %v575
      %v578 = vmul.f32 %v535, %v575
      %v579 = vmul.f32 %v538, %v575
      %v580 = vmul.f32 %v541, %v575
      %v581 = vmul.f32 %v544, %v575
      %v582 = vmul.f32 %v547, %v575
      %v583 = vmul.f32 %v550, %v575
      %v584 = vmul.f32 %v553, %v575
      %v585 = vmul.f32 %v556, %v575
      %v586 = vmul.f32 %v559, %v575
      %v587 = vmul.f32 %v562, %v575
      %v588 = vmul.f32 %v565, %v575
      %v589 = vmul.f32 %v568, %v575
      %v590 = vmul.f32 %v571, %v575
      %v591 = vmul.f32 %v574, %v575
      %v592 = vsub.f32 %v508, %v576
      %v593 = vsub.f32 %v509, %v577
      %v594 = vsub.f32 %v510, %v578
      %v595 = vsub.f32 %v511, %v579
      %v596 = vsub.f32 %v512, %v580
      %v597 = vsub.f32 %v513, %v581
      %v598 = vsub.f32 %v514, %v582
      %v599 = vsub.f32 %v515, %v583
      %v600 = vsub.f32 %v516, %v584
      %v601 = vsub.f32 %v517, %v585
      %v602 = vsub.f32 %v518, %v586
      %v603 = vsub.f32 %v519, %v587
      %v604 = vsub.f32 %v520, %v588
      %v605 = vsub.f32 %v521, %v589
      %v606 = vsub.f32 %v522, %v590
      %v607 = vsub.f32 %v523, %v591
      %v608 = vmul.f32 %v592, %v592
      %v609 = vmul.f32 %v593, %v593
      %v610 = vmul.f32 %v594, %v594
      %v611 = vmul.f32 %v595, %v595
      %v612 = vmul.f32 %v596, %v596
      %v613 = vmul.f32 %v597, %v597
      %v614 = vmul.f32 %v598, %v598
      %v615 = vmul.f32 %v599, %v599
      %v616 = vmul.f32 %v600, %v600
      %v617 = vmul.f32 %v601, %v601
      %v618 = vmul.f32 %v602, %v602
      %v619 = vmul.f32 %v603, %v603
      %v620 = vmul.f32 %v604, %v604
      %v621 = vmul.f32 %v605, %v605
      %v622 = vmul.f32 %v606, %v606
      %v623 = vmul.f32 %v607, %v607
      %v624 = vsel %vm526, %v608, 0.0
      %625 = vadd.xlane.f32.xlu0 %v624
      %v626 = vpop.xlane.xlu0 %625
      %v627 = vsel %vm526, %v609, 0.0
      %628 = vadd.xlane.f32.xlu0 %v627
      %v629 = vpop.xlane.xlu0 %628
      %v630 = vsel %vm526, %v610, 0.0
      %631 = vadd.xlane.f32.xlu0 %v630
      %v632 = vpop.xlane.xlu0 %631
      %v633 = vsel %vm526, %v611, 0.0
      %634 = vadd.xlane.f32.xlu0 %v633
      %v635 = vpop.xlane.xlu0 %634
      %v636 = vsel %vm526, %v612, 0.0
      %637 = vadd.xlane.f32.xlu0 %v636
      %v638 = vpop.xlane.xlu0 %637
      %v639 = vsel %vm526, %v613, 0.0
      %640 = vadd.xlane.f32.xlu0 %v639
      %v641 = vpop.xlane.xlu0 %640
      %v642 = vsel %vm526, %v614, 0.0
      %643 = vadd.xlane.f32.xlu0 %v642
      %v644 = vpop.xlane.xlu0 %643
      %v645 = vsel %vm526, %v615, 0.0
      %646 = vadd.xlane.f32.xlu0 %v645
      %v647 = vpop.xlane.xlu0 %646
      %v648 = vsel %vm526, %v616, 0.0
      %649 = vadd.xlane.f32.xlu0 %v648
      %v650 = vpop.xlane.xlu0 %649
      %v651 = vsel %vm526, %v617, 0.0
      %652 = vadd.xlane.f32.xlu0 %v651
      %v653 = vpop.xlane.xlu0 %652
      %v654 = vsel %vm526, %v618, 0.0
      %655 = vadd.xlane.f32.xlu0 %v654
      %v656 = vpop.xlane.xlu0 %655
      %v657 = vsel %vm526, %v619, 0.0
      %658 = vadd.xlane.f32.xlu0 %v657
      %v659 = vpop.xlane.xlu0 %658
      %v660 = vsel %vm526, %v620, 0.0
      %661 = vadd.xlane.f32.xlu0 %v660
      %v662 = vpop.xlane.xlu0 %661
      %v663 = vsel %vm526, %v621, 0.0
      %664 = vadd.xlane.f32.xlu0 %v663
      %v665 = vpop.xlane.xlu0 %664
      %v666 = vsel %vm526, %v622, 0.0
      %667 = vadd.xlane.f32.xlu0 %v666
      %v668 = vpop.xlane.xlu0 %667
      %v669 = vsel %vm526, %v623, 0.0
      %670 = vadd.xlane.f32.xlu0 %v669
      %v671 = vpop.xlane.xlu0 %670
      %v672 = vmul.f32 %v626, %v575
      %v673 = vmul.f32 %v629, %v575
      %v674 = vmul.f32 %v632, %v575
      %v675 = vmul.f32 %v635, %v575
      %v676 = vmul.f32 %v638, %v575
      %v677 = vmul.f32 %v641, %v575
      %v678 = vmul.f32 %v644, %v575
      %v679 = vmul.f32 %v647, %v575
      %v680 = vmul.f32 %v650, %v575
      %v681 = vmul.f32 %v653, %v575
      %v682 = vmul.f32 %v656, %v575
      %v683 = vmul.f32 %v659, %v575
      %v684 = vmul.f32 %v662, %v575
      %v685 = vmul.f32 %v665, %v575
      %v686 = vmul.f32 %v668, %v575
      %v687 = vmul.f32 %v671, %v575
      %v688 = vadd.f32 %v672, 1e-05
      %v689 = vadd.f32 %v673, 1e-05
      %v690 = vadd.f32 %v674, 1e-05
      %v691 = vadd.f32 %v675, 1e-05
      %v692 = vadd.f32 %v676, 1e-05
      %v693 = vadd.f32 %v677, 1e-05
      %v694 = vadd.f32 %v678, 1e-05
      %v695 = vadd.f32 %v679, 1e-05
      %v696 = vadd.f32 %v680, 1e-05
      %v697 = vadd.f32 %v681, 1e-05
      %v698 = vadd.f32 %v682, 1e-05
      %v699 = vadd.f32 %v683, 1e-05
      %v700 = vadd.f32 %v684, 1e-05
      %v701 = vadd.f32 %v685, 1e-05
      %v702 = vadd.f32 %v686, 1e-05
      %v703 = vadd.f32 %v687, 1e-05
      %v704 = vrsqrt.pop %v688
      %v705 = vrsqrt.pop %v689
      %v706 = vrsqrt.pop %v690
      %v707 = vrsqrt.pop %v691
      %v708 = vrsqrt.pop %v692
      %v709 = vrsqrt.pop %v693
      %v710 = vrsqrt.pop %v694
      %v711 = vrsqrt.pop %v695
      %v712 = vrsqrt.pop %v696
      %v713 = vrsqrt.pop %v697
      %v714 = vrsqrt.pop %v698
      %v715 = vrsqrt.pop %v699
      %v716 = vrsqrt.pop %v700
      %v717 = vrsqrt.pop %v701
      %v718 = vrsqrt.pop %v702
      %v719 = vrsqrt.pop %v703
      %v720 = vmul.f32 %v592, %v704
      %v721 = vmul.f32 %v593, %v705
      %v722 = vmul.f32 %v594, %v706
      %v723 = vmul.f32 %v595, %v707
      %v724 = vmul.f32 %v596, %v708
      %v725 = vmul.f32 %v597, %v709
      %v726 = vmul.f32 %v598, %v710
      %v727 = vmul.f32 %v599, %v711
      %v728 = vmul.f32 %v600, %v712
      %v729 = vmul.f32 %v601, %v713
      %v730 = vmul.f32 %v602, %v714
      %v731 = vmul.f32 %v603, %v715
      %v732 = vmul.f32 %v604, %v716
      %v733 = vmul.f32 %v605, %v717
      %v734 = vmul.f32 %v606, %v718
      %v735 = vmul.f32 %v607, %v719
      %v737 = vlaneseq
      %v738 = vshrl.u32 %v737, 7
      %v739 = vsub.s32 0, %v738
      %v740 = vrot.slane %v524, %v739
      %v742 = vmul.f32 %v720, %v740
      %v743 = vmul.f32 %v721, %v740
      %v744 = vmul.f32 %v722, %v740
      %v745 = vmul.f32 %v723, %v740
      %v746 = vmul.f32 %v724, %v740
      %v747 = vmul.f32 %v725, %v740
      %v748 = vmul.f32 %v726, %v740
      %v749 = vmul.f32 %v727, %v740
      %v750 = vmul.f32 %v728, %v740
      %v751 = vmul.f32 %v729, %v740
      %v752 = vmul.f32 %v730, %v740
      %v753 = vmul.f32 %v731, %v740
      %v754 = vmul.f32 %v732, %v740
      %v755 = vmul.f32 %v733, %v740
      %v756 = vmul.f32 %v734, %v740
      %v757 = vmul.f32 %v735, %v740
      %v759 = vlaneseq
      %v760 = vshrl.u32 %v759, 7
      %v761 = vsub.s32 0, %v760
      %v762 = vrot.slane %v525, %v761
      %v764 = vadd.f32 %v742, %v762
      %v765 = vadd.f32 %v743, %v762
      %v766 = vadd.f32 %v744, %v762
      %v767 = vadd.f32 %v745, %v762
      %v768 = vadd.f32 %v746, %v762
      %v769 = vadd.f32 %v747, %v762
      %v770 = vadd.f32 %v748, %v762
      %v771 = vadd.f32 %v749, %v762
      %v772 = vadd.f32 %v750, %v762
      %v773 = vadd.f32 %v751, %v762
      %v774 = vadd.f32 %v752, %v762
      %v775 = vadd.f32 %v753, %v762
      %v776 = vadd.f32 %v754, %v762
      %v777 = vadd.f32 %v755, %v762
      %v778 = vadd.f32 %v756, %v762
      %v779 = vadd.f32 %v757, %v762
      %v780 = vpack.c.bf16 %v765, %v764
      %v781 = vpack.c.bf16 %v767, %v766
      %v782 = vpack.c.bf16 %v769, %v768
      %v783 = vpack.c.bf16 %v771, %v770
      %v784 = vpack.c.bf16 %v773, %v772
      %v785 = vpack.c.bf16 %v775, %v774
      %v786 = vpack.c.bf16 %v777, %v776
      %v787 = vpack.c.bf16 %v779, %v778
      %788 = vxpose.xlu0.b32.start [1/16] %v764, 128
      %789 = vxpose.xlu0.b32.cont [2/16] %v765, 128
      %790 = vxpose.xlu0.b32.cont [3/16] %v766, 128
      %791 = vxpose.xlu0.b32.cont [4/16] %v767, 128
      %792 = vxpose.xlu0.b32.cont [5/16] %v768, 128
      %793 = vxpose.xlu0.b32.cont [6/16] %v769, 128
      %794 = vxpose.xlu0.b32.cont [7/16] %v770, 128
      %795 = vxpose.xlu0.b32.cont [8/16] %v771, 128
      %796 = vxpose.xlu0.b32.cont [9/16] %v772, 128
      %797 = vxpose.xlu0.b32.cont [10/16] %v773, 128
      %798 = vxpose.xlu0.b32.cont [11/16] %v774, 128
      %799 = vxpose.xlu0.b32.cont [12/16] %v775, 128
      %800 = vxpose.xlu0.b32.cont [13/16] %v776, 128
      %801 = vxpose.xlu0.b32.cont [14/16] %v777, 128
      %802 = vxpose.xlu0.b32.cont [15/16] %v778, 128
      %803 = vxpose.xlu0.b32.end [16/16] %v779, 128
      %v804 = vpop.trf.xlu0
      %v805 = vpop.trf.xlu0
      %v806 = vpop.trf.xlu0
      %v807 = vpop.trf.xlu0
      %v808 = vpop.trf.xlu0
      %v809 = vpop.trf.xlu0
      %v810 = vpop.trf.xlu0
      %v811 = vpop.trf.xlu0
      %v812 = vpop.trf.xlu0
      %v813 = vpop.trf.xlu0
      %v814 = vpop.trf.xlu0
      %v815 = vpop.trf.xlu0
      %v816 = vpop.trf.xlu0
      %v817 = vpop.trf.xlu0
      %v818 = vpop.trf.xlu0
      %v819 = vpop.trf.xlu0
      %v820 = vpack.c.bf16 %v805, %v804
      %v821 = vpack.c.bf16 %v807, %v806
      %v822 = vld [vmem:[%s3] sm:$0xf]
      %v823 = vld [vmem:[%s3 + $0x4] sm:$0xf]
      %v824 = vld [vmem:[%s3 + $0x8] sm:$0xf]
      %v825 = vld [vmem:[%s3 + $0xc] sm:$0xf]
      %v830 = vunpack.c.l.b16 %v822
      %v831 = vunpack.c.l.b16 %v823
      %v832 = vunpack.c.l.b16 %v824
      %v833 = vunpack.c.l.b16 %v825
      %v834 = vpack.c.b16 %v831, %v830
      %v835 = vpack.c.b16 %v833, %v832
      %v839 = vsel %vm526, %v780, 0
      %v842 = vsel %vm526, %v781, 0
      %v845 = vsel %vm526, %v782, 0
      %v848 = vsel %vm526, %v783, 0
      %v851 = vsel %vm526, %v784, 0
      %v854 = vsel %vm526, %v785, 0
      %v857 = vsel %vm526, %v786, 0
      %v860 = vsel %vm526, %v787, 0
      %862 = vmatprep.subr.bf16.mxu0 0
      %863 = vmatpush1.bf16.msra.mxu0 %v834
      %864 = vmatprep.subr.bf16.mxu0 0
      %865 = vmatpush1.bf16.msra.mxu0 %v835
      %866 = vmatprep.subr.bf16.mxu0 0
      %867 = vmatpush1.bf16.msra.mxu0 0
      %868 = vmatprep.subr.bf16.mxu0 0
      %869 = vmatpush1.bf16.msra.mxu0 0
      %870 = vmatprep.subr.bf16.mxu0 0
      %871 = vmatpush1.bf16.msra.mxu0 0
      %872 = vmatprep.subr.bf16.mxu0 0
      %873 = vmatpush1.bf16.msra.mxu0 0
      %874 = vmatprep.subr.bf16.mxu0 0
      %875 = vmatpush1.bf16.msra.mxu0 0
      %876 = vmatprep.subr.bf16.mxu0 0
      %877 = vmatpush1.bf16.msra.mxu0 0
      %878 = vmatprep.subr.bf16.mxu0 0
      %879 = vmatpush1.bf16.msra.mxu0 0
      %880 = vmatprep.subr.bf16.mxu0 0
      %881 = vmatpush1.bf16.msra.mxu0 0
      %882 = vmatprep.subr.bf16.mxu0 0
      %883 = vmatpush1.bf16.msra.mxu0 0
      %884 = vmatprep.subr.bf16.mxu0 0
      %885 = vmatpush1.bf16.msra.mxu0 0
      %886 = vmatprep.subr.bf16.mxu0 0
      %887 = vmatpush1.bf16.msra.mxu0 0
      %888 = vmatprep.subr.bf16.mxu0 0
      %889 = vmatpush1.bf16.msra.mxu0 0
      %890 = vmatprep.subr.bf16.mxu0 0
      %891 = vmatpush1.bf16.msra.mxu0 0
      %892 = vmatprep.subr.bf16.mxu0 0
      %893 = vmatpush1.bf16.msra.mxu0 0
      %894 = vmatprep.mubr.bf16.mxu0 0
      %895 = vmatmul.mubr.bf16.gmra.mrb[0].mxu0 %v839
      %v896 = vpop.f32.mrb[0].mxu0
      %v897 = vadd.f32 0.0, %v896
      %v898 = vpop.f32.mrb[0].mxu0
      %v899 = vpop.f32.mrb[0].mxu0
      %v900 = vadd.f32 0.0, %v899
      %v901 = vpop.f32.mrb[0].mxu0
      %902 = vmatprep.mubr.bf16.mxu0 0
      %903 = vmatmul.mubr.bf16.gmra.mrb[0].mxu0 %v842
      %v904 = vpop.f32.mrb[0].mxu0
      %v905 = vadd.f32 0.0, %v904
      %v906 = vpop.f32.mrb[0].mxu0
      %v907 = vpop.f32.mrb[0].mxu0
      %v908 = vadd.f32 0.0, %v907
      %v909 = vpop.f32.mrb[0].mxu0
      %910 = vmatprep.mubr.bf16.mxu0 0
      %911 = vmatmul.mubr.bf16.gmra.mrb[0].mxu0 %v845
      %v912 = vpop.f32.mrb[0].mxu0
      %v913 = vadd.f32 0.0, %v912
      %v914 = vpop.f32.mrb[0].mxu0
      %v915 = vpop.f32.mrb[0].mxu0
      %v916 = vadd.f32 0.0, %v915
      %v917 = vpop.f32.mrb[0].mxu0
      %918 = vmatprep.mubr.bf16.mxu0 0
      %919 = vmatmul.mubr.bf16.gmra.mrb[0].mxu0 %v848
      %v920 = vpop.f32.mrb[0].mxu0
      %v921 = vadd.f32 0.0, %v920
      %v922 = vpop.f32.mrb[0].mxu0
      %v923 = vpop.f32.mrb[0].mxu0
      %v924 = vadd.f32 0.0, %v923
      %v925 = vpop.f32.mrb[0].mxu0
      %926 = vmatprep.mubr.bf16.mxu0 0
      %927 = vmatmul.mubr.bf16.gmra.mrb[0].mxu0 %v851
      %v928 = vpop.f32.mrb[0].mxu0
      %v929 = vadd.f32 0.0, %v928
      %v930 = vpop.f32.mrb[0].mxu0
      %v931 = vpop.f32.mrb[0].mxu0
      %v932 = vadd.f32 0.0, %v931
      %v933 = vpop.f32.mrb[0].mxu0
      %934 = vmatprep.mubr.bf16.mxu0 0
      %935 = vmatmul.mubr.bf16.gmra.mrb[0].mxu0 %v854
      %v936 = vpop.f32.mrb[0].mxu0
      %v937 = vadd.f32 0.0, %v936
      %v938 = vpop.f32.mrb[0].mxu0
      %v939 = vpop.f32.mrb[0].mxu0
      %v940 = vadd.f32 0.0, %v939
      %v941 = vpop.f32.mrb[0].mxu0
      %942 = vmatprep.mubr.bf16.mxu0 0
      %943 = vmatmul.mubr.bf16.gmra.mrb[0].mxu0 %v857
      %v944 = vpop.f32.mrb[0].mxu0
      %v945 = vadd.f32 0.0, %v944
      %v946 = vpop.f32.mrb[0].mxu0
      %v947 = vpop.f32.mrb[0].mxu0
      %v948 = vadd.f32 0.0, %v947
      %v949 = vpop.f32.mrb[0].mxu0
      %950 = vmatprep.mubr.bf16.mxu0 0
      %951 = vmatmul.mubr.bf16.gmra.mrb[0].mxu0 %v860
      %v952 = vpop.f32.mrb[0].mxu0
      %v953 = vadd.f32 0.0, %v952
      %v954 = vpop.f32.mrb[0].mxu0
      %v955 = vpop.f32.mrb[0].mxu0
      %v956 = vadd.f32 0.0, %v955
      %v957 = vpop.f32.mrb[0].mxu0
      %958 = vdwg.mxu0
      %v959 = vpack.c.bf16 %v900, %v897
      %v960 = vpack.c.bf16 %v908, %v905
      %v961 = vpack.c.bf16 %v916, %v913
      %v962 = vpack.c.bf16 %v924, %v921
      %v963 = vpack.c.bf16 %v932, %v929
      %v964 = vpack.c.bf16 %v940, %v937
      %v965 = vpack.c.bf16 %v948, %v945
      %v966 = vpack.c.bf16 %v956, %v953
      %v967 = vld [vmem:[%s4] sm:$0xf]
      %v968 = vld [vmem:[%s4 + $0x4] sm:$0xf]
      %v969 = vld [vmem:[%s4 + $0x8] sm:$0xf]
      %v970 = vld [vmem:[%s4 + $0xc] sm:$0xf]
      %v975 = vunpack.c.l.b16 %v967
      %v976 = vunpack.c.l.b16 %v968
      %v977 = vunpack.c.l.b16 %v969
      %v978 = vunpack.c.l.b16 %v970
      %v979 = vpack.c.b16 %v976, %v975
      %v980 = vpack.c.b16 %v978, %v977
      %v982 = vsel %vm526, %v979, 0
      %v985 = vsel %vm526, %v980, 0
      %987 = vmatprep.subr.bf16.mxu0 0
      %988 = vmatpush1.bf16.msra.mxu0 %v820
      %989 = vmatprep.subr.bf16.mxu0 0
      %990 = vmatpush1.bf16.msra.mxu0 %v821
      %991 = vmatprep.subr.bf16.mxu0 0
      %992 = vmatpush1.bf16.msra.mxu0 0
      %993 = vmatprep.subr.bf16.mxu0 0
      %994 = vmatpush1.bf16.msra.mxu0 0
      %995 = vmatprep.subr.bf16.mxu0 0
      %996 = vmatpush1.bf16.msra.mxu0 0
      %997 = vmatprep.subr.bf16.mxu0 0
      %998 = vmatpush1.bf16.msra.mxu0 0
      %999 = vmatprep.subr.bf16.mxu0 0
      %1000 = vmatpush1.bf16.msra.mxu0 0
      %1001 = vmatprep.subr.bf16.mxu0 0
      %1002 = vmatpush1.bf16.msra.mxu0 0
      %1003 = vmatprep.subr.bf16.mxu0 0
      %1004 = vmatpush1.bf16.msra.mxu0 0
      %1005 = vmatprep.subr.bf16.mxu0 0
      %1006 = vmatpush1.bf16.msra.mxu0 0
      %1007 = vmatprep.subr.bf16.mxu0 0
      %1008 = vmatpush1.bf16.msra.mxu0 0
      %1009 = vmatprep.subr.bf16.mxu0 0
      %1010 = vmatpush1.bf16.msra.mxu0 0
      %1011 = vmatprep.subr.bf16.mxu0 0
      %1012 = vmatpush1.bf16.msra.mxu0 0
      %1013 = vmatprep.subr.bf16.mxu0 0
      %1014 = vmatpush1.bf16.msra.mxu0 0
      %1015 = vmatprep.subr.bf16.mxu0 0
      %1016 = vmatpush1.bf16.msra.mxu0 0
      %1017 = vmatprep.subr.bf16.mxu0 0
      %1018 = vmatpush1.bf16.msra.mxu0 0
      %1019 = vmatprep.mubr.bf16.mxu0 0
      %1020 = vmatmul.mubr.bf16.gmra.mrb[0].mxu0 %v982
      %v1021 = vpop.f32.mrb[0].mxu0
      %v1022 = vadd.f32 0.0, %v1021
      %v1023 = vpop.f32.mrb[0].mxu0
      %v1024 = vpop.f32.mrb[0].mxu0
      %v1025 = vadd.f32 0.0, %v1024
      %v1026 = vpop.f32.mrb[0].mxu0
      %1027 = vmatprep.mubr.bf16.mxu0 0
      %1028 = vmatmul.mubr.bf16.gmra.mrb[0].mxu0 %v985
      %v1029 = vpop.f32.mrb[0].mxu0
      %v1030 = vadd.f32 0.0, %v1029
      %v1031 = vpop.f32.mrb[0].mxu0
      %v1032 = vpop.f32.mrb[0].mxu0
      %v1033 = vadd.f32 0.0, %v1032
      %v1034 = vpop.f32.mrb[0].mxu0
      %1035 = vdwg.mxu0
      %v1036 = vpack.c.bf16 %v1025, %v1022
      %v1037 = vpack.c.bf16 %v1033, %v1030
      %v1038 = vld [vmem:[%s5] sm:$0xf]
      %v1039 = vld [vmem:[%s5 + $0x4] sm:$0xf]
      %v1040 = vld [vmem:[%s5 + $0x8] sm:$0xf]
      %v1041 = vld [vmem:[%s5 + $0xc] sm:$0xf]
      %v1046 = vunpack.c.l.b16 %v1038
      %v1047 = vunpack.c.l.b16 %v1039
      %v1048 = vunpack.c.l.b16 %v1040
      %v1049 = vunpack.c.l.b16 %v1041
      %v1050 = vpack.c.b16 %v1047, %v1046
      %v1051 = vpack.c.b16 %v1049, %v1048
      %1054 = vmatprep.subr.bf16.mxu0 0
      %1055 = vmatpush1.bf16.msra.mxu0 %v1050
      %1056 = vmatprep.subr.bf16.mxu0 0
      %1057 = vmatpush1.bf16.msra.mxu0 %v1051
      %1058 = vmatprep.subr.bf16.mxu0 0
      %1059 = vmatpush1.bf16.msra.mxu0 0
      %1060 = vmatprep.subr.bf16.mxu0 0
      %1061 = vmatpush1.bf16.msra.mxu0 0
      %1062 = vmatprep.subr.bf16.mxu0 0
      %1063 = vmatpush1.bf16.msra.mxu0 0
      %1064 = vmatprep.subr.bf16.mxu0 0
      %1065 = vmatpush1.bf16.msra.mxu0 0
      %1066 = vmatprep.subr.bf16.mxu0 0
      %1067 = vmatpush1.bf16.msra.mxu0 0
      %1068 = vmatprep.subr.bf16.mxu0 0
      %1069 = vmatpush1.bf16.msra.mxu0 0
      %1070 = vmatprep.subr.bf16.mxu0 0
      %1071 = vmatpush1.bf16.msra.mxu0 0
      %1072 = vmatprep.subr.bf16.mxu0 0
      %1073 = vmatpush1.bf16.msra.mxu0 0
      %1074 = vmatprep.subr.bf16.mxu0 0
      %1075 = vmatpush1.bf16.msra.mxu0 0
      %1076 = vmatprep.subr.bf16.mxu0 0
      %1077 = vmatpush1.bf16.msra.mxu0 0
      %1078 = vmatprep.subr.bf16.mxu0 0
      %1079 = vmatpush1.bf16.msra.mxu0 0
      %1080 = vmatprep.subr.bf16.mxu0 0
      %1081 = vmatpush1.bf16.msra.mxu0 0
      %1082 = vmatprep.subr.bf16.mxu0 0
      %1083 = vmatpush1.bf16.msra.mxu0 0
      %1084 = vmatprep.subr.bf16.mxu0 0
      %1085 = vmatpush1.bf16.msra.mxu0 0
      %1086 = vmatprep.mubr.bf16.mxu0 0
      %1087 = vmatmul.mubr.bf16.gmra.mrb[0].mxu0 %v839
      %v1088 = vpop.f32.mrb[0].mxu0
      %v1089 = vadd.f32 0.0, %v1088
      %v1090 = vpop.f32.mrb[0].mxu0
      %v1091 = vpop.f32.mrb[0].mxu0
      %v1092 = vadd.f32 0.0, %v1091
      %v1093 = vpop.f32.mrb[0].mxu0
      %1094 = vmatprep.mubr.bf16.mxu0 0
      %1095 = vmatmul.mubr.bf16.gmra.mrb[0].mxu0 %v842
      %v1096 = vpop.f32.mrb[0].mxu0
      %v1097 = vadd.f32 0.0, %v1096
      %v1098 = vpop.f32.mrb[0].mxu0
      %v1099 = vpop.f32.mrb[0].mxu0
      %v1100 = vadd.f32 0.0, %v1099
      %v1101 = vpop.f32.mrb[0].mxu0
      %1102 = vmatprep.mubr.bf16.mxu0 0
      %1103 = vmatmul.mubr.bf16.gmra.mrb[0].mxu0 %v845
      %v1104 = vpop.f32.mrb[0].mxu0
      %v1105 = vadd.f32 0.0, %v1104
      %v1106 = vpop.f32.mrb[0].mxu0
      %v1107 = vpop.f32.mrb[0].mxu0
      %v1108 = vadd.f32 0.0, %v1107
      %v1109 = vpop.f32.mrb[0].mxu0
      %1110 = vmatprep.mubr.bf16.mxu0 0
      %1111 = vmatmul.mubr.bf16.gmra.mrb[0].mxu0 %v848
      %v1112 = vpop.f32.mrb[0].mxu0
      %v1113 = vadd.f32 0.0, %v1112
      %v1114 = vpop.f32.mrb[0].mxu0
      %v1115 = vpop.f32.mrb[0].mxu0
      %v1116 = vadd.f32 0.0, %v1115
      %v1117 = vpop.f32.mrb[0].mxu0
      %1118 = vmatprep.mubr.bf16.mxu0 0
      %1119 = vmatmul.mubr.bf16.gmra.mrb[0].mxu0 %v851
      %v1120 = vpop.f32.mrb[0].mxu0
      %v1121 = vadd.f32 0.0, %v1120
      %v1122 = vpop.f32.mrb[0].mxu0
      %v1123 = vpop.f32.mrb[0].mxu0
      %v1124 = vadd.f32 0.0, %v1123
      %v1125 = vpop.f32.mrb[0].mxu0
      %1126 = vmatprep.mubr.bf16.mxu0 0
      %1127 = vmatmul.mubr.bf16.gmra.mrb[0].mxu0 %v854
      %v1128 = vpop.f32.mrb[0].mxu0
      %v1129 = vadd.f32 0.0, %v1128
      %v1130 = vpop.f32.mrb[0].mxu0
      %v1131 = vpop.f32.mrb[0].mxu0
      %v1132 = vadd.f32 0.0, %v1131
      %v1133 = vpop.f32.mrb[0].mxu0
      %1134 = vmatprep.mubr.bf16.mxu0 0
      %1135 = vmatmul.mubr.bf16.gmra.mrb[0].mxu0 %v857
      %v1136 = vpop.f32.mrb[0].mxu0
      %v1137 = vadd.f32 0.0, %v1136
      %v1138 = vpop.f32.mrb[0].mxu0
      %v1139 = vpop.f32.mrb[0].mxu0
      %v1140 = vadd.f32 0.0, %v1139
      %v1141 = vpop.f32.mrb[0].mxu0
      %1142 = vmatprep.mubr.bf16.mxu0 0
      %1143 = vmatmul.mubr.bf16.gmra.mrb[0].mxu0 %v860
      %v1144 = vpop.f32.mrb[0].mxu0
      %v1145 = vadd.f32 0.0, %v1144
      %v1146 = vpop.f32.mrb[0].mxu0
      %v1147 = vpop.f32.mrb[0].mxu0
      %v1148 = vadd.f32 0.0, %v1147
      %v1149 = vpop.f32.mrb[0].mxu0
      %1150 = vdwg.mxu0
      %v1151 = vpack.c.bf16 %v1092, %v1089
      %v1152 = vpack.c.bf16 %v1100, %v1097
      %v1153 = vpack.c.bf16 %v1108, %v1105
      %v1154 = vpack.c.bf16 %v1116, %v1113
      %v1155 = vpack.c.bf16 %v1124, %v1121
      %v1156 = vpack.c.bf16 %v1132, %v1129
      %v1157 = vpack.c.bf16 %v1140, %v1137
      %v1158 = vpack.c.bf16 %v1148, %v1145
      %s1159 = smul.u32 %s30, 128
      %s1160 = sshra.s32 %s1159, 7
      %s1161 = sand.u32 %s1159, 127
      %s1162 = smul.addr %s1160, 8
      %s1163 = scalar_lea.vmem [#allocation2], %s1162
      %1164 = vst [vmem:[%s1163] sm:$0xff] %v1036
      %1165 = vst [vmem:[%s1163 + $0x8] sm:$0xff] %v1037
      %s1166 = sshra.s32 %s1159, 4
      %s1167 = sand.u32 %s1159, 15
      %s1168 = smul.addr %s1166, 8
      %s1169 = scalar_lea.vmem [#allocation3], %s1168
      %1170 = vst.msk [vmem:[%s1169] sm:$0xff] %vm526, %v1151
      %1171 = vst.msk [vmem:[%s1169 + $0x8] sm:$0xff] %vm526, %v1152
      %1172 = vst.msk [vmem:[%s1169 + $0x10] sm:$0xff] %vm526, %v1153
      %1173 = vst.msk [vmem:[%s1169 + $0x18] sm:$0xff] %vm526, %v1154
      %1174 = vst.msk [vmem:[%s1169 + $0x20] sm:$0xff] %vm526, %v1155
      %1175 = vst.msk [vmem:[%s1169 + $0x28] sm:$0xff] %vm526, %v1156
      %1176 = vst.msk [vmem:[%s1169 + $0x30] sm:$0xff] %vm526, %v1157
      %1177 = vst.msk [vmem:[%s1169 + $0x38] sm:$0xff] %vm526, %v1158
      %v1178 = vlaneseq
      %v1179 = vshrl.u32 %v1178, 7
      %v1180 = vadd.s32 %v1179, 8
      %v1181 = vadd.s32 %v1179, 16
      %v1182 = vadd.s32 %v1179, 24
      %v1183 = vadd.s32 %v1179, 32
      %v1184 = vadd.s32 %v1179, 40
      %v1185 = vadd.s32 %v1179, 48
      %v1186 = vadd.s32 %v1179, 56
      %v1187 = vadd.s32 %v1179, 64
      %v1188 = vadd.s32 %v1179, 72
      %v1189 = vadd.s32 %v1179, 80
      %v1190 = vadd.s32 %v1179, 88
      %v1191 = vadd.s32 %v1179, 96
      %v1192 = vadd.s32 %v1179, 104
      %v1193 = vadd.s32 %v1179, 112
      %v1194 = vadd.s32 %v1179, 120
      %v1195 = vlaneseq
      %v1196 = vand.u32 %v1195, 127
      %v1197 = vsub.s32 %v1179, %v1196
      %v1198 = vsub.s32 %v1180, %v1196
      %v1199 = vsub.s32 %v1181, %v1196
      %v1200 = vsub.s32 %v1182, %v1196
      %v1201 = vsub.s32 %v1183, %v1196
      %v1202 = vsub.s32 %v1184, %v1196
      %v1203 = vsub.s32 %v1185, %v1196
      %v1204 = vsub.s32 %v1186, %v1196
      %v1205 = vsub.s32 %v1187, %v1196
      %v1206 = vsub.s32 %v1188, %v1196
      %v1207 = vsub.s32 %v1189, %v1196
      %v1208 = vsub.s32 %v1190, %v1196
      %v1209 = vsub.s32 %v1191, %v1196
      %v1210 = vsub.s32 %v1192, %v1196
      %v1211 = vsub.s32 %v1193, %v1196
      %v1212 = vsub.s32 %v1194, %v1196
      %s1213 = sadd.s32 %s30, 1
      // While loop
      $region77: #{tpu_custom_call.1} parent=75 // loop_pre_header
        _
      $region78: #{tpu_custom_call.1} parent=75 // loop_header
        %s1215 = sphi 0, %s1217
        %p1216 = scmp.ge.s32.totalorder %s1215, %s1213
        %v1220 = vphi -1e+30, %v1479
        %v1221 = vphi -1e+30, %v1480
        %v1222 = vphi -1e+30, %v1481
        %v1223 = vphi -1e+30, %v1482
        %v1224 = vphi -1e+30, %v1483
        %v1225 = vphi -1e+30, %v1484
        %v1226 = vphi -1e+30, %v1485
        %v1227 = vphi -1e+30, %v1486
        %v1228 = vphi -1e+30, %v1487
        %v1229 = vphi -1e+30, %v1488
        %v1230 = vphi -1e+30, %v1489
        %v1231 = vphi -1e+30, %v1490
        %v1232 = vphi -1e+30, %v1491
        %v1233 = vphi -1e+30, %v1492
        %v1234 = vphi -1e+30, %v1493
        %v1235 = vphi -1e+30, %v1494
        %v1236 = vphi 0.0, %v1639
        %v1237 = vphi 0.0, %v1640
        %v1238 = vphi 0.0, %v1641
        %v1239 = vphi 0.0, %v1642
        %v1240 = vphi 0.0, %v1643
        %v1241 = vphi 0.0, %v1644
        %v1242 = vphi 0.0, %v1645
        %v1243 = vphi 0.0, %v1646
        %v1244 = vphi 0.0, %v1647
        %v1245 = vphi 0.0, %v1648
        %v1246 = vphi 0.0, %v1649
        %v1247 = vphi 0.0, %v1650
        %v1248 = vphi 0.0, %v1651
        %v1249 = vphi 0.0, %v1652
        %v1250 = vphi 0.0, %v1653
        %v1251 = vphi 0.0, %v1654
        %v1252 = vphi 0.0, %v1776
        %v1253 = vphi 0.0, %v1777
        %v1254 = vphi 0.0, %v1778
        %v1255 = vphi 0.0, %v1779
        %v1256 = vphi 0.0, %v1780
        %v1257 = vphi 0.0, %v1781
        %v1258 = vphi 0.0, %v1782
        %v1259 = vphi 0.0, %v1783
        %v1260 = vphi 0.0, %v1784
        %v1261 = vphi 0.0, %v1785
        %v1262 = vphi 0.0, %v1786
        %v1263 = vphi 0.0, %v1787
        %v1264 = vphi 0.0, %v1788
        %v1265 = vphi 0.0, %v1789
        %v1266 = vphi 0.0, %v1790
        %v1267 = vphi 0.0, %v1791
      $region79: #{tpu_custom_call.1} parent=75 // loop_header_branch
        %1219 = sbr.rel (%p1216) target = $region83
      $region80: #{tpu_custom_call.1} parent=75 // loop_body
        %s1268 = smul.u32 %s1215, 128
        %s1269 = sshra.s32 %s1268, 7
        %s1270 = sand.u32 %s1268, 127
        %s1271 = smul.addr %s1269, 8
        %s1272 = scalar_lea.vmem [#allocation2], %s1271
        %v1273 = vld [vmem:[%s1272] sm:$0xf]
        %s1274 = sshra.s32 %s1268, 4
        %s1275 = sand.u32 %s1268, 15
        %s1276 = smul.addr %s1274, 8
        %s1277 = scalar_lea.vmem [#allocation3], %s1276
        %v1278 = vld [vmem:[%s1277] sm:$0xff]
        %v1279 = vld [vmem:[%s1277 + $0x8] sm:$0xff]
        %v1280 = vld [vmem:[%s1277 + $0x10] sm:$0xff]
        %v1281 = vld [vmem:[%s1277 + $0x18] sm:$0xff]
        %v1282 = vld [vmem:[%s1277 + $0x20] sm:$0xff]
        %v1283 = vld [vmem:[%s1277 + $0x28] sm:$0xff]
        %v1284 = vld [vmem:[%s1277 + $0x30] sm:$0xff]
        %v1285 = vld [vmem:[%s1277 + $0x38] sm:$0xff]
        %vm1286 = vcmask 64512
        %v1288 = vsel %vm1286, %v959, 0
        %v1291 = vsel %vm1286, %v960, 0
        %v1294 = vsel %vm1286, %v961, 0
        %v1297 = vsel %vm1286, %v962, 0
        %v1300 = vsel %vm1286, %v963, 0
        %v1303 = vsel %vm1286, %v964, 0
        %v1306 = vsel %vm1286, %v965, 0
        %v1309 = vsel %vm1286, %v966, 0
        %vm1311 = vcmask 1043456
        %v1313 = vsel %vm1311, %v1273, 0
        %1315 = vmatprep.subr.bf16.mxu0 0
        %1316 = vmatpush1.bf16.msra.mxu0 %v1313
        %1317 = vmatprep.subr.bf16.mxu0 0
        %1318 = vmatpush1.bf16.msra.mxu0 0
        %1319 = vmatprep.subr.bf16.mxu0 0
        %1320 = vmatpush1.bf16.msra.mxu0 0
        %1321 = vmatprep.subr.bf16.mxu0 0
        %1322 = vmatpush1.bf16.msra.mxu0 0
        %1323 = vmatprep.subr.bf16.mxu0 0
        %1324 = vmatpush1.bf16.msra.mxu0 0
        %1325 = vmatprep.subr.bf16.mxu0 0
        %1326 = vmatpush1.bf16.msra.mxu0 0
        %1327 = vmatprep.subr.bf16.mxu0 0
        %1328 = vmatpush1.bf16.msra.mxu0 0
        %1329 = vmatprep.subr.bf16.mxu0 0
        %1330 = vmatpush1.bf16.msra.mxu0 0
        %1331 = vmatprep.subr.bf16.mxu0 0
        %1332 = vmatpush1.bf16.msra.mxu0 0
        %1333 = vmatprep.subr.bf16.mxu0 0
        %1334 = vmatpush1.bf16.msra.mxu0 0
        %1335 = vmatprep.subr.bf16.mxu0 0
        %1336 = vmatpush1.bf16.msra.mxu0 0
        %1337 = vmatprep.subr.bf16.mxu0 0
        %1338 = vmatpush1.bf16.msra.mxu0 0
        %1339 = vmatprep.subr.bf16.mxu0 0
        %1340 = vmatpush1.bf16.msra.mxu0 0
        %1341 = vmatprep.subr.bf16.mxu0 0
        %1342 = vmatpush1.bf16.msra.mxu0 0
        %1343 = vmatprep.subr.bf16.mxu0 0
        %1344 = vmatpush1.bf16.msra.mxu0 0
        %1345 = vmatprep.subr.bf16.mxu0 0
        %1346 = vmatpush1.bf16.msra.mxu0 0
        %1347 = vmatprep.mubr.bf16.mxu0 0
        %1348 = vmatmul.mubr.bf16.gmra.mrb[0].mxu0 %v1288
        %v1349 = vpop.f32.mrb[0].mxu0
        %v1350 = vadd.f32 0.0, %v1349
        %v1351 = vpop.f32.mrb[0].mxu0
        %v1352 = vpop.f32.mrb[0].mxu0
        %v1353 = vadd.f32 0.0, %v1352
        %v1354 = vpop.f32.mrb[0].mxu0
        %1355 = vmatprep.mubr.bf16.mxu0 0
        %1356 = vmatmul.mubr.bf16.gmra.mrb[0].mxu0 %v1291
        %v1357 = vpop.f32.mrb[0].mxu0
        %v1358 = vadd.f32 0.0, %v1357
        %v1359 = vpop.f32.mrb[0].mxu0
        %v1360 = vpop.f32.mrb[0].mxu0
        %v1361 = vadd.f32 0.0, %v1360
        %v1362 = vpop.f32.mrb[0].mxu0
        %1363 = vmatprep.mubr.bf16.mxu0 0
        %1364 = vmatmul.mubr.bf16.gmra.mrb[0].mxu0 %v1294
        %v1365 = vpop.f32.mrb[0].mxu0
        %v1366 = vadd.f32 0.0, %v1365
        %v1367 = vpop.f32.mrb[0].mxu0
        %v1368 = vpop.f32.mrb[0].mxu0
        %v1369 = vadd.f32 0.0, %v1368
        %v1370 = vpop.f32.mrb[0].mxu0
        %1371 = vmatprep.mubr.bf16.mxu0 0
        %1372 = vmatmul.mubr.bf16.gmra.mrb[0].mxu0 %v1297
        %v1373 = vpop.f32.mrb[0].mxu0
        %v1374 = vadd.f32 0.0, %v1373
        %v1375 = vpop.f32.mrb[0].mxu0
        %v1376 = vpop.f32.mrb[0].mxu0
        %v1377 = vadd.f32 0.0, %v1376
        %v1378 = vpop.f32.mrb[0].mxu0
        %1379 = vmatprep.mubr.bf16.mxu0 0
        %1380 = vmatmul.mubr.bf16.gmra.mrb[0].mxu0 %v1300
        %v1381 = vpop.f32.mrb[0].mxu0
        %v1382 = vadd.f32 0.0, %v1381
        %v1383 = vpop.f32.mrb[0].mxu0
        %v1384 = vpop.f32.mrb[0].mxu0
        %v1385 = vadd.f32 0.0, %v1384
        %v1386 = vpop.f32.mrb[0].mxu0
        %1387 = vmatprep.mubr.bf16.mxu0 0
        %1388 = vmatmul.mubr.bf16.gmra.mrb[0].mxu0 %v1303
        %v1389 = vpop.f32.mrb[0].mxu0
        %v1390 = vadd.f32 0.0, %v1389
        %v1391 = vpop.f32.mrb[0].mxu0
        %v1392 = vpop.f32.mrb[0].mxu0
        %v1393 = vadd.f32 0.0, %v1392
        %v1394 = vpop.f32.mrb[0].mxu0
        %1395 = vmatprep.mubr.bf16.mxu0 0
        %1396 = vmatmul.mubr.bf16.gmra.mrb[0].mxu0 %v1306
        %v1397 = vpop.f32.mrb[0].mxu0
        %v1398 = vadd.f32 0.0, %v1397
        %v1399 = vpop.f32.mrb[0].mxu0
        %v1400 = vpop.f32.mrb[0].mxu0
        %v1401 = vadd.f32 0.0, %v1400
        %v1402 = vpop.f32.mrb[0].mxu0
        %1403 = vmatprep.mubr.bf16.mxu0 0
        %1404 = vmatmul.mubr.bf16.gmra.mrb[0].mxu0 %v1309
        %v1405 = vpop.f32.mrb[0].mxu0
        %v1406 = vadd.f32 0.0, %v1405
        %v1407 = vpop.f32.mrb[0].mxu0
        %v1408 = vpop.f32.mrb[0].mxu0
        %v1409 = vadd.f32 0.0, %v1408
        %v1410 = vpop.f32.mrb[0].mxu0
        %1411 = vdwg.mxu0
        %s1412 = ssub.s32 %s1215, %s30
        %s1413 = smul.u32 %s1412, 128
        %v1414 = vstv %s1413
        %vm1415 = vcmp.ge.s32.totalorder %v1197, %v1414
        %vm1416 = vcmp.ge.s32.totalorder %v1198, %v1414
        %vm1417 = vcmp.ge.s32.totalorder %v1199, %v1414
        %vm1418 = vcmp.ge.s32.totalorder %v1200, %v1414
        %vm1419 = vcmp.ge.s32.totalorder %v1201, %v1414
        %vm1420 = vcmp.ge.s32.totalorder %v1202, %v1414
        %vm1421 = vcmp.ge.s32.totalorder %v1203, %v1414
        %vm1422 = vcmp.ge.s32.totalorder %v1204, %v1414
        %vm1423 = vcmp.ge.s32.totalorder %v1205, %v1414
        %vm1424 = vcmp.ge.s32.totalorder %v1206, %v1414
        %vm1425 = vcmp.ge.s32.totalorder %v1207, %v1414
        %vm1426 = vcmp.ge.s32.totalorder %v1208, %v1414
        %vm1427 = vcmp.ge.s32.totalorder %v1209, %v1414
        %vm1428 = vcmp.ge.s32.totalorder %v1210, %v1414
        %vm1429 = vcmp.ge.s32.totalorder %v1211, %v1414
        %vm1430 = vcmp.ge.s32.totalorder %v1212, %v1414
        %v1431 = vsel %vm1415, %v1350, -1e+30
        %v1432 = vsel %vm1416, %v1353, -1e+30
        %v1433 = vsel %vm1417, %v1358, -1e+30
        %v1434 = vsel %vm1418, %v1361, -1e+30
        %v1435 = vsel %vm1419, %v1366, -1e+30
        %v1436 = vsel %vm1420, %v1369, -1e+30
        %v1437 = vsel %vm1421, %v1374, -1e+30
        %v1438 = vsel %vm1422, %v1377, -1e+30
        %v1439 = vsel %vm1423, %v1382, -1e+30
        %v1440 = vsel %vm1424, %v1385, -1e+30
        %v1441 = vsel %vm1425, %v1390, -1e+30
        %v1442 = vsel %vm1426, %v1393, -1e+30
        %v1443 = vsel %vm1427, %v1398, -1e+30
        %v1444 = vsel %vm1428, %v1401, -1e+30
        %v1445 = vsel %vm1429, %v1406, -1e+30
        %v1446 = vsel %vm1430, %v1409, -1e+30
        %1447 = vmax.xlane.f32.xlu0 %v1431
        %v1448 = vpop.xlane.xlu0 %1447
        %1449 = vmax.xlane.f32.xlu0 %v1432
        %v1450 = vpop.xlane.xlu0 %1449
        %1451 = vmax.xlane.f32.xlu0 %v1433
        %v1452 = vpop.xlane.xlu0 %1451
        %1453 = vmax.xlane.f32.xlu0 %v1434
        %v1454 = vpop.xlane.xlu0 %1453
        %1455 = vmax.xlane.f32.xlu0 %v1435
        %v1456 = vpop.xlane.xlu0 %1455
        %1457 = vmax.xlane.f32.xlu0 %v1436
        %v1458 = vpop.xlane.xlu0 %1457
        %1459 = vmax.xlane.f32.xlu0 %v1437
        %v1460 = vpop.xlane.xlu0 %1459
        %1461 = vmax.xlane.f32.xlu0 %v1438
        %v1462 = vpop.xlane.xlu0 %1461
        %1463 = vmax.xlane.f32.xlu0 %v1439
        %v1464 = vpop.xlane.xlu0 %1463
        %1465 = vmax.xlane.f32.xlu0 %v1440
        %v1466 = vpop.xlane.xlu0 %1465
        %1467 = vmax.xlane.f32.xlu0 %v1441
        %v1468 = vpop.xlane.xlu0 %1467
        %1469 = vmax.xlane.f32.xlu0 %v1442
        %v1470 = vpop.xlane.xlu0 %1469
        %1471 = vmax.xlane.f32.xlu0 %v1443
        %v1472 = vpop.xlane.xlu0 %1471
        %1473 = vmax.xlane.f32.xlu0 %v1444
        %v1474 = vpop.xlane.xlu0 %1473
        %1475 = vmax.xlane.f32.xlu0 %v1445
        %v1476 = vpop.xlane.xlu0 %1475
        %1477 = vmax.xlane.f32.xlu0 %v1446
        %v1478 = vpop.xlane.xlu0 %1477
        %v1479 = vmax.f32 %v1220, %v1448
        %v1480 = vmax.f32 %v1221, %v1450
        %v1481 = vmax.f32 %v1222, %v1452
        %v1482 = vmax.f32 %v1223, %v1454
        %v1483 = vmax.f32 %v1224, %v1456
        %v1484 = vmax.f32 %v1225, %v1458
        %v1485 = vmax.f32 %v1226, %v1460
        %v1486 = vmax.f32 %v1227, %v1462
        %v1487 = vmax.f32 %v1228, %v1464
        %v1488 = vmax.f32 %v1229, %v1466
        %v1489 = vmax.f32 %v1230, %v1468
        %v1490 = vmax.f32 %v1231, %v1470
        %v1491 = vmax.f32 %v1232, %v1472
        %v1492 = vmax.f32 %v1233, %v1474
        %v1493 = vmax.f32 %v1234, %v1476
        %v1494 = vmax.f32 %v1235, %v1478
        %v1495 = vsub.f32 %v1220, %v1479
        %v1496 = vsub.f32 %v1221, %v1480
        %v1497 = vsub.f32 %v1222, %v1481
        %v1498 = vsub.f32 %v1223, %v1482
        %v1499 = vsub.f32 %v1224, %v1483
        %v1500 = vsub.f32 %v1225, %v1484
        %v1501 = vsub.f32 %v1226, %v1485
        %v1502 = vsub.f32 %v1227, %v1486
        %v1503 = vsub.f32 %v1228, %v1487
        %v1504 = vsub.f32 %v1229, %v1488
        %v1505 = vsub.f32 %v1230, %v1489
        %v1506 = vsub.f32 %v1231, %v1490
        %v1507 = vsub.f32 %v1232, %v1491
        %v1508 = vsub.f32 %v1233, %v1492
        %v1509 = vsub.f32 %v1234, %v1493
        %v1510 = vsub.f32 %v1235, %v1494
        %v1511 = vmul.f32 %v1495, 1.442695
        %v1512 = vpow.pop %v1511
        %v1513 = vmul.f32 %v1496, 1.442695
        %v1514 = vpow.pop %v1513
        %v1515 = vmul.f32 %v1497, 1.442695
        %v1516 = vpow.pop %v1515
        %v1517 = vmul.f32 %v1498, 1.442695
        %v1518 = vpow.pop %v1517
        %v1519 = vmul.f32 %v1499, 1.442695
        %v1520 = vpow.pop %v1519
        %v1521 = vmul.f32 %v1500, 1.442695
        %v1522 = vpow.pop %v1521
        %v1523 = vmul.f32 %v1501, 1.442695
        %v1524 = vpow.pop %v1523
        %v1525 = vmul.f32 %v1502, 1.442695
        %v1526 = vpow.pop %v1525
        %v1527 = vmul.f32 %v1503, 1.442695
        %v1528 = vpow.pop %v1527
        %v1529 = vmul.f32 %v1504, 1.442695
        %v1530 = vpow.pop %v1529
        %v1531 = vmul.f32 %v1505, 1.442695
        %v1532 = vpow.pop %v1531
        %v1533 = vmul.f32 %v1506, 1.442695
        %v1534 = vpow.pop %v1533
        %v1535 = vmul.f32 %v1507, 1.442695
        %v1536 = vpow.pop %v1535
        %v1537 = vmul.f32 %v1508, 1.442695
        %v1538 = vpow.pop %v1537
        %v1539 = vmul.f32 %v1509, 1.442695
        %v1540 = vpow.pop %v1539
        %v1541 = vmul.f32 %v1510, 1.442695
        %v1542 = vpow.pop %v1541
        %v1543 = vsub.f32 %v1431, %v1479
        %v1544 = vsub.f32 %v1432, %v1480
        %v1545 = vsub.f32 %v1433, %v1481
        %v1546 = vsub.f32 %v1434, %v1482
        %v1547 = vsub.f32 %v1435, %v1483
        %v1548 = vsub.f32 %v1436, %v1484
        %v1549 = vsub.f32 %v1437, %v1485
        %v1550 = vsub.f32 %v1438, %v1486
        %v1551 = vsub.f32 %v1439, %v1487
        %v1552 = vsub.f32 %v1440, %v1488
        %v1553 = vsub.f32 %v1441, %v1489
        %v1554 = vsub.f32 %v1442, %v1490
        %v1555 = vsub.f32 %v1443, %v1491
        %v1556 = vsub.f32 %v1444, %v1492
        %v1557 = vsub.f32 %v1445, %v1493
        %v1558 = vsub.f32 %v1446, %v1494
        %v1559 = vmul.f32 %v1543, 1.442695
        %v1560 = vpow.pop %v1559
        %v1561 = vmul.f32 %v1544, 1.442695
        %v1562 = vpow.pop %v1561
        %v1563 = vmul.f32 %v1545, 1.442695
        %v1564 = vpow.pop %v1563
        %v1565 = vmul.f32 %v1546, 1.442695
        %v1566 = vpow.pop %v1565
        %v1567 = vmul.f32 %v1547, 1.442695
        %v1568 = vpow.pop %v1567
        %v1569 = vmul.f32 %v1548, 1.442695
        %v1570 = vpow.pop %v1569
        %v1571 = vmul.f32 %v1549, 1.442695
        %v1572 = vpow.pop %v1571
        %v1573 = vmul.f32 %v1550, 1.442695
        %v1574 = vpow.pop %v1573
        %v1575 = vmul.f32 %v1551, 1.442695
        %v1576 = vpow.pop %v1575
        %v1577 = vmul.f32 %v1552, 1.442695
        %v1578 = vpow.pop %v1577
        %v1579 = vmul.f32 %v1553, 1.442695
        %v1580 = vpow.pop %v1579
        %v1581 = vmul.f32 %v1554, 1.442695
        %v1582 = vpow.pop %v1581
        %v1583 = vmul.f32 %v1555, 1.442695
        %v1584 = vpow.pop %v1583
        %v1585 = vmul.f32 %v1556, 1.442695
        %v1586 = vpow.pop %v1585
        %v1587 = vmul.f32 %v1557, 1.442695
        %v1588 = vpow.pop %v1587
        %v1589 = vmul.f32 %v1558, 1.442695
        %v1590 = vpow.pop %v1589
        %v1591 = vmul.f32 %v1512, %v1236
        %v1592 = vmul.f32 %v1514, %v1237
        %v1593 = vmul.f32 %v1516, %v1238
        %v1594 = vmul.f32 %v1518, %v1239
        %v1595 = vmul.f32 %v1520, %v1240
        %v1596 = vmul.f32 %v1522, %v1241
        %v1597 = vmul.f32 %v1524, %v1242
        %v1598 = vmul.f32 %v1526, %v1243
        %v1599 = vmul.f32 %v1528, %v1244
        %v1600 = vmul.f32 %v1530, %v1245
        %v1601 = vmul.f32 %v1532, %v1246
        %v1602 = vmul.f32 %v1534, %v1247
        %v1603 = vmul.f32 %v1536, %v1248
        %v1604 = vmul.f32 %v1538, %v1249
        %v1605 = vmul.f32 %v1540, %v1250
        %v1606 = vmul.f32 %v1542, %v1251
        %1607 = vadd.xlane.f32.xlu0 %v1560
        %v1608 = vpop.xlane.xlu0 %1607
        %1609 = vadd.xlane.f32.xlu0 %v1562
        %v1610 = vpop.xlane.xlu0 %1609
        %1611 = vadd.xlane.f32.xlu0 %v1564
        %v1612 = vpop.xlane.xlu0 %1611
        %1613 = vadd.xlane.f32.xlu0 %v1566
        %v1614 = vpop.xlane.xlu0 %1613
        %1615 = vadd.xlane.f32.xlu0 %v1568
        %v1616 = vpop.xlane.xlu0 %1615
        %1617 = vadd.xlane.f32.xlu0 %v1570
        %v1618 = vpop.xlane.xlu0 %1617
        %1619 = vadd.xlane.f32.xlu0 %v1572
        %v1620 = vpop.xlane.xlu0 %1619
        %1621 = vadd.xlane.f32.xlu0 %v1574
        %v1622 = vpop.xlane.xlu0 %1621
        %1623 = vadd.xlane.f32.xlu0 %v1576
        %v1624 = vpop.xlane.xlu0 %1623
        %1625 = vadd.xlane.f32.xlu0 %v1578
        %v1626 = vpop.xlane.xlu0 %1625
        %1627 = vadd.xlane.f32.xlu0 %v1580
        %v1628 = vpop.xlane.xlu0 %1627
        %1629 = vadd.xlane.f32.xlu0 %v1582
        %v1630 = vpop.xlane.xlu0 %1629
        %1631 = vadd.xlane.f32.xlu0 %v1584
        %v1632 = vpop.xlane.xlu0 %1631
        %1633 = vadd.xlane.f32.xlu0 %v1586
        %v1634 = vpop.xlane.xlu0 %1633
        %1635 = vadd.xlane.f32.xlu0 %v1588
        %v1636 = vpop.xlane.xlu0 %1635
        %1637 = vadd.xlane.f32.xlu0 %v1590
        %v1638 = vpop.xlane.xlu0 %1637
        %v1639 = vadd.f32 %v1591, %v1608
        %v1640 = vadd.f32 %v1592, %v1610
        %v1641 = vadd.f32 %v1593, %v1612
        %v1642 = vadd.f32 %v1594, %v1614
        %v1643 = vadd.f32 %v1595, %v1616
        %v1644 = vadd.f32 %v1596, %v1618
        %v1645 = vadd.f32 %v1597, %v1620
        %v1646 = vadd.f32 %v1598, %v1622
        %v1647 = vadd.f32 %v1599, %v1624
        %v1648 = vadd.f32 %v1600, %v1626
        %v1649 = vadd.f32 %v1601, %v1628
        %v1650 = vadd.f32 %v1602, %v1630
        %v1651 = vadd.f32 %v1603, %v1632
        %v1652 = vadd.f32 %v1604, %v1634
        %v1653 = vadd.f32 %v1605, %v1636
        %v1654 = vadd.f32 %v1606, %v1638
        %v1655 = vmul.f32 %v1512, %v1252
        %v1656 = vmul.f32 %v1514, %v1253
        %v1657 = vmul.f32 %v1516, %v1254
        %v1658 = vmul.f32 %v1518, %v1255
        %v1659 = vmul.f32 %v1520, %v1256
        %v1660 = vmul.f32 %v1522, %v1257
        %v1661 = vmul.f32 %v1524, %v1258
        %v1662 = vmul.f32 %v1526, %v1259
        %v1663 = vmul.f32 %v1528, %v1260
        %v1664 = vmul.f32 %v1530, %v1261
        %v1665 = vmul.f32 %v1532, %v1262
        %v1666 = vmul.f32 %v1534, %v1263
        %v1667 = vmul.f32 %v1536, %v1264
        %v1668 = vmul.f32 %v1538, %v1265
        %v1669 = vmul.f32 %v1540, %v1266
        %v1670 = vmul.f32 %v1542, %v1267
        %v1671 = vpack.c.bf16 %v1562, %v1560
        %v1672 = vpack.c.bf16 %v1566, %v1564
        %v1673 = vpack.c.bf16 %v1570, %v1568
        %v1674 = vpack.c.bf16 %v1574, %v1572
        %v1675 = vpack.c.bf16 %v1578, %v1576
        %v1676 = vpack.c.bf16 %v1582, %v1580
        %v1677 = vpack.c.bf16 %v1586, %v1584
        %v1678 = vpack.c.bf16 %v1590, %v1588
        %1679 = vmatprep.subr.bf16.mxu0 0
        %1680 = vmatpush1.bf16.msra.mxu0 %v1278
        %1681 = vmatprep.subr.bf16.mxu0 0
        %1682 = vmatpush1.bf16.msra.mxu0 %v1279
        %1683 = vmatprep.subr.bf16.mxu0 0
        %1684 = vmatpush1.bf16.msra.mxu0 %v1280
        %1685 = vmatprep.subr.bf16.mxu0 0
        %1686 = vmatpush1.bf16.msra.mxu0 %v1281
        %1687 = vmatprep.subr.bf16.mxu0 0
        %1688 = vmatpush1.bf16.msra.mxu0 %v1282
        %1689 = vmatprep.subr.bf16.mxu0 0
        %1690 = vmatpush1.bf16.msra.mxu0 %v1283
        %1691 = vmatprep.subr.bf16.mxu0 0
        %1692 = vmatpush1.bf16.msra.mxu0 %v1284
        %1693 = vmatprep.subr.bf16.mxu0 0
        %1694 = vmatpush1.bf16.msra.mxu0 %v1285
        %1695 = vmatprep.subr.bf16.mxu0 0
        %1696 = vmatpush1.bf16.msra.mxu0 0
        %1697 = vmatprep.subr.bf16.mxu0 0
        %1698 = vmatpush1.bf16.msra.mxu0 0
        %1699 = vmatprep.subr.bf16.mxu0 0
        %1700 = vmatpush1.bf16.msra.mxu0 0
        %1701 = vmatprep.subr.bf16.mxu0 0
        %1702 = vmatpush1.bf16.msra.mxu0 0
        %1703 = vmatprep.subr.bf16.mxu0 0
        %1704 = vmatpush1.bf16.msra.mxu0 0
        %1705 = vmatprep.subr.bf16.mxu0 0
        %1706 = vmatpush1.bf16.msra.mxu0 0
        %1707 = vmatprep.subr.bf16.mxu0 0
        %1708 = vmatpush1.bf16.msra.mxu0 0
        %1709 = vmatprep.subr.bf16.mxu0 0
        %1710 = vmatpush1.bf16.msra.mxu0 0
        %1711 = vmatprep.mubr.bf16.mxu0 0
        %1712 = vmatmul.mubr.bf16.gmra.mrb[0].mxu0 %v1671
        %v1713 = vpop.f32.mrb[0].mxu0
        %v1714 = vadd.f32 0.0, %v1713
        %v1715 = vpop.f32.mrb[0].mxu0
        %v1716 = vpop.f32.mrb[0].mxu0
        %v1717 = vadd.f32 0.0, %v1716
        %v1718 = vpop.f32.mrb[0].mxu0
        %1719 = vmatprep.mubr.bf16.mxu0 0
        %1720 = vmatmul.mubr.bf16.gmra.mrb[0].mxu0 %v1672
        %v1721 = vpop.f32.mrb[0].mxu0
        %v1722 = vadd.f32 0.0, %v1721
        %v1723 = vpop.f32.mrb[0].mxu0
        %v1724 = vpop.f32.mrb[0].mxu0
        %v1725 = vadd.f32 0.0, %v1724
        %v1726 = vpop.f32.mrb[0].mxu0
        %1727 = vmatprep.mubr.bf16.mxu0 0
        %1728 = vmatmul.mubr.bf16.gmra.mrb[0].mxu0 %v1673
        %v1729 = vpop.f32.mrb[0].mxu0
        %v1730 = vadd.f32 0.0, %v1729
        %v1731 = vpop.f32.mrb[0].mxu0
        %v1732 = vpop.f32.mrb[0].mxu0
        %v1733 = vadd.f32 0.0, %v1732
        %v1734 = vpop.f32.mrb[0].mxu0
        %1735 = vmatprep.mubr.bf16.mxu0 0
        %1736 = vmatmul.mubr.bf16.gmra.mrb[0].mxu0 %v1674
        %v1737 = vpop.f32.mrb[0].mxu0
        %v1738 = vadd.f32 0.0, %v1737
        %v1739 = vpop.f32.mrb[0].mxu0
        %v1740 = vpop.f32.mrb[0].mxu0
        %v1741 = vadd.f32 0.0, %v1740
        %v1742 = vpop.f32.mrb[0].mxu0
        %1743 = vmatprep.mubr.bf16.mxu0 0
        %1744 = vmatmul.mubr.bf16.gmra.mrb[0].mxu0 %v1675
        %v1745 = vpop.f32.mrb[0].mxu0
        %v1746 = vadd.f32 0.0, %v1745
        %v1747 = vpop.f32.mrb[0].mxu0
        %v1748 = vpop.f32.mrb[0].mxu0
        %v1749 = vadd.f32 0.0, %v1748
        %v1750 = vpop.f32.mrb[0].mxu0
        %1751 = vmatprep.mubr.bf16.mxu0 0
        %1752 = vmatmul.mubr.bf16.gmra.mrb[0].mxu0 %v1676
        %v1753 = vpop.f32.mrb[0].mxu0
        %v1754 = vadd.f32 0.0, %v1753
        %v1755 = vpop.f32.mrb[0].mxu0
        %v1756 = vpop.f32.mrb[0].mxu0
        %v1757 = vadd.f32 0.0, %v1756
        %v1758 = vpop.f32.mrb[0].mxu0
        %1759 = vmatprep.mubr.bf16.mxu0 0
        %1760 = vmatmul.mubr.bf16.gmra.mrb[0].mxu0 %v1677
        %v1761 = vpop.f32.mrb[0].mxu0
        %v1762 = vadd.f32 0.0, %v1761
        %v1763 = vpop.f32.mrb[0].mxu0
        %v1764 = vpop.f32.mrb[0].mxu0
        %v1765 = vadd.f32 0.0, %v1764
        %v1766 = vpop.f32.mrb[0].mxu0
        %1767 = vmatprep.mubr.bf16.mxu0 0
        %1768 = vmatmul.mubr.bf16.gmra.mrb[0].mxu0 %v1678
        %v1769 = vpop.f32.mrb[0].mxu0
        %v1770 = vadd.f32 0.0, %v1769
        %v1771 = vpop.f32.mrb[0].mxu0
        %v1772 = vpop.f32.mrb[0].mxu0
        %v1773 = vadd.f32 0.0, %v1772
        %v1774 = vpop.f32.mrb[0].mxu0
        %1775 = vdwg.mxu0
        %v1776 = vadd.f32 %v1655, %v1714
        %v1777 = vadd.f32 %v1656, %v1717
        %v1778 = vadd.f32 %v1657, %v1722
        %v1779 = vadd.f32 %v1658, %v1725
        %v1780 = vadd.f32 %v1659, %v1730
        %v1781 = vadd.f32 %v1660, %v1733
        %v1782 = vadd.f32 %v1661, %v1738
        %v1783 = vadd.f32 %v1662, %v1741
        %v1784 = vadd.f32 %v1663, %v1746
        %v1785 = vadd.f32 %v1664, %v1749
        %v1786 = vadd.f32 %v1665, %v1754
        %v1787 = vadd.f32 %v1666, %v1757
        %v1788 = vadd.f32 %v1667, %v1762
        %v1789 = vadd.f32 %v1668, %v1765
        %v1790 = vadd.f32 %v1669, %v1770
        %v1791 = vadd.f32 %v1670, %v1773
      $region81: #{tpu_custom_call.1} parent=75 // loop_footer
        %s1217 = sadd.s32 %s1215, 1
      $region82: #{tpu_custom_call.1} parent=75 // loop_footer_branch
        %1214 = sbr.rel target = $region78
      $region83: #{tpu_custom_call.1} parent=75 // loop_exit
        _
      %v1792 = vrcp.pop %v1236
      %v1793 = vrcp.pop %v1237
      %v1794 = vrcp.pop %v1238
      %v1795 = vrcp.pop %v1239
      %v1796 = vrcp.pop %v1240
      %v1797 = vrcp.pop %v1241
      %v1798 = vrcp.pop %v1242
      %v1799 = vrcp.pop %v1243
      %v1800 = vrcp.pop %v1244
      %v1801 = vrcp.pop %v1245
      %v1802 = vrcp.pop %v1246
      %v1803 = vrcp.pop %v1247
      %v1804 = vrcp.pop %v1248
      %v1805 = vrcp.pop %v1249
      %v1806 = vrcp.pop %v1250
      %v1807 = vrcp.pop %v1251
      %v1808 = vmul.f32 %v1252, %v1792
      %v1809 = vmul.f32 %v1253, %v1793
      %v1810 = vmul.f32 %v1254, %v1794
      %v1811 = vmul.f32 %v1255, %v1795
      %v1812 = vmul.f32 %v1256, %v1796
      %v1813 = vmul.f32 %v1257, %v1797
      %v1814 = vmul.f32 %v1258, %v1798
      %v1815 = vmul.f32 %v1259, %v1799
      %v1816 = vmul.f32 %v1260, %v1800
      %v1817 = vmul.f32 %v1261, %v1801
      %v1818 = vmul.f32 %v1262, %v1802
      %v1819 = vmul.f32 %v1263, %v1803
      %v1820 = vmul.f32 %v1264, %v1804
      %v1821 = vmul.f32 %v1265, %v1805
      %v1822 = vmul.f32 %v1266, %v1806
      %v1823 = vmul.f32 %v1267, %v1807
      // While loop
      $region84: #{tpu_custom_call.1} parent=75 // loop_pre_header
        _
      $region85: #{tpu_custom_call.1} parent=75 // loop_header
        %s1825 = sphi 0, %s1827
        %p1826 = scmp.ge.s32.totalorder %s1825, %s1213
        %v1830 = vphi -1e+30, %v2115
        %v1831 = vphi -1e+30, %v2116
        %v1832 = vphi -1e+30, %v2117
        %v1833 = vphi -1e+30, %v2118
        %v1834 = vphi -1e+30, %v2119
        %v1835 = vphi -1e+30, %v2120
        %v1836 = vphi -1e+30, %v2121
        %v1837 = vphi -1e+30, %v2122
        %v1838 = vphi -1e+30, %v2123
        %v1839 = vphi -1e+30, %v2124
        %v1840 = vphi -1e+30, %v2125
        %v1841 = vphi -1e+30, %v2126
        %v1842 = vphi -1e+30, %v2127
        %v1843 = vphi -1e+30, %v2128
        %v1844 = vphi -1e+30, %v2129
        %v1845 = vphi -1e+30, %v2130
        %v1846 = vphi 0.0, %v2275
        %v1847 = vphi 0.0, %v2276
        %v1848 = vphi 0.0, %v2277
        %v1849 = vphi 0.0, %v2278
        %v1850 = vphi 0.0, %v2279
        %v1851 = vphi 0.0, %v2280
        %v1852 = vphi 0.0, %v2281
        %v1853 = vphi 0.0, %v2282
        %v1854 = vphi 0.0, %v2283
        %v1855 = vphi 0.0, %v2284
        %v1856 = vphi 0.0, %v2285
        %v1857 = vphi 0.0, %v2286
        %v1858 = vphi 0.0, %v2287
        %v1859 = vphi 0.0, %v2288
        %v1860 = vphi 0.0, %v2289
        %v1861 = vphi 0.0, %v2290
        %v1862 = vphi 0.0, %v2444
        %v1863 = vphi 0.0, %v2445
        %v1864 = vphi 0.0, %v2446
        %v1865 = vphi 0.0, %v2447
        %v1866 = vphi 0.0, %v2448
        %v1867 = vphi 0.0, %v2449
        %v1868 = vphi 0.0, %v2450
        %v1869 = vphi 0.0, %v2451
        %v1870 = vphi 0.0, %v2452
        %v1871 = vphi 0.0, %v2453
        %v1872 = vphi 0.0, %v2454
        %v1873 = vphi 0.0, %v2455
        %v1874 = vphi 0.0, %v2456
        %v1875 = vphi 0.0, %v2457
        %v1876 = vphi 0.0, %v2458
        %v1877 = vphi 0.0, %v2459
      $region86: #{tpu_custom_call.1} parent=75 // loop_header_branch
        %1829 = sbr.rel (%p1826) target = $region90
      $region87: #{tpu_custom_call.1} parent=75 // loop_body
        %s1878 = smul.u32 %s1825, 128
        %s1879 = sshra.s32 %s1878, 7
        %s1880 = sand.u32 %s1878, 127
        %s1881 = smul.addr %s1879, 8
        %s1882 = scalar_lea.vmem [#allocation2], %s1881
        %v1883 = vld [vmem:[%s1882] sm:$0xf0]
        %s1884 = sshra.s32 %s1878, 4
        %s1885 = sand.u32 %s1878, 15
        %s1886 = smul.addr %s1884, 8
        %s1887 = scalar_lea.vmem [#allocation3], %s1886
        %v1888 = vld [vmem:[%s1887] sm:$0xff]
        %v1889 = vld [vmem:[%s1887 + $0x8] sm:$0xff]
        %v1890 = vld [vmem:[%s1887 + $0x10] sm:$0xff]
        %v1891 = vld [vmem:[%s1887 + $0x18] sm:$0xff]
        %v1892 = vld [vmem:[%s1887 + $0x20] sm:$0xff]
        %v1893 = vld [vmem:[%s1887 + $0x28] sm:$0xff]
        %v1894 = vld [vmem:[%s1887 + $0x30] sm:$0xff]
        %v1895 = vld [vmem:[%s1887 + $0x38] sm:$0xff]
        %1904 = vrot.lane.b32.xlu0 %v959, 120
        %v1905 = vpop.permute.xlu0 %1904
        %1906 = vrot.lane.b32.xlu0 %v960, 120
        %v1907 = vpop.permute.xlu0 %1906
        %1908 = vrot.lane.b32.xlu0 %v961, 120
        %v1909 = vpop.permute.xlu0 %1908
        %1910 = vrot.lane.b32.xlu0 %v962, 120
        %v1911 = vpop.permute.xlu0 %1910
        %1912 = vrot.lane.b32.xlu0 %v963, 120
        %v1913 = vpop.permute.xlu0 %1912
        %1914 = vrot.lane.b32.xlu0 %v964, 120
        %v1915 = vpop.permute.xlu0 %1914
        %1916 = vrot.lane.b32.xlu0 %v965, 120
        %v1917 = vpop.permute.xlu0 %1916
        %1918 = vrot.lane.b32.xlu0 %v966, 120
        %v1919 = vpop.permute.xlu0 %1918
        %v1921 = vrot.slane %v1883, 4
        %vm1922 = vcmask 64512
        %v1924 = vsel %vm1922, %v1905, 0
        %v1927 = vsel %vm1922, %v1907, 0
        %v1930 = vsel %vm1922, %v1909, 0
        %v1933 = vsel %vm1922, %v1911, 0
        %v1936 = vsel %vm1922, %v1913, 0
        %v1939 = vsel %vm1922, %v1915, 0
        %v1942 = vsel %vm1922, %v1917, 0
        %v1945 = vsel %vm1922, %v1919, 0
        %vm1947 = vcmask 1043456
        %v1949 = vsel %vm1947, %v1921, 0
        %1951 = vmatprep.subr.bf16.mxu0 0
        %1952 = vmatpush1.bf16.msra.mxu0 %v1949
        %1953 = vmatprep.subr.bf16.mxu0 0
        %1954 = vmatpush1.bf16.msra.mxu0 0
        %1955 = vmatprep.subr.bf16.mxu0 0
        %1956 = vmatpush1.bf16.msra.mxu0 0
        %1957 = vmatprep.subr.bf16.mxu0 0
        %1958 = vmatpush1.bf16.msra.mxu0 0
        %1959 = vmatprep.subr.bf16.mxu0 0
        %1960 = vmatpush1.bf16.msra.mxu0 0
        %1961 = vmatprep.subr.bf16.mxu0 0
        %1962 = vmatpush1.bf16.msra.mxu0 0
        %1963 = vmatprep.subr.bf16.mxu0 0
        %1964 = vmatpush1.bf16.msra.mxu0 0
        %1965 = vmatprep.subr.bf16.mxu0 0
        %1966 = vmatpush1.bf16.msra.mxu0 0
        %1967 = vmatprep.subr.bf16.mxu0 0
        %1968 = vmatpush1.bf16.msra.mxu0 0
        %1969 = vmatprep.subr.bf16.mxu0 0
        %1970 = vmatpush1.bf16.msra.mxu0 0
        %1971 = vmatprep.subr.bf16.mxu0 0
        %1972 = vmatpush1.bf16.msra.mxu0 0
        %1973 = vmatprep.subr.bf16.mxu0 0
        %1974 = vmatpush1.bf16.msra.mxu0 0
        %1975 = vmatprep.subr.bf16.mxu0 0
        %1976 = vmatpush1.bf16.msra.mxu0 0
        %1977 = vmatprep.subr.bf16.mxu0 0
        %1978 = vmatpush1.bf16.msra.mxu0 0
        %1979 = vmatprep.subr.bf16.mxu0 0
        %1980 = vmatpush1.bf16.msra.mxu0 0
        %1981 = vmatprep.subr.bf16.mxu0 0
        %1982 = vmatpush1.bf16.msra.mxu0 0
        %1983 = vmatprep.mubr.bf16.mxu0 0
        %1984 = vmatmul.mubr.bf16.gmra.mrb[0].mxu0 %v1924
        %v1985 = vpop.f32.mrb[0].mxu0
        %v1986 = vadd.f32 0.0, %v1985
        %v1987 = vpop.f32.mrb[0].mxu0
        %v1988 = vpop.f32.mrb[0].mxu0
        %v1989 = vadd.f32 0.0, %v1988
        %v1990 = vpop.f32.mrb[0].mxu0
        %1991 = vmatprep.mubr.bf16.mxu0 0
        %1992 = vmatmul.mubr.bf16.gmra.mrb[0].mxu0 %v1927
        %v1993 = vpop.f32.mrb[0].mxu0
        %v1994 = vadd.f32 0.0, %v1993
        %v1995 = vpop.f32.mrb[0].mxu0
        %v1996 = vpop.f32.mrb[0].mxu0
        %v1997 = vadd.f32 0.0, %v1996
        %v1998 = vpop.f32.mrb[0].mxu0
        %1999 = vmatprep.mubr.bf16.mxu0 0
        %2000 = vmatmul.mubr.bf16.gmra.mrb[0].mxu0 %v1930
        %v2001 = vpop.f32.mrb[0].mxu0
        %v2002 = vadd.f32 0.0, %v2001
        %v2003 = vpop.f32.mrb[0].mxu0
        %v2004 = vpop.f32.mrb[0].mxu0
        %v2005 = vadd.f32 0.0, %v2004
        %v2006 = vpop.f32.mrb[0].mxu0
        %2007 = vmatprep.mubr.bf16.mxu0 0
        %2008 = vmatmul.mubr.bf16.gmra.mrb[0].mxu0 %v1933
        %v2009 = vpop.f32.mrb[0].mxu0
        %v2010 = vadd.f32 0.0, %v2009
        %v2011 = vpop.f32.mrb[0].mxu0
        %v2012 = vpop.f32.mrb[0].mxu0
        %v2013 = vadd.f32 0.0, %v2012
        %v2014 = vpop.f32.mrb[0].mxu0
        %2015 = vmatprep.mubr.bf16.mxu0 0
        %2016 = vmatmul.mubr.bf16.gmra.mrb[0].mxu0 %v1936
        %v2017 = vpop.f32.mrb[0].mxu0
        %v2018 = vadd.f32 0.0, %v2017
        %v2019 = vpop.f32.mrb[0].mxu0
        %v2020 = vpop.f32.mrb[0].mxu0
        %v2021 = vadd.f32 0.0, %v2020
        %v2022 = vpop.f32.mrb[0].mxu0
        %2023 = vmatprep.mubr.bf16.mxu0 0
        %2024 = vmatmul.mubr.bf16.gmra.mrb[0].mxu0 %v1939
        %v2025 = vpop.f32.mrb[0].mxu0
        %v2026 = vadd.f32 0.0, %v2025
        %v2027 = vpop.f32.mrb[0].mxu0
        %v2028 = vpop.f32.mrb[0].mxu0
        %v2029 = vadd.f32 0.0, %v2028
        %v2030 = vpop.f32.mrb[0].mxu0
        %2031 = vmatprep.mubr.bf16.mxu0 0
        %2032 = vmatmul.mubr.bf16.gmra.mrb[0].mxu0 %v1942
        %v2033 = vpop.f32.mrb[0].mxu0
        %v2034 = vadd.f32 0.0, %v2033
        %v2035 = vpop.f32.mrb[0].mxu0
        %v2036 = vpop.f32.mrb[0].mxu0
        %v2037 = vadd.f32 0.0, %v2036
        %v2038 = vpop.f32.mrb[0].mxu0
        %2039 = vmatprep.mubr.bf16.mxu0 0
        %2040 = vmatmul.mubr.bf16.gmra.mrb[0].mxu0 %v1945
        %v2041 = vpop.f32.mrb[0].mxu0
        %v2042 = vadd.f32 0.0, %v2041
        %v2043 = vpop.f32.mrb[0].mxu0
        %v2044 = vpop.f32.mrb[0].mxu0
        %v2045 = vadd.f32 0.0, %v2044
        %v2046 = vpop.f32.mrb[0].mxu0
        %2047 = vdwg.mxu0
        %s2048 = ssub.s32 %s1825, %s30
        %s2049 = smul.u32 %s2048, 128
        %v2050 = vstv %s2049
        %vm2051 = vcmp.ge.s32.totalorder %v1197, %v2050
        %vm2052 = vcmp.ge.s32.totalorder %v1198, %v2050
        %vm2053 = vcmp.ge.s32.totalorder %v1199, %v2050
        %vm2054 = vcmp.ge.s32.totalorder %v1200, %v2050
        %vm2055 = vcmp.ge.s32.totalorder %v1201, %v2050
        %vm2056 = vcmp.ge.s32.totalorder %v1202, %v2050
        %vm2057 = vcmp.ge.s32.totalorder %v1203, %v2050
        %vm2058 = vcmp.ge.s32.totalorder %v1204, %v2050
        %vm2059 = vcmp.ge.s32.totalorder %v1205, %v2050
        %vm2060 = vcmp.ge.s32.totalorder %v1206, %v2050
        %vm2061 = vcmp.ge.s32.totalorder %v1207, %v2050
        %vm2062 = vcmp.ge.s32.totalorder %v1208, %v2050
        %vm2063 = vcmp.ge.s32.totalorder %v1209, %v2050
        %vm2064 = vcmp.ge.s32.totalorder %v1210, %v2050
        %vm2065 = vcmp.ge.s32.totalorder %v1211, %v2050
        %vm2066 = vcmp.ge.s32.totalorder %v1212, %v2050
        %v2067 = vsel %vm2051, %v1986, -1e+30
        %v2068 = vsel %vm2052, %v1989, -1e+30
        %v2069 = vsel %vm2053, %v1994, -1e+30
        %v2070 = vsel %vm2054, %v1997, -1e+30
        %v2071 = vsel %vm2055, %v2002, -1e+30
        %v2072 = vsel %vm2056, %v2005, -1e+30
        %v2073 = vsel %vm2057, %v2010, -1e+30
        %v2074 = vsel %vm2058, %v2013, -1e+30
        %v2075 = vsel %vm2059, %v2018, -1e+30
        %v2076 = vsel %vm2060, %v2021, -1e+30
        %v2077 = vsel %vm2061, %v2026, -1e+30
        %v2078 = vsel %vm2062, %v2029, -1e+30
        %v2079 = vsel %vm2063, %v2034, -1e+30
        %v2080 = vsel %vm2064, %v2037, -1e+30
        %v2081 = vsel %vm2065, %v2042, -1e+30
        %v2082 = vsel %vm2066, %v2045, -1e+30
        %2083 = vmax.xlane.f32.xlu0 %v2067
        %v2084 = vpop.xlane.xlu0 %2083
        %2085 = vmax.xlane.f32.xlu0 %v2068
        %v2086 = vpop.xlane.xlu0 %2085
        %2087 = vmax.xlane.f32.xlu0 %v2069
        %v2088 = vpop.xlane.xlu0 %2087
        %2089 = vmax.xlane.f32.xlu0 %v2070
        %v2090 = vpop.xlane.xlu0 %2089
        %2091 = vmax.xlane.f32.xlu0 %v2071
        %v2092 = vpop.xlane.xlu0 %2091
        %2093 = vmax.xlane.f32.xlu0 %v2072
        %v2094 = vpop.xlane.xlu0 %2093
        %2095 = vmax.xlane.f32.xlu0 %v2073
        %v2096 = vpop.xlane.xlu0 %2095
        %2097 = vmax.xlane.f32.xlu0 %v2074
        %v2098 = vpop.xlane.xlu0 %2097
        %2099 = vmax.xlane.f32.xlu0 %v2075
        %v2100 = vpop.xlane.xlu0 %2099
        %2101 = vmax.xlane.f32.xlu0 %v2076
        %v2102 = vpop.xlane.xlu0 %2101
        %2103 = vmax.xlane.f32.xlu0 %v2077
        %v2104 = vpop.xlane.xlu0 %2103
        %2105 = vmax.xlane.f32.xlu0 %v2078
        %v2106 = vpop.xlane.xlu0 %2105
        %2107 = vmax.xlane.f32.xlu0 %v2079
        %v2108 = vpop.xlane.xlu0 %2107
        %2109 = vmax.xlane.f32.xlu0 %v2080
        %v2110 = vpop.xlane.xlu0 %2109
        %2111 = vmax.xlane.f32.xlu0 %v2081
        %v2112 = vpop.xlane.xlu0 %2111
        %2113 = vmax.xlane.f32.xlu0 %v2082
        %v2114 = vpop.xlane.xlu0 %2113
        %v2115 = vmax.f32 %v1830, %v2084
        %v2116 = vmax.f32 %v1831, %v2086
        %v2117 = vmax.f32 %v1832, %v2088
        %v2118 = vmax.f32 %v1833, %v2090
        %v2119 = vmax.f32 %v1834, %v2092
        %v2120 = vmax.f32 %v1835, %v2094
        %v2121 = vmax.f32 %v1836, %v2096
        %v2122 = vmax.f32 %v1837, %v2098
        %v2123 = vmax.f32 %v1838, %v2100
        %v2124 = vmax.f32 %v1839, %v2102
        %v2125 = vmax.f32 %v1840, %v2104
        %v2126 = vmax.f32 %v1841, %v2106
        %v2127 = vmax.f32 %v1842, %v2108
        %v2128 = vmax.f32 %v1843, %v2110
        %v2129 = vmax.f32 %v1844, %v2112
        %v2130 = vmax.f32 %v1845, %v2114
        %v2131 = vsub.f32 %v1830, %v2115
        %v2132 = vsub.f32 %v1831, %v2116
        %v2133 = vsub.f32 %v1832, %v2117
        %v2134 = vsub.f32 %v1833, %v2118
        %v2135 = vsub.f32 %v1834, %v2119
        %v2136 = vsub.f32 %v1835, %v2120
        %v2137 = vsub.f32 %v1836, %v2121
        %v2138 = vsub.f32 %v1837, %v2122
        %v2139 = vsub.f32 %v1838, %v2123
        %v2140 = vsub.f32 %v1839, %v2124
        %v2141 = vsub.f32 %v1840, %v2125
        %v2142 = vsub.f32 %v1841, %v2126
        %v2143 = vsub.f32 %v1842, %v2127
        %v2144 = vsub.f32 %v1843, %v2128
        %v2145 = vsub.f32 %v1844, %v2129
        %v2146 = vsub.f32 %v1845, %v2130
        %v2147 = vmul.f32 %v2131, 1.442695
        %v2148 = vpow.pop %v2147
        %v2149 = vmul.f32 %v2132, 1.442695
        %v2150 = vpow.pop %v2149
        %v2151 = vmul.f32 %v2133, 1.442695
        %v2152 = vpow.pop %v2151
        %v2153 = vmul.f32 %v2134, 1.442695
        %v2154 = vpow.pop %v2153
        %v2155 = vmul.f32 %v2135, 1.442695
        %v2156 = vpow.pop %v2155
        %v2157 = vmul.f32 %v2136, 1.442695
        %v2158 = vpow.pop %v2157
        %v2159 = vmul.f32 %v2137, 1.442695
        %v2160 = vpow.pop %v2159
        %v2161 = vmul.f32 %v2138, 1.442695
        %v2162 = vpow.pop %v2161
        %v2163 = vmul.f32 %v2139, 1.442695
        %v2164 = vpow.pop %v2163
        %v2165 = vmul.f32 %v2140, 1.442695
        %v2166 = vpow.pop %v2165
        %v2167 = vmul.f32 %v2141, 1.442695
        %v2168 = vpow.pop %v2167
        %v2169 = vmul.f32 %v2142, 1.442695
        %v2170 = vpow.pop %v2169
        %v2171 = vmul.f32 %v2143, 1.442695
        %v2172 = vpow.pop %v2171
        %v2173 = vmul.f32 %v2144, 1.442695
        %v2174 = vpow.pop %v2173
        %v2175 = vmul.f32 %v2145, 1.442695
        %v2176 = vpow.pop %v2175
        %v2177 = vmul.f32 %v2146, 1.442695
        %v2178 = vpow.pop %v2177
        %v2179 = vsub.f32 %v2067, %v2115
        %v2180 = vsub.f32 %v2068, %v2116
        %v2181 = vsub.f32 %v2069, %v2117
        %v2182 = vsub.f32 %v2070, %v2118
        %v2183 = vsub.f32 %v2071, %v2119
        %v2184 = vsub.f32 %v2072, %v2120
        %v2185 = vsub.f32 %v2073, %v2121
        %v2186 = vsub.f32 %v2074, %v2122
        %v2187 = vsub.f32 %v2075, %v2123
        %v2188 = vsub.f32 %v2076, %v2124
        %v2189 = vsub.f32 %v2077, %v2125
        %v2190 = vsub.f32 %v2078, %v2126
        %v2191 = vsub.f32 %v2079, %v2127
        %v2192 = vsub.f32 %v2080, %v2128
        %v2193 = vsub.f32 %v2081, %v2129
        %v2194 = vsub.f32 %v2082, %v2130
        %v2195 = vmul.f32 %v2179, 1.442695
        %v2196 = vpow.pop %v2195
        %v2197 = vmul.f32 %v2180, 1.442695
        %v2198 = vpow.pop %v2197
        %v2199 = vmul.f32 %v2181, 1.442695
        %v2200 = vpow.pop %v2199
        %v2201 = vmul.f32 %v2182, 1.442695
        %v2202 = vpow.pop %v2201
        %v2203 = vmul.f32 %v2183, 1.442695
        %v2204 = vpow.pop %v2203
        %v2205 = vmul.f32 %v2184, 1.442695
        %v2206 = vpow.pop %v2205
        %v2207 = vmul.f32 %v2185, 1.442695
        %v2208 = vpow.pop %v2207
        %v2209 = vmul.f32 %v2186, 1.442695
        %v2210 = vpow.pop %v2209
        %v2211 = vmul.f32 %v2187, 1.442695
        %v2212 = vpow.pop %v2211
        %v2213 = vmul.f32 %v2188, 1.442695
        %v2214 = vpow.pop %v2213
        %v2215 = vmul.f32 %v2189, 1.442695
        %v2216 = vpow.pop %v2215
        %v2217 = vmul.f32 %v2190, 1.442695
        %v2218 = vpow.pop %v2217
        %v2219 = vmul.f32 %v2191, 1.442695
        %v2220 = vpow.pop %v2219
        %v2221 = vmul.f32 %v2192, 1.442695
        %v2222 = vpow.pop %v2221
        %v2223 = vmul.f32 %v2193, 1.442695
        %v2224 = vpow.pop %v2223
        %v2225 = vmul.f32 %v2194, 1.442695
        %v2226 = vpow.pop %v2225
        %v2227 = vmul.f32 %v2148, %v1846
        %v2228 = vmul.f32 %v2150, %v1847
        %v2229 = vmul.f32 %v2152, %v1848
        %v2230 = vmul.f32 %v2154, %v1849
        %v2231 = vmul.f32 %v2156, %v1850
        %v2232 = vmul.f32 %v2158, %v1851
        %v2233 = vmul.f32 %v2160, %v1852
        %v2234 = vmul.f32 %v2162, %v1853
        %v2235 = vmul.f32 %v2164, %v1854
        %v2236 = vmul.f32 %v2166, %v1855
        %v2237 = vmul.f32 %v2168, %v1856
        %v2238 = vmul.f32 %v2170, %v1857
        %v2239 = vmul.f32 %v2172, %v1858
        %v2240 = vmul.f32 %v2174, %v1859
        %v2241 = vmul.f32 %v2176, %v1860
        %v2242 = vmul.f32 %v2178, %v1861
        %2243 = vadd.xlane.f32.xlu0 %v2196
        %v2244 = vpop.xlane.xlu0 %2243
        %2245 = vadd.xlane.f32.xlu0 %v2198
        %v2246 = vpop.xlane.xlu0 %2245
        %2247 = vadd.xlane.f32.xlu0 %v2200
        %v2248 = vpop.xlane.xlu0 %2247
        %2249 = vadd.xlane.f32.xlu0 %v2202
        %v2250 = vpop.xlane.xlu0 %2249
        %2251 = vadd.xlane.f32.xlu0 %v2204
        %v2252 = vpop.xlane.xlu0 %2251
        %2253 = vadd.xlane.f32.xlu0 %v2206
        %v2254 = vpop.xlane.xlu0 %2253
        %2255 = vadd.xlane.f32.xlu0 %v2208
        %v2256 = vpop.xlane.xlu0 %2255
        %2257 = vadd.xlane.f32.xlu0 %v2210
        %v2258 = vpop.xlane.xlu0 %2257
        %2259 = vadd.xlane.f32.xlu0 %v2212
        %v2260 = vpop.xlane.xlu0 %2259
        %2261 = vadd.xlane.f32.xlu0 %v2214
        %v2262 = vpop.xlane.xlu0 %2261
        %2263 = vadd.xlane.f32.xlu0 %v2216
        %v2264 = vpop.xlane.xlu0 %2263
        %2265 = vadd.xlane.f32.xlu0 %v2218
        %v2266 = vpop.xlane.xlu0 %2265
        %2267 = vadd.xlane.f32.xlu0 %v2220
        %v2268 = vpop.xlane.xlu0 %2267
        %2269 = vadd.xlane.f32.xlu0 %v2222
        %v2270 = vpop.xlane.xlu0 %2269
        %2271 = vadd.xlane.f32.xlu0 %v2224
        %v2272 = vpop.xlane.xlu0 %2271
        %2273 = vadd.xlane.f32.xlu0 %v2226
        %v2274 = vpop.xlane.xlu0 %2273
        %v2275 = vadd.f32 %v2227, %v2244
        %v2276 = vadd.f32 %v2228, %v2246
        %v2277 = vadd.f32 %v2229, %v2248
        %v2278 = vadd.f32 %v2230, %v2250
        %v2279 = vadd.f32 %v2231, %v2252
        %v2280 = vadd.f32 %v2232, %v2254
        %v2281 = vadd.f32 %v2233, %v2256
        %v2282 = vadd.f32 %v2234, %v2258
        %v2283 = vadd.f32 %v2235, %v2260
        %v2284 = vadd.f32 %v2236, %v2262
        %v2285 = vadd.f32 %v2237, %v2264
        %v2286 = vadd.f32 %v2238, %v2266
        %v2287 = vadd.f32 %v2239, %v2268
        %v2288 = vadd.f32 %v2240, %v2270
        %v2289 = vadd.f32 %v2241, %v2272
        %v2290 = vadd.f32 %v2242, %v2274
        %v2291 = vmul.f32 %v2148, %v1862
        %v2292 = vmul.f32 %v2150, %v1863
        %v2293 = vmul.f32 %v2152, %v1864
        %v2294 = vmul.f32 %v2154, %v1865
        %v2295 = vmul.f32 %v2156, %v1866
        %v2296 = vmul.f32 %v2158, %v1867
        %v2297 = vmul.f32 %v2160, %v1868
        %v2298 = vmul.f32 %v2162, %v1869
        %v2299 = vmul.f32 %v2164, %v1870
        %v2300 = vmul.f32 %v2166, %v1871
        %v2301 = vmul.f32 %v2168, %v1872
        %v2302 = vmul.f32 %v2170, %v1873
        %v2303 = vmul.f32 %v2172, %v1874
        %v2304 = vmul.f32 %v2174, %v1875
        %v2305 = vmul.f32 %v2176, %v1876
        %v2306 = vmul.f32 %v2178, %v1877
        %v2307 = vpack.c.bf16 %v2198, %v2196
        %v2308 = vpack.c.bf16 %v2202, %v2200
        %v2309 = vpack.c.bf16 %v2206, %v2204
        %v2310 = vpack.c.bf16 %v2210, %v2208
        %v2311 = vpack.c.bf16 %v2214, %v2212
        %v2312 = vpack.c.bf16 %v2218, %v2216
        %v2313 = vpack.c.bf16 %v2222, %v2220
        %v2314 = vpack.c.bf16 %v2226, %v2224
        %2323 = vrot.lane.b32.xlu0 %v1888, 120
        %v2324 = vpop.permute.xlu0 %2323
        %2325 = vrot.lane.b32.xlu0 %v1889, 120
        %v2326 = vpop.permute.xlu0 %2325
        %2327 = vrot.lane.b32.xlu0 %v1890, 120
        %v2328 = vpop.permute.xlu0 %2327
        %2329 = vrot.lane.b32.xlu0 %v1891, 120
        %v2330 = vpop.permute.xlu0 %2329
        %2331 = vrot.lane.b32.xlu0 %v1892, 120
        %v2332 = vpop.permute.xlu0 %2331
        %2333 = vrot.lane.b32.xlu0 %v1893, 120
        %v2334 = vpop.permute.xlu0 %2333
        %2335 = vrot.lane.b32.xlu0 %v1894, 120
        %v2336 = vpop.permute.xlu0 %2335
        %2337 = vrot.lane.b32.xlu0 %v1895, 120
        %v2338 = vpop.permute.xlu0 %2337
        %2347 = vmatprep.subr.bf16.mxu0 0
        %2348 = vmatpush1.bf16.msra.mxu0 %v2324
        %2349 = vmatprep.subr.bf16.mxu0 0
        %2350 = vmatpush1.bf16.msra.mxu0 %v2326
        %2351 = vmatprep.subr.bf16.mxu0 0
        %2352 = vmatpush1.bf16.msra.mxu0 %v2328
        %2353 = vmatprep.subr.bf16.mxu0 0
        %2354 = vmatpush1.bf16.msra.mxu0 %v2330
        %2355 = vmatprep.subr.bf16.mxu0 0
        %2356 = vmatpush1.bf16.msra.mxu0 %v2332
        %2357 = vmatprep.subr.bf16.mxu0 0
        %2358 = vmatpush1.bf16.msra.mxu0 %v2334
        %2359 = vmatprep.subr.bf16.mxu0 0
        %2360 = vmatpush1.bf16.msra.mxu0 %v2336
        %2361 = vmatprep.subr.bf16.mxu0 0
        %2362 = vmatpush1.bf16.msra.mxu0 %v2338
        %2363 = vmatprep.subr.bf16.mxu0 0
        %2364 = vmatpush1.bf16.msra.mxu0 0
        %2365 = vmatprep.subr.bf16.mxu0 0
        %2366 = vmatpush1.bf16.msra.mxu0 0
        %2367 = vmatprep.subr.bf16.mxu0 0
        %2368 = vmatpush1.bf16.msra.mxu0 0
        %2369 = vmatprep.subr.bf16.mxu0 0
        %2370 = vmatpush1.bf16.msra.mxu0 0
        %2371 = vmatprep.subr.bf16.mxu0 0
        %2372 = vmatpush1.bf16.msra.mxu0 0
        %2373 = vmatprep.subr.bf16.mxu0 0
        %2374 = vmatpush1.bf16.msra.mxu0 0
        %2375 = vmatprep.subr.bf16.mxu0 0
        %2376 = vmatpush1.bf16.msra.mxu0 0
        %2377 = vmatprep.subr.bf16.mxu0 0
        %2378 = vmatpush1.bf16.msra.mxu0 0
        %2379 = vmatprep.mubr.bf16.mxu0 0
        %2380 = vmatmul.mubr.bf16.gmra.mrb[0].mxu0 %v2307
        %v2381 = vpop.f32.mrb[0].mxu0
        %v2382 = vadd.f32 0.0, %v2381
        %v2383 = vpop.f32.mrb[0].mxu0
        %v2384 = vpop.f32.mrb[0].mxu0
        %v2385 = vadd.f32 0.0, %v2384
        %v2386 = vpop.f32.mrb[0].mxu0
        %2387 = vmatprep.mubr.bf16.mxu0 0
        %2388 = vmatmul.mubr.bf16.gmra.mrb[0].mxu0 %v2308
        %v2389 = vpop.f32.mrb[0].mxu0
        %v2390 = vadd.f32 0.0, %v2389
        %v2391 = vpop.f32.mrb[0].mxu0
        %v2392 = vpop.f32.mrb[0].mxu0
        %v2393 = vadd.f32 0.0, %v2392
        %v2394 = vpop.f32.mrb[0].mxu0
        %2395 = vmatprep.mubr.bf16.mxu0 0
        %2396 = vmatmul.mubr.bf16.gmra.mrb[0].mxu0 %v2309
        %v2397 = vpop.f32.mrb[0].mxu0
        %v2398 = vadd.f32 0.0, %v2397
        %v2399 = vpop.f32.mrb[0].mxu0
        %v2400 = vpop.f32.mrb[0].mxu0
        %v2401 = vadd.f32 0.0, %v2400
        %v2402 = vpop.f32.mrb[0].mxu0
        %2403 = vmatprep.mubr.bf16.mxu0 0
        %2404 = vmatmul.mubr.bf16.gmra.mrb[0].mxu0 %v2310
        %v2405 = vpop.f32.mrb[0].mxu0
        %v2406 = vadd.f32 0.0, %v2405
        %v2407 = vpop.f32.mrb[0].mxu0
        %v2408 = vpop.f32.mrb[0].mxu0
        %v2409 = vadd.f32 0.0, %v2408
        %v2410 = vpop.f32.mrb[0].mxu0
        %2411 = vmatprep.mubr.bf16.mxu0 0
        %2412 = vmatmul.mubr.bf16.gmra.mrb[0].mxu0 %v2311
        %v2413 = vpop.f32.mrb[0].mxu0
        %v2414 = vadd.f32 0.0, %v2413
        %v2415 = vpop.f32.mrb[0].mxu0
        %v2416 = vpop.f32.mrb[0].mxu0
        %v2417 = vadd.f32 0.0, %v2416
        %v2418 = vpop.f32.mrb[0].mxu0
        %2419 = vmatprep.mubr.bf16.mxu0 0
        %2420 = vmatmul.mubr.bf16.gmra.mrb[0].mxu0 %v2312
        %v2421 = vpop.f32.mrb[0].mxu0
        %v2422 = vadd.f32 0.0, %v2421
        %v2423 = vpop.f32.mrb[0].mxu0
        %v2424 = vpop.f32.mrb[0].mxu0
        %v2425 = vadd.f32 0.0, %v2424
        %v2426 = vpop.f32.mrb[0].mxu0
        %2427 = vmatprep.mubr.bf16.mxu0 0
        %2428 = vmatmul.mubr.bf16.gmra.mrb[0].mxu0 %v2313
        %v2429 = vpop.f32.mrb[0].mxu0
        %v2430 = vadd.f32 0.0, %v2429
        %v2431 = vpop.f32.mrb[0].mxu0
        %v2432 = vpop.f32.mrb[0].mxu0
        %v2433 = vadd.f32 0.0, %v2432
        %v2434 = vpop.f32.mrb[0].mxu0
        %2435 = vmatprep.mubr.bf16.mxu0 0
        %2436 = vmatmul.mubr.bf16.gmra.mrb[0].mxu0 %v2314
        %v2437 = vpop.f32.mrb[0].mxu0
        %v2438 = vadd.f32 0.0, %v2437
        %v2439 = vpop.f32.mrb[0].mxu0
        %v2440 = vpop.f32.mrb[0].mxu0
        %v2441 = vadd.f32 0.0, %v2440
        %v2442 = vpop.f32.mrb[0].mxu0
        %2443 = vdwg.mxu0
        %v2444 = vadd.f32 %v2291, %v2382
        %v2445 = vadd.f32 %v2292, %v2385
        %v2446 = vadd.f32 %v2293, %v2390
        %v2447 = vadd.f32 %v2294, %v2393
        %v2448 = vadd.f32 %v2295, %v2398
        %v2449 = vadd.f32 %v2296, %v2401
        %v2450 = vadd.f32 %v2297, %v2406
        %v2451 = vadd.f32 %v2298, %v2409
        %v2452 = vadd.f32 %v2299, %v2414
        %v2453 = vadd.f32 %v2300, %v2417
        %v2454 = vadd.f32 %v2301, %v2422
        %v2455 = vadd.f32 %v2302, %v2425
        %v2456 = vadd.f32 %v2303, %v2430
        %v2457 = vadd.f32 %v2304, %v2433
        %v2458 = vadd.f32 %v2305, %v2438
        %v2459 = vadd.f32 %v2306, %v2441
      $region88: #{tpu_custom_call.1} parent=75 // loop_footer
        %s1827 = sadd.s32 %s1825, 1
      $region89: #{tpu_custom_call.1} parent=75 // loop_footer_branch
        %1824 = sbr.rel target = $region85
      $region90: #{tpu_custom_call.1} parent=75 // loop_exit
        _
      %v2460 = vrcp.pop %v1846
      %v2461 = vrcp.pop %v1847
      %v2462 = vrcp.pop %v1848
      %v2463 = vrcp.pop %v1849
      %v2464 = vrcp.pop %v1850
      %v2465 = vrcp.pop %v1851
      %v2466 = vrcp.pop %v1852
      %v2467 = vrcp.pop %v1853
      %v2468 = vrcp.pop %v1854
      %v2469 = vrcp.pop %v1855
      %v2470 = vrcp.pop %v1856
      %v2471 = vrcp.pop %v1857
      %v2472 = vrcp.pop %v1858
      %v2473 = vrcp.pop %v1859
      %v2474 = vrcp.pop %v1860
      %v2475 = vrcp.pop %v1861
      %v2476 = vmul.f32 %v1862, %v2460
      %v2477 = vmul.f32 %v1863, %v2461
      %v2478 = vmul.f32 %v1864, %v2462
      %v2479 = vmul.f32 %v1865, %v2463
      %v2480 = vmul.f32 %v1866, %v2464
      %v2481 = vmul.f32 %v1867, %v2465
      %v2482 = vmul.f32 %v1868, %v2466
      %v2483 = vmul.f32 %v1869, %v2467
      %v2484 = vmul.f32 %v1870, %v2468
      %v2485 = vmul.f32 %v1871, %v2469
      %v2486 = vmul.f32 %v1872, %v2470
      %v2487 = vmul.f32 %v1873, %v2471
      %v2488 = vmul.f32 %v1874, %v2472
      %v2489 = vmul.f32 %v1875, %v2473
      %v2490 = vmul.f32 %v1876, %v2474
      %v2491 = vmul.f32 %v1877, %v2475
      // While loop
      $region91: #{tpu_custom_call.1} parent=75 // loop_pre_header
        _
      $region92: #{tpu_custom_call.1} parent=75 // loop_header
        %s2493 = sphi 0, %s2495
        %p2494 = scmp.ge.s32.totalorder %s2493, %s1213
        %v2498 = vphi -1e+30, %v2781
        %v2499 = vphi -1e+30, %v2782
        %v2500 = vphi -1e+30, %v2783
        %v2501 = vphi -1e+30, %v2784
        %v2502 = vphi -1e+30, %v2785
        %v2503 = vphi -1e+30, %v2786
        %v2504 = vphi -1e+30, %v2787
        %v2505 = vphi -1e+30, %v2788
        %v2506 = vphi -1e+30, %v2789
        %v2507 = vphi -1e+30, %v2790
        %v2508 = vphi -1e+30, %v2791
        %v2509 = vphi -1e+30, %v2792
        %v2510 = vphi -1e+30, %v2793
        %v2511 = vphi -1e+30, %v2794
        %v2512 = vphi -1e+30, %v2795
        %v2513 = vphi -1e+30, %v2796
        %v2514 = vphi 0.0, %v2941
        %v2515 = vphi 0.0, %v2942
        %v2516 = vphi 0.0, %v2943
        %v2517 = vphi 0.0, %v2944
        %v2518 = vphi 0.0, %v2945
        %v2519 = vphi 0.0, %v2946
        %v2520 = vphi 0.0, %v2947
        %v2521 = vphi 0.0, %v2948
        %v2522 = vphi 0.0, %v2949
        %v2523 = vphi 0.0, %v2950
        %v2524 = vphi 0.0, %v2951
        %v2525 = vphi 0.0, %v2952
        %v2526 = vphi 0.0, %v2953
        %v2527 = vphi 0.0, %v2954
        %v2528 = vphi 0.0, %v2955
        %v2529 = vphi 0.0, %v2956
        %v2530 = vphi 0.0, %v3110
        %v2531 = vphi 0.0, %v3111
        %v2532 = vphi 0.0, %v3112
        %v2533 = vphi 0.0, %v3113
        %v2534 = vphi 0.0, %v3114
        %v2535 = vphi 0.0, %v3115
        %v2536 = vphi 0.0, %v3116
        %v2537 = vphi 0.0, %v3117
        %v2538 = vphi 0.0, %v3118
        %v2539 = vphi 0.0, %v3119
        %v2540 = vphi 0.0, %v3120
        %v2541 = vphi 0.0, %v3121
        %v2542 = vphi 0.0, %v3122
        %v2543 = vphi 0.0, %v3123
        %v2544 = vphi 0.0, %v3124
        %v2545 = vphi 0.0, %v3125
      $region93: #{tpu_custom_call.1} parent=75 // loop_header_branch
        %2497 = sbr.rel (%p2494) target = $region97
      $region94: #{tpu_custom_call.1} parent=75 // loop_body
        %s2546 = smul.u32 %s2493, 128
        %s2547 = sshra.s32 %s2546, 7
        %s2548 = sand.u32 %s2546, 127
        %s2549 = smul.addr %s2547, 8
        %s2550 = scalar_lea.vmem [#allocation2], %s2549
        %v2551 = vld [vmem:[%s2550 + $0x8] sm:$0xf]
        %s2552 = sshra.s32 %s2546, 4
        %s2553 = sand.u32 %s2546, 15
        %s2554 = smul.addr %s2552, 8
        %s2555 = scalar_lea.vmem [#allocation3], %s2554
        %v2556 = vld [vmem:[%s2555] sm:$0xff]
        %v2557 = vld [vmem:[%s2555 + $0x8] sm:$0xff]
        %v2558 = vld [vmem:[%s2555 + $0x10] sm:$0xff]
        %v2559 = vld [vmem:[%s2555 + $0x18] sm:$0xff]
        %v2560 = vld [vmem:[%s2555 + $0x20] sm:$0xff]
        %v2561 = vld [vmem:[%s2555 + $0x28] sm:$0xff]
        %v2562 = vld [vmem:[%s2555 + $0x30] sm:$0xff]
        %v2563 = vld [vmem:[%s2555 + $0x38] sm:$0xff]
        %2572 = vrot.lane.b32.xlu0 %v959, 112
        %v2573 = vpop.permute.xlu0 %2572
        %2574 = vrot.lane.b32.xlu0 %v960, 112
        %v2575 = vpop.permute.xlu0 %2574
        %2576 = vrot.lane.b32.xlu0 %v961, 112
        %v2577 = vpop.permute.xlu0 %2576
        %2578 = vrot.lane.b32.xlu0 %v962, 112
        %v2579 = vpop.permute.xlu0 %2578
        %2580 = vrot.lane.b32.xlu0 %v963, 112
        %v2581 = vpop.permute.xlu0 %2580
        %2582 = vrot.lane.b32.xlu0 %v964, 112
        %v2583 = vpop.permute.xlu0 %2582
        %2584 = vrot.lane.b32.xlu0 %v965, 112
        %v2585 = vpop.permute.xlu0 %2584
        %2586 = vrot.lane.b32.xlu0 %v966, 112
        %v2587 = vpop.permute.xlu0 %2586
        %vm2588 = vcmask 64512
        %v2590 = vsel %vm2588, %v2573, 0
        %v2593 = vsel %vm2588, %v2575, 0
        %v2596 = vsel %vm2588, %v2577, 0
        %v2599 = vsel %vm2588, %v2579, 0
        %v2602 = vsel %vm2588, %v2581, 0
        %v2605 = vsel %vm2588, %v2583, 0
        %v2608 = vsel %vm2588, %v2585, 0
        %v2611 = vsel %vm2588, %v2587, 0
        %vm2613 = vcmask 1043456
        %v2615 = vsel %vm2613, %v2551, 0
        %2617 = vmatprep.subr.bf16.mxu0 0
        %2618 = vmatpush1.bf16.msra.mxu0 %v2615
        %2619 = vmatprep.subr.bf16.mxu0 0
        %2620 = vmatpush1.bf16.msra.mxu0 0
        %2621 = vmatprep.subr.bf16.mxu0 0
        %2622 = vmatpush1.bf16.msra.mxu0 0
        %2623 = vmatprep.subr.bf16.mxu0 0
        %2624 = vmatpush1.bf16.msra.mxu0 0
        %2625 = vmatprep.subr.bf16.mxu0 0
        %2626 = vmatpush1.bf16.msra.mxu0 0
        %2627 = vmatprep.subr.bf16.mxu0 0
        %2628 = vmatpush1.bf16.msra.mxu0 0
        %2629 = vmatprep.subr.bf16.mxu0 0
        %2630 = vmatpush1.bf16.msra.mxu0 0
        %2631 = vmatprep.subr.bf16.mxu0 0
        %2632 = vmatpush1.bf16.msra.mxu0 0
        %2633 = vmatprep.subr.bf16.mxu0 0
        %2634 = vmatpush1.bf16.msra.mxu0 0
        %2635 = vmatprep.subr.bf16.mxu0 0
        %2636 = vmatpush1.bf16.msra.mxu0 0
        %2637 = vmatprep.subr.bf16.mxu0 0
        %2638 = vmatpush1.bf16.msra.mxu0 0
        %2639 = vmatprep.subr.bf16.mxu0 0
        %2640 = vmatpush1.bf16.msra.mxu0 0
        %2641 = vmatprep.subr.bf16.mxu0 0
        %2642 = vmatpush1.bf16.msra.mxu0 0
        %2643 = vmatprep.subr.bf16.mxu0 0
        %2644 = vmatpush1.bf16.msra.mxu0 0
        %2645 = vmatprep.subr.bf16.mxu0 0
        %2646 = vmatpush1.bf16.msra.mxu0 0
        %2647 = vmatprep.subr.bf16.mxu0 0
        %2648 = vmatpush1.bf16.msra.mxu0 0
        %2649 = vmatprep.mubr.bf16.mxu0 0
        %2650 = vmatmul.mubr.bf16.gmra.mrb[0].mxu0 %v2590
        %v2651 = vpop.f32.mrb[0].mxu0
        %v2652 = vadd.f32 0.0, %v2651
        %v2653 = vpop.f32.mrb[0].mxu0
        %v2654 = vpop.f32.mrb[0].mxu0
        %v2655 = vadd.f32 0.0, %v2654
        %v2656 = vpop.f32.mrb[0].mxu0
        %2657 = vmatprep.mubr.bf16.mxu0 0
        %2658 = vmatmul.mubr.bf16.gmra.mrb[0].mxu0 %v2593
        %v2659 = vpop.f32.mrb[0].mxu0
        %v2660 = vadd.f32 0.0, %v2659
        %v2661 = vpop.f32.mrb[0].mxu0
        %v2662 = vpop.f32.mrb[0].mxu0
        %v2663 = vadd.f32 0.0, %v2662
        %v2664 = vpop.f32.mrb[0].mxu0
        %2665 = vmatprep.mubr.bf16.mxu0 0
        %2666 = vmatmul.mubr.bf16.gmra.mrb[0].mxu0 %v2596
        %v2667 = vpop.f32.mrb[0].mxu0
        %v2668 = vadd.f32 0.0, %v2667
        %v2669 = vpop.f32.mrb[0].mxu0
        %v2670 = vpop.f32.mrb[0].mxu0
        %v2671 = vadd.f32 0.0, %v2670
        %v2672 = vpop.f32.mrb[0].mxu0
        %2673 = vmatprep.mubr.bf16.mxu0 0
        %2674 = vmatmul.mubr.bf16.gmra.mrb[0].mxu0 %v2599
        %v2675 = vpop.f32.mrb[0].mxu0
        %v2676 = vadd.f32 0.0, %v2675
        %v2677 = vpop.f32.mrb[0].mxu0
        %v2678 = vpop.f32.mrb[0].mxu0
        %v2679 = vadd.f32 0.0, %v2678
        %v2680 = vpop.f32.mrb[0].mxu0
        %2681 = vmatprep.mubr.bf16.mxu0 0
        %2682 = vmatmul.mubr.bf16.gmra.mrb[0].mxu0 %v2602
        %v2683 = vpop.f32.mrb[0].mxu0
        %v2684 = vadd.f32 0.0, %v2683
        %v2685 = vpop.f32.mrb[0].mxu0
        %v2686 = vpop.f32.mrb[0].mxu0
        %v2687 = vadd.f32 0.0, %v2686
        %v2688 = vpop.f32.mrb[0].mxu0
        %2689 = vmatprep.mubr.bf16.mxu0 0
        %2690 = vmatmul.mubr.bf16.gmra.mrb[0].mxu0 %v2605
        %v2691 = vpop.f32.mrb[0].mxu0
        %v2692 = vadd.f32 0.0, %v2691
        %v2693 = vpop.f32.mrb[0].mxu0
        %v2694 = vpop.f32.mrb[0].mxu0
        %v2695 = vadd.f32 0.0, %v2694
        %v2696 = vpop.f32.mrb[0].mxu0
        %2697 = vmatprep.mubr.bf16.mxu0 0
        %2698 = vmatmul.mubr.bf16.gmra.mrb[0].mxu0 %v2608
        %v2699 = vpop.f32.mrb[0].mxu0
        %v2700 = vadd.f32 0.0, %v2699
        %v2701 = vpop.f32.mrb[0].mxu0
        %v2702 = vpop.f32.mrb[0].mxu0
        %v2703 = vadd.f32 0.0, %v2702
        %v2704 = vpop.f32.mrb[0].mxu0
        %2705 = vmatprep.mubr.bf16.mxu0 0
        %2706 = vmatmul.mubr.bf16.gmra.mrb[0].mxu0 %v2611
        %v2707 = vpop.f32.mrb[0].mxu0
        %v2708 = vadd.f32 0.0, %v2707
        %v2709 = vpop.f32.mrb[0].mxu0
        %v2710 = vpop.f32.mrb[0].mxu0
        %v2711 = vadd.f32 0.0, %v2710
        %v2712 = vpop.f32.mrb[0].mxu0
        %2713 = vdwg.mxu0
        %s2714 = ssub.s32 %s2493, %s30
        %s2715 = smul.u32 %s2714, 128
        %v2716 = vstv %s2715
        %vm2717 = vcmp.ge.s32.totalorder %v1197, %v2716
        %vm2718 = vcmp.ge.s32.totalorder %v1198, %v2716
        %vm2719 = vcmp.ge.s32.totalorder %v1199, %v2716
        %vm2720 = vcmp.ge.s32.totalorder %v1200, %v2716
        %vm2721 = vcmp.ge.s32.totalorder %v1201, %v2716
        %vm2722 = vcmp.ge.s32.totalorder %v1202, %v2716
        %vm2723 = vcmp.ge.s32.totalorder %v1203, %v2716
        %vm2724 = vcmp.ge.s32.totalorder %v1204, %v2716
        %vm2725 = vcmp.ge.s32.totalorder %v1205, %v2716
        %vm2726 = vcmp.ge.s32.totalorder %v1206, %v2716
        %vm2727 = vcmp.ge.s32.totalorder %v1207, %v2716
        %vm2728 = vcmp.ge.s32.totalorder %v1208, %v2716
        %vm2729 = vcmp.ge.s32.totalorder %v1209, %v2716
        %vm2730 = vcmp.ge.s32.totalorder %v1210, %v2716
        %vm2731 = vcmp.ge.s32.totalorder %v1211, %v2716
        %vm2732 = vcmp.ge.s32.totalorder %v1212, %v2716
        %v2733 = vsel %vm2717, %v2652, -1e+30
        %v2734 = vsel %vm2718, %v2655, -1e+30
        %v2735 = vsel %vm2719, %v2660, -1e+30
        %v2736 = vsel %vm2720, %v2663, -1e+30
        %v2737 = vsel %vm2721, %v2668, -1e+30
        %v2738 = vsel %vm2722, %v2671, -1e+30
        %v2739 = vsel %vm2723, %v2676, -1e+30
        %v2740 = vsel %vm2724, %v2679, -1e+30
        %v2741 = vsel %vm2725, %v2684, -1e+30
        %v2742 = vsel %vm2726, %v2687, -1e+30
        %v2743 = vsel %vm2727, %v2692, -1e+30
        %v2744 = vsel %vm2728, %v2695, -1e+30
        %v2745 = vsel %vm2729, %v2700, -1e+30
        %v2746 = vsel %vm2730, %v2703, -1e+30
        %v2747 = vsel %vm2731, %v2708, -1e+30
        %v2748 = vsel %vm2732, %v2711, -1e+30
        %2749 = vmax.xlane.f32.xlu0 %v2733
        %v2750 = vpop.xlane.xlu0 %2749
        %2751 = vmax.xlane.f32.xlu0 %v2734
        %v2752 = vpop.xlane.xlu0 %2751
        %2753 = vmax.xlane.f32.xlu0 %v2735
        %v2754 = vpop.xlane.xlu0 %2753
        %2755 = vmax.xlane.f32.xlu0 %v2736
        %v2756 = vpop.xlane.xlu0 %2755
        %2757 = vmax.xlane.f32.xlu0 %v2737
        %v2758 = vpop.xlane.xlu0 %2757
        %2759 = vmax.xlane.f32.xlu0 %v2738
        %v2760 = vpop.xlane.xlu0 %2759
        %2761 = vmax.xlane.f32.xlu0 %v2739
        %v2762 = vpop.xlane.xlu0 %2761
        %2763 = vmax.xlane.f32.xlu0 %v2740
        %v2764 = vpop.xlane.xlu0 %2763
        %2765 = vmax.xlane.f32.xlu0 %v2741
        %v2766 = vpop.xlane.xlu0 %2765
        %2767 = vmax.xlane.f32.xlu0 %v2742
        %v2768 = vpop.xlane.xlu0 %2767
        %2769 = vmax.xlane.f32.xlu0 %v2743
        %v2770 = vpop.xlane.xlu0 %2769
        %2771 = vmax.xlane.f32.xlu0 %v2744
        %v2772 = vpop.xlane.xlu0 %2771
        %2773 = vmax.xlane.f32.xlu0 %v2745
        %v2774 = vpop.xlane.xlu0 %2773
        %2775 = vmax.xlane.f32.xlu0 %v2746
        %v2776 = vpop.xlane.xlu0 %2775
        %2777 = vmax.xlane.f32.xlu0 %v2747
        %v2778 = vpop.xlane.xlu0 %2777
        %2779 = vmax.xlane.f32.xlu0 %v2748
        %v2780 = vpop.xlane.xlu0 %2779
        %v2781 = vmax.f32 %v2498, %v2750
        %v2782 = vmax.f32 %v2499, %v2752
        %v2783 = vmax.f32 %v2500, %v2754
        %v2784 = vmax.f32 %v2501, %v2756
        %v2785 = vmax.f32 %v2502, %v2758
        %v2786 = vmax.f32 %v2503, %v2760
        %v2787 = vmax.f32 %v2504, %v2762
        %v2788 = vmax.f32 %v2505, %v2764
        %v2789 = vmax.f32 %v2506, %v2766
        %v2790 = vmax.f32 %v2507, %v2768
        %v2791 = vmax.f32 %v2508, %v2770
        %v2792 = vmax.f32 %v2509, %v2772
        %v2793 = vmax.f32 %v2510, %v2774
        %v2794 = vmax.f32 %v2511, %v2776
        %v2795 = vmax.f32 %v2512, %v2778
        %v2796 = vmax.f32 %v2513, %v2780
        %v2797 = vsub.f32 %v2498, %v2781
        %v2798 = vsub.f32 %v2499, %v2782
        %v2799 = vsub.f32 %v2500, %v2783
        %v2800 = vsub.f32 %v2501, %v2784
        %v2801 = vsub.f32 %v2502, %v2785
        %v2802 = vsub.f32 %v2503, %v2786
        %v2803 = vsub.f32 %v2504, %v2787
        %v2804 = vsub.f32 %v2505, %v2788
        %v2805 = vsub.f32 %v2506, %v2789
        %v2806 = vsub.f32 %v2507, %v2790
        %v2807 = vsub.f32 %v2508, %v2791
        %v2808 = vsub.f32 %v2509, %v2792
        %v2809 = vsub.f32 %v2510, %v2793
        %v2810 = vsub.f32 %v2511, %v2794
        %v2811 = vsub.f32 %v2512, %v2795
        %v2812 = vsub.f32 %v2513, %v2796
        %v2813 = vmul.f32 %v2797, 1.442695
        %v2814 = vpow.pop %v2813
        %v2815 = vmul.f32 %v2798, 1.442695
        %v2816 = vpow.pop %v2815
        %v2817 = vmul.f32 %v2799, 1.442695
        %v2818 = vpow.pop %v2817
        %v2819 = vmul.f32 %v2800, 1.442695
        %v2820 = vpow.pop %v2819
        %v2821 = vmul.f32 %v2801, 1.442695
        %v2822 = vpow.pop %v2821
        %v2823 = vmul.f32 %v2802, 1.442695
        %v2824 = vpow.pop %v2823
        %v2825 = vmul.f32 %v2803, 1.442695
        %v2826 = vpow.pop %v2825
        %v2827 = vmul.f32 %v2804, 1.442695
        %v2828 = vpow.pop %v2827
        %v2829 = vmul.f32 %v2805, 1.442695
        %v2830 = vpow.pop %v2829
        %v2831 = vmul.f32 %v2806, 1.442695
        %v2832 = vpow.pop %v2831
        %v2833 = vmul.f32 %v2807, 1.442695
        %v2834 = vpow.pop %v2833
        %v2835 = vmul.f32 %v2808, 1.442695
        %v2836 = vpow.pop %v2835
        %v2837 = vmul.f32 %v2809, 1.442695
        %v2838 = vpow.pop %v2837
        %v2839 = vmul.f32 %v2810, 1.442695
        %v2840 = vpow.pop %v2839
        %v2841 = vmul.f32 %v2811, 1.442695
        %v2842 = vpow.pop %v2841
        %v2843 = vmul.f32 %v2812, 1.442695
        %v2844 = vpow.pop %v2843
        %v2845 = vsub.f32 %v2733, %v2781
        %v2846 = vsub.f32 %v2734, %v2782
        %v2847 = vsub.f32 %v2735, %v2783
        %v2848 = vsub.f32 %v2736, %v2784
        %v2849 = vsub.f32 %v2737, %v2785
        %v2850 = vsub.f32 %v2738, %v2786
        %v2851 = vsub.f32 %v2739, %v2787
        %v2852 = vsub.f32 %v2740, %v2788
        %v2853 = vsub.f32 %v2741, %v2789
        %v2854 = vsub.f32 %v2742, %v2790
        %v2855 = vsub.f32 %v2743, %v2791
        %v2856 = vsub.f32 %v2744, %v2792
        %v2857 = vsub.f32 %v2745, %v2793
        %v2858 = vsub.f32 %v2746, %v2794
        %v2859 = vsub.f32 %v2747, %v2795
        %v2860 = vsub.f32 %v2748, %v2796
        %v2861 = vmul.f32 %v2845, 1.442695
        %v2862 = vpow.pop %v2861
        %v2863 = vmul.f32 %v2846, 1.442695
        %v2864 = vpow.pop %v2863
        %v2865 = vmul.f32 %v2847, 1.442695
        %v2866 = vpow.pop %v2865
        %v2867 = vmul.f32 %v2848, 1.442695
        %v2868 = vpow.pop %v2867
        %v2869 = vmul.f32 %v2849, 1.442695
        %v2870 = vpow.pop %v2869
        %v2871 = vmul.f32 %v2850, 1.442695
        %v2872 = vpow.pop %v2871
        %v2873 = vmul.f32 %v2851, 1.442695
        %v2874 = vpow.pop %v2873
        %v2875 = vmul.f32 %v2852, 1.442695
        %v2876 = vpow.pop %v2875
        %v2877 = vmul.f32 %v2853, 1.442695
        %v2878 = vpow.pop %v2877
        %v2879 = vmul.f32 %v2854, 1.442695
        %v2880 = vpow.pop %v2879
        %v2881 = vmul.f32 %v2855, 1.442695
        %v2882 = vpow.pop %v2881
        %v2883 = vmul.f32 %v2856, 1.442695
        %v2884 = vpow.pop %v2883
        %v2885 = vmul.f32 %v2857, 1.442695
        %v2886 = vpow.pop %v2885
        %v2887 = vmul.f32 %v2858, 1.442695
        %v2888 = vpow.pop %v2887
        %v2889 = vmul.f32 %v2859, 1.442695
        %v2890 = vpow.pop %v2889
        %v2891 = vmul.f32 %v2860, 1.442695
        %v2892 = vpow.pop %v2891
        %v2893 = vmul.f32 %v2814, %v2514
        %v2894 = vmul.f32 %v2816, %v2515
        %v2895 = vmul.f32 %v2818, %v2516
        %v2896 = vmul.f32 %v2820, %v2517
        %v2897 = vmul.f32 %v2822, %v2518
        %v2898 = vmul.f32 %v2824, %v2519
        %v2899 = vmul.f32 %v2826, %v2520
        %v2900 = vmul.f32 %v2828, %v2521
        %v2901 = vmul.f32 %v2830, %v2522
        %v2902 = vmul.f32 %v2832, %v2523
        %v2903 = vmul.f32 %v2834, %v2524
        %v2904 = vmul.f32 %v2836, %v2525
        %v2905 = vmul.f32 %v2838, %v2526
        %v2906 = vmul.f32 %v2840, %v2527
        %v2907 = vmul.f32 %v2842, %v2528
        %v2908 = vmul.f32 %v2844, %v2529
        %2909 = vadd.xlane.f32.xlu0 %v2862
        %v2910 = vpop.xlane.xlu0 %2909
        %2911 = vadd.xlane.f32.xlu0 %v2864
        %v2912 = vpop.xlane.xlu0 %2911
        %2913 = vadd.xlane.f32.xlu0 %v2866
        %v2914 = vpop.xlane.xlu0 %2913
        %2915 = vadd.xlane.f32.xlu0 %v2868
        %v2916 = vpop.xlane.xlu0 %2915
        %2917 = vadd.xlane.f32.xlu0 %v2870
        %v2918 = vpop.xlane.xlu0 %2917
        %2919 = vadd.xlane.f32.xlu0 %v2872
        %v2920 = vpop.xlane.xlu0 %2919
        %2921 = vadd.xlane.f32.xlu0 %v2874
        %v2922 = vpop.xlane.xlu0 %2921
        %2923 = vadd.xlane.f32.xlu0 %v2876
        %v2924 = vpop.xlane.xlu0 %2923
        %2925 = vadd.xlane.f32.xlu0 %v2878
        %v2926 = vpop.xlane.xlu0 %2925
        %2927 = vadd.xlane.f32.xlu0 %v2880
        %v2928 = vpop.xlane.xlu0 %2927
        %2929 = vadd.xlane.f32.xlu0 %v2882
        %v2930 = vpop.xlane.xlu0 %2929
        %2931 = vadd.xlane.f32.xlu0 %v2884
        %v2932 = vpop.xlane.xlu0 %2931
        %2933 = vadd.xlane.f32.xlu0 %v2886
        %v2934 = vpop.xlane.xlu0 %2933
        %2935 = vadd.xlane.f32.xlu0 %v2888
        %v2936 = vpop.xlane.xlu0 %2935
        %2937 = vadd.xlane.f32.xlu0 %v2890
        %v2938 = vpop.xlane.xlu0 %2937
        %2939 = vadd.xlane.f32.xlu0 %v2892
        %v2940 = vpop.xlane.xlu0 %2939
        %v2941 = vadd.f32 %v2893, %v2910
        %v2942 = vadd.f32 %v2894, %v2912
        %v2943 = vadd.f32 %v2895, %v2914
        %v2944 = vadd.f32 %v2896, %v2916
        %v2945 = vadd.f32 %v2897, %v2918
        %v2946 = vadd.f32 %v2898, %v2920
        %v2947 = vadd.f32 %v2899, %v2922
        %v2948 = vadd.f32 %v2900, %v2924
        %v2949 = vadd.f32 %v2901, %v2926
        %v2950 = vadd.f32 %v2902, %v2928
        %v2951 = vadd.f32 %v2903, %v2930
        %v2952 = vadd.f32 %v2904, %v2932
        %v2953 = vadd.f32 %v2905, %v2934
        %v2954 = vadd.f32 %v2906, %v2936
        %v2955 = vadd.f32 %v2907, %v2938
        %v2956 = vadd.f32 %v2908, %v2940
        %v2957 = vmul.f32 %v2814, %v2530
        %v2958 = vmul.f32 %v2816, %v2531
        %v2959 = vmul.f32 %v2818, %v2532
        %v2960 = vmul.f32 %v2820, %v2533
        %v2961 = vmul.f32 %v2822, %v2534
        %v2962 = vmul.f32 %v2824, %v2535
        %v2963 = vmul.f32 %v2826, %v2536
        %v2964 = vmul.f32 %v2828, %v2537
        %v2965 = vmul.f32 %v2830, %v2538
        %v2966 = vmul.f32 %v2832, %v2539
        %v2967 = vmul.f32 %v2834, %v2540
        %v2968 = vmul.f32 %v2836, %v2541
        %v2969 = vmul.f32 %v2838, %v2542
        %v2970 = vmul.f32 %v2840, %v2543
        %v2971 = vmul.f32 %v2842, %v2544
        %v2972 = vmul.f32 %v2844, %v2545
        %v2973 = vpack.c.bf16 %v2864, %v2862
        %v2974 = vpack.c.bf16 %v2868, %v2866
        %v2975 = vpack.c.bf16 %v2872, %v2870
        %v2976 = vpack.c.bf16 %v2876, %v2874
        %v2977 = vpack.c.bf16 %v2880, %v2878
        %v2978 = vpack.c.bf16 %v2884, %v2882
        %v2979 = vpack.c.bf16 %v2888, %v2886
        %v2980 = vpack.c.bf16 %v2892, %v2890
        %2989 = vrot.lane.b32.xlu0 %v2556, 112
        %v2990 = vpop.permute.xlu0 %2989
        %2991 = vrot.lane.b32.xlu0 %v2557, 112
        %v2992 = vpop.permute.xlu0 %2991
        %2993 = vrot.lane.b32.xlu0 %v2558, 112
        %v2994 = vpop.permute.xlu0 %2993
        %2995 = vrot.lane.b32.xlu0 %v2559, 112
        %v2996 = vpop.permute.xlu0 %2995
        %2997 = vrot.lane.b32.xlu0 %v2560, 112
        %v2998 = vpop.permute.xlu0 %2997
        %2999 = vrot.lane.b32.xlu0 %v2561, 112
        %v3000 = vpop.permute.xlu0 %2999
        %3001 = vrot.lane.b32.xlu0 %v2562, 112
        %v3002 = vpop.permute.xlu0 %3001
        %3003 = vrot.lane.b32.xlu0 %v2563, 112
        %v3004 = vpop.permute.xlu0 %3003
        %3013 = vmatprep.subr.bf16.mxu0 0
        %3014 = vmatpush1.bf16.msra.mxu0 %v2990
        %3015 = vmatprep.subr.bf16.mxu0 0
        %3016 = vmatpush1.bf16.msra.mxu0 %v2992
        %3017 = vmatprep.subr.bf16.mxu0 0
        %3018 = vmatpush1.bf16.msra.mxu0 %v2994
        %3019 = vmatprep.subr.bf16.mxu0 0
        %3020 = vmatpush1.bf16.msra.mxu0 %v2996
        %3021 = vmatprep.subr.bf16.mxu0 0
        %3022 = vmatpush1.bf16.msra.mxu0 %v2998
        %3023 = vmatprep.subr.bf16.mxu0 0
        %3024 = vmatpush1.bf16.msra.mxu0 %v3000
        %3025 = vmatprep.subr.bf16.mxu0 0
        %3026 = vmatpush1.bf16.msra.mxu0 %v3002
        %3027 = vmatprep.subr.bf16.mxu0 0
        %3028 = vmatpush1.bf16.msra.mxu0 %v3004
        %3029 = vmatprep.subr.bf16.mxu0 0
        %3030 = vmatpush1.bf16.msra.mxu0 0
        %3031 = vmatprep.subr.bf16.mxu0 0
        %3032 = vmatpush1.bf16.msra.mxu0 0
        %3033 = vmatprep.subr.bf16.mxu0 0
        %3034 = vmatpush1.bf16.msra.mxu0 0
        %3035 = vmatprep.subr.bf16.mxu0 0
        %3036 = vmatpush1.bf16.msra.mxu0 0
        %3037 = vmatprep.subr.bf16.mxu0 0
        %3038 = vmatpush1.bf16.msra.mxu0 0
        %3039 = vmatprep.subr.bf16.mxu0 0
        %3040 = vmatpush1.bf16.msra.mxu0 0
        %3041 = vmatprep.subr.bf16.mxu0 0
        %3042 = vmatpush1.bf16.msra.mxu0 0
        %3043 = vmatprep.subr.bf16.mxu0 0
        %3044 = vmatpush1.bf16.msra.mxu0 0
        %3045 = vmatprep.mubr.bf16.mxu0 0
        %3046 = vmatmul.mubr.bf16.gmra.mrb[0].mxu0 %v2973
        %v3047 = vpop.f32.mrb[0].mxu0
        %v3048 = vadd.f32 0.0, %v3047
        %v3049 = vpop.f32.mrb[0].mxu0
        %v3050 = vpop.f32.mrb[0].mxu0
        %v3051 = vadd.f32 0.0, %v3050
        %v3052 = vpop.f32.mrb[0].mxu0
        %3053 = vmatprep.mubr.bf16.mxu0 0
        %3054 = vmatmul.mubr.bf16.gmra.mrb[0].mxu0 %v2974
        %v3055 = vpop.f32.mrb[0].mxu0
        %v3056 = vadd.f32 0.0, %v3055
        %v3057 = vpop.f32.mrb[0].mxu0
        %v3058 = vpop.f32.mrb[0].mxu0
        %v3059 = vadd.f32 0.0, %v3058
        %v3060 = vpop.f32.mrb[0].mxu0
        %3061 = vmatprep.mubr.bf16.mxu0 0
        %3062 = vmatmul.mubr.bf16.gmra.mrb[0].mxu0 %v2975
        %v3063 = vpop.f32.mrb[0].mxu0
        %v3064 = vadd.f32 0.0, %v3063
        %v3065 = vpop.f32.mrb[0].mxu0
        %v3066 = vpop.f32.mrb[0].mxu0
        %v3067 = vadd.f32 0.0, %v3066
        %v3068 = vpop.f32.mrb[0].mxu0
        %3069 = vmatprep.mubr.bf16.mxu0 0
        %3070 = vmatmul.mubr.bf16.gmra.mrb[0].mxu0 %v2976
        %v3071 = vpop.f32.mrb[0].mxu0
        %v3072 = vadd.f32 0.0, %v3071
        %v3073 = vpop.f32.mrb[0].mxu0
        %v3074 = vpop.f32.mrb[0].mxu0
        %v3075 = vadd.f32 0.0, %v3074
        %v3076 = vpop.f32.mrb[0].mxu0
        %3077 = vmatprep.mubr.bf16.mxu0 0
        %3078 = vmatmul.mubr.bf16.gmra.mrb[0].mxu0 %v2977
        %v3079 = vpop.f32.mrb[0].mxu0
        %v3080 = vadd.f32 0.0, %v3079
        %v3081 = vpop.f32.mrb[0].mxu0
        %v3082 = vpop.f32.mrb[0].mxu0
        %v3083 = vadd.f32 0.0, %v3082
        %v3084 = vpop.f32.mrb[0].mxu0
        %3085 = vmatprep.mubr.bf16.mxu0 0
        %3086 = vmatmul.mubr.bf16.gmra.mrb[0].mxu0 %v2978
        %v3087 = vpop.f32.mrb[0].mxu0
        %v3088 = vadd.f32 0.0, %v3087
        %v3089 = vpop.f32.mrb[0].mxu0
        %v3090 = vpop.f32.mrb[0].mxu0
        %v3091 = vadd.f32 0.0, %v3090
        %v3092 = vpop.f32.mrb[0].mxu0
        %3093 = vmatprep.mubr.bf16.mxu0 0
        %3094 = vmatmul.mubr.bf16.gmra.mrb[0].mxu0 %v2979
        %v3095 = vpop.f32.mrb[0].mxu0
        %v3096 = vadd.f32 0.0, %v3095
        %v3097 = vpop.f32.mrb[0].mxu0
        %v3098 = vpop.f32.mrb[0].mxu0
        %v3099 = vadd.f32 0.0, %v3098
        %v3100 = vpop.f32.mrb[0].mxu0
        %3101 = vmatprep.mubr.bf16.mxu0 0
        %3102 = vmatmul.mubr.bf16.gmra.mrb[0].mxu0 %v2980
        %v3103 = vpop.f32.mrb[0].mxu0
        %v3104 = vadd.f32 0.0, %v3103
        %v3105 = vpop.f32.mrb[0].mxu0
        %v3106 = vpop.f32.mrb[0].mxu0
        %v3107 = vadd.f32 0.0, %v3106
        %v3108 = vpop.f32.mrb[0].mxu0
        %3109 = vdwg.mxu0
        %v3110 = vadd.f32 %v2957, %v3048
        %v3111 = vadd.f32 %v2958, %v3051
        %v3112 = vadd.f32 %v2959, %v3056
        %v3113 = vadd.f32 %v2960, %v3059
        %v3114 = vadd.f32 %v2961, %v3064
        %v3115 = vadd.f32 %v2962, %v3067
        %v3116 = vadd.f32 %v2963, %v3072
        %v3117 = vadd.f32 %v2964, %v3075
        %v3118 = vadd.f32 %v2965, %v3080
        %v3119 = vadd.f32 %v2966, %v3083
        %v3120 = vadd.f32 %v2967, %v3088
        %v3121 = vadd.f32 %v2968, %v3091
        %v3122 = vadd.f32 %v2969, %v3096
        %v3123 = vadd.f32 %v2970, %v3099
        %v3124 = vadd.f32 %v2971, %v3104
        %v3125 = vadd.f32 %v2972, %v3107
      $region95: #{tpu_custom_call.1} parent=75 // loop_footer
        %s2495 = sadd.s32 %s2493, 1
      $region96: #{tpu_custom_call.1} parent=75 // loop_footer_branch
        %2492 = sbr.rel target = $region92
      $region97: #{tpu_custom_call.1} parent=75 // loop_exit
        _
      %v3126 = vrcp.pop %v2514
      %v3127 = vrcp.pop %v2515
      %v3128 = vrcp.pop %v2516
      %v3129 = vrcp.pop %v2517
      %v3130 = vrcp.pop %v2518
      %v3131 = vrcp.pop %v2519
      %v3132 = vrcp.pop %v2520
      %v3133 = vrcp.pop %v2521
      %v3134 = vrcp.pop %v2522
      %v3135 = vrcp.pop %v2523
      %v3136 = vrcp.pop %v2524
      %v3137 = vrcp.pop %v2525
      %v3138 = vrcp.pop %v2526
      %v3139 = vrcp.pop %v2527
      %v3140 = vrcp.pop %v2528
      %v3141 = vrcp.pop %v2529
      %v3142 = vmul.f32 %v2530, %v3126
      %v3143 = vmul.f32 %v2531, %v3127
      %v3144 = vmul.f32 %v2532, %v3128
      %v3145 = vmul.f32 %v2533, %v3129
      %v3146 = vmul.f32 %v2534, %v3130
      %v3147 = vmul.f32 %v2535, %v3131
      %v3148 = vmul.f32 %v2536, %v3132
      %v3149 = vmul.f32 %v2537, %v3133
      %v3150 = vmul.f32 %v2538, %v3134
      %v3151 = vmul.f32 %v2539, %v3135
      %v3152 = vmul.f32 %v2540, %v3136
      %v3153 = vmul.f32 %v2541, %v3137
      %v3154 = vmul.f32 %v2542, %v3138
      %v3155 = vmul.f32 %v2543, %v3139
      %v3156 = vmul.f32 %v2544, %v3140
      %v3157 = vmul.f32 %v2545, %v3141
      // While loop
      $region98: #{tpu_custom_call.1} parent=75 // loop_pre_header
        _
      $region99: #{tpu_custom_call.1} parent=75 // loop_header
        %s3159 = sphi 0, %s3161
        %p3160 = scmp.ge.s32.totalorder %s3159, %s1213
        %v3164 = vphi -1e+30, %v3449
        %v3165 = vphi -1e+30, %v3450
        %v3166 = vphi -1e+30, %v3451
        %v3167 = vphi -1e+30, %v3452
        %v3168 = vphi -1e+30, %v3453
        %v3169 = vphi -1e+30, %v3454
        %v3170 = vphi -1e+30, %v3455
        %v3171 = vphi -1e+30, %v3456
        %v3172 = vphi -1e+30, %v3457
        %v3173 = vphi -1e+30, %v3458
        %v3174 = vphi -1e+30, %v3459
        %v3175 = vphi -1e+30, %v3460
        %v3176 = vphi -1e+30, %v3461
        %v3177 = vphi -1e+30, %v3462
        %v3178 = vphi -1e+30, %v3463
        %v3179 = vphi -1e+30, %v3464
        %v3180 = vphi 0.0, %v3609
        %v3181 = vphi 0.0, %v3610
        %v3182 = vphi 0.0, %v3611
        %v3183 = vphi 0.0, %v3612
        %v3184 = vphi 0.0, %v3613
        %v3185 = vphi 0.0, %v3614
        %v3186 = vphi 0.0, %v3615
        %v3187 = vphi 0.0, %v3616
        %v3188 = vphi 0.0, %v3617
        %v3189 = vphi 0.0, %v3618
        %v3190 = vphi 0.0, %v3619
        %v3191 = vphi 0.0, %v3620
        %v3192 = vphi 0.0, %v3621
        %v3193 = vphi 0.0, %v3622
        %v3194 = vphi 0.0, %v3623
        %v3195 = vphi 0.0, %v3624
        %v3196 = vphi 0.0, %v3778
        %v3197 = vphi 0.0, %v3779
        %v3198 = vphi 0.0, %v3780
        %v3199 = vphi 0.0, %v3781
        %v3200 = vphi 0.0, %v3782
        %v3201 = vphi 0.0, %v3783
        %v3202 = vphi 0.0, %v3784
        %v3203 = vphi 0.0, %v3785
        %v3204 = vphi 0.0, %v3786
        %v3205 = vphi 0.0, %v3787
        %v3206 = vphi 0.0, %v3788
        %v3207 = vphi 0.0, %v3789
        %v3208 = vphi 0.0, %v3790
        %v3209 = vphi 0.0, %v3791
        %v3210 = vphi 0.0, %v3792
        %v3211 = vphi 0.0, %v3793
      $region100: #{tpu_custom_call.1} parent=75 // loop_header_branch
        %3163 = sbr.rel (%p3160) target = $region104
      $region101: #{tpu_custom_call.1} parent=75 // loop_body
        %s3212 = smul.u32 %s3159, 128
        %s3213 = sshra.s32 %s3212, 7
        %s3214 = sand.u32 %s3212, 127
        %s3215 = smul.addr %s3213, 8
        %s3216 = scalar_lea.vmem [#allocation2], %s3215
        %v3217 = vld [vmem:[%s3216 + $0x8] sm:$0xf0]
        %s3218 = sshra.s32 %s3212, 4
        %s3219 = sand.u32 %s3212, 15
        %s3220 = smul.addr %s3218, 8
        %s3221 = scalar_lea.vmem [#allocation3], %s3220
        %v3222 = vld [vmem:[%s3221] sm:$0xff]
        %v3223 = vld [vmem:[%s3221 + $0x8] sm:$0xff]
        %v3224 = vld [vmem:[%s3221 + $0x10] sm:$0xff]
        %v3225 = vld [vmem:[%s3221 + $0x18] sm:$0xff]
        %v3226 = vld [vmem:[%s3221 + $0x20] sm:$0xff]
        %v3227 = vld [vmem:[%s3221 + $0x28] sm:$0xff]
        %v3228 = vld [vmem:[%s3221 + $0x30] sm:$0xff]
        %v3229 = vld [vmem:[%s3221 + $0x38] sm:$0xff]
        %3238 = vrot.lane.b32.xlu0 %v959, 104
        %v3239 = vpop.permute.xlu0 %3238
        %3240 = vrot.lane.b32.xlu0 %v960, 104
        %v3241 = vpop.permute.xlu0 %3240
        %3242 = vrot.lane.b32.xlu0 %v961, 104
        %v3243 = vpop.permute.xlu0 %3242
        %3244 = vrot.lane.b32.xlu0 %v962, 104
        %v3245 = vpop.permute.xlu0 %3244
        %3246 = vrot.lane.b32.xlu0 %v963, 104
        %v3247 = vpop.permute.xlu0 %3246
        %3248 = vrot.lane.b32.xlu0 %v964, 104
        %v3249 = vpop.permute.xlu0 %3248
        %3250 = vrot.lane.b32.xlu0 %v965, 104
        %v3251 = vpop.permute.xlu0 %3250
        %3252 = vrot.lane.b32.xlu0 %v966, 104
        %v3253 = vpop.permute.xlu0 %3252
        %v3255 = vrot.slane %v3217, 4
        %vm3256 = vcmask 64512
        %v3258 = vsel %vm3256, %v3239, 0
        %v3261 = vsel %vm3256, %v3241, 0
        %v3264 = vsel %vm3256, %v3243, 0
        %v3267 = vsel %vm3256, %v3245, 0
        %v3270 = vsel %vm3256, %v3247, 0
        %v3273 = vsel %vm3256, %v3249, 0
        %v3276 = vsel %vm3256, %v3251, 0
        %v3279 = vsel %vm3256, %v3253, 0
        %vm3281 = vcmask 1043456
        %v3283 = vsel %vm3281, %v3255, 0
        %3285 = vmatprep.subr.bf16.mxu0 0
        %3286 = vmatpush1.bf16.msra.mxu0 %v3283
        %3287 = vmatprep.subr.bf16.mxu0 0
        %3288 = vmatpush1.bf16.msra.mxu0 0
        %3289 = vmatprep.subr.bf16.mxu0 0
        %3290 = vmatpush1.bf16.msra.mxu0 0
        %3291 = vmatprep.subr.bf16.mxu0 0
        %3292 = vmatpush1.bf16.msra.mxu0 0
        %3293 = vmatprep.subr.bf16.mxu0 0
        %3294 = vmatpush1.bf16.msra.mxu0 0
        %3295 = vmatprep.subr.bf16.mxu0 0
        %3296 = vmatpush1.bf16.msra.mxu0 0
        %3297 = vmatprep.subr.bf16.mxu0 0
        %3298 = vmatpush1.bf16.msra.mxu0 0
        %3299 = vmatprep.subr.bf16.mxu0 0
        %3300 = vmatpush1.bf16.msra.mxu0 0
        %3301 = vmatprep.subr.bf16.mxu0 0
        %3302 = vmatpush1.bf16.msra.mxu0 0
        %3303 = vmatprep.subr.bf16.mxu0 0
        %3304 = vmatpush1.bf16.msra.mxu0 0
        %3305 = vmatprep.subr.bf16.mxu0 0
        %3306 = vmatpush1.bf16.msra.mxu0 0
        %3307 = vmatprep.subr.bf16.mxu0 0
        %3308 = vmatpush1.bf16.msra.mxu0 0
        %3309 = vmatprep.subr.bf16.mxu0 0
        %3310 = vmatpush1.bf16.msra.mxu0 0
        %3311 = vmatprep.subr.bf16.mxu0 0
        %3312 = vmatpush1.bf16.msra.mxu0 0
        %3313 = vmatprep.subr.bf16.mxu0 0
        %3314 = vmatpush1.bf16.msra.mxu0 0
        %3315 = vmatprep.subr.bf16.mxu0 0
        %3316 = vmatpush1.bf16.msra.mxu0 0
        %3317 = vmatprep.mubr.bf16.mxu0 0
        %3318 = vmatmul.mubr.bf16.gmra.mrb[0].mxu0 %v3258
        %v3319 = vpop.f32.mrb[0].mxu0
        %v3320 = vadd.f32 0.0, %v3319
        %v3321 = vpop.f32.mrb[0].mxu0
        %v3322 = vpop.f32.mrb[0].mxu0
        %v3323 = vadd.f32 0.0, %v3322
        %v3324 = vpop.f32.mrb[0].mxu0
        %3325 = vmatprep.mubr.bf16.mxu0 0
        %3326 = vmatmul.mubr.bf16.gmra.mrb[0].mxu0 %v3261
        %v3327 = vpop.f32.mrb[0].mxu0
        %v3328 = vadd.f32 0.0, %v3327
        %v3329 = vpop.f32.mrb[0].mxu0
        %v3330 = vpop.f32.mrb[0].mxu0
        %v3331 = vadd.f32 0.0, %v3330
        %v3332 = vpop.f32.mrb[0].mxu0
        %3333 = vmatprep.mubr.bf16.mxu0 0
        %3334 = vmatmul.mubr.bf16.gmra.mrb[0].mxu0 %v3264
        %v3335 = vpop.f32.mrb[0].mxu0
        %v3336 = vadd.f32 0.0, %v3335
        %v3337 = vpop.f32.mrb[0].mxu0
        %v3338 = vpop.f32.mrb[0].mxu0
        %v3339 = vadd.f32 0.0, %v3338
        %v3340 = vpop.f32.mrb[0].mxu0
        %3341 = vmatprep.mubr.bf16.mxu0 0
        %3342 = vmatmul.mubr.bf16.gmra.mrb[0].mxu0 %v3267
        %v3343 = vpop.f32.mrb[0].mxu0
        %v3344 = vadd.f32 0.0, %v3343
        %v3345 = vpop.f32.mrb[0].mxu0
        %v3346 = vpop.f32.mrb[0].mxu0
        %v3347 = vadd.f32 0.0, %v3346
        %v3348 = vpop.f32.mrb[0].mxu0
        %3349 = vmatprep.mubr.bf16.mxu0 0
        %3350 = vmatmul.mubr.bf16.gmra.mrb[0].mxu0 %v3270
        %v3351 = vpop.f32.mrb[0].mxu0
        %v3352 = vadd.f32 0.0, %v3351
        %v3353 = vpop.f32.mrb[0].mxu0
        %v3354 = vpop.f32.mrb[0].mxu0
        %v3355 = vadd.f32 0.0, %v3354
        %v3356 = vpop.f32.mrb[0].mxu0
        %3357 = vmatprep.mubr.bf16.mxu0 0
        %3358 = vmatmul.mubr.bf16.gmra.mrb[0].mxu0 %v3273
        %v3359 = vpop.f32.mrb[0].mxu0
        %v3360 = vadd.f32 0.0, %v3359
        %v3361 = vpop.f32.mrb[0].mxu0
        %v3362 = vpop.f32.mrb[0].mxu0
        %v3363 = vadd.f32 0.0, %v3362
        %v3364 = vpop.f32.mrb[0].mxu0
        %3365 = vmatprep.mubr.bf16.mxu0 0
        %3366 = vmatmul.mubr.bf16.gmra.mrb[0].mxu0 %v3276
        %v3367 = vpop.f32.mrb[0].mxu0
        %v3368 = vadd.f32 0.0, %v3367
        %v3369 = vpop.f32.mrb[0].mxu0
        %v3370 = vpop.f32.mrb[0].mxu0
        %v3371 = vadd.f32 0.0, %v3370
        %v3372 = vpop.f32.mrb[0].mxu0
        %3373 = vmatprep.mubr.bf16.mxu0 0
        %3374 = vmatmul.mubr.bf16.gmra.mrb[0].mxu0 %v3279
        %v3375 = vpop.f32.mrb[0].mxu0
        %v3376 = vadd.f32 0.0, %v3375
        %v3377 = vpop.f32.mrb[0].mxu0
        %v3378 = vpop.f32.mrb[0].mxu0
        %v3379 = vadd.f32 0.0, %v3378
        %v3380 = vpop.f32.mrb[0].mxu0
        %3381 = vdwg.mxu0
        %s3382 = ssub.s32 %s3159, %s30
        %s3383 = smul.u32 %s3382, 128
        %v3384 = vstv %s3383
        %vm3385 = vcmp.ge.s32.totalorder %v1197, %v3384
        %vm3386 = vcmp.ge.s32.totalorder %v1198, %v3384
        %vm3387 = vcmp.ge.s32.totalorder %v1199, %v3384
        %vm3388 = vcmp.ge.s32.totalorder %v1200, %v3384
        %vm3389 = vcmp.ge.s32.totalorder %v1201, %v3384
        %vm3390 = vcmp.ge.s32.totalorder %v1202, %v3384
        %vm3391 = vcmp.ge.s32.totalorder %v1203, %v3384
        %vm3392 = vcmp.ge.s32.totalorder %v1204, %v3384
        %vm3393 = vcmp.ge.s32.totalorder %v1205, %v3384
        %vm3394 = vcmp.ge.s32.totalorder %v1206, %v3384
        %vm3395 = vcmp.ge.s32.totalorder %v1207, %v3384
        %vm3396 = vcmp.ge.s32.totalorder %v1208, %v3384
        %vm3397 = vcmp.ge.s32.totalorder %v1209, %v3384
        %vm3398 = vcmp.ge.s32.totalorder %v1210, %v3384
        %vm3399 = vcmp.ge.s32.totalorder %v1211, %v3384
        %vm3400 = vcmp.ge.s32.totalorder %v1212, %v3384
        %v3401 = vsel %vm3385, %v3320, -1e+30
        %v3402 = vsel %vm3386, %v3323, -1e+30
        %v3403 = vsel %vm3387, %v3328, -1e+30
        %v3404 = vsel %vm3388, %v3331, -1e+30
        %v3405 = vsel %vm3389, %v3336, -1e+30
        %v3406 = vsel %vm3390, %v3339, -1e+30
        %v3407 = vsel %vm3391, %v3344, -1e+30
        %v3408 = vsel %vm3392, %v3347, -1e+30
        %v3409 = vsel %vm3393, %v3352, -1e+30
        %v3410 = vsel %vm3394, %v3355, -1e+30
        %v3411 = vsel %vm3395, %v3360, -1e+30
        %v3412 = vsel %vm3396, %v3363, -1e+30
        %v3413 = vsel %vm3397, %v3368, -1e+30
        %v3414 = vsel %vm3398, %v3371, -1e+30
        %v3415 = vsel %vm3399, %v3376, -1e+30
        %v3416 = vsel %vm3400, %v3379, -1e+30
        %3417 = vmax.xlane.f32.xlu0 %v3401
        %v3418 = vpop.xlane.xlu0 %3417
        %3419 = vmax.xlane.f32.xlu0 %v3402
        %v3420 = vpop.xlane.xlu0 %3419
        %3421 = vmax.xlane.f32.xlu0 %v3403
        %v3422 = vpop.xlane.xlu0 %3421
        %3423 = vmax.xlane.f32.xlu0 %v3404
        %v3424 = vpop.xlane.xlu0 %3423
        %3425 = vmax.xlane.f32.xlu0 %v3405
        %v3426 = vpop.xlane.xlu0 %3425
        %3427 = vmax.xlane.f32.xlu0 %v3406
        %v3428 = vpop.xlane.xlu0 %3427
        %3429 = vmax.xlane.f32.xlu0 %v3407
        %v3430 = vpop.xlane.xlu0 %3429
        %3431 = vmax.xlane.f32.xlu0 %v3408
        %v3432 = vpop.xlane.xlu0 %3431
        %3433 = vmax.xlane.f32.xlu0 %v3409
        %v3434 = vpop.xlane.xlu0 %3433
        %3435 = vmax.xlane.f32.xlu0 %v3410
        %v3436 = vpop.xlane.xlu0 %3435
        %3437 = vmax.xlane.f32.xlu0 %v3411
        %v3438 = vpop.xlane.xlu0 %3437
        %3439 = vmax.xlane.f32.xlu0 %v3412
        %v3440 = vpop.xlane.xlu0 %3439
        %3441 = vmax.xlane.f32.xlu0 %v3413
        %v3442 = vpop.xlane.xlu0 %3441
        %3443 = vmax.xlane.f32.xlu0 %v3414
        %v3444 = vpop.xlane.xlu0 %3443
        %3445 = vmax.xlane.f32.xlu0 %v3415
        %v3446 = vpop.xlane.xlu0 %3445
        %3447 = vmax.xlane.f32.xlu0 %v3416
        %v3448 = vpop.xlane.xlu0 %3447
        %v3449 = vmax.f32 %v3164, %v3418
        %v3450 = vmax.f32 %v3165, %v3420
        %v3451 = vmax.f32 %v3166, %v3422
        %v3452 = vmax.f32 %v3167, %v3424
        %v3453 = vmax.f32 %v3168, %v3426
        %v3454 = vmax.f32 %v3169, %v3428
        %v3455 = vmax.f32 %v3170, %v3430
        %v3456 = vmax.f32 %v3171, %v3432
        %v3457 = vmax.f32 %v3172, %v3434
        %v3458 = vmax.f32 %v3173, %v3436
        %v3459 = vmax.f32 %v3174, %v3438
        %v3460 = vmax.f32 %v3175, %v3440
        %v3461 = vmax.f32 %v3176, %v3442
        %v3462 = vmax.f32 %v3177, %v3444
        %v3463 = vmax.f32 %v3178, %v3446
        %v3464 = vmax.f32 %v3179, %v3448
        %v3465 = vsub.f32 %v3164, %v3449
        %v3466 = vsub.f32 %v3165, %v3450
        %v3467 = vsub.f32 %v3166, %v3451
        %v3468 = vsub.f32 %v3167, %v3452
        %v3469 = vsub.f32 %v3168, %v3453
        %v3470 = vsub.f32 %v3169, %v3454
        %v3471 = vsub.f32 %v3170, %v3455
        %v3472 = vsub.f32 %v3171, %v3456
        %v3473 = vsub.f32 %v3172, %v3457
        %v3474 = vsub.f32 %v3173, %v3458
        %v3475 = vsub.f32 %v3174, %v3459
        %v3476 = vsub.f32 %v3175, %v3460
        %v3477 = vsub.f32 %v3176, %v3461
        %v3478 = vsub.f32 %v3177, %v3462
        %v3479 = vsub.f32 %v3178, %v3463
        %v3480 = vsub.f32 %v3179, %v3464
        %v3481 = vmul.f32 %v3465, 1.442695
        %v3482 = vpow.pop %v3481
        %v3483 = vmul.f32 %v3466, 1.442695
        %v3484 = vpow.pop %v3483
        %v3485 = vmul.f32 %v3467, 1.442695
        %v3486 = vpow.pop %v3485
        %v3487 = vmul.f32 %v3468, 1.442695
        %v3488 = vpow.pop %v3487
        %v3489 = vmul.f32 %v3469, 1.442695
        %v3490 = vpow.pop %v3489
        %v3491 = vmul.f32 %v3470, 1.442695
        %v3492 = vpow.pop %v3491
        %v3493 = vmul.f32 %v3471, 1.442695
        %v3494 = vpow.pop %v3493
        %v3495 = vmul.f32 %v3472, 1.442695
        %v3496 = vpow.pop %v3495
        %v3497 = vmul.f32 %v3473, 1.442695
        %v3498 = vpow.pop %v3497
        %v3499 = vmul.f32 %v3474, 1.442695
        %v3500 = vpow.pop %v3499
        %v3501 = vmul.f32 %v3475, 1.442695
        %v3502 = vpow.pop %v3501
        %v3503 = vmul.f32 %v3476, 1.442695
        %v3504 = vpow.pop %v3503
        %v3505 = vmul.f32 %v3477, 1.442695
        %v3506 = vpow.pop %v3505
        %v3507 = vmul.f32 %v3478, 1.442695
        %v3508 = vpow.pop %v3507
        %v3509 = vmul.f32 %v3479, 1.442695
        %v3510 = vpow.pop %v3509
        %v3511 = vmul.f32 %v3480, 1.442695
        %v3512 = vpow.pop %v3511
        %v3513 = vsub.f32 %v3401, %v3449
        %v3514 = vsub.f32 %v3402, %v3450
        %v3515 = vsub.f32 %v3403, %v3451
        %v3516 = vsub.f32 %v3404, %v3452
        %v3517 = vsub.f32 %v3405, %v3453
        %v3518 = vsub.f32 %v3406, %v3454
        %v3519 = vsub.f32 %v3407, %v3455
        %v3520 = vsub.f32 %v3408, %v3456
        %v3521 = vsub.f32 %v3409, %v3457
        %v3522 = vsub.f32 %v3410, %v3458
        %v3523 = vsub.f32 %v3411, %v3459
        %v3524 = vsub.f32 %v3412, %v3460
        %v3525 = vsub.f32 %v3413, %v3461
        %v3526 = vsub.f32 %v3414, %v3462
        %v3527 = vsub.f32 %v3415, %v3463
        %v3528 = vsub.f32 %v3416, %v3464
        %v3529 = vmul.f32 %v3513, 1.442695
        %v3530 = vpow.pop %v3529
        %v3531 = vmul.f32 %v3514, 1.442695
        %v3532 = vpow.pop %v3531
        %v3533 = vmul.f32 %v3515, 1.442695
        %v3534 = vpow.pop %v3533
        %v3535 = vmul.f32 %v3516, 1.442695
        %v3536 = vpow.pop %v3535
        %v3537 = vmul.f32 %v3517, 1.442695
        %v3538 = vpow.pop %v3537
        %v3539 = vmul.f32 %v3518, 1.442695
        %v3540 = vpow.pop %v3539
        %v3541 = vmul.f32 %v3519, 1.442695
        %v3542 = vpow.pop %v3541
        %v3543 = vmul.f32 %v3520, 1.442695
        %v3544 = vpow.pop %v3543
        %v3545 = vmul.f32 %v3521, 1.442695
        %v3546 = vpow.pop %v3545
        %v3547 = vmul.f32 %v3522, 1.442695
        %v3548 = vpow.pop %v3547
        %v3549 = vmul.f32 %v3523, 1.442695
        %v3550 = vpow.pop %v3549
        %v3551 = vmul.f32 %v3524, 1.442695
        %v3552 = vpow.pop %v3551
        %v3553 = vmul.f32 %v3525, 1.442695
        %v3554 = vpow.pop %v3553
        %v3555 = vmul.f32 %v3526, 1.442695
        %v3556 = vpow.pop %v3555
        %v3557 = vmul.f32 %v3527, 1.442695
        %v3558 = vpow.pop %v3557
        %v3559 = vmul.f32 %v3528, 1.442695
        %v3560 = vpow.pop %v3559
        %v3561 = vmul.f32 %v3482, %v3180
        %v3562 = vmul.f32 %v3484, %v3181
        %v3563 = vmul.f32 %v3486, %v3182
        %v3564 = vmul.f32 %v3488, %v3183
        %v3565 = vmul.f32 %v3490, %v3184
        %v3566 = vmul.f32 %v3492, %v3185
        %v3567 = vmul.f32 %v3494, %v3186
        %v3568 = vmul.f32 %v3496, %v3187
        %v3569 = vmul.f32 %v3498, %v3188
        %v3570 = vmul.f32 %v3500, %v3189
        %v3571 = vmul.f32 %v3502, %v3190
        %v3572 = vmul.f32 %v3504, %v3191
        %v3573 = vmul.f32 %v3506, %v3192
        %v3574 = vmul.f32 %v3508, %v3193
        %v3575 = vmul.f32 %v3510, %v3194
        %v3576 = vmul.f32 %v3512, %v3195
        %3577 = vadd.xlane.f32.xlu0 %v3530
        %v3578 = vpop.xlane.xlu0 %3577
        %3579 = vadd.xlane.f32.xlu0 %v3532
        %v3580 = vpop.xlane.xlu0 %3579
        %3581 = vadd.xlane.f32.xlu0 %v3534
        %v3582 = vpop.xlane.xlu0 %3581
        %3583 = vadd.xlane.f32.xlu0 %v3536
        %v3584 = vpop.xlane.xlu0 %3583
        %3585 = vadd.xlane.f32.xlu0 %v3538
        %v3586 = vpop.xlane.xlu0 %3585
        %3587 = vadd.xlane.f32.xlu0 %v3540
        %v3588 = vpop.xlane.xlu0 %3587
        %3589 = vadd.xlane.f32.xlu0 %v3542
        %v3590 = vpop.xlane.xlu0 %3589
        %3591 = vadd.xlane.f32.xlu0 %v3544
        %v3592 = vpop.xlane.xlu0 %3591
        %3593 = vadd.xlane.f32.xlu0 %v3546
        %v3594 = vpop.xlane.xlu0 %3593
        %3595 = vadd.xlane.f32.xlu0 %v3548
        %v3596 = vpop.xlane.xlu0 %3595
        %3597 = vadd.xlane.f32.xlu0 %v3550
        %v3598 = vpop.xlane.xlu0 %3597
        %3599 = vadd.xlane.f32.xlu0 %v3552
        %v3600 = vpop.xlane.xlu0 %3599
        %3601 = vadd.xlane.f32.xlu0 %v3554
        %v3602 = vpop.xlane.xlu0 %3601
        %3603 = vadd.xlane.f32.xlu0 %v3556
        %v3604 = vpop.xlane.xlu0 %3603
        %3605 = vadd.xlane.f32.xlu0 %v3558
        %v3606 = vpop.xlane.xlu0 %3605
        %3607 = vadd.xlane.f32.xlu0 %v3560
        %v3608 = vpop.xlane.xlu0 %3607
        %v3609 = vadd.f32 %v3561, %v3578
        %v3610 = vadd.f32 %v3562, %v3580
        %v3611 = vadd.f32 %v3563, %v3582
        %v3612 = vadd.f32 %v3564, %v3584
        %v3613 = vadd.f32 %v3565, %v3586
        %v3614 = vadd.f32 %v3566, %v3588
        %v3615 = vadd.f32 %v3567, %v3590
        %v3616 = vadd.f32 %v3568, %v3592
        %v3617 = vadd.f32 %v3569, %v3594
        %v3618 = vadd.f32 %v3570, %v3596
        %v3619 = vadd.f32 %v3571, %v3598
        %v3620 = vadd.f32 %v3572, %v3600
        %v3621 = vadd.f32 %v3573, %v3602
        %v3622 = vadd.f32 %v3574, %v3604
        %v3623 = vadd.f32 %v3575, %v3606
        %v3624 = vadd.f32 %v3576, %v3608
        %v3625 = vmul.f32 %v3482, %v3196
        %v3626 = vmul.f32 %v3484, %v3197
        %v3627 = vmul.f32 %v3486, %v3198
        %v3628 = vmul.f32 %v3488, %v3199
        %v3629 = vmul.f32 %v3490, %v3200
        %v3630 = vmul.f32 %v3492, %v3201
        %v3631 = vmul.f32 %v3494, %v3202
        %v3632 = vmul.f32 %v3496, %v3203
        %v3633 = vmul.f32 %v3498, %v3204
        %v3634 = vmul.f32 %v3500, %v3205
        %v3635 = vmul.f32 %v3502, %v3206
        %v3636 = vmul.f32 %v3504, %v3207
        %v3637 = vmul.f32 %v3506, %v3208
        %v3638 = vmul.f32 %v3508, %v3209
        %v3639 = vmul.f32 %v3510, %v3210
        %v3640 = vmul.f32 %v3512, %v3211
        %v3641 = vpack.c.bf16 %v3532, %v3530
        %v3642 = vpack.c.bf16 %v3536, %v3534
        %v3643 = vpack.c.bf16 %v3540, %v3538
        %v3644 = vpack.c.bf16 %v3544, %v3542
        %v3645 = vpack.c.bf16 %v3548, %v3546
        %v3646 = vpack.c.bf16 %v3552, %v3550
        %v3647 = vpack.c.bf16 %v3556, %v3554
        %v3648 = vpack.c.bf16 %v3560, %v3558
        %3657 = vrot.lane.b32.xlu0 %v3222, 104
        %v3658 = vpop.permute.xlu0 %3657
        %3659 = vrot.lane.b32.xlu0 %v3223, 104
        %v3660 = vpop.permute.xlu0 %3659
        %3661 = vrot.lane.b32.xlu0 %v3224, 104
        %v3662 = vpop.permute.xlu0 %3661
        %3663 = vrot.lane.b32.xlu0 %v3225, 104
        %v3664 = vpop.permute.xlu0 %3663
        %3665 = vrot.lane.b32.xlu0 %v3226, 104
        %v3666 = vpop.permute.xlu0 %3665
        %3667 = vrot.lane.b32.xlu0 %v3227, 104
        %v3668 = vpop.permute.xlu0 %3667
        %3669 = vrot.lane.b32.xlu0 %v3228, 104
        %v3670 = vpop.permute.xlu0 %3669
        %3671 = vrot.lane.b32.xlu0 %v3229, 104
        %v3672 = vpop.permute.xlu0 %3671
        %3681 = vmatprep.subr.bf16.mxu0 0
        %3682 = vmatpush1.bf16.msra.mxu0 %v3658
        %3683 = vmatprep.subr.bf16.mxu0 0
        %3684 = vmatpush1.bf16.msra.mxu0 %v3660
        %3685 = vmatprep.subr.bf16.mxu0 0
        %3686 = vmatpush1.bf16.msra.mxu0 %v3662
        %3687 = vmatprep.subr.bf16.mxu0 0
        %3688 = vmatpush1.bf16.msra.mxu0 %v3664
        %3689 = vmatprep.subr.bf16.mxu0 0
        %3690 = vmatpush1.bf16.msra.mxu0 %v3666
        %3691 = vmatprep.subr.bf16.mxu0 0
        %3692 = vmatpush1.bf16.msra.mxu0 %v3668
        %3693 = vmatprep.subr.bf16.mxu0 0
        %3694 = vmatpush1.bf16.msra.mxu0 %v3670
        %3695 = vmatprep.subr.bf16.mxu0 0
        %3696 = vmatpush1.bf16.msra.mxu0 %v3672
        %3697 = vmatprep.subr.bf16.mxu0 0
        %3698 = vmatpush1.bf16.msra.mxu0 0
        %3699 = vmatprep.subr.bf16.mxu0 0
        %3700 = vmatpush1.bf16.msra.mxu0 0
        %3701 = vmatprep.subr.bf16.mxu0 0
        %3702 = vmatpush1.bf16.msra.mxu0 0
        %3703 = vmatprep.subr.bf16.mxu0 0
        %3704 = vmatpush1.bf16.msra.mxu0 0
        %3705 = vmatprep.subr.bf16.mxu0 0
        %3706 = vmatpush1.bf16.msra.mxu0 0
        %3707 = vmatprep.subr.bf16.mxu0 0
        %3708 = vmatpush1.bf16.msra.mxu0 0
        %3709 = vmatprep.subr.bf16.mxu0 0
        %3710 = vmatpush1.bf16.msra.mxu0 0
        %3711 = vmatprep.subr.bf16.mxu0 0
        %3712 = vmatpush1.bf16.msra.mxu0 0
        %3713 = vmatprep.mubr.bf16.mxu0 0
        %3714 = vmatmul.mubr.bf16.gmra.mrb[0].mxu0 %v3641
        %v3715 = vpop.f32.mrb[0].mxu0
        %v3716 = vadd.f32 0.0, %v3715
        %v3717 = vpop.f32.mrb[0].mxu0
        %v3718 = vpop.f32.mrb[0].mxu0
        %v3719 = vadd.f32 0.0, %v3718
        %v3720 = vpop.f32.mrb[0].mxu0
        %3721 = vmatprep.mubr.bf16.mxu0 0
        %3722 = vmatmul.mubr.bf16.gmra.mrb[0].mxu0 %v3642
        %v3723 = vpop.f32.mrb[0].mxu0
        %v3724 = vadd.f32 0.0, %v3723
        %v3725 = vpop.f32.mrb[0].mxu0
        %v3726 = vpop.f32.mrb[0].mxu0
        %v3727 = vadd.f32 0.0, %v3726
        %v3728 = vpop.f32.mrb[0].mxu0
        %3729 = vmatprep.mubr.bf16.mxu0 0
        %3730 = vmatmul.mubr.bf16.gmra.mrb[0].mxu0 %v3643
        %v3731 = vpop.f32.mrb[0].mxu0
        %v3732 = vadd.f32 0.0, %v3731
        %v3733 = vpop.f32.mrb[0].mxu0
        %v3734 = vpop.f32.mrb[0].mxu0
        %v3735 = vadd.f32 0.0, %v3734
        %v3736 = vpop.f32.mrb[0].mxu0
        %3737 = vmatprep.mubr.bf16.mxu0 0
        %3738 = vmatmul.mubr.bf16.gmra.mrb[0].mxu0 %v3644
        %v3739 = vpop.f32.mrb[0].mxu0
        %v3740 = vadd.f32 0.0, %v3739
        %v3741 = vpop.f32.mrb[0].mxu0
        %v3742 = vpop.f32.mrb[0].mxu0
        %v3743 = vadd.f32 0.0, %v3742
        %v3744 = vpop.f32.mrb[0].mxu0
        %3745 = vmatprep.mubr.bf16.mxu0 0
        %3746 = vmatmul.mubr.bf16.gmra.mrb[0].mxu0 %v3645
        %v3747 = vpop.f32.mrb[0].mxu0
        %v3748 = vadd.f32 0.0, %v3747
        %v3749 = vpop.f32.mrb[0].mxu0
        %v3750 = vpop.f32.mrb[0].mxu0
        %v3751 = vadd.f32 0.0, %v3750
        %v3752 = vpop.f32.mrb[0].mxu0
        %3753 = vmatprep.mubr.bf16.mxu0 0
        %3754 = vmatmul.mubr.bf16.gmra.mrb[0].mxu0 %v3646
        %v3755 = vpop.f32.mrb[0].mxu0
        %v3756 = vadd.f32 0.0, %v3755
        %v3757 = vpop.f32.mrb[0].mxu0
        %v3758 = vpop.f32.mrb[0].mxu0
        %v3759 = vadd.f32 0.0, %v3758
        %v3760 = vpop.f32.mrb[0].mxu0
        %3761 = vmatprep.mubr.bf16.mxu0 0
        %3762 = vmatmul.mubr.bf16.gmra.mrb[0].mxu0 %v3647
        %v3763 = vpop.f32.mrb[0].mxu0
        %v3764 = vadd.f32 0.0, %v3763
        %v3765 = vpop.f32.mrb[0].mxu0
        %v3766 = vpop.f32.mrb[0].mxu0
        %v3767 = vadd.f32 0.0, %v3766
        %v3768 = vpop.f32.mrb[0].mxu0
        %3769 = vmatprep.mubr.bf16.mxu0 0
        %3770 = vmatmul.mubr.bf16.gmra.mrb[0].mxu0 %v3648
        %v3771 = vpop.f32.mrb[0].mxu0
        %v3772 = vadd.f32 0.0, %v3771
        %v3773 = vpop.f32.mrb[0].mxu0
        %v3774 = vpop.f32.mrb[0].mxu0
        %v3775 = vadd.f32 0.0, %v3774
        %v3776 = vpop.f32.mrb[0].mxu0
        %3777 = vdwg.mxu0
        %v3778 = vadd.f32 %v3625, %v3716
        %v3779 = vadd.f32 %v3626, %v3719
        %v3780 = vadd.f32 %v3627, %v3724
        %v3781 = vadd.f32 %v3628, %v3727
        %v3782 = vadd.f32 %v3629, %v3732
        %v3783 = vadd.f32 %v3630, %v3735
        %v3784 = vadd.f32 %v3631, %v3740
        %v3785 = vadd.f32 %v3632, %v3743
        %v3786 = vadd.f32 %v3633, %v3748
        %v3787 = vadd.f32 %v3634, %v3751
        %v3788 = vadd.f32 %v3635, %v3756
        %v3789 = vadd.f32 %v3636, %v3759
        %v3790 = vadd.f32 %v3637, %v3764
        %v3791 = vadd.f32 %v3638, %v3767
        %v3792 = vadd.f32 %v3639, %v3772
        %v3793 = vadd.f32 %v3640, %v3775
      $region102: #{tpu_custom_call.1} parent=75 // loop_footer
        %s3161 = sadd.s32 %s3159, 1
      $region103: #{tpu_custom_call.1} parent=75 // loop_footer_branch
        %3158 = sbr.rel target = $region99
      $region104: #{tpu_custom_call.1} parent=75 // loop_exit
        _
      %v3794 = vrcp.pop %v3180
      %v3795 = vrcp.pop %v3181
      %v3796 = vrcp.pop %v3182
      %v3797 = vrcp.pop %v3183
      %v3798 = vrcp.pop %v3184
      %v3799 = vrcp.pop %v3185
      %v3800 = vrcp.pop %v3186
      %v3801 = vrcp.pop %v3187
      %v3802 = vrcp.pop %v3188
      %v3803 = vrcp.pop %v3189
      %v3804 = vrcp.pop %v3190
      %v3805 = vrcp.pop %v3191
      %v3806 = vrcp.pop %v3192
      %v3807 = vrcp.pop %v3193
      %v3808 = vrcp.pop %v3194
      %v3809 = vrcp.pop %v3195
      %v3810 = vmul.f32 %v3196, %v3794
      %v3811 = vmul.f32 %v3197, %v3795
      %v3812 = vmul.f32 %v3198, %v3796
      %v3813 = vmul.f32 %v3199, %v3797
      %v3814 = vmul.f32 %v3200, %v3798
      %v3815 = vmul.f32 %v3201, %v3799
      %v3816 = vmul.f32 %v3202, %v3800
      %v3817 = vmul.f32 %v3203, %v3801
      %v3818 = vmul.f32 %v3204, %v3802
      %v3819 = vmul.f32 %v3205, %v3803
      %v3820 = vmul.f32 %v3206, %v3804
      %v3821 = vmul.f32 %v3207, %v3805
      %v3822 = vmul.f32 %v3208, %v3806
      %v3823 = vmul.f32 %v3209, %v3807
      %v3824 = vmul.f32 %v3210, %v3808
      %v3825 = vmul.f32 %v3211, %v3809
      %3842 = vrot.lane.b32.xlu0 %v2476, 8
      %v3843 = vpop.permute.xlu0 %3842
      %3844 = vrot.lane.b32.xlu0 %v2477, 8
      %v3845 = vpop.permute.xlu0 %3844
      %3846 = vrot.lane.b32.xlu0 %v2478, 8
      %v3847 = vpop.permute.xlu0 %3846
      %3848 = vrot.lane.b32.xlu0 %v2479, 8
      %v3849 = vpop.permute.xlu0 %3848
      %3850 = vrot.lane.b32.xlu0 %v2480, 8
      %v3851 = vpop.permute.xlu0 %3850
      %3852 = vrot.lane.b32.xlu0 %v2481, 8
      %v3853 = vpop.permute.xlu0 %3852
      %3854 = vrot.lane.b32.xlu0 %v2482, 8
      %v3855 = vpop.permute.xlu0 %3854
      %3856 = vrot.lane.b32.xlu0 %v2483, 8
      %v3857 = vpop.permute.xlu0 %3856
      %3858 = vrot.lane.b32.xlu0 %v2484, 8
      %v3859 = vpop.permute.xlu0 %3858
      %3860 = vrot.lane.b32.xlu0 %v2485, 8
      %v3861 = vpop.permute.xlu0 %3860
      %3862 = vrot.lane.b32.xlu0 %v2486, 8
      %v3863 = vpop.permute.xlu0 %3862
      %3864 = vrot.lane.b32.xlu0 %v2487, 8
      %v3865 = vpop.permute.xlu0 %3864
      %3866 = vrot.lane.b32.xlu0 %v2488, 8
      %v3867 = vpop.permute.xlu0 %3866
      %3868 = vrot.lane.b32.xlu0 %v2489, 8
      %v3869 = vpop.permute.xlu0 %3868
      %3870 = vrot.lane.b32.xlu0 %v2490, 8
      %v3871 = vpop.permute.xlu0 %3870
      %3872 = vrot.lane.b32.xlu0 %v2491, 8
      %v3873 = vpop.permute.xlu0 %3872
      %3906 = vrot.lane.b32.xlu0 %v3142, 16
      %v3907 = vpop.permute.xlu0 %3906
      %3908 = vrot.lane.b32.xlu0 %v3143, 16
      %v3909 = vpop.permute.xlu0 %3908
      %3910 = vrot.lane.b32.xlu0 %v3144, 16
      %v3911 = vpop.permute.xlu0 %3910
      %3912 = vrot.lane.b32.xlu0 %v3145, 16
      %v3913 = vpop.permute.xlu0 %3912
      %3914 = vrot.lane.b32.xlu0 %v3146, 16
      %v3915 = vpop.permute.xlu0 %3914
      %3916 = vrot.lane.b32.xlu0 %v3147, 16
      %v3917 = vpop.permute.xlu0 %3916
      %3918 = vrot.lane.b32.xlu0 %v3148, 16
      %v3919 = vpop.permute.xlu0 %3918
      %3920 = vrot.lane.b32.xlu0 %v3149, 16
      %v3921 = vpop.permute.xlu0 %3920
      %3922 = vrot.lane.b32.xlu0 %v3150, 16
      %v3923 = vpop.permute.xlu0 %3922
      %3924 = vrot.lane.b32.xlu0 %v3151, 16
      %v3925 = vpop.permute.xlu0 %3924
      %3926 = vrot.lane.b32.xlu0 %v3152, 16
      %v3927 = vpop.permute.xlu0 %3926
      %3928 = vrot.lane.b32.xlu0 %v3153, 16
      %v3929 = vpop.permute.xlu0 %3928
      %3930 = vrot.lane.b32.xlu0 %v3154, 16
      %v3931 = vpop.permute.xlu0 %3930
      %3932 = vrot.lane.b32.xlu0 %v3155, 16
      %v3933 = vpop.permute.xlu0 %3932
      %3934 = vrot.lane.b32.xlu0 %v3156, 16
      %v3935 = vpop.permute.xlu0 %3934
      %3936 = vrot.lane.b32.xlu0 %v3157, 16
      %v3937 = vpop.permute.xlu0 %3936
      %3970 = vrot.lane.b32.xlu0 %v3810, 24
      %v3971 = vpop.permute.xlu0 %3970
      %3972 = vrot.lane.b32.xlu0 %v3811, 24
      %v3973 = vpop.permute.xlu0 %3972
      %3974 = vrot.lane.b32.xlu0 %v3812, 24
      %v3975 = vpop.permute.xlu0 %3974
      %3976 = vrot.lane.b32.xlu0 %v3813, 24
      %v3977 = vpop.permute.xlu0 %3976
      %3978 = vrot.lane.b32.xlu0 %v3814, 24
      %v3979 = vpop.permute.xlu0 %3978
      %3980 = vrot.lane.b32.xlu0 %v3815, 24
      %v3981 = vpop.permute.xlu0 %3980
      %3982 = vrot.lane.b32.xlu0 %v3816, 24
      %v3983 = vpop.permute.xlu0 %3982
      %3984 = vrot.lane.b32.xlu0 %v3817, 24
      %v3985 = vpop.permute.xlu0 %3984
      %3986 = vrot.lane.b32.xlu0 %v3818, 24
      %v3987 = vpop.permute.xlu0 %3986
      %3988 = vrot.lane.b32.xlu0 %v3819, 24
      %v3989 = vpop.permute.xlu0 %3988
      %3990 = vrot.lane.b32.xlu0 %v3820, 24
      %v3991 = vpop.permute.xlu0 %3990
      %3992 = vrot.lane.b32.xlu0 %v3821, 24
      %v3993 = vpop.permute.xlu0 %3992
      %3994 = vrot.lane.b32.xlu0 %v3822, 24
      %v3995 = vpop.permute.xlu0 %3994
      %3996 = vrot.lane.b32.xlu0 %v3823, 24
      %v3997 = vpop.permute.xlu0 %3996
      %3998 = vrot.lane.b32.xlu0 %v3824, 24
      %v3999 = vpop.permute.xlu0 %3998
      %4000 = vrot.lane.b32.xlu0 %v3825, 24
      %v4001 = vpop.permute.xlu0 %4000
      %vm4018 = vcmask 64512
      %v4019 = vsel %vm4018, %v1808, %v3843
      %v4020 = vsel %vm4018, %v1809, %v3845
      %v4021 = vsel %vm4018, %v1810, %v3847
      %v4022 = vsel %vm4018, %v1811, %v3849
      %v4023 = vsel %vm4018, %v1812, %v3851
      %v4024 = vsel %vm4018, %v1813, %v3853
      %v4025 = vsel %vm4018, %v1814, %v3855
      %v4026 = vsel %vm4018, %v1815, %v3857
      %v4027 = vsel %vm4018, %v1816, %v3859
      %v4028 = vsel %vm4018, %v1817, %v3861
      %v4029 = vsel %vm4018, %v1818, %v3863
      %v4030 = vsel %vm4018, %v1819, %v3865
      %v4031 = vsel %vm4018, %v1820, %v3867
      %v4032 = vsel %vm4018, %v1821, %v3869
      %v4033 = vsel %vm4018, %v1822, %v3871
      %v4034 = vsel %vm4018, %v1823, %v3873
      %vm4035 = vcmask 130048
      %v4036 = vsel %vm4035, %v4019, %v3907
      %v4037 = vsel %vm4035, %v4020, %v3909
      %v4038 = vsel %vm4035, %v4021, %v3911
      %v4039 = vsel %vm4035, %v4022, %v3913
      %v4040 = vsel %vm4035, %v4023, %v3915
      %v4041 = vsel %vm4035, %v4024, %v3917
      %v4042 = vsel %vm4035, %v4025, %v3919
      %v4043 = vsel %vm4035, %v4026, %v3921
      %v4044 = vsel %vm4035, %v4027, %v3923
      %v4045 = vsel %vm4035, %v4028, %v3925
      %v4046 = vsel %vm4035, %v4029, %v3927
      %v4047 = vsel %vm4035, %v4030, %v3929
      %v4048 = vsel %vm4035, %v4031, %v3931
      %v4049 = vsel %vm4035, %v4032, %v3933
      %v4050 = vsel %vm4035, %v4033, %v3935
      %v4051 = vsel %vm4035, %v4034, %v3937
      %vm4052 = vcmask 195584
      %v4053 = vsel %vm4052, %v4036, %v3971
      %v4054 = vsel %vm4052, %v4037, %v3973
      %v4055 = vsel %vm4052, %v4038, %v3975
      %v4056 = vsel %vm4052, %v4039, %v3977
      %v4057 = vsel %vm4052, %v4040, %v3979
      %v4058 = vsel %vm4052, %v4041, %v3981
      %v4059 = vsel %vm4052, %v4042, %v3983
      %v4060 = vsel %vm4052, %v4043, %v3985
      %v4061 = vsel %vm4052, %v4044, %v3987
      %v4062 = vsel %vm4052, %v4045, %v3989
      %v4063 = vsel %vm4052, %v4046, %v3991
      %v4064 = vsel %vm4052, %v4047, %v3993
      %v4065 = vsel %vm4052, %v4048, %v3995
      %v4066 = vsel %vm4052, %v4049, %v3997
      %v4067 = vsel %vm4052, %v4050, %v3999
      %v4068 = vsel %vm4052, %v4051, %v4001
      %v4069 = vpack.c.bf16 %v4054, %v4053
      %v4070 = vpack.c.bf16 %v4056, %v4055
      %v4071 = vpack.c.bf16 %v4058, %v4057
      %v4072 = vpack.c.bf16 %v4060, %v4059
      %v4073 = vpack.c.bf16 %v4062, %v4061
      %v4074 = vpack.c.bf16 %v4064, %v4063
      %v4075 = vpack.c.bf16 %v4066, %v4065
      %v4076 = vpack.c.bf16 %v4068, %v4067
      %v4077 = vld [vmem:[%s6] sm:$0xf]
      %v4078 = vld [vmem:[%s6 + $0x4] sm:$0xf]
      %v4079 = vld [vmem:[%s6 + $0x8] sm:$0xf]
      %v4080 = vld [vmem:[%s6 + $0xc] sm:$0xf]
      %v4081 = vld [vmem:[%s7] sm:$0x1]
      %v4083 = vlaneseq
      %v4084 = vshrl.u32 %v4083, 7
      %v4085 = vsub.s32 0, %v4084
      %v4086 = vrot.slane %v4081, %v4085
      %v4092 = vunpack.c.l.b16 %v4077
      %v4093 = vunpack.c.l.b16 %v4078
      %v4094 = vunpack.c.l.b16 %v4079
      %v4095 = vunpack.c.l.b16 %v4080
      %v4096 = vpack.c.b16 %v4093, %v4092
      %v4097 = vpack.c.b16 %v4095, %v4094
      %v4101 = vsel %vm526, %v4069, 0
      %v4104 = vsel %vm526, %v4070, 0
      %v4107 = vsel %vm526, %v4071, 0
      %v4110 = vsel %vm526, %v4072, 0
      %v4113 = vsel %vm526, %v4073, 0
      %v4116 = vsel %vm526, %v4074, 0
      %v4119 = vsel %vm526, %v4075, 0
      %v4122 = vsel %vm526, %v4076, 0
      %4124 = vmatprep.subr.bf16.mxu0 0
      %4125 = vmatpush1.bf16.msra.mxu0 %v4096
      %4126 = vmatprep.subr.bf16.mxu0 0
      %4127 = vmatpush1.bf16.msra.mxu0 %v4097
      %4128 = vmatprep.subr.bf16.mxu0 0
      %4129 = vmatpush1.bf16.msra.mxu0 0
      %4130 = vmatprep.subr.bf16.mxu0 0
      %4131 = vmatpush1.bf16.msra.mxu0 0
      %4132 = vmatprep.subr.bf16.mxu0 0
      %4133 = vmatpush1.bf16.msra.mxu0 0
      %4134 = vmatprep.subr.bf16.mxu0 0
      %4135 = vmatpush1.bf16.msra.mxu0 0
      %4136 = vmatprep.subr.bf16.mxu0 0
      %4137 = vmatpush1.bf16.msra.mxu0 0
      %4138 = vmatprep.subr.bf16.mxu0 0
      %4139 = vmatpush1.bf16.msra.mxu0 0
      %4140 = vmatprep.subr.bf16.mxu0 0
      %4141 = vmatpush1.bf16.msra.mxu0 0
      %4142 = vmatprep.subr.bf16.mxu0 0
      %4143 = vmatpush1.bf16.msra.mxu0 0
      %4144 = vmatprep.subr.bf16.mxu0 0
      %4145 = vmatpush1.bf16.msra.mxu0 0
      %4146 = vmatprep.subr.bf16.mxu0 0
      %4147 = vmatpush1.bf16.msra.mxu0 0
      %4148 = vmatprep.subr.bf16.mxu0 0
      %4149 = vmatpush1.bf16.msra.mxu0 0
      %4150 = vmatprep.subr.bf16.mxu0 0
      %4151 = vmatpush1.bf16.msra.mxu0 0
      %4152 = vmatprep.subr.bf16.mxu0 0
      %4153 = vmatpush1.bf16.msra.mxu0 0
      %4154 = vmatprep.subr.bf16.mxu0 0
      %4155 = vmatpush1.bf16.msra.mxu0 0
      %4156 = vmatprep.mubr.bf16.mxu0 0
      %4157 = vmatmul.mubr.bf16.gmra.mrb[0].mxu0 %v4101
      %v4158 = vpop.f32.mrb[0].mxu0
      %v4159 = vadd.f32 %v4086, %v4158
      %v4160 = vpop.f32.mrb[0].mxu0
      %v4161 = vpop.f32.mrb[0].mxu0
      %v4162 = vadd.f32 %v4086, %v4161
      %v4163 = vpop.f32.mrb[0].mxu0
      %4164 = vmatprep.mubr.bf16.mxu0 0
      %4165 = vmatmul.mubr.bf16.gmra.mrb[0].mxu0 %v4104
      %v4166 = vpop.f32.mrb[0].mxu0
      %v4167 = vadd.f32 %v4086, %v4166
      %v4168 = vpop.f32.mrb[0].mxu0
      %v4169 = vpop.f32.mrb[0].mxu0
      %v4170 = vadd.f32 %v4086, %v4169
      %v4171 = vpop.f32.mrb[0].mxu0
      %4172 = vmatprep.mubr.bf16.mxu0 0
      %4173 = vmatmul.mubr.bf16.gmra.mrb[0].mxu0 %v4107
      %v4174 = vpop.f32.mrb[0].mxu0
      %v4175 = vadd.f32 %v4086, %v4174
      %v4176 = vpop.f32.mrb[0].mxu0
      %v4177 = vpop.f32.mrb[0].mxu0
      %v4178 = vadd.f32 %v4086, %v4177
      %v4179 = vpop.f32.mrb[0].mxu0
      %4180 = vmatprep.mubr.bf16.mxu0 0
      %4181 = vmatmul.mubr.bf16.gmra.mrb[0].mxu0 %v4110
      %v4182 = vpop.f32.mrb[0].mxu0
      %v4183 = vadd.f32 %v4086, %v4182
      %v4184 = vpop.f32.mrb[0].mxu0
      %v4185 = vpop.f32.mrb[0].mxu0
      %v4186 = vadd.f32 %v4086, %v4185
      %v4187 = vpop.f32.mrb[0].mxu0
      %4188 = vmatprep.mubr.bf16.mxu0 0
      %4189 = vmatmul.mubr.bf16.gmra.mrb[0].mxu0 %v4113
      %v4190 = vpop.f32.mrb[0].mxu0
      %v4191 = vadd.f32 %v4086, %v4190
      %v4192 = vpop.f32.mrb[0].mxu0
      %v4193 = vpop.f32.mrb[0].mxu0
      %v4194 = vadd.f32 %v4086, %v4193
      %v4195 = vpop.f32.mrb[0].mxu0
      %4196 = vmatprep.mubr.bf16.mxu0 0
      %4197 = vmatmul.mubr.bf16.gmra.mrb[0].mxu0 %v4116
      %v4198 = vpop.f32.mrb[0].mxu0
      %v4199 = vadd.f32 %v4086, %v4198
      %v4200 = vpop.f32.mrb[0].mxu0
      %v4201 = vpop.f32.mrb[0].mxu0
      %v4202 = vadd.f32 %v4086, %v4201
      %v4203 = vpop.f32.mrb[0].mxu0
      %4204 = vmatprep.mubr.bf16.mxu0 0
      %4205 = vmatmul.mubr.bf16.gmra.mrb[0].mxu0 %v4119
      %v4206 = vpop.f32.mrb[0].mxu0
      %v4207 = vadd.f32 %v4086, %v4206
      %v4208 = vpop.f32.mrb[0].mxu0
      %v4209 = vpop.f32.mrb[0].mxu0
      %v4210 = vadd.f32 %v4086, %v4209
      %v4211 = vpop.f32.mrb[0].mxu0
      %4212 = vmatprep.mubr.bf16.mxu0 0
      %4213 = vmatmul.mubr.bf16.gmra.mrb[0].mxu0 %v4122
      %v4214 = vpop.f32.mrb[0].mxu0
      %v4215 = vadd.f32 %v4086, %v4214
      %v4216 = vpop.f32.mrb[0].mxu0
      %v4217 = vpop.f32.mrb[0].mxu0
      %v4218 = vadd.f32 %v4086, %v4217
      %v4219 = vpop.f32.mrb[0].mxu0
      %4220 = vdwg.mxu0
      %v4221 = vadd.f32 %v508, %v4159
      %v4222 = vadd.f32 %v509, %v4162
      %v4223 = vadd.f32 %v510, %v4167
      %v4224 = vadd.f32 %v511, %v4170
      %v4225 = vadd.f32 %v512, %v4175
      %v4226 = vadd.f32 %v513, %v4178
      %v4227 = vadd.f32 %v514, %v4183
      %v4228 = vadd.f32 %v515, %v4186
      %v4229 = vadd.f32 %v516, %v4191
      %v4230 = vadd.f32 %v517, %v4194
      %v4231 = vadd.f32 %v518, %v4199
      %v4232 = vadd.f32 %v519, %v4202
      %v4233 = vadd.f32 %v520, %v4207
      %v4234 = vadd.f32 %v521, %v4210
      %v4235 = vadd.f32 %v522, %v4215
      %v4236 = vadd.f32 %v523, %v4218
      %v4237 = vld [vmem:[%s8] sm:$0x1]
      %v4238 = vld [vmem:[%s9] sm:$0x1]
      %v4239 = vsel %vm526, %v4221, 0.0
      %4240 = vadd.xlane.f32.xlu0 %v4239
      %v4241 = vpop.xlane.xlu0 %4240
      %v4242 = vsel %vm526, %v4222, 0.0
      %4243 = vadd.xlane.f32.xlu0 %v4242
      %v4244 = vpop.xlane.xlu0 %4243
      %v4245 = vsel %vm526, %v4223, 0.0
      %4246 = vadd.xlane.f32.xlu0 %v4245
      %v4247 = vpop.xlane.xlu0 %4246
      %v4248 = vsel %vm526, %v4224, 0.0
      %4249 = vadd.xlane.f32.xlu0 %v4248
      %v4250 = vpop.xlane.xlu0 %4249
      %v4251 = vsel %vm526, %v4225, 0.0
      %4252 = vadd.xlane.f32.xlu0 %v4251
      %v4253 = vpop.xlane.xlu0 %4252
      %v4254 = vsel %vm526, %v4226, 0.0
      %4255 = vadd.xlane.f32.xlu0 %v4254
      %v4256 = vpop.xlane.xlu0 %4255
      %v4257 = vsel %vm526, %v4227, 0.0
      %4258 = vadd.xlane.f32.xlu0 %v4257
      %v4259 = vpop.xlane.xlu0 %4258
      %v4260 = vsel %vm526, %v4228, 0.0
      %4261 = vadd.xlane.f32.xlu0 %v4260
      %v4262 = vpop.xlane.xlu0 %4261
      %v4263 = vsel %vm526, %v4229, 0.0
      %4264 = vadd.xlane.f32.xlu0 %v4263
      %v4265 = vpop.xlane.xlu0 %4264
      %v4266 = vsel %vm526, %v4230, 0.0
      %4267 = vadd.xlane.f32.xlu0 %v4266
      %v4268 = vpop.xlane.xlu0 %4267
      %v4269 = vsel %vm526, %v4231, 0.0
      %4270 = vadd.xlane.f32.xlu0 %v4269
      %v4271 = vpop.xlane.xlu0 %4270
      %v4272 = vsel %vm526, %v4232, 0.0
      %4273 = vadd.xlane.f32.xlu0 %v4272
      %v4274 = vpop.xlane.xlu0 %4273
      %v4275 = vsel %vm526, %v4233, 0.0
      %4276 = vadd.xlane.f32.xlu0 %v4275
      %v4277 = vpop.xlane.xlu0 %4276
      %v4278 = vsel %vm526, %v4234, 0.0
      %4279 = vadd.xlane.f32.xlu0 %v4278
      %v4280 = vpop.xlane.xlu0 %4279
      %v4281 = vsel %vm526, %v4235, 0.0
      %4282 = vadd.xlane.f32.xlu0 %v4281
      %v4283 = vpop.xlane.xlu0 %4282
      %v4284 = vsel %vm526, %v4236, 0.0
      %4285 = vadd.xlane.f32.xlu0 %v4284
      %v4286 = vpop.xlane.xlu0 %4285
      %v4287 = vmul.f32 %v4241, %v575
      %v4288 = vmul.f32 %v4244, %v575
      %v4289 = vmul.f32 %v4247, %v575
      %v4290 = vmul.f32 %v4250, %v575
      %v4291 = vmul.f32 %v4253, %v575
      %v4292 = vmul.f32 %v4256, %v575
      %v4293 = vmul.f32 %v4259, %v575
      %v4294 = vmul.f32 %v4262, %v575
      %v4295 = vmul.f32 %v4265, %v575
      %v4296 = vmul.f32 %v4268, %v575
      %v4297 = vmul.f32 %v4271, %v575
      %v4298 = vmul.f32 %v4274, %v575
      %v4299 = vmul.f32 %v4277, %v575
      %v4300 = vmul.f32 %v4280, %v575
      %v4301 = vmul.f32 %v4283, %v575
      %v4302 = vmul.f32 %v4286, %v575
      %v4303 = vsub.f32 %v4221, %v4287
      %v4304 = vsub.f32 %v4222, %v4288
      %v4305 = vsub.f32 %v4223, %v4289
      %v4306 = vsub.f32 %v4224, %v4290
      %v4307 = vsub.f32 %v4225, %v4291
      %v4308 = vsub.f32 %v4226, %v4292
      %v4309 = vsub.f32 %v4227, %v4293
      %v4310 = vsub.f32 %v4228, %v4294
      %v4311 = vsub.f32 %v4229, %v4295
      %v4312 = vsub.f32 %v4230, %v4296
      %v4313 = vsub.f32 %v4231, %v4297
      %v4314 = vsub.f32 %v4232, %v4298
      %v4315 = vsub.f32 %v4233, %v4299
      %v4316 = vsub.f32 %v4234, %v4300
      %v4317 = vsub.f32 %v4235, %v4301
      %v4318 = vsub.f32 %v4236, %v4302
      %v4319 = vmul.f32 %v4303, %v4303
      %v4320 = vmul.f32 %v4304, %v4304
      %v4321 = vmul.f32 %v4305, %v4305
      %v4322 = vmul.f32 %v4306, %v4306
      %v4323 = vmul.f32 %v4307, %v4307
      %v4324 = vmul.f32 %v4308, %v4308
      %v4325 = vmul.f32 %v4309, %v4309
      %v4326 = vmul.f32 %v4310, %v4310
      %v4327 = vmul.f32 %v4311, %v4311
      %v4328 = vmul.f32 %v4312, %v4312
      %v4329 = vmul.f32 %v4313, %v4313
      %v4330 = vmul.f32 %v4314, %v4314
      %v4331 = vmul.f32 %v4315, %v4315
      %v4332 = vmul.f32 %v4316, %v4316
      %v4333 = vmul.f32 %v4317, %v4317
      %v4334 = vmul.f32 %v4318, %v4318
      %v4335 = vsel %vm526, %v4319, 0.0
      %4336 = vadd.xlane.f32.xlu0 %v4335
      %v4337 = vpop.xlane.xlu0 %4336
      %v4338 = vsel %vm526, %v4320, 0.0
      %4339 = vadd.xlane.f32.xlu0 %v4338
      %v4340 = vpop.xlane.xlu0 %4339
      %v4341 = vsel %vm526, %v4321, 0.0
      %4342 = vadd.xlane.f32.xlu0 %v4341
      %v4343 = vpop.xlane.xlu0 %4342
      %v4344 = vsel %vm526, %v4322, 0.0
      %4345 = vadd.xlane.f32.xlu0 %v4344
      %v4346 = vpop.xlane.xlu0 %4345
      %v4347 = vsel %vm526, %v4323, 0.0
      %4348 = vadd.xlane.f32.xlu0 %v4347
      %v4349 = vpop.xlane.xlu0 %4348
      %v4350 = vsel %vm526, %v4324, 0.0
      %4351 = vadd.xlane.f32.xlu0 %v4350
      %v4352 = vpop.xlane.xlu0 %4351
      %v4353 = vsel %vm526, %v4325, 0.0
      %4354 = vadd.xlane.f32.xlu0 %v4353
      %v4355 = vpop.xlane.xlu0 %4354
      %v4356 = vsel %vm526, %v4326, 0.0
      %4357 = vadd.xlane.f32.xlu0 %v4356
      %v4358 = vpop.xlane.xlu0 %4357
      %v4359 = vsel %vm526, %v4327, 0.0
      %4360 = vadd.xlane.f32.xlu0 %v4359
      %v4361 = vpop.xlane.xlu0 %4360
      %v4362 = vsel %vm526, %v4328, 0.0
      %4363 = vadd.xlane.f32.xlu0 %v4362
      %v4364 = vpop.xlane.xlu0 %4363
      %v4365 = vsel %vm526, %v4329, 0.0
      %4366 = vadd.xlane.f32.xlu0 %v4365
      %v4367 = vpop.xlane.xlu0 %4366
      %v4368 = vsel %vm526, %v4330, 0.0
      %4369 = vadd.xlane.f32.xlu0 %v4368
      %v4370 = vpop.xlane.xlu0 %4369
      %v4371 = vsel %vm526, %v4331, 0.0
      %4372 = vadd.xlane.f32.xlu0 %v4371
      %v4373 = vpop.xlane.xlu0 %4372
      %v4374 = vsel %vm526, %v4332, 0.0
      %4375 = vadd.xlane.f32.xlu0 %v4374
      %v4376 = vpop.xlane.xlu0 %4375
      %v4377 = vsel %vm526, %v4333, 0.0
      %4378 = vadd.xlane.f32.xlu0 %v4377
      %v4379 = vpop.xlane.xlu0 %4378
      %v4380 = vsel %vm526, %v4334, 0.0
      %4381 = vadd.xlane.f32.xlu0 %v4380
      %v4382 = vpop.xlane.xlu0 %4381
      %v4383 = vmul.f32 %v4337, %v575
      %v4384 = vmul.f32 %v4340, %v575
      %v4385 = vmul.f32 %v4343, %v575
      %v4386 = vmul.f32 %v4346, %v575
      %v4387 = vmul.f32 %v4349, %v575
      %v4388 = vmul.f32 %v4352, %v575
      %v4389 = vmul.f32 %v4355, %v575
      %v4390 = vmul.f32 %v4358, %v575
      %v4391 = vmul.f32 %v4361, %v575
      %v4392 = vmul.f32 %v4364, %v575
      %v4393 = vmul.f32 %v4367, %v575
      %v4394 = vmul.f32 %v4370, %v575
      %v4395 = vmul.f32 %v4373, %v575
      %v4396 = vmul.f32 %v4376, %v575
      %v4397 = vmul.f32 %v4379, %v575
      %v4398 = vmul.f32 %v4382, %v575
      %v4399 = vadd.f32 %v4383, 1e-05
      %v4400 = vadd.f32 %v4384, 1e-05
      %v4401 = vadd.f32 %v4385, 1e-05
      %v4402 = vadd.f32 %v4386, 1e-05
      %v4403 = vadd.f32 %v4387, 1e-05
      %v4404 = vadd.f32 %v4388, 1e-05
      %v4405 = vadd.f32 %v4389, 1e-05
      %v4406 = vadd.f32 %v4390, 1e-05
      %v4407 = vadd.f32 %v4391, 1e-05
      %v4408 = vadd.f32 %v4392, 1e-05
      %v4409 = vadd.f32 %v4393, 1e-05
      %v4410 = vadd.f32 %v4394, 1e-05
      %v4411 = vadd.f32 %v4395, 1e-05
      %v4412 = vadd.f32 %v4396, 1e-05
      %v4413 = vadd.f32 %v4397, 1e-05
      %v4414 = vadd.f32 %v4398, 1e-05
      %v4415 = vrsqrt.pop %v4399
      %v4416 = vrsqrt.pop %v4400
      %v4417 = vrsqrt.pop %v4401
      %v4418 = vrsqrt.pop %v4402
      %v4419 = vrsqrt.pop %v4403
      %v4420 = vrsqrt.pop %v4404
      %v4421 = vrsqrt.pop %v4405
      %v4422 = vrsqrt.pop %v4406
      %v4423 = vrsqrt.pop %v4407
      %v4424 = vrsqrt.pop %v4408
      %v4425 = vrsqrt.pop %v4409
      %v4426 = vrsqrt.pop %v4410
      %v4427 = vrsqrt.pop %v4411
      %v4428 = vrsqrt.pop %v4412
      %v4429 = vrsqrt.pop %v4413
      %v4430 = vrsqrt.pop %v4414
      %v4431 = vmul.f32 %v4303, %v4415
      %v4432 = vmul.f32 %v4304, %v4416
      %v4433 = vmul.f32 %v4305, %v4417
      %v4434 = vmul.f32 %v4306, %v4418
      %v4435 = vmul.f32 %v4307, %v4419
      %v4436 = vmul.f32 %v4308, %v4420
      %v4437 = vmul.f32 %v4309, %v4421
      %v4438 = vmul.f32 %v4310, %v4422
      %v4439 = vmul.f32 %v4311, %v4423
      %v4440 = vmul.f32 %v4312, %v4424
      %v4441 = vmul.f32 %v4313, %v4425
      %v4442 = vmul.f32 %v4314, %v4426
      %v4443 = vmul.f32 %v4315, %v4427
      %v4444 = vmul.f32 %v4316, %v4428
      %v4445 = vmul.f32 %v4317, %v4429
      %v4446 = vmul.f32 %v4318, %v4430
      %v4448 = vlaneseq
      %v4449 = vshrl.u32 %v4448, 7
      %v4450 = vsub.s32 0, %v4449
      %v4451 = vrot.slane %v4237, %v4450
      %v4453 = vmul.f32 %v4431, %v4451
      %v4454 = vmul.f32 %v4432, %v4451
      %v4455 = vmul.f32 %v4433, %v4451
      %v4456 = vmul.f32 %v4434, %v4451
      %v4457 = vmul.f32 %v4435, %v4451
      %v4458 = vmul.f32 %v4436, %v4451
      %v4459 = vmul.f32 %v4437, %v4451
      %v4460 = vmul.f32 %v4438, %v4451
      %v4461 = vmul.f32 %v4439, %v4451
      %v4462 = vmul.f32 %v4440, %v4451
      %v4463 = vmul.f32 %v4441, %v4451
      %v4464 = vmul.f32 %v4442, %v4451
      %v4465 = vmul.f32 %v4443, %v4451
      %v4466 = vmul.f32 %v4444, %v4451
      %v4467 = vmul.f32 %v4445, %v4451
      %v4468 = vmul.f32 %v4446, %v4451
      %v4470 = vlaneseq
      %v4471 = vshrl.u32 %v4470, 7
      %v4472 = vsub.s32 0, %v4471
      %v4473 = vrot.slane %v4238, %v4472
      %v4475 = vadd.f32 %v4453, %v4473
      %v4476 = vadd.f32 %v4454, %v4473
      %v4477 = vadd.f32 %v4455, %v4473
      %v4478 = vadd.f32 %v4456, %v4473
      %v4479 = vadd.f32 %v4457, %v4473
      %v4480 = vadd.f32 %v4458, %v4473
      %v4481 = vadd.f32 %v4459, %v4473
      %v4482 = vadd.f32 %v4460, %v4473
      %v4483 = vadd.f32 %v4461, %v4473
      %v4484 = vadd.f32 %v4462, %v4473
      %v4485 = vadd.f32 %v4463, %v4473
      %v4486 = vadd.f32 %v4464, %v4473
      %v4487 = vadd.f32 %v4465, %v4473
      %v4488 = vadd.f32 %v4466, %v4473
      %v4489 = vadd.f32 %v4467, %v4473
      %v4490 = vadd.f32 %v4468, %v4473
      %v4491 = vpack.c.bf16 %v4476, %v4475
      %v4492 = vpack.c.bf16 %v4478, %v4477
      %v4493 = vpack.c.bf16 %v4480, %v4479
      %v4494 = vpack.c.bf16 %v4482, %v4481
      %v4495 = vpack.c.bf16 %v4484, %v4483
      %v4496 = vpack.c.bf16 %v4486, %v4485
      %v4497 = vpack.c.bf16 %v4488, %v4487
      %v4498 = vpack.c.bf16 %v4490, %v4489
      %v4499 = vld [vmem:[%s10] sm:$0xf]
      %v4500 = vld [vmem:[%s10 + $0x4] sm:$0xf]
      %v4501 = vld [vmem:[%s10 + $0x8] sm:$0xf]
      %v4502 = vld [vmem:[%s10 + $0xc] sm:$0xf]
      %v4503 = vld [vmem:[%s11] sm:$0x1]
      %v4505 = vlaneseq
      %v4506 = vshrl.u32 %v4505, 7
      %v4507 = vsub.s32 0, %v4506
      %v4508 = vrot.slane %v4503, %v4507
      %v4514 = vunpack.c.l.b16 %v4499
      %v4515 = vunpack.c.l.b16 %v4500
      %v4516 = vunpack.c.l.b16 %v4501
      %v4517 = vunpack.c.l.b16 %v4502
      %v4518 = vpack.c.b16 %v4515, %v4514
      %v4519 = vpack.c.b16 %v4517, %v4516
      %v4523 = vsel %vm526, %v4491, 0
      %v4526 = vsel %vm526, %v4492, 0
      %v4529 = vsel %vm526, %v4493, 0
      %v4532 = vsel %vm526, %v4494, 0
      %v4535 = vsel %vm526, %v4495, 0
      %v4538 = vsel %vm526, %v4496, 0
      %v4541 = vsel %vm526, %v4497, 0
      %v4544 = vsel %vm526, %v4498, 0
      %4546 = vmatprep.subr.bf16.mxu0 0
      %4547 = vmatpush1.bf16.msra.mxu0 %v4518
      %4548 = vmatprep.subr.bf16.mxu0 0
      %4549 = vmatpush1.bf16.msra.mxu0 %v4519
      %4550 = vmatprep.subr.bf16.mxu0 0
      %4551 = vmatpush1.bf16.msra.mxu0 0
      %4552 = vmatprep.subr.bf16.mxu0 0
      %4553 = vmatpush1.bf16.msra.mxu0 0
      %4554 = vmatprep.subr.bf16.mxu0 0
      %4555 = vmatpush1.bf16.msra.mxu0 0
      %4556 = vmatprep.subr.bf16.mxu0 0
      %4557 = vmatpush1.bf16.msra.mxu0 0
      %4558 = vmatprep.subr.bf16.mxu0 0
      %4559 = vmatpush1.bf16.msra.mxu0 0
      %4560 = vmatprep.subr.bf16.mxu0 0
      %4561 = vmatpush1.bf16.msra.mxu0 0
      %4562 = vmatprep.subr.bf16.mxu0 0
      %4563 = vmatpush1.bf16.msra.mxu0 0
      %4564 = vmatprep.subr.bf16.mxu0 0
      %4565 = vmatpush1.bf16.msra.mxu0 0
      %4566 = vmatprep.subr.bf16.mxu0 0
      %4567 = vmatpush1.bf16.msra.mxu0 0
      %4568 = vmatprep.subr.bf16.mxu0 0
      %4569 = vmatpush1.bf16.msra.mxu0 0
      %4570 = vmatprep.subr.bf16.mxu0 0
      %4571 = vmatpush1.bf16.msra.mxu0 0
      %4572 = vmatprep.subr.bf16.mxu0 0
      %4573 = vmatpush1.bf16.msra.mxu0 0
      %4574 = vmatprep.subr.bf16.mxu0 0
      %4575 = vmatpush1.bf16.msra.mxu0 0
      %4576 = vmatprep.subr.bf16.mxu0 0
      %4577 = vmatpush1.bf16.msra.mxu0 0
      %4578 = vmatprep.mubr.bf16.mxu0 0
      %4579 = vmatmul.mubr.bf16.gmra.mrb[0].mxu0 %v4523
      %v4580 = vpop.f32.mrb[0].mxu0
      %v4581 = vadd.f32 %v4508, %v4580
      %v4582 = vpop.f32.mrb[0].mxu0
      %v4583 = vpop.f32.mrb[0].mxu0
      %v4584 = vadd.f32 %v4508, %v4583
      %v4585 = vpop.f32.mrb[0].mxu0
      %4586 = vmatprep.mubr.bf16.mxu0 0
      %4587 = vmatmul.mubr.bf16.gmra.mrb[0].mxu0 %v4526
      %v4588 = vpop.f32.mrb[0].mxu0
      %v4589 = vadd.f32 %v4508, %v4588
      %v4590 = vpop.f32.mrb[0].mxu0
      %v4591 = vpop.f32.mrb[0].mxu0
      %v4592 = vadd.f32 %v4508, %v4591
      %v4593 = vpop.f32.mrb[0].mxu0
      %4594 = vmatprep.mubr.bf16.mxu0 0
      %4595 = vmatmul.mubr.bf16.gmra.mrb[0].mxu0 %v4529
      %v4596 = vpop.f32.mrb[0].mxu0
      %v4597 = vadd.f32 %v4508, %v4596
      %v4598 = vpop.f32.mrb[0].mxu0
      %v4599 = vpop.f32.mrb[0].mxu0
      %v4600 = vadd.f32 %v4508, %v4599
      %v4601 = vpop.f32.mrb[0].mxu0
      %4602 = vmatprep.mubr.bf16.mxu0 0
      %4603 = vmatmul.mubr.bf16.gmra.mrb[0].mxu0 %v4532
      %v4604 = vpop.f32.mrb[0].mxu0
      %v4605 = vadd.f32 %v4508, %v4604
      %v4606 = vpop.f32.mrb[0].mxu0
      %v4607 = vpop.f32.mrb[0].mxu0
      %v4608 = vadd.f32 %v4508, %v4607
      %v4609 = vpop.f32.mrb[0].mxu0
      %4610 = vmatprep.mubr.bf16.mxu0 0
      %4611 = vmatmul.mubr.bf16.gmra.mrb[0].mxu0 %v4535
      %v4612 = vpop.f32.mrb[0].mxu0
      %v4613 = vadd.f32 %v4508, %v4612
      %v4614 = vpop.f32.mrb[0].mxu0
      %v4615 = vpop.f32.mrb[0].mxu0
      %v4616 = vadd.f32 %v4508, %v4615
      %v4617 = vpop.f32.mrb[0].mxu0
      %4618 = vmatprep.mubr.bf16.mxu0 0
      %4619 = vmatmul.mubr.bf16.gmra.mrb[0].mxu0 %v4538
      %v4620 = vpop.f32.mrb[0].mxu0
      %v4621 = vadd.f32 %v4508, %v4620
      %v4622 = vpop.f32.mrb[0].mxu0
      %v4623 = vpop.f32.mrb[0].mxu0
      %v4624 = vadd.f32 %v4508, %v4623
      %v4625 = vpop.f32.mrb[0].mxu0
      %4626 = vmatprep.mubr.bf16.mxu0 0
      %4627 = vmatmul.mubr.bf16.gmra.mrb[0].mxu0 %v4541
      %v4628 = vpop.f32.mrb[0].mxu0
      %v4629 = vadd.f32 %v4508, %v4628
      %v4630 = vpop.f32.mrb[0].mxu0
      %v4631 = vpop.f32.mrb[0].mxu0
      %v4632 = vadd.f32 %v4508, %v4631
      %v4633 = vpop.f32.mrb[0].mxu0
      %4634 = vmatprep.mubr.bf16.mxu0 0
      %4635 = vmatmul.mubr.bf16.gmra.mrb[0].mxu0 %v4544
      %v4636 = vpop.f32.mrb[0].mxu0
      %v4637 = vadd.f32 %v4508, %v4636
      %v4638 = vpop.f32.mrb[0].mxu0
      %v4639 = vpop.f32.mrb[0].mxu0
      %v4640 = vadd.f32 %v4508, %v4639
      %v4641 = vpop.f32.mrb[0].mxu0
      %4642 = vdwg.mxu0
      %v4643 = vmul.f32 %v4581, 0.5
      %v4644 = vmul.f32 %v4584, 0.5
      %v4645 = vmul.f32 %v4589, 0.5
      %v4646 = vmul.f32 %v4592, 0.5
      %v4647 = vmul.f32 %v4597, 0.5
      %v4648 = vmul.f32 %v4600, 0.5
      %v4649 = vmul.f32 %v4605, 0.5
      %v4650 = vmul.f32 %v4608, 0.5
      %v4651 = vmul.f32 %v4613, 0.5
      %v4652 = vmul.f32 %v4616, 0.5
      %v4653 = vmul.f32 %v4621, 0.5
      %v4654 = vmul.f32 %v4624, 0.5
      %v4655 = vmul.f32 %v4629, 0.5
      %v4656 = vmul.f32 %v4632, 0.5
      %v4657 = vmul.f32 %v4637, 0.5
      %v4658 = vmul.f32 %v4640, 0.5
      %v4659 = vmul.f32 %v4581, 0.70710677
      %v4660 = vmul.f32 %v4584, 0.70710677
      %v4661 = vmul.f32 %v4589, 0.70710677
      %v4662 = vmul.f32 %v4592, 0.70710677
      %v4663 = vmul.f32 %v4597, 0.70710677
      %v4664 = vmul.f32 %v4600, 0.70710677
      %v4665 = vmul.f32 %v4605, 0.70710677
      %v4666 = vmul.f32 %v4608, 0.70710677
      %v4667 = vmul.f32 %v4613, 0.70710677
      %v4668 = vmul.f32 %v4616, 0.70710677
      %v4669 = vmul.f32 %v4621, 0.70710677
      %v4670 = vmul.f32 %v4624, 0.70710677
      %v4671 = vmul.f32 %v4629, 0.70710677
      %v4672 = vmul.f32 %v4632, 0.70710677
      %v4673 = vmul.f32 %v4637, 0.70710677
      %v4674 = vmul.f32 %v4640, 0.70710677
      %v4675 = verf.f32.pop %v4659
      %v4676 = verf.f32.pop %v4660
      %v4677 = verf.f32.pop %v4661
      %v4678 = verf.f32.pop %v4662
      %v4679 = verf.f32.pop %v4663
      %v4680 = verf.f32.pop %v4664
      %v4681 = verf.f32.pop %v4665
      %v4682 = verf.f32.pop %v4666
      %v4683 = verf.f32.pop %v4667
      %v4684 = verf.f32.pop %v4668
      %v4685 = verf.f32.pop %v4669
      %v4686 = verf.f32.pop %v4670
      %v4687 = verf.f32.pop %v4671
      %v4688 = verf.f32.pop %v4672
      %v4689 = verf.f32.pop %v4673
      %v4690 = verf.f32.pop %v4674
      %v4691 = vadd.f32 %v4675, 1.0
      %v4692 = vadd.f32 %v4676, 1.0
      %v4693 = vadd.f32 %v4677, 1.0
      %v4694 = vadd.f32 %v4678, 1.0
      %v4695 = vadd.f32 %v4679, 1.0
      %v4696 = vadd.f32 %v4680, 1.0
      %v4697 = vadd.f32 %v4681, 1.0
      %v4698 = vadd.f32 %v4682, 1.0
      %v4699 = vadd.f32 %v4683, 1.0
      %v4700 = vadd.f32 %v4684, 1.0
      %v4701 = vadd.f32 %v4685, 1.0
      %v4702 = vadd.f32 %v4686, 1.0
      %v4703 = vadd.f32 %v4687, 1.0
      %v4704 = vadd.f32 %v4688, 1.0
      %v4705 = vadd.f32 %v4689, 1.0
      %v4706 = vadd.f32 %v4690, 1.0
      %v4707 = vmul.f32 %v4643, %v4691
      %v4708 = vmul.f32 %v4644, %v4692
      %v4709 = vmul.f32 %v4645, %v4693
      %v4710 = vmul.f32 %v4646, %v4694
      %v4711 = vmul.f32 %v4647, %v4695
      %v4712 = vmul.f32 %v4648, %v4696
      %v4713 = vmul.f32 %v4649, %v4697
      %v4714 = vmul.f32 %v4650, %v4698
      %v4715 = vmul.f32 %v4651, %v4699
      %v4716 = vmul.f32 %v4652, %v4700
      %v4717 = vmul.f32 %v4653, %v4701
      %v4718 = vmul.f32 %v4654, %v4702
      %v4719 = vmul.f32 %v4655, %v4703
      %v4720 = vmul.f32 %v4656, %v4704
      %v4721 = vmul.f32 %v4657, %v4705
      %v4722 = vmul.f32 %v4658, %v4706
      %v4723 = vpack.c.bf16 %v4708, %v4707
      %v4724 = vpack.c.bf16 %v4710, %v4709
      %v4725 = vpack.c.bf16 %v4712, %v4711
      %v4726 = vpack.c.bf16 %v4714, %v4713
      %v4727 = vpack.c.bf16 %v4716, %v4715
      %v4728 = vpack.c.bf16 %v4718, %v4717
      %v4729 = vpack.c.bf16 %v4720, %v4719
      %v4730 = vpack.c.bf16 %v4722, %v4721
      %v4731 = vld [vmem:[%s12] sm:$0xf]
      %v4732 = vld [vmem:[%s12 + $0x4] sm:$0xf]
      %v4733 = vld [vmem:[%s12 + $0x8] sm:$0xf]
      %v4734 = vld [vmem:[%s12 + $0xc] sm:$0xf]
      %v4735 = vld [vmem:[%s12 + $0x10] sm:$0xf]
      %v4736 = vld [vmem:[%s12 + $0x14] sm:$0xf]
      %v4737 = vld [vmem:[%s12 + $0x18] sm:$0xf]
      %v4738 = vld [vmem:[%s12 + $0x1c] sm:$0xf]
      %v4739 = vld [vmem:[%s12 + $0x20] sm:$0xf]
      %v4740 = vld [vmem:[%s12 + $0x24] sm:$0xf]
      %v4741 = vld [vmem:[%s12 + $0x28] sm:$0xf]
      %v4742 = vld [vmem:[%s12 + $0x2c] sm:$0xf]
      %v4743 = vld [vmem:[%s12 + $0x30] sm:$0xf]
      %v4744 = vld [vmem:[%s12 + $0x34] sm:$0xf]
      %v4745 = vld [vmem:[%s12 + $0x38] sm:$0xf]
      %v4746 = vld [vmem:[%s12 + $0x3c] sm:$0xf]
      %v4747 = vld [vmem:[%s13] sm:$0x1]
      %v4749 = vlaneseq
      %v4750 = vshrl.u32 %v4749, 7
      %v4751 = vsub.s32 0, %v4750
      %v4752 = vrot.slane %v4747, %v4751
      %v4770 = vunpack.c.l.b16 %v4731
      %v4771 = vunpack.c.l.b16 %v4732
      %v4772 = vunpack.c.l.b16 %v4733
      %v4773 = vunpack.c.l.b16 %v4734
      %v4774 = vunpack.c.l.b16 %v4735
      %v4775 = vunpack.c.l.b16 %v4736
      %v4776 = vunpack.c.l.b16 %v4737
      %v4777 = vunpack.c.l.b16 %v4738
      %v4778 = vunpack.c.l.b16 %v4739
      %v4779 = vunpack.c.l.b16 %v4740
      %v4780 = vunpack.c.l.b16 %v4741
      %v4781 = vunpack.c.l.b16 %v4742
      %v4782 = vunpack.c.l.b16 %v4743
      %v4783 = vunpack.c.l.b16 %v4744
      %v4784 = vunpack.c.l.b16 %v4745
      %v4785 = vunpack.c.l.b16 %v4746
      %v4786 = vpack.c.b16 %v4771, %v4770
      %v4787 = vpack.c.b16 %v4773, %v4772
      %v4788 = vpack.c.b16 %v4775, %v4774
      %v4789 = vpack.c.b16 %v4777, %v4776
      %v4790 = vpack.c.b16 %v4779, %v4778
      %v4791 = vpack.c.b16 %v4781, %v4780
      %v4792 = vpack.c.b16 %v4783, %v4782
      %v4793 = vpack.c.b16 %v4785, %v4784
      %4802 = vmatprep.subr.bf16.mxu0 0
      %4803 = vmatpush1.bf16.msra.mxu0 %v4786
      %4804 = vmatprep.subr.bf16.mxu0 0
      %4805 = vmatpush1.bf16.msra.mxu0 %v4787
      %4806 = vmatprep.subr.bf16.mxu0 0
      %4807 = vmatpush1.bf16.msra.mxu0 %v4788
      %4808 = vmatprep.subr.bf16.mxu0 0
      %4809 = vmatpush1.bf16.msra.mxu0 %v4789
      %4810 = vmatprep.subr.bf16.mxu0 0
      %4811 = vmatpush1.bf16.msra.mxu0 %v4790
      %4812 = vmatprep.subr.bf16.mxu0 0
      %4813 = vmatpush1.bf16.msra.mxu0 %v4791
      %4814 = vmatprep.subr.bf16.mxu0 0
      %4815 = vmatpush1.bf16.msra.mxu0 %v4792
      %4816 = vmatprep.subr.bf16.mxu0 0
      %4817 = vmatpush1.bf16.msra.mxu0 %v4793
      %4818 = vmatprep.subr.bf16.mxu0 0
      %4819 = vmatpush1.bf16.msra.mxu0 0
      %4820 = vmatprep.subr.bf16.mxu0 0
      %4821 = vmatpush1.bf16.msra.mxu0 0
      %4822 = vmatprep.subr.bf16.mxu0 0
      %4823 = vmatpush1.bf16.msra.mxu0 0
      %4824 = vmatprep.subr.bf16.mxu0 0
      %4825 = vmatpush1.bf16.msra.mxu0 0
      %4826 = vmatprep.subr.bf16.mxu0 0
      %4827 = vmatpush1.bf16.msra.mxu0 0
      %4828 = vmatprep.subr.bf16.mxu0 0
      %4829 = vmatpush1.bf16.msra.mxu0 0
      %4830 = vmatprep.subr.bf16.mxu0 0
      %4831 = vmatpush1.bf16.msra.mxu0 0
      %4832 = vmatprep.subr.bf16.mxu0 0
      %4833 = vmatpush1.bf16.msra.mxu0 0
      %4834 = vmatprep.mubr.bf16.mxu0 0
      %4835 = vmatmul.mubr.bf16.gmra.mrb[0].mxu0 %v4723
      %v4836 = vpop.f32.mrb[0].mxu0
      %v4837 = vadd.f32 %v4752, %v4836
      %v4838 = vpop.f32.mrb[0].mxu0
      %v4839 = vpop.f32.mrb[0].mxu0
      %v4840 = vadd.f32 %v4752, %v4839
      %v4841 = vpop.f32.mrb[0].mxu0
      %4842 = vmatprep.mubr.bf16.mxu0 0
      %4843 = vmatmul.mubr.bf16.gmra.mrb[0].mxu0 %v4724
      %v4844 = vpop.f32.mrb[0].mxu0
      %v4845 = vadd.f32 %v4752, %v4844
      %v4846 = vpop.f32.mrb[0].mxu0
      %v4847 = vpop.f32.mrb[0].mxu0
      %v4848 = vadd.f32 %v4752, %v4847
      %v4849 = vpop.f32.mrb[0].mxu0
      %4850 = vmatprep.mubr.bf16.mxu0 0
      %4851 = vmatmul.mubr.bf16.gmra.mrb[0].mxu0 %v4725
      %v4852 = vpop.f32.mrb[0].mxu0
      %v4853 = vadd.f32 %v4752, %v4852
      %v4854 = vpop.f32.mrb[0].mxu0
      %v4855 = vpop.f32.mrb[0].mxu0
      %v4856 = vadd.f32 %v4752, %v4855
      %v4857 = vpop.f32.mrb[0].mxu0
      %4858 = vmatprep.mubr.bf16.mxu0 0
      %4859 = vmatmul.mubr.bf16.gmra.mrb[0].mxu0 %v4726
      %v4860 = vpop.f32.mrb[0].mxu0
      %v4861 = vadd.f32 %v4752, %v4860
      %v4862 = vpop.f32.mrb[0].mxu0
      %v4863 = vpop.f32.mrb[0].mxu0
      %v4864 = vadd.f32 %v4752, %v4863
      %v4865 = vpop.f32.mrb[0].mxu0
      %4866 = vmatprep.mubr.bf16.mxu0 0
      %4867 = vmatmul.mubr.bf16.gmra.mrb[0].mxu0 %v4727
      %v4868 = vpop.f32.mrb[0].mxu0
      %v4869 = vadd.f32 %v4752, %v4868
      %v4870 = vpop.f32.mrb[0].mxu0
      %v4871 = vpop.f32.mrb[0].mxu0
      %v4872 = vadd.f32 %v4752, %v4871
      %v4873 = vpop.f32.mrb[0].mxu0
      %4874 = vmatprep.mubr.bf16.mxu0 0
      %4875 = vmatmul.mubr.bf16.gmra.mrb[0].mxu0 %v4728
      %v4876 = vpop.f32.mrb[0].mxu0
      %v4877 = vadd.f32 %v4752, %v4876
      %v4878 = vpop.f32.mrb[0].mxu0
      %v4879 = vpop.f32.mrb[0].mxu0
      %v4880 = vadd.f32 %v4752, %v4879
      %v4881 = vpop.f32.mrb[0].mxu0
      %4882 = vmatprep.mubr.bf16.mxu0 0
      %4883 = vmatmul.mubr.bf16.gmra.mrb[0].mxu0 %v4729
      %v4884 = vpop.f32.mrb[0].mxu0
      %v4885 = vadd.f32 %v4752, %v4884
      %v4886 = vpop.f32.mrb[0].mxu0
      %v4887 = vpop.f32.mrb[0].mxu0
      %v4888 = vadd.f32 %v4752, %v4887
      %v4889 = vpop.f32.mrb[0].mxu0
      %4890 = vmatprep.mubr.bf16.mxu0 0
      %4891 = vmatmul.mubr.bf16.gmra.mrb[0].mxu0 %v4730
      %v4892 = vpop.f32.mrb[0].mxu0
      %v4893 = vadd.f32 %v4752, %v4892
      %v4894 = vpop.f32.mrb[0].mxu0
      %v4895 = vpop.f32.mrb[0].mxu0
      %v4896 = vadd.f32 %v4752, %v4895
      %v4897 = vpop.f32.mrb[0].mxu0
      %4898 = vdwg.mxu0
      %v4899 = vadd.f32 %v4221, %v4837
      %v4900 = vadd.f32 %v4222, %v4840
      %v4901 = vadd.f32 %v4223, %v4845
      %v4902 = vadd.f32 %v4224, %v4848
      %v4903 = vadd.f32 %v4225, %v4853
      %v4904 = vadd.f32 %v4226, %v4856
      %v4905 = vadd.f32 %v4227, %v4861
      %v4906 = vadd.f32 %v4228, %v4864
      %v4907 = vadd.f32 %v4229, %v4869
      %v4908 = vadd.f32 %v4230, %v4872
      %v4909 = vadd.f32 %v4231, %v4877
      %v4910 = vadd.f32 %v4232, %v4880
      %v4911 = vadd.f32 %v4233, %v4885
      %v4912 = vadd.f32 %v4234, %v4888
      %v4913 = vadd.f32 %v4235, %v4893
      %v4914 = vadd.f32 %v4236, %v4896
      %4915 = vst.msk [vmem:[%s505] sm:$0xff] %vm526, %v4899
      %4916 = vst.msk [vmem:[%s505 + $0x8] sm:$0xff] %vm526, %v4900
      %4917 = vst.msk [vmem:[%s505 + $0x10] sm:$0xff] %vm526, %v4901
      %4918 = vst.msk [vmem:[%s505 + $0x18] sm:$0xff] %vm526, %v4902
      %4919 = vst.msk [vmem:[%s505 + $0x20] sm:$0xff] %vm526, %v4903
      %4920 = vst.msk [vmem:[%s505 + $0x28] sm:$0xff] %vm526, %v4904
      %4921 = vst.msk [vmem:[%s505 + $0x30] sm:$0xff] %vm526, %v4905
      %4922 = vst.msk [vmem:[%s505 + $0x38] sm:$0xff] %vm526, %v4906
      %4923 = vst.msk [vmem:[%s505 + $0x40] sm:$0xff] %vm526, %v4907
      %4924 = vst.msk [vmem:[%s505 + $0x48] sm:$0xff] %vm526, %v4908
      %4925 = vst.msk [vmem:[%s505 + $0x50] sm:$0xff] %vm526, %v4909
      %4926 = vst.msk [vmem:[%s505 + $0x58] sm:$0xff] %vm526, %v4910
      %4927 = vst.msk [vmem:[%s505 + $0x60] sm:$0xff] %vm526, %v4911
      %4928 = vst.msk [vmem:[%s505 + $0x68] sm:$0xff] %vm526, %v4912
      %4929 = vst.msk [vmem:[%s505 + $0x70] sm:$0xff] %vm526, %v4913
      %4930 = vst.msk [vmem:[%s505 + $0x78] sm:$0xff] %vm526, %v4914
      %s4931 = smul.u32 16, %s30
      %p4932 = scmp.lt.s32.totalorder %s29, 1
      %s4933 = scalar_select %p4932, %s29, 1
      %p4934 = scmp.lt.s32.totalorder %s4931, 15
      %s4935 = scalar_select %p4934, %s4931, 15
      %s4936 = smul.addr %s4933, 16
      %s4937 = sadd.s32 %s4935, %s4936
      %s4938 = smul.addr %s4937, 8
      %s4939 = scalar_lea.vmem %s14, %s4938
      // Predicated region
      $region105: #{tpu_custom_call.1} parent=75 // pred_check
        %p4940 = pneg %p358
      $region106: #{tpu_custom_call.1} parent=75 // pred_check_branch
        %4942 = sbr.rel (%p4940) target = $region108
      $region107: #{tpu_custom_call.1} parent=75 // pred_region
        %s4943 = smul.u32 16, %s30
      $region108: #{tpu_custom_call.1} parent=75 // pred_fallthru
        _
    $region76: #{tpu_custom_call.1} parent=5 // pred_fallthru
      _
    %p4944 = scmp.le.s32.totalorder 2, %s20
    // Predicated region
    $region109: #{tpu_custom_call.1} parent=5 // pred_check
      %p4945 = pneg %p4944
    $region110: #{tpu_custom_call.1} parent=5 // pred_check_branch
      %4947 = sbr.rel (%p4945) target = $region112
    $region111: #{tpu_custom_call.1} parent=5 // pred_region
      %s4948 = ssub.s32 %s20, 2
      // Predicated region
      $region113: #{tpu_custom_call.1} parent=111 // pred_check
        %p4949 = pneg %p364
      $region114: #{tpu_custom_call.1} parent=111 // pred_check_branch
        %4951 = sbr.rel (%p4949) target = $region116
      $region115: #{tpu_custom_call.1} parent=111 // pred_region
        %s4952 = smul.u32 16, %s32
        %p4953 = scmp.lt.s32.totalorder %s31, 1
        %s4954 = scalar_select %p4953, %s31, 1
        %p4955 = scmp.lt.s32.totalorder %s4952, 15
        %s4956 = scalar_select %p4955, %s4952, 15
        %s4957 = smul.addr %s4954, 16
        %s4958 = sadd.s32 %s4956, %s4957
        %s4959 = smul.addr %s4958, 8
        %s4960 = scalar_lea.vmem %s14, %s4959
      $region116: #{tpu_custom_call.1} parent=111 // pred_fallthru
        _
    $region112: #{tpu_custom_call.1} parent=5 // pred_fallthru
      _
  $region6: #{tpu_custom_call.1} parent=0 // loop_footer
    %s24 = sadd.s32 1, %s20
  $region7: #{tpu_custom_call.1} parent=0 // loop_footer_branch
    %19 = sbr.rel target = $region3
  $region8: #{tpu_custom_call.1} parent=0 // loop_exit
    _

// kernel: tpu_custom_call.1
$region0: #{tpu_custom_call.1}
  #allocation0 [shape = 'u32[]', space=smem, size = 0x4, offset = 0x4, fixed_abs, tag = 'smem constant byte address 0x4 - core index']
  #allocation1 [shape = 'u32[144,128]{1,0:T(1,128)}', space=vmem, size = 0x12000, scoped, tag = 'internal scratch']
  #allocation2 [shape = 'bf16[32,128]{1,0:T(16,128)(2,1)}', space=vmem, size = 0x2000, scoped, tag = 'scratch operand']
  #allocation3 [shape = 'bf16[128,32]{1,0:T(16,128)(2,1)}', space=vmem, size = 0x8000, scoped, tag = 'scratch operand']
  %s0 = inlined_call_operand.vmem [shape: f32[2,128,32], index: 0, kind: input, shape index: {}]
  %s1 = inlined_call_operand.vmem [shape: f32[1,32], index: 1, kind: input, shape index: {}]
  %s2 = inlined_call_operand.vmem [shape: f32[1,32], index: 2, kind: input, shape index: {}]
  %s3 = inlined_call_operand.vmem [shape: bf16[32,32], index: 3, kind: input, shape index: {}]
  %s4 = inlined_call_operand.vmem [shape: bf16[32,32], index: 4, kind: input, shape index: {}]
  %s5 = inlined_call_operand.vmem [shape: bf16[32,32], index: 5, kind: input, shape index: {}]
  %s6 = inlined_call_operand.vmem [shape: bf16[32,32], index: 6, kind: input, shape index: {}]
  %s7 = inlined_call_operand.vmem [shape: f32[1,32], index: 7, kind: input, shape index: {}]
  %s8 = inlined_call_operand.vmem [shape: f32[1,32], index: 8, kind: input, shape index: {}]
  %s9 = inlined_call_operand.vmem [shape: f32[1,32], index: 9, kind: input, shape index: {}]
  %s10 = inlined_call_operand.vmem [shape: bf16[32,128], index: 10, kind: input, shape index: {}]
  %s11 = inlined_call_operand.vmem [shape: f32[1,128], index: 11, kind: input, shape index: {}]
  %s12 = inlined_call_operand.vmem [shape: bf16[128,32], index: 12, kind: input, shape index: {}]
  %s13 = inlined_call_operand.vmem [shape: f32[1,32], index: 13, kind: input, shape index: {}]
  %s14 = inlined_call_operand.vmem [shape: f32[2,128,32], index: 14, kind: output, shape index: {}]
  %s15 = sld [smem:[#allocation0]]
  $region117: #{tpu_custom_call.1} parent=0
    _
  %s17 = ssub.s32 1, %s15
  %s18 = scalar_select 0, %s17, %s15
  loop: start=0, step=1, limit=4
  $region2: #{tpu_custom_call.1} parent=0 // loop_pre_header
    _
  $region3: #{tpu_custom_call.1} parent=0 // loop_header
    %s20 = sphi 0, %s24
    %p21 = scmp.ge.s32.totalorder %s20, 4
    %s27 = sphi 0, %s39
    %s28 = sphi 0, %s35
    %s29 = sphi 0, %s27
    %s30 = sphi 0, %s28
    %s31 = sphi 0, %s29
    %s32 = sphi 0, %s30
    %s44 = sphi 0, %s46
    %s47 = sphi 0, %s44
    %s48 = sphi 0, %s47
    %s64 = sphi 0, %s48
    %s68 = sphi 0, %s68
    %s70 = sphi 0, %s68
    %s71 = sphi 0, %s70
    %s85 = sphi 0, %s71
    %s89 = sphi 0, %s89
    %s91 = sphi 0, %s89
    %s92 = sphi 0, %s91
    %s106 = sphi 0, %s92
    %s110 = sphi 0, %s110
    %s112 = sphi 0, %s110
    %s113 = sphi 0, %s112
    %s127 = sphi 0, %s113
    %s131 = sphi 0, %s131
    %s133 = sphi 0, %s131
    %s134 = sphi 0, %s133
    %s148 = sphi 0, %s134
    %s152 = sphi 0, %s152
    %s154 = sphi 0, %s152
    %s155 = sphi 0, %s154
    %s169 = sphi 0, %s155
    %s173 = sphi 0, %s173
    %s175 = sphi 0, %s173
    %s176 = sphi 0, %s175
    %s190 = sphi 0, %s176
    %s194 = sphi 0, %s194
    %s196 = sphi 0, %s194
    %s197 = sphi 0, %s196
    %s211 = sphi 0, %s197
    %s215 = sphi 0, %s215
    %s217 = sphi 0, %s215
    %s218 = sphi 0, %s217
    %s232 = sphi 0, %s218
    %s236 = sphi 0, %s236
    %s238 = sphi 0, %s236
    %s239 = sphi 0, %s238
    %s253 = sphi 0, %s239
    %s257 = sphi 0, %s257
    %s259 = sphi 0, %s257
    %s260 = sphi 0, %s259
    %s274 = sphi 0, %s260
    %s278 = sphi 0, %s278
    %s280 = sphi 0, %s278
    %s281 = sphi 0, %s280
    %s295 = sphi 0, %s281
    %s299 = sphi 0, %s299
    %s301 = sphi 0, %s299
    %s302 = sphi 0, %s301
    %s316 = sphi 0, %s302
    %s320 = sphi 0, %s320
    %s322 = sphi 0, %s320
    %s323 = sphi 0, %s322
    %s337 = sphi 0, %s323
    %s345 = sphi 0, %s347
    %s348 = sphi 0, %s345
    %s349 = sphi 0, %s348
    %s365 = sphi 0, %s349
  $region4: #{tpu_custom_call.1} parent=0 // loop_header_branch
    %23 = sbr.rel (%p21) target = $region8
  $region5: #{tpu_custom_call.1} parent=0 // loop_body
    %s25 = ssub.s32 %s20, 1
    %s26 = ssub.s32 %s20, 2
    %s33 = sadd.s32 1, %s28
    %p34 = scmp.ge.s32.totalorder %s33, 1
    %s35 = scalar_select %p34, 0, %s33
    %s36 = sadd.s32 1, %s27
    %s37 = scalar_select %p34, %s36, %s27
    %p38 = scmp.ge.s32.totalorder %s37, 2
    %s39 = scalar_select %p38, 0, %s37
    %s40 = ssub.s32 %s27, %s39
    %s41 = ssub.s32 %s28, %s35
    %s42 = sor.u32 %s40, %s41
    %p43 = scmp.eq.s32.totalorder %s42, 0
    %s45 = sadd.s32 %s44, 1
    %s46 = scalar_select %p43, %s44, %s45
    %p49 = pneg %p43
    %p50 = scmp.eq.s32.totalorder %s20, 1
    %p51 = por %p49, %p50
    %p52 = scmp.ne.s32.totalorder %s44, %s47
    %p53 = scmp.eq.s32.totalorder %s20, 0
    %p54 = por %p52, %p53
    %p55 = scmp.ne.s32.totalorder %s44, %s47
    %p56 = scmp.eq.s32.totalorder %s25, 1
    %p57 = por %p55, %p56
    %p58 = scmp.ne.s32.totalorder %s47, %s48
    %p59 = scmp.eq.s32.totalorder %s25, 0
    %p60 = por %p58, %p59
    %p61 = scmp.ne.s32.totalorder %s47, %s48
    %p62 = scmp.eq.s32.totalorder %s26, 1
    %p63 = por %p61, %p62
    %p65 = scmp.ne.s32.totalorder %s48, %s64
    %p66 = scmp.eq.s32.totalorder %s26, 0
    %p67 = por %p65, %p66
    %s69 = sadd.s32 %s68, 1
    %p72 = scmp.eq.s32.totalorder %s20, 1
    %p73 = scmp.ne.s32.totalorder %s68, %s70
    %p74 = scmp.eq.s32.totalorder %s20, 0
    %p75 = por %p73, %p74
    %p76 = scmp.ne.s32.totalorder %s68, %s70
    %p77 = scmp.eq.s32.totalorder %s25, 1
    %p78 = por %p76, %p77
    %p79 = scmp.ne.s32.totalorder %s70, %s71
    %p80 = scmp.eq.s32.totalorder %s25, 0
    %p81 = por %p79, %p80
    %p82 = scmp.ne.s32.totalorder %s70, %s71
    %p83 = scmp.eq.s32.totalorder %s26, 1
    %p84 = por %p82, %p83
    %p86 = scmp.ne.s32.totalorder %s71, %s85
    %p87 = scmp.eq.s32.totalorder %s26, 0
    %p88 = por %p86, %p87
    %s90 = sadd.s32 %s89, 1
    %p93 = scmp.eq.s32.totalorder %s20, 1
    %p94 = scmp.ne.s32.totalorder %s89, %s91
    %p95 = scmp.eq.s32.totalorder %s20, 0
    %p96 = por %p94, %p95
    %p97 = scmp.ne.s32.totalorder %s89, %s91
    %p98 = scmp.eq.s32.totalorder %s25, 1
    %p99 = por %p97, %p98
    %p100 = scmp.ne.s32.totalorder %s91, %s92
    %p101 = scmp.eq.s32.totalorder %s25, 0
    %p102 = por %p100, %p101
    %p103 = scmp.ne.s32.totalorder %s91, %s92
    %p104 = scmp.eq.s32.totalorder %s26, 1
    %p105 = por %p103, %p104
    %p107 = scmp.ne.s32.totalorder %s92, %s106
    %p108 = scmp.eq.s32.totalorder %s26, 0
    %p109 = por %p107, %p108
    %s111 = sadd.s32 %s110, 1
    %p114 = scmp.eq.s32.totalorder %s20, 1
    %p115 = scmp.ne.s32.totalorder %s110, %s112
    %p116 = scmp.eq.s32.totalorder %s20, 0
    %p117 = por %p115, %p116
    %p118 = scmp.ne.s32.totalorder %s110, %s112
    %p119 = scmp.eq.s32.totalorder %s25, 1
    %p120 = por %p118, %p119
    %p121 = scmp.ne.s32.totalorder %s112, %s113
    %p122 = scmp.eq.s32.totalorder %s25, 0
    %p123 = por %p121, %p122
    %p124 = scmp.ne.s32.totalorder %s112, %s113
    %p125 = scmp.eq.s32.totalorder %s26, 1
    %p126 = por %p124, %p125
    %p128 = scmp.ne.s32.totalorder %s113, %s127
    %p129 = scmp.eq.s32.totalorder %s26, 0
    %p130 = por %p128, %p129
    %s132 = sadd.s32 %s131, 1
    %p135 = scmp.eq.s32.totalorder %s20, 1
    %p136 = scmp.ne.s32.totalorder %s131, %s133
    %p137 = scmp.eq.s32.totalorder %s20, 0
    %p138 = por %p136, %p137
    %p139 = scmp.ne.s32.totalorder %s131, %s133
    %p140 = scmp.eq.s32.totalorder %s25, 1
    %p141 = por %p139, %p140
    %p142 = scmp.ne.s32.totalorder %s133, %s134
    %p143 = scmp.eq.s32.totalorder %s25, 0
    %p144 = por %p142, %p143
    %p145 = scmp.ne.s32.totalorder %s133, %s134
    %p146 = scmp.eq.s32.totalorder %s26, 1
    %p147 = por %p145, %p146
    %p149 = scmp.ne.s32.totalorder %s134, %s148
    %p150 = scmp.eq.s32.totalorder %s26, 0
    %p151 = por %p149, %p150
    %s153 = sadd.s32 %s152, 1
    %p156 = scmp.eq.s32.totalorder %s20, 1
    %p157 = scmp.ne.s32.totalorder %s152, %s154
    %p158 = scmp.eq.s32.totalorder %s20, 0
    %p159 = por %p157, %p158
    %p160 = scmp.ne.s32.totalorder %s152, %s154
    %p161 = scmp.eq.s32.totalorder %s25, 1
    %p162 = por %p160, %p161
    %p163 = scmp.ne.s32.totalorder %s154, %s155
    %p164 = scmp.eq.s32.totalorder %s25, 0
    %p165 = por %p163, %p164
    %p166 = scmp.ne.s32.totalorder %s154, %s155
    %p167 = scmp.eq.s32.totalorder %s26, 1
    %p168 = por %p166, %p167
    %p170 = scmp.ne.s32.totalorder %s155, %s169
    %p171 = scmp.eq.s32.totalorder %s26, 0
    %p172 = por %p170, %p171
    %s174 = sadd.s32 %s173, 1
    %p177 = scmp.eq.s32.totalorder %s20, 1
    %p178 = scmp.ne.s32.totalorder %s173, %s175
    %p179 = scmp.eq.s32.totalorder %s20, 0
    %p180 = por %p178, %p179
    %p181 = scmp.ne.s32.totalorder %s173, %s175
    %p182 = scmp.eq.s32.totalorder %s25, 1
    %p183 = por %p181, %p182
    %p184 = scmp.ne.s32.totalorder %s175, %s176
    %p185 = scmp.eq.s32.totalorder %s25, 0
    %p186 = por %p184, %p185
    %p187 = scmp.ne.s32.totalorder %s175, %s176
    %p188 = scmp.eq.s32.totalorder %s26, 1
    %p189 = por %p187, %p188
    %p191 = scmp.ne.s32.totalorder %s176, %s190
    %p192 = scmp.eq.s32.totalorder %s26, 0
    %p193 = por %p191, %p192
    %s195 = sadd.s32 %s194, 1
    %p198 = scmp.eq.s32.totalorder %s20, 1
    %p199 = scmp.ne.s32.totalorder %s194, %s196
    %p200 = scmp.eq.s32.totalorder %s20, 0
    %p201 = por %p199, %p200
    %p202 = scmp.ne.s32.totalorder %s194, %s196
    %p203 = scmp.eq.s32.totalorder %s25, 1
    %p204 = por %p202, %p203
    %p205 = scmp.ne.s32.totalorder %s196, %s197
    %p206 = scmp.eq.s32.totalorder %s25, 0
    %p207 = por %p205, %p206
    %p208 = scmp.ne.s32.totalorder %s196, %s197
    %p209 = scmp.eq.s32.totalorder %s26, 1
    %p210 = por %p208, %p209
    %p212 = scmp.ne.s32.totalorder %s197, %s211
    %p213 = scmp.eq.s32.totalorder %s26, 0
    %p214 = por %p212, %p213
    %s216 = sadd.s32 %s215, 1
    %p219 = scmp.eq.s32.totalorder %s20, 1
    %p220 = scmp.ne.s32.totalorder %s215, %s217
    %p221 = scmp.eq.s32.totalorder %s20, 0
    %p222 = por %p220, %p221
    %p223 = scmp.ne.s32.totalorder %s215, %s217
    %p224 = scmp.eq.s32.totalorder %s25, 1
    %p225 = por %p223, %p224
    %p226 = scmp.ne.s32.totalorder %s217, %s218
    %p227 = scmp.eq.s32.totalorder %s25, 0
    %p228 = por %p226, %p227
    %p229 = scmp.ne.s32.totalorder %s217, %s218
    %p230 = scmp.eq.s32.totalorder %s26, 1
    %p231 = por %p229, %p230
    %p233 = scmp.ne.s32.totalorder %s218, %s232
    %p234 = scmp.eq.s32.totalorder %s26, 0
    %p235 = por %p233, %p234
    %s237 = sadd.s32 %s236, 1
    %p240 = scmp.eq.s32.totalorder %s20, 1
    %p241 = scmp.ne.s32.totalorder %s236, %s238
    %p242 = scmp.eq.s32.totalorder %s20, 0
    %p243 = por %p241, %p242
    %p244 = scmp.ne.s32.totalorder %s236, %s238
    %p245 = scmp.eq.s32.totalorder %s25, 1
    %p246 = por %p244, %p245
    %p247 = scmp.ne.s32.totalorder %s238, %s239
    %p248 = scmp.eq.s32.totalorder %s25, 0
    %p249 = por %p247, %p248
    %p250 = scmp.ne.s32.totalorder %s238, %s239
    %p251 = scmp.eq.s32.totalorder %s26, 1
    %p252 = por %p250, %p251
    %p254 = scmp.ne.s32.totalorder %s239, %s253
    %p255 = scmp.eq.s32.totalorder %s26, 0
    %p256 = por %p254, %p255
    %s258 = sadd.s32 %s257, 1
    %p261 = scmp.eq.s32.totalorder %s20, 1
    %p262 = scmp.ne.s32.totalorder %s257, %s259
    %p263 = scmp.eq.s32.totalorder %s20, 0
    %p264 = por %p262, %p263
    %p265 = scmp.ne.s32.totalorder %s257, %s259
    %p266 = scmp.eq.s32.totalorder %s25, 1
    %p267 = por %p265, %p266
    %p268 = scmp.ne.s32.totalorder %s259, %s260
    %p269 = scmp.eq.s32.totalorder %s25, 0
    %p270 = por %p268, %p269
    %p271 = scmp.ne.s32.totalorder %s259, %s260
    %p272 = scmp.eq.s32.totalorder %s26, 1
    %p273 = por %p271, %p272
    %p275 = scmp.ne.s32.totalorder %s260, %s274
    %p276 = scmp.eq.s32.totalorder %s26, 0
    %p277 = por %p275, %p276
    %s279 = sadd.s32 %s278, 1
    %p282 = scmp.eq.s32.totalorder %s20, 1
    %p283 = scmp.ne.s32.totalorder %s278, %s280
    %p284 = scmp.eq.s32.totalorder %s20, 0
    %p285 = por %p283, %p284
    %p286 = scmp.ne.s32.totalorder %s278, %s280
    %p287 = scmp.eq.s32.totalorder %s25, 1
    %p288 = por %p286, %p287
    %p289 = scmp.ne.s32.totalorder %s280, %s281
    %p290 = scmp.eq.s32.totalorder %s25, 0
    %p291 = por %p289, %p290
    %p292 = scmp.ne.s32.totalorder %s280, %s281
    %p293 = scmp.eq.s32.totalorder %s26, 1
    %p294 = por %p292, %p293
    %p296 = scmp.ne.s32.totalorder %s281, %s295
    %p297 = scmp.eq.s32.totalorder %s26, 0
    %p298 = por %p296, %p297
    %s300 = sadd.s32 %s299, 1
    %p303 = scmp.eq.s32.totalorder %s20, 1
    %p304 = scmp.ne.s32.totalorder %s299, %s301
    %p305 = scmp.eq.s32.totalorder %s20, 0
    %p306 = por %p304, %p305
    %p307 = scmp.ne.s32.totalorder %s299, %s301
    %p308 = scmp.eq.s32.totalorder %s25, 1
    %p309 = por %p307, %p308
    %p310 = scmp.ne.s32.totalorder %s301, %s302
    %p311 = scmp.eq.s32.totalorder %s25, 0
    %p312 = por %p310, %p311
    %p313 = scmp.ne.s32.totalorder %s301, %s302
    %p314 = scmp.eq.s32.totalorder %s26, 1
    %p315 = por %p313, %p314
    %p317 = scmp.ne.s32.totalorder %s302, %s316
    %p318 = scmp.eq.s32.totalorder %s26, 0
    %p319 = por %p317, %p318
    %s321 = sadd.s32 %s320, 1
    %p324 = scmp.eq.s32.totalorder %s20, 1
    %p325 = scmp.ne.s32.totalorder %s320, %s322
    %p326 = scmp.eq.s32.totalorder %s20, 0
    %p327 = por %p325, %p326
    %p328 = scmp.ne.s32.totalorder %s320, %s322
    %p329 = scmp.eq.s32.totalorder %s25, 1
    %p330 = por %p328, %p329
    %p331 = scmp.ne.s32.totalorder %s322, %s323
    %p332 = scmp.eq.s32.totalorder %s25, 0
    %p333 = por %p331, %p332
    %p334 = scmp.ne.s32.totalorder %s322, %s323
    %p335 = scmp.eq.s32.totalorder %s26, 1
    %p336 = por %p334, %p335
    %p338 = scmp.ne.s32.totalorder %s323, %s337
    %p339 = scmp.eq.s32.totalorder %s26, 0
    %p340 = por %p338, %p339
    %s341 = ssub.s32 %s27, %s39
    %s342 = ssub.s32 %s28, %s35
    %s343 = sor.u32 %s341, %s342
    %p344 = scmp.eq.s32.totalorder %s343, 0
    %s346 = sadd.s32 %s345, 1
    %s347 = scalar_select %p344, %s345, %s346
    %p350 = pneg %p344
    %p351 = scmp.eq.s32.totalorder %s20, 1
    %p352 = por %p350, %p351
    %p353 = scmp.ne.s32.totalorder %s345, %s348
    %p354 = scmp.eq.s32.totalorder %s20, 0
    %p355 = por %p353, %p354
    %p356 = scmp.ne.s32.totalorder %s345, %s348
    %p357 = scmp.eq.s32.totalorder %s25, 1
    %p358 = por %p356, %p357
    %p359 = scmp.ne.s32.totalorder %s348, %s349
    %p360 = scmp.eq.s32.totalorder %s25, 0
    %p361 = por %p359, %p360
    %p362 = scmp.ne.s32.totalorder %s348, %s349
    %p363 = scmp.eq.s32.totalorder %s26, 1
    %p364 = por %p362, %p363
    %p366 = scmp.ne.s32.totalorder %s349, %s365
    %p367 = scmp.eq.s32.totalorder %s26, 0
    %p368 = por %p366, %p367
    %p369 = scmp.le.s32.totalorder 1, %s20
    %p370 = scmp.lt.s32.totalorder %s20, 3
    %p371 = pnand %p369, %p370
    %p372 = pneg %p371
    // Predicated region
    $region9: #{tpu_custom_call.1} parent=5 // pred_check
      _
    $region10: #{tpu_custom_call.1} parent=5 // pred_check_branch
      %374 = sbr.rel (%p371) target = $region12
    $region11: #{tpu_custom_call.1} parent=5 // pred_region
      %s375 = ssub.s32 %s20, 1
      // Predicated region
      $region13: #{tpu_custom_call.1} parent=11 // pred_check
        %p376 = pneg %p81
      $region14: #{tpu_custom_call.1} parent=11 // pred_check_branch
        %378 = sbr.rel (%p376) target = $region16
      $region15: #{tpu_custom_call.1} parent=11 // pred_region
        _
      $region16: #{tpu_custom_call.1} parent=11 // pred_fallthru
        _
      // Predicated region
      $region17: #{tpu_custom_call.1} parent=11 // pred_check
        %p379 = pneg %p102
      $region18: #{tpu_custom_call.1} parent=11 // pred_check_branch
        %381 = sbr.rel (%p379) target = $region20
      $region19: #{tpu_custom_call.1} parent=11 // pred_region
        _
      $region20: #{tpu_custom_call.1} parent=11 // pred_fallthru
        _
      // Predicated region
      $region21: #{tpu_custom_call.1} parent=11 // pred_check
        %p382 = pneg %p123
      $region22: #{tpu_custom_call.1} parent=11 // pred_check_branch
        %384 = sbr.rel (%p382) target = $region24
      $region23: #{tpu_custom_call.1} parent=11 // pred_region
        _
      $region24: #{tpu_custom_call.1} parent=11 // pred_fallthru
        _
      // Predicated region
      $region25: #{tpu_custom_call.1} parent=11 // pred_check
        %p385 = pneg %p144
      $region26: #{tpu_custom_call.1} parent=11 // pred_check_branch
        %387 = sbr.rel (%p385) target = $region28
      $region27: #{tpu_custom_call.1} parent=11 // pred_region
        _
      $region28: #{tpu_custom_call.1} parent=11 // pred_fallthru
        _
      // Predicated region
      $region29: #{tpu_custom_call.1} parent=11 // pred_check
        %p388 = pneg %p165
      $region30: #{tpu_custom_call.1} parent=11 // pred_check_branch
        %390 = sbr.rel (%p388) target = $region32
      $region31: #{tpu_custom_call.1} parent=11 // pred_region
        _
      $region32: #{tpu_custom_call.1} parent=11 // pred_fallthru
        _
      // Predicated region
      $region33: #{tpu_custom_call.1} parent=11 // pred_check
        %p391 = pneg %p186
      $region34: #{tpu_custom_call.1} parent=11 // pred_check_branch
        %393 = sbr.rel (%p391) target = $region36
      $region35: #{tpu_custom_call.1} parent=11 // pred_region
        _
      $region36: #{tpu_custom_call.1} parent=11 // pred_fallthru
        _
      // Predicated region
      $region37: #{tpu_custom_call.1} parent=11 // pred_check
        %p394 = pneg %p207
      $region38: #{tpu_custom_call.1} parent=11 // pred_check_branch
        %396 = sbr.rel (%p394) target = $region40
      $region39: #{tpu_custom_call.1} parent=11 // pred_region
        _
      $region40: #{tpu_custom_call.1} parent=11 // pred_fallthru
        _
      // Predicated region
      $region41: #{tpu_custom_call.1} parent=11 // pred_check
        %p397 = pneg %p228
      $region42: #{tpu_custom_call.1} parent=11 // pred_check_branch
        %399 = sbr.rel (%p397) target = $region44
      $region43: #{tpu_custom_call.1} parent=11 // pred_region
        _
      $region44: #{tpu_custom_call.1} parent=11 // pred_fallthru
        _
      // Predicated region
      $region45: #{tpu_custom_call.1} parent=11 // pred_check
        %p400 = pneg %p249
      $region46: #{tpu_custom_call.1} parent=11 // pred_check_branch
        %402 = sbr.rel (%p400) target = $region48
      $region47: #{tpu_custom_call.1} parent=11 // pred_region
        _
      $region48: #{tpu_custom_call.1} parent=11 // pred_fallthru
        _
      // Predicated region
      $region49: #{tpu_custom_call.1} parent=11 // pred_check
        %p403 = pneg %p270
      $region50: #{tpu_custom_call.1} parent=11 // pred_check_branch
        %405 = sbr.rel (%p403) target = $region52
      $region51: #{tpu_custom_call.1} parent=11 // pred_region
        _
      $region52: #{tpu_custom_call.1} parent=11 // pred_fallthru
        _
      // Predicated region
      $region53: #{tpu_custom_call.1} parent=11 // pred_check
        %p406 = pneg %p291
      $region54: #{tpu_custom_call.1} parent=11 // pred_check_branch
        %408 = sbr.rel (%p406) target = $region56
      $region55: #{tpu_custom_call.1} parent=11 // pred_region
        _
      $region56: #{tpu_custom_call.1} parent=11 // pred_fallthru
        _
      // Predicated region
      $region57: #{tpu_custom_call.1} parent=11 // pred_check
        %p409 = pneg %p312
      $region58: #{tpu_custom_call.1} parent=11 // pred_check_branch
        %411 = sbr.rel (%p409) target = $region60
      $region59: #{tpu_custom_call.1} parent=11 // pred_region
        _
      $region60: #{tpu_custom_call.1} parent=11 // pred_fallthru
        _
      // Predicated region
      $region61: #{tpu_custom_call.1} parent=11 // pred_check
        %p412 = pneg %p333
      $region62: #{tpu_custom_call.1} parent=11 // pred_check_branch
        %414 = sbr.rel (%p412) target = $region64
      $region63: #{tpu_custom_call.1} parent=11 // pred_region
        _
      $region64: #{tpu_custom_call.1} parent=11 // pred_fallthru
        _
    $region12: #{tpu_custom_call.1} parent=5 // pred_fallthru
      _
    %p415 = scmp.lt.s32.totalorder %s20, 2
    // Predicated region
    $region65: #{tpu_custom_call.1} parent=5 // pred_check
      %p416 = pneg %p415
    $region66: #{tpu_custom_call.1} parent=5 // pred_check_branch
      %418 = sbr.rel (%p416) target = $region68
    $region67: #{tpu_custom_call.1} parent=5 // pred_region
      // Predicated region
      $region69: #{tpu_custom_call.1} parent=67 // pred_check
        %p419 = pneg %p54
      $region70: #{tpu_custom_call.1} parent=67 // pred_check_branch
        %421 = sbr.rel (%p419) target = $region72
      $region71: #{tpu_custom_call.1} parent=67 // pred_region
        %s422 = smul.u32 16, %s28
        %p423 = scmp.lt.s32.totalorder %s27, 1
        %s424 = scalar_select %p423, %s27, 1
        %p425 = scmp.lt.s32.totalorder %s422, 15
        %s426 = scalar_select %p425, %s422, 15
        %s427 = smul.addr %s424, 16
        %s428 = sadd.s32 %s426, %s427
        %s429 = smul.addr %s428, 8
        %s430 = scalar_lea.vmem %s0, %s429
        %s431 = smul.u32 16, %s28
      $region72: #{tpu_custom_call.1} parent=67 // pred_fallthru
        _
    $region68: #{tpu_custom_call.1} parent=5 // pred_fallthru
      _
    %p432 = scmp.le.s32.totalorder 1, %s20
    %p433 = scmp.lt.s32.totalorder %s20, 3
    %p434 = pnand %p432, %p433
    %p435 = pneg %p434
    // Predicated region
    $region73: #{tpu_custom_call.1} parent=5 // pred_check
      _
    $region74: #{tpu_custom_call.1} parent=5 // pred_check_branch
      %437 = sbr.rel (%p434) target = $region76
    $region75: #{tpu_custom_call.1} parent=5 // pred_region
      %s438 = ssub.s32 %s20, 1
      %s439 = smul.u32 16, %s30
      %p440 = scmp.lt.s32.totalorder %s29, 1
      %s441 = scalar_select %p440, %s29, 1
      %p442 = scmp.lt.s32.totalorder %s439, 15
      %s443 = scalar_select %p442, %s439, 15
      %s444 = smul.addr %s441, 16
      %s445 = sadd.s32 %s443, %s444
      %s446 = smul.addr %s445, 8
      %s447 = scalar_lea.vmem %s0, %s446
      %p448 = pneg %p60
      %p449 = pneg %p57
      %p450 = pneg %p81
      %p451 = pneg %p78
      %p452 = pneg %p102
      %p453 = pneg %p99
      %p454 = pneg %p123
      %p455 = pneg %p120
      %p456 = pneg %p144
      %p457 = pneg %p141
      %p458 = pneg %p165
      %p459 = pneg %p162
      %p460 = pneg %p186
      %p461 = pneg %p183
      %p462 = pneg %p207
      %p463 = pneg %p204
      %p464 = pneg %p228
      %p465 = pneg %p225
      %p466 = pneg %p249
      %p467 = pneg %p246
      %p468 = pneg %p270
      %p469 = pneg %p267
      %p470 = pneg %p291
      %p471 = pneg %p288
      %p472 = pneg %p312
      %p473 = pneg %p309
      %p474 = pneg %p333
      %p475 = pneg %p330
      %p476 = pneg %p361
      %p477 = pneg %p358
      %s478 = smul.u32 16, %s30
      %p479 = scmp.lt.s32.totalorder %s29, 1
      %s480 = scalar_select %p479, %s29, 1
      %p481 = scmp.lt.s32.totalorder %s478, 15
      %s482 = scalar_select %p481, %s478, 15
      %s483 = smul.addr %s480, 16
      %s484 = sadd.s32 %s482, %s483
      %s485 = smul.addr %s484, 8
      %s486 = scalar_lea.vmem %s14, %s485
      %s487 = smul.u32 16, %s30
      %p488 = scmp.lt.s32.totalorder %s29, 1
      %s489 = scalar_select %p488, %s29, 1
      %p490 = scmp.lt.s32.totalorder %s487, 15
      %s491 = scalar_select %p490, %s487, 15
      %s492 = smul.addr %s489, 16
      %s493 = sadd.s32 %s491, %s492
      %s494 = smul.addr %s493, 8
      %s495 = scalar_lea.vmem %s0, %s494
      %s496 = smul.u32 16, %s30
      %s497 = smul.u32 16, %s30
      %p498 = scmp.lt.s32.totalorder %s29, 1
      %s499 = scalar_select %p498, %s29, 1
      %p500 = scmp.lt.s32.totalorder %s497, 15
      %s501 = scalar_select %p500, %s497, 15
      %s502 = smul.addr %s499, 16
      %s503 = sadd.s32 %s501, %s502
      %s504 = smul.addr %s503, 8
      %s505 = scalar_lea.vmem %s14, %s504
      %s506 = smul.u32 16, %s30
      %v508 = vld [vmem:[%s495] sm:$0xff]
      %v509 = vld [vmem:[%s495 + $0x8] sm:$0xff]
      %v510 = vld [vmem:[%s495 + $0x10] sm:$0xff]
      %v511 = vld [vmem:[%s495 + $0x18] sm:$0xff]
      %v512 = vld [vmem:[%s495 + $0x20] sm:$0xff]
      %v513 = vld [vmem:[%s495 + $0x28] sm:$0xff]
      %v514 = vld [vmem:[%s495 + $0x30] sm:$0xff]
      %v515 = vld [vmem:[%s495 + $0x38] sm:$0xff]
      %v516 = vld [vmem:[%s495 + $0x40] sm:$0xff]
      %v517 = vld [vmem:[%s495 + $0x48] sm:$0xff]
      %v518 = vld [vmem:[%s495 + $0x50] sm:$0xff]
      %v519 = vld [vmem:[%s495 + $0x58] sm:$0xff]
      %v520 = vld [vmem:[%s495 + $0x60] sm:$0xff]
      %v521 = vld [vmem:[%s495 + $0x68] sm:$0xff]
      %v522 = vld [vmem:[%s495 + $0x70] sm:$0xff]
      %v523 = vld [vmem:[%s495 + $0x78] sm:$0xff]
      %v524 = vld [vmem:[%s1] sm:$0x1]
      %v525 = vld [vmem:[%s2] sm:$0x1]
      %vm526 = vcmask 261120
      %v527 = vsel %vm526, %v508, 0.0
      %528 = vadd.xlane.f32.xlu0 %v527
      %v529 = vpop.xlane.xlu0 %528
      %v530 = vsel %vm526, %v509, 0.0
      %531 = vadd.xlane.f32.xlu0 %v530
      %v532 = vpop.xlane.xlu0 %531
      %v533 = vsel %vm526, %v510, 0.0
      %534 = vadd.xlane.f32.xlu0 %v533
      %v535 = vpop.xlane.xlu0 %534
      %v536 = vsel %vm526, %v511, 0.0
      %537 = vadd.xlane.f32.xlu0 %v536
      %v538 = vpop.xlane.xlu0 %537
      %v539 = vsel %vm526, %v512, 0.0
      %540 = vadd.xlane.f32.xlu0 %v539
      %v541 = vpop.xlane.xlu0 %540
      %v542 = vsel %vm526, %v513, 0.0
      %543 = vadd.xlane.f32.xlu0 %v542
      %v544 = vpop.xlane.xlu0 %543
      %v545 = vsel %vm526, %v514, 0.0
      %546 = vadd.xlane.f32.xlu0 %v545
      %v547 = vpop.xlane.xlu0 %546
      %v548 = vsel %vm526, %v515, 0.0
      %549 = vadd.xlane.f32.xlu0 %v548
      %v550 = vpop.xlane.xlu0 %549
      %v551 = vsel %vm526, %v516, 0.0
      %552 = vadd.xlane.f32.xlu0 %v551
      %v553 = vpop.xlane.xlu0 %552
      %v554 = vsel %vm526, %v517, 0.0
      %555 = vadd.xlane.f32.xlu0 %v554
      %v556 = vpop.xlane.xlu0 %555
      %v557 = vsel %vm526, %v518, 0.0
      %558 = vadd.xlane.f32.xlu0 %v557
      %v559 = vpop.xlane.xlu0 %558
      %v560 = vsel %vm526, %v519, 0.0
      %561 = vadd.xlane.f32.xlu0 %v560
      %v562 = vpop.xlane.xlu0 %561
      %v563 = vsel %vm526, %v520, 0.0
      %564 = vadd.xlane.f32.xlu0 %v563
      %v565 = vpop.xlane.xlu0 %564
      %v566 = vsel %vm526, %v521, 0.0
      %567 = vadd.xlane.f32.xlu0 %v566
      %v568 = vpop.xlane.xlu0 %567
      %v569 = vsel %vm526, %v522, 0.0
      %570 = vadd.xlane.f32.xlu0 %v569
      %v571 = vpop.xlane.xlu0 %570
      %v572 = vsel %vm526, %v523, 0.0
      %573 = vadd.xlane.f32.xlu0 %v572
      %v574 = vpop.xlane.xlu0 %573
      %v575 = vrcp.pop 32.0
      %v576 = vmul.f32 %v529, %v575
      %v577 = vmul.f32 %v532, %v575
      %v578 = vmul.f32 %v535, %v575
      %v579 = vmul.f32 %v538, %v575
      %v580 = vmul.f32 %v541, %v575
      %v581 = vmul.f32 %v544, %v575
      %v582 = vmul.f32 %v547, %v575
      %v583 = vmul.f32 %v550, %v575
      %v584 = vmul.f32 %v553, %v575
      %v585 = vmul.f32 %v556, %v575
      %v586 = vmul.f32 %v559, %v575
      %v587 = vmul.f32 %v562, %v575
      %v588 = vmul.f32 %v565, %v575
      %v589 = vmul.f32 %v568, %v575
      %v590 = vmul.f32 %v571, %v575
      %v591 = vmul.f32 %v574, %v575
      %v592 = vsub.f32 %v508, %v576
      %v593 = vsub.f32 %v509, %v577
      %v594 = vsub.f32 %v510, %v578
      %v595 = vsub.f32 %v511, %v579
      %v596 = vsub.f32 %v512, %v580
      %v597 = vsub.f32 %v513, %v581
      %v598 = vsub.f32 %v514, %v582
      %v599 = vsub.f32 %v515, %v583
      %v600 = vsub.f32 %v516, %v584
      %v601 = vsub.f32 %v517, %v585
      %v602 = vsub.f32 %v518, %v586
      %v603 = vsub.f32 %v519, %v587
      %v604 = vsub.f32 %v520, %v588
      %v605 = vsub.f32 %v521, %v589
      %v606 = vsub.f32 %v522, %v590
      %v607 = vsub.f32 %v523, %v591
      %v608 = vmul.f32 %v592, %v592
      %v609 = vmul.f32 %v593, %v593
      %v610 = vmul.f32 %v594, %v594
      %v611 = vmul.f32 %v595, %v595
      %v612 = vmul.f32 %v596, %v596
      %v613 = vmul.f32 %v597, %v597
      %v614 = vmul.f32 %v598, %v598
      %v615 = vmul.f32 %v599, %v599
      %v616 = vmul.f32 %v600, %v600
      %v617 = vmul.f32 %v601, %v601
      %v618 = vmul.f32 %v602, %v602
      %v619 = vmul.f32 %v603, %v603
      %v620 = vmul.f32 %v604, %v604
      %v621 = vmul.f32 %v605, %v605
      %v622 = vmul.f32 %v606, %v606
      %v623 = vmul.f32 %v607, %v607
      %v624 = vsel %vm526, %v608, 0.0
      %625 = vadd.xlane.f32.xlu0 %v624
      %v626 = vpop.xlane.xlu0 %625
      %v627 = vsel %vm526, %v609, 0.0
      %628 = vadd.xlane.f32.xlu0 %v627
      %v629 = vpop.xlane.xlu0 %628
      %v630 = vsel %vm526, %v610, 0.0
      %631 = vadd.xlane.f32.xlu0 %v630
      %v632 = vpop.xlane.xlu0 %631
      %v633 = vsel %vm526, %v611, 0.0
      %634 = vadd.xlane.f32.xlu0 %v633
      %v635 = vpop.xlane.xlu0 %634
      %v636 = vsel %vm526, %v612, 0.0
      %637 = vadd.xlane.f32.xlu0 %v636
      %v638 = vpop.xlane.xlu0 %637
      %v639 = vsel %vm526, %v613, 0.0
      %640 = vadd.xlane.f32.xlu0 %v639
      %v641 = vpop.xlane.xlu0 %640
      %v642 = vsel %vm526, %v614, 0.0
      %643 = vadd.xlane.f32.xlu0 %v642
      %v644 = vpop.xlane.xlu0 %643
      %v645 = vsel %vm526, %v615, 0.0
      %646 = vadd.xlane.f32.xlu0 %v645
      %v647 = vpop.xlane.xlu0 %646
      %v648 = vsel %vm526, %v616, 0.0
      %649 = vadd.xlane.f32.xlu0 %v648
      %v650 = vpop.xlane.xlu0 %649
      %v651 = vsel %vm526, %v617, 0.0
      %652 = vadd.xlane.f32.xlu0 %v651
      %v653 = vpop.xlane.xlu0 %652
      %v654 = vsel %vm526, %v618, 0.0
      %655 = vadd.xlane.f32.xlu0 %v654
      %v656 = vpop.xlane.xlu0 %655
      %v657 = vsel %vm526, %v619, 0.0
      %658 = vadd.xlane.f32.xlu0 %v657
      %v659 = vpop.xlane.xlu0 %658
      %v660 = vsel %vm526, %v620, 0.0
      %661 = vadd.xlane.f32.xlu0 %v660
      %v662 = vpop.xlane.xlu0 %661
      %v663 = vsel %vm526, %v621, 0.0
      %664 = vadd.xlane.f32.xlu0 %v663
      %v665 = vpop.xlane.xlu0 %664
      %v666 = vsel %vm526, %v622, 0.0
      %667 = vadd.xlane.f32.xlu0 %v666
      %v668 = vpop.xlane.xlu0 %667
      %v669 = vsel %vm526, %v623, 0.0
      %670 = vadd.xlane.f32.xlu0 %v669
      %v671 = vpop.xlane.xlu0 %670
      %v672 = vmul.f32 %v626, %v575
      %v673 = vmul.f32 %v629, %v575
      %v674 = vmul.f32 %v632, %v575
      %v675 = vmul.f32 %v635, %v575
      %v676 = vmul.f32 %v638, %v575
      %v677 = vmul.f32 %v641, %v575
      %v678 = vmul.f32 %v644, %v575
      %v679 = vmul.f32 %v647, %v575
      %v680 = vmul.f32 %v650, %v575
      %v681 = vmul.f32 %v653, %v575
      %v682 = vmul.f32 %v656, %v575
      %v683 = vmul.f32 %v659, %v575
      %v684 = vmul.f32 %v662, %v575
      %v685 = vmul.f32 %v665, %v575
      %v686 = vmul.f32 %v668, %v575
      %v687 = vmul.f32 %v671, %v575
      %v688 = vadd.f32 %v672, 1e-05
      %v689 = vadd.f32 %v673, 1e-05
      %v690 = vadd.f32 %v674, 1e-05
      %v691 = vadd.f32 %v675, 1e-05
      %v692 = vadd.f32 %v676, 1e-05
      %v693 = vadd.f32 %v677, 1e-05
      %v694 = vadd.f32 %v678, 1e-05
      %v695 = vadd.f32 %v679, 1e-05
      %v696 = vadd.f32 %v680, 1e-05
      %v697 = vadd.f32 %v681, 1e-05
      %v698 = vadd.f32 %v682, 1e-05
      %v699 = vadd.f32 %v683, 1e-05
      %v700 = vadd.f32 %v684, 1e-05
      %v701 = vadd.f32 %v685, 1e-05
      %v702 = vadd.f32 %v686, 1e-05
      %v703 = vadd.f32 %v687, 1e-05
      %v704 = vrsqrt.pop %v688
      %v705 = vrsqrt.pop %v689
      %v706 = vrsqrt.pop %v690
      %v707 = vrsqrt.pop %v691
      %v708 = vrsqrt.pop %v692
      %v709 = vrsqrt.pop %v693
      %v710 = vrsqrt.pop %v694
      %v711 = vrsqrt.pop %v695
      %v712 = vrsqrt.pop %v696
      %v713 = vrsqrt.pop %v697
      %v714 = vrsqrt.pop %v698
      %v715 = vrsqrt.pop %v699
      %v716 = vrsqrt.pop %v700
      %v717 = vrsqrt.pop %v701
      %v718 = vrsqrt.pop %v702
      %v719 = vrsqrt.pop %v703
      %v720 = vmul.f32 %v592, %v704
      %v721 = vmul.f32 %v593, %v705
      %v722 = vmul.f32 %v594, %v706
      %v723 = vmul.f32 %v595, %v707
      %v724 = vmul.f32 %v596, %v708
      %v725 = vmul.f32 %v597, %v709
      %v726 = vmul.f32 %v598, %v710
      %v727 = vmul.f32 %v599, %v711
      %v728 = vmul.f32 %v600, %v712
      %v729 = vmul.f32 %v601, %v713
      %v730 = vmul.f32 %v602, %v714
      %v731 = vmul.f32 %v603, %v715
      %v732 = vmul.f32 %v604, %v716
      %v733 = vmul.f32 %v605, %v717
      %v734 = vmul.f32 %v606, %v718
      %v735 = vmul.f32 %v607, %v719
      %v737 = vlaneseq
      %v738 = vshrl.u32 %v737, 7
      %v739 = vsub.s32 0, %v738
      %v740 = vrot.slane %v524, %v739
      %v742 = vmul.f32 %v720, %v740
      %v743 = vmul.f32 %v721, %v740
      %v744 = vmul.f32 %v722, %v740
      %v745 = vmul.f32 %v723, %v740
      %v746 = vmul.f32 %v724, %v740
      %v747 = vmul.f32 %v725, %v740
      %v748 = vmul.f32 %v726, %v740
      %v749 = vmul.f32 %v727, %v740
      %v750 = vmul.f32 %v728, %v740
      %v751 = vmul.f32 %v729, %v740
      %v752 = vmul.f32 %v730, %v740
      %v753 = vmul.f32 %v731, %v740
      %v754 = vmul.f32 %v732, %v740
      %v755 = vmul.f32 %v733, %v740
      %v756 = vmul.f32 %v734, %v740
      %v757 = vmul.f32 %v735, %v740
      %v759 = vlaneseq
      %v760 = vshrl.u32 %v759, 7
      %v761 = vsub.s32 0, %v760
      %v762 = vrot.slane %v525, %v761
      %v764 = vadd.f32 %v742, %v762
      %v765 = vadd.f32 %v743, %v762
      %v766 = vadd.f32 %v744, %v762
      %v767 = vadd.f32 %v745, %v762
      %v768 = vadd.f32 %v746, %v762
      %v769 = vadd.f32 %v747, %v762
      %v770 = vadd.f32 %v748, %v762
      %v771 = vadd.f32 %v749, %v762
      %v772 = vadd.f32 %v750, %v762
      %v773 = vadd.f32 %v751, %v762
      %v774 = vadd.f32 %v752, %v762
      %v775 = vadd.f32 %v753, %v762
      %v776 = vadd.f32 %v754, %v762
      %v777 = vadd.f32 %v755, %v762
      %v778 = vadd.f32 %v756, %v762
      %v779 = vadd.f32 %v757, %v762
      %v780 = vpack.c.bf16 %v765, %v764
      %v781 = vpack.c.bf16 %v767, %v766
      %v782 = vpack.c.bf16 %v769, %v768
      %v783 = vpack.c.bf16 %v771, %v770
      %v784 = vpack.c.bf16 %v773, %v772
      %v785 = vpack.c.bf16 %v775, %v774
      %v786 = vpack.c.bf16 %v777, %v776
      %v787 = vpack.c.bf16 %v779, %v778
      %788 = vxpose.xlu0.b32.start [1/16] %v764, 128
      %789 = vxpose.xlu0.b32.cont [2/16] %v765, 128
      %790 = vxpose.xlu0.b32.cont [3/16] %v766, 128
      %791 = vxpose.xlu0.b32.cont [4/16] %v767, 128
      %792 = vxpose.xlu0.b32.cont [5/16] %v768, 128
      %793 = vxpose.xlu0.b32.cont [6/16] %v769, 128
      %794 = vxpose.xlu0.b32.cont [7/16] %v770, 128
      %795 = vxpose.xlu0.b32.cont [8/16] %v771, 128
      %796 = vxpose.xlu0.b32.cont [9/16] %v772, 128
      %797 = vxpose.xlu0.b32.cont [10/16] %v773, 128
      %798 = vxpose.xlu0.b32.cont [11/16] %v774, 128
      %799 = vxpose.xlu0.b32.cont [12/16] %v775, 128
      %800 = vxpose.xlu0.b32.cont [13/16] %v776, 128
      %801 = vxpose.xlu0.b32.cont [14/16] %v777, 128
      %802 = vxpose.xlu0.b32.cont [15/16] %v778, 128
      %803 = vxpose.xlu0.b32.end [16/16] %v779, 128
      %v804 = vpop.trf.xlu0
      %v805 = vpop.trf.xlu0
      %v806 = vpop.trf.xlu0
      %v807 = vpop.trf.xlu0
      %v808 = vpop.trf.xlu0
      %v809 = vpop.trf.xlu0
      %v810 = vpop.trf.xlu0
      %v811 = vpop.trf.xlu0
      %v812 = vpop.trf.xlu0
      %v813 = vpop.trf.xlu0
      %v814 = vpop.trf.xlu0
      %v815 = vpop.trf.xlu0
      %v816 = vpop.trf.xlu0
      %v817 = vpop.trf.xlu0
      %v818 = vpop.trf.xlu0
      %v819 = vpop.trf.xlu0
      %v820 = vpack.c.bf16 %v805, %v804
      %v821 = vpack.c.bf16 %v807, %v806
      %v822 = vld [vmem:[%s3] sm:$0xf]
      %v823 = vld [vmem:[%s3 + $0x4] sm:$0xf]
      %v824 = vld [vmem:[%s3 + $0x8] sm:$0xf]
      %v825 = vld [vmem:[%s3 + $0xc] sm:$0xf]
      %v830 = vunpack.c.l.b16 %v822
      %v831 = vunpack.c.l.b16 %v823
      %v832 = vunpack.c.l.b16 %v824
      %v833 = vunpack.c.l.b16 %v825
      %v834 = vpack.c.b16 %v831, %v830
      %v835 = vpack.c.b16 %v833, %v832
      %v839 = vsel %vm526, %v780, 0
      %v842 = vsel %vm526, %v781, 0
      %v845 = vsel %vm526, %v782, 0
      %v848 = vsel %vm526, %v783, 0
      %v851 = vsel %vm526, %v784, 0
      %v854 = vsel %vm526, %v785, 0
      %v857 = vsel %vm526, %v786, 0
      %v860 = vsel %vm526, %v787, 0
      %862 = vmatprep.subr.bf16.mxu0 0
      %863 = vmatpush1.bf16.msra.mxu0 %v834
      %864 = vmatprep.subr.bf16.mxu0 0
      %865 = vmatpush1.bf16.msra.mxu0 %v835
      %866 = vmatprep.subr.bf16.mxu0 0
      %867 = vmatpush1.bf16.msra.mxu0 0
      %868 = vmatprep.subr.bf16.mxu0 0
      %869 = vmatpush1.bf16.msra.mxu0 0
      %870 = vmatprep.subr.bf16.mxu0 0
      %871 = vmatpush1.bf16.msra.mxu0 0
      %872 = vmatprep.subr.bf16.mxu0 0
      %873 = vmatpush1.bf16.msra.mxu0 0
      %874 = vmatprep.subr.bf16.mxu0 0
      %875 = vmatpush1.bf16.msra.mxu0 0
      %876 = vmatprep.subr.bf16.mxu0 0
      %877 = vmatpush1.bf16.msra.mxu0 0
      %878 = vmatprep.subr.bf16.mxu0 0
      %879 = vmatpush1.bf16.msra.mxu0 0
      %880 = vmatprep.subr.bf16.mxu0 0
      %881 = vmatpush1.bf16.msra.mxu0 0
      %882 = vmatprep.subr.bf16.mxu0 0
      %883 = vmatpush1.bf16.msra.mxu0 0
      %884 = vmatprep.subr.bf16.mxu0 0
      %885 = vmatpush1.bf16.msra.mxu0 0
      %886 = vmatprep.subr.bf16.mxu0 0
      %887 = vmatpush1.bf16.msra.mxu0 0
      %888 = vmatprep.subr.bf16.mxu0 0
      %889 = vmatpush1.bf16.msra.mxu0 0
      %890 = vmatprep.subr.bf16.mxu0 0
      %891 = vmatpush1.bf16.msra.mxu0 0
      %892 = vmatprep.subr.bf16.mxu0 0
      %893 = vmatpush1.bf16.msra.mxu0 0
      %894 = vmatprep.mubr.bf16.mxu0 0
      %895 = vmatmul.mubr.bf16.gmra.mrb[0].mxu0 %v839
      %v896 = vpop.f32.mrb[0].mxu0
      %v897 = vadd.f32 0.0, %v896
      %v898 = vpop.f32.mrb[0].mxu0
      %v899 = vpop.f32.mrb[0].mxu0
      %v900 = vadd.f32 0.0, %v899
      %v901 = vpop.f32.mrb[0].mxu0
      %902 = vmatprep.mubr.bf16.mxu0 0
      %903 = vmatmul.mubr.bf16.gmra.mrb[0].mxu0 %v842
      %v904 = vpop.f32.mrb[0].mxu0
      %v905 = vadd.f32 0.0, %v904
      %v906 = vpop.f32.mrb[0].mxu0
      %v907 = vpop.f32.mrb[0].mxu0
      %v908 = vadd.f32 0.0, %v907
      %v909 = vpop.f32.mrb[0].mxu0
      %910 = vmatprep.mubr.bf16.mxu0 0
      %911 = vmatmul.mubr.bf16.gmra.mrb[0].mxu0 %v845
      %v912 = vpop.f32.mrb[0].mxu0
      %v913 = vadd.f32 0.0, %v912
      %v914 = vpop.f32.mrb[0].mxu0
      %v915 = vpop.f32.mrb[0].mxu0
      %v916 = vadd.f32 0.0, %v915
      %v917 = vpop.f32.mrb[0].mxu0
      %918 = vmatprep.mubr.bf16.mxu0 0
      %919 = vmatmul.mubr.bf16.gmra.mrb[0].mxu0 %v848
      %v920 = vpop.f32.mrb[0].mxu0
      %v921 = vadd.f32 0.0, %v920
      %v922 = vpop.f32.mrb[0].mxu0
      %v923 = vpop.f32.mrb[0].mxu0
      %v924 = vadd.f32 0.0, %v923
      %v925 = vpop.f32.mrb[0].mxu0
      %926 = vmatprep.mubr.bf16.mxu0 0
      %927 = vmatmul.mubr.bf16.gmra.mrb[0].mxu0 %v851
      %v928 = vpop.f32.mrb[0].mxu0
      %v929 = vadd.f32 0.0, %v928
      %v930 = vpop.f32.mrb[0].mxu0
      %v931 = vpop.f32.mrb[0].mxu0
      %v932 = vadd.f32 0.0, %v931
      %v933 = vpop.f32.mrb[0].mxu0
      %934 = vmatprep.mubr.bf16.mxu0 0
      %935 = vmatmul.mubr.bf16.gmra.mrb[0].mxu0 %v854
      %v936 = vpop.f32.mrb[0].mxu0
      %v937 = vadd.f32 0.0, %v936
      %v938 = vpop.f32.mrb[0].mxu0
      %v939 = vpop.f32.mrb[0].mxu0
      %v940 = vadd.f32 0.0, %v939
      %v941 = vpop.f32.mrb[0].mxu0
      %942 = vmatprep.mubr.bf16.mxu0 0
      %943 = vmatmul.mubr.bf16.gmra.mrb[0].mxu0 %v857
      %v944 = vpop.f32.mrb[0].mxu0
      %v945 = vadd.f32 0.0, %v944
      %v946 = vpop.f32.mrb[0].mxu0
      %v947 = vpop.f32.mrb[0].mxu0
      %v948 = vadd.f32 0.0, %v947
      %v949 = vpop.f32.mrb[0].mxu0
      %950 = vmatprep.mubr.bf16.mxu0 0
      %951 = vmatmul.mubr.bf16.gmra.mrb[0].mxu0 %v860
      %v952 = vpop.f32.mrb[0].mxu0
      %v953 = vadd.f32 0.0, %v952
      %v954 = vpop.f32.mrb[0].mxu0
      %v955 = vpop.f32.mrb[0].mxu0
      %v956 = vadd.f32 0.0, %v955
      %v957 = vpop.f32.mrb[0].mxu0
      %958 = vdwg.mxu0
      %v959 = vpack.c.bf16 %v900, %v897
      %v960 = vpack.c.bf16 %v908, %v905
      %v961 = vpack.c.bf16 %v916, %v913
      %v962 = vpack.c.bf16 %v924, %v921
      %v963 = vpack.c.bf16 %v932, %v929
      %v964 = vpack.c.bf16 %v940, %v937
      %v965 = vpack.c.bf16 %v948, %v945
      %v966 = vpack.c.bf16 %v956, %v953
      %v967 = vld [vmem:[%s4] sm:$0xf]
      %v968 = vld [vmem:[%s4 + $0x4] sm:$0xf]
      %v969 = vld [vmem:[%s4 + $0x8] sm:$0xf]
      %v970 = vld [vmem:[%s4 + $0xc] sm:$0xf]
      %v975 = vunpack.c.l.b16 %v967
      %v976 = vunpack.c.l.b16 %v968
      %v977 = vunpack.c.l.b16 %v969
      %v978 = vunpack.c.l.b16 %v970
      %v979 = vpack.c.b16 %v976, %v975
      %v980 = vpack.c.b16 %v978, %v977
      %v982 = vsel %vm526, %v979, 0
      %v985 = vsel %vm526, %v980, 0
      %987 = vmatprep.subr.bf16.mxu0 0
      %988 = vmatpush1.bf16.msra.mxu0 %v820
      %989 = vmatprep.subr.bf16.mxu0 0
      %990 = vmatpush1.bf16.msra.mxu0 %v821
      %991 = vmatprep.subr.bf16.mxu0 0
      %992 = vmatpush1.bf16.msra.mxu0 0
      %993 = vmatprep.subr.bf16.mxu0 0
      %994 = vmatpush1.bf16.msra.mxu0 0
      %995 = vmatprep.subr.bf16.mxu0 0
      %996 = vmatpush1.bf16.msra.mxu0 0
      %997 = vmatprep.subr.bf16.mxu0 0
      %998 = vmatpush1.bf16.msra.mxu0 0
      %999 = vmatprep.subr.bf16.mxu0 0
      %1000 = vmatpush1.bf16.msra.mxu0 0
      %1001 = vmatprep.subr.bf16.mxu0 0
      %1002 = vmatpush1.bf16.msra.mxu0 0
      %1003 = vmatprep.subr.bf16.mxu0 0
      %1004 = vmatpush1.bf16.msra.mxu0 0
      %1005 = vmatprep.subr.bf16.mxu0 0
      %1006 = vmatpush1.bf16.msra.mxu0 0
      %1007 = vmatprep.subr.bf16.mxu0 0
      %1008 = vmatpush1.bf16.msra.mxu0 0
      %1009 = vmatprep.subr.bf16.mxu0 0
      %1010 = vmatpush1.bf16.msra.mxu0 0
      %1011 = vmatprep.subr.bf16.mxu0 0
      %1012 = vmatpush1.bf16.msra.mxu0 0
      %1013 = vmatprep.subr.bf16.mxu0 0
      %1014 = vmatpush1.bf16.msra.mxu0 0
      %1015 = vmatprep.subr.bf16.mxu0 0
      %1016 = vmatpush1.bf16.msra.mxu0 0
      %1017 = vmatprep.subr.bf16.mxu0 0
      %1018 = vmatpush1.bf16.msra.mxu0 0
      %1019 = vmatprep.mubr.bf16.mxu0 0
      %1020 = vmatmul.mubr.bf16.gmra.mrb[0].mxu0 %v982
      %v1021 = vpop.f32.mrb[0].mxu0
      %v1022 = vadd.f32 0.0, %v1021
      %v1023 = vpop.f32.mrb[0].mxu0
      %v1024 = vpop.f32.mrb[0].mxu0
      %v1025 = vadd.f32 0.0, %v1024
      %v1026 = vpop.f32.mrb[0].mxu0
      %1027 = vmatprep.mubr.bf16.mxu0 0
      %1028 = vmatmul.mubr.bf16.gmra.mrb[0].mxu0 %v985
      %v1029 = vpop.f32.mrb[0].mxu0
      %v1030 = vadd.f32 0.0, %v1029
      %v1031 = vpop.f32.mrb[0].mxu0
      %v1032 = vpop.f32.mrb[0].mxu0
      %v1033 = vadd.f32 0.0, %v1032
      %v1034 = vpop.f32.mrb[0].mxu0
      %1035 = vdwg.mxu0
      %v1036 = vpack.c.bf16 %v1025, %v1022
      %v1037 = vpack.c.bf16 %v1033, %v1030
      %v1038 = vld [vmem:[%s5] sm:$0xf]
      %v1039 = vld [vmem:[%s5 + $0x4] sm:$0xf]
      %v1040 = vld [vmem:[%s5 + $0x8] sm:$0xf]
      %v1041 = vld [vmem:[%s5 + $0xc] sm:$0xf]
      %v1046 = vunpack.c.l.b16 %v1038
      %v1047 = vunpack.c.l.b16 %v1039
      %v1048 = vunpack.c.l.b16 %v1040
      %v1049 = vunpack.c.l.b16 %v1041
      %v1050 = vpack.c.b16 %v1047, %v1046
      %v1051 = vpack.c.b16 %v1049, %v1048
      %1054 = vmatprep.subr.bf16.mxu0 0
      %1055 = vmatpush1.bf16.msra.mxu0 %v1050
      %1056 = vmatprep.subr.bf16.mxu0 0
      %1057 = vmatpush1.bf16.msra.mxu0 %v1051
      %1058 = vmatprep.subr.bf16.mxu0 0
      %1059 = vmatpush1.bf16.msra.mxu0 0
      %1060 = vmatprep.subr.bf16.mxu0 0
      %1061 = vmatpush1.bf16.msra.mxu0 0
      %1062 = vmatprep.subr.bf16.mxu0 0
      %1063 = vmatpush1.bf16.msra.mxu0 0
      %1064 = vmatprep.subr.bf16.mxu0 0
      %1065 = vmatpush1.bf16.msra.mxu0 0
      %1066 = vmatprep.subr.bf16.mxu0 0
      %1067 = vmatpush1.bf16.msra.mxu0 0
      %1068 = vmatprep.subr.bf16.mxu0 0
      %1069 = vmatpush1.bf16.msra.mxu0 0
      %1070 = vmatprep.subr.bf16.mxu0 0
      %1071 = vmatpush1.bf16.msra.mxu0 0
      %1072 = vmatprep.subr.bf16.mxu0 0
      %1073 = vmatpush1.bf16.msra.mxu0 0
      %1074 = vmatprep.subr.bf16.mxu0 0
      %1075 = vmatpush1.bf16.msra.mxu0 0
      %1076 = vmatprep.subr.bf16.mxu0 0
      %1077 = vmatpush1.bf16.msra.mxu0 0
      %1078 = vmatprep.subr.bf16.mxu0 0
      %1079 = vmatpush1.bf16.msra.mxu0 0
      %1080 = vmatprep.subr.bf16.mxu0 0
      %1081 = vmatpush1.bf16.msra.mxu0 0
      %1082 = vmatprep.subr.bf16.mxu0 0
      %1083 = vmatpush1.bf16.msra.mxu0 0
      %1084 = vmatprep.subr.bf16.mxu0 0
      %1085 = vmatpush1.bf16.msra.mxu0 0
      %1086 = vmatprep.mubr.bf16.mxu0 0
      %1087 = vmatmul.mubr.bf16.gmra.mrb[0].mxu0 %v839
      %v1088 = vpop.f32.mrb[0].mxu0
      %v1089 = vadd.f32 0.0, %v1088
      %v1090 = vpop.f32.mrb[0].mxu0
      %v1091 = vpop.f32.mrb[0].mxu0
      %v1092 = vadd.f32 0.0, %v1091
      %v1093 = vpop.f32.mrb[0].mxu0
      %1094 = vmatprep.mubr.bf16.mxu0 0
      %1095 = vmatmul.mubr.bf16.gmra.mrb[0].mxu0 %v842
      %v1096 = vpop.f32.mrb[0].mxu0
      %v1097 = vadd.f32 0.0, %v1096
      %v1098 = vpop.f32.mrb[0].mxu0
      %v1099 = vpop.f32.mrb[0].mxu0
      %v1100 = vadd.f32 0.0, %v1099
      %v1101 = vpop.f32.mrb[0].mxu0
      %1102 = vmatprep.mubr.bf16.mxu0 0
      %1103 = vmatmul.mubr.bf16.gmra.mrb[0].mxu0 %v845
      %v1104 = vpop.f32.mrb[0].mxu0
      %v1105 = vadd.f32 0.0, %v1104
      %v1106 = vpop.f32.mrb[0].mxu0
      %v1107 = vpop.f32.mrb[0].mxu0
      %v1108 = vadd.f32 0.0, %v1107
      %v1109 = vpop.f32.mrb[0].mxu0
      %1110 = vmatprep.mubr.bf16.mxu0 0
      %1111 = vmatmul.mubr.bf16.gmra.mrb[0].mxu0 %v848
      %v1112 = vpop.f32.mrb[0].mxu0
      %v1113 = vadd.f32 0.0, %v1112
      %v1114 = vpop.f32.mrb[0].mxu0
      %v1115 = vpop.f32.mrb[0].mxu0
      %v1116 = vadd.f32 0.0, %v1115
      %v1117 = vpop.f32.mrb[0].mxu0
      %1118 = vmatprep.mubr.bf16.mxu0 0
      %1119 = vmatmul.mubr.bf16.gmra.mrb[0].mxu0 %v851
      %v1120 = vpop.f32.mrb[0].mxu0
      %v1121 = vadd.f32 0.0, %v1120
      %v1122 = vpop.f32.mrb[0].mxu0
      %v1123 = vpop.f32.mrb[0].mxu0
      %v1124 = vadd.f32 0.0, %v1123
      %v1125 = vpop.f32.mrb[0].mxu0
      %1126 = vmatprep.mubr.bf16.mxu0 0
      %1127 = vmatmul.mubr.bf16.gmra.mrb[0].mxu0 %v854
      %v1128 = vpop.f32.mrb[0].mxu0
      %v1129 = vadd.f32 0.0, %v1128
      %v1130 = vpop.f32.mrb[0].mxu0
      %v1131 = vpop.f32.mrb[0].mxu0
      %v1132 = vadd.f32 0.0, %v1131
      %v1133 = vpop.f32.mrb[0].mxu0
      %1134 = vmatprep.mubr.bf16.mxu0 0
      %1135 = vmatmul.mubr.bf16.gmra.mrb[0].mxu0 %v857
      %v1136 = vpop.f32.mrb[0].mxu0
      %v1137 = vadd.f32 0.0, %v1136
      %v1138 = vpop.f32.mrb[0].mxu0
      %v1139 = vpop.f32.mrb[0].mxu0
      %v1140 = vadd.f32 0.0, %v1139
      %v1141 = vpop.f32.mrb[0].mxu0
      %1142 = vmatprep.mubr.bf16.mxu0 0
      %1143 = vmatmul.mubr.bf16.gmra.mrb[0].mxu0 %v860
      %v1144 = vpop.f32.mrb[0].mxu0
      %v1145 = vadd.f32 0.0, %v1144
      %v1146 = vpop.f32.mrb[0].mxu0
      %v1147 = vpop.f32.mrb[0].mxu0
      %v1148 = vadd.f32 0.0, %v1147
      %v1149 = vpop.f32.mrb[0].mxu0
      %1150 = vdwg.mxu0
      %v1151 = vpack.c.bf16 %v1092, %v1089
      %v1152 = vpack.c.bf16 %v1100, %v1097
      %v1153 = vpack.c.bf16 %v1108, %v1105
      %v1154 = vpack.c.bf16 %v1116, %v1113
      %v1155 = vpack.c.bf16 %v1124, %v1121
      %v1156 = vpack.c.bf16 %v1132, %v1129
      %v1157 = vpack.c.bf16 %v1140, %v1137
      %v1158 = vpack.c.bf16 %v1148, %v1145
      %s1159 = smul.u32 %s30, 128
      %s1160 = sshra.s32 %s1159, 7
      %s1161 = sand.u32 %s1159, 127
      %s1162 = smul.addr %s1160, 8
      %s1163 = scalar_lea.vmem [#allocation2], %s1162
      %1164 = vst [vmem:[%s1163] sm:$0xff] %v1036
      %1165 = vst [vmem:[%s1163 + $0x8] sm:$0xff] %v1037
      %s1166 = sshra.s32 %s1159, 4
      %s1167 = sand.u32 %s1159, 15
      %s1168 = smul.addr %s1166, 8
      %s1169 = scalar_lea.vmem [#allocation3], %s1168
      %1170 = vst.msk [vmem:[%s1169] sm:$0xff] %vm526, %v1151
      %1171 = vst.msk [vmem:[%s1169 + $0x8] sm:$0xff] %vm526, %v1152
      %1172 = vst.msk [vmem:[%s1169 + $0x10] sm:$0xff] %vm526, %v1153
      %1173 = vst.msk [vmem:[%s1169 + $0x18] sm:$0xff] %vm526, %v1154
      %1174 = vst.msk [vmem:[%s1169 + $0x20] sm:$0xff] %vm526, %v1155
      %1175 = vst.msk [vmem:[%s1169 + $0x28] sm:$0xff] %vm526, %v1156
      %1176 = vst.msk [vmem:[%s1169 + $0x30] sm:$0xff] %vm526, %v1157
      %1177 = vst.msk [vmem:[%s1169 + $0x38] sm:$0xff] %vm526, %v1158
      %v1178 = vlaneseq
      %v1179 = vshrl.u32 %v1178, 7
      %v1180 = vadd.s32 %v1179, 8
      %v1181 = vadd.s32 %v1179, 16
      %v1182 = vadd.s32 %v1179, 24
      %v1183 = vadd.s32 %v1179, 32
      %v1184 = vadd.s32 %v1179, 40
      %v1185 = vadd.s32 %v1179, 48
      %v1186 = vadd.s32 %v1179, 56
      %v1187 = vadd.s32 %v1179, 64
      %v1188 = vadd.s32 %v1179, 72
      %v1189 = vadd.s32 %v1179, 80
      %v1190 = vadd.s32 %v1179, 88
      %v1191 = vadd.s32 %v1179, 96
      %v1192 = vadd.s32 %v1179, 104
      %v1193 = vadd.s32 %v1179, 112
      %v1194 = vadd.s32 %v1179, 120
      %v1195 = vlaneseq
      %v1196 = vand.u32 %v1195, 127
      %v1197 = vsub.s32 %v1179, %v1196
      %v1198 = vsub.s32 %v1180, %v1196
      %v1199 = vsub.s32 %v1181, %v1196
      %v1200 = vsub.s32 %v1182, %v1196
      %v1201 = vsub.s32 %v1183, %v1196
      %v1202 = vsub.s32 %v1184, %v1196
      %v1203 = vsub.s32 %v1185, %v1196
      %v1204 = vsub.s32 %v1186, %v1196
      %v1205 = vsub.s32 %v1187, %v1196
      %v1206 = vsub.s32 %v1188, %v1196
      %v1207 = vsub.s32 %v1189, %v1196
      %v1208 = vsub.s32 %v1190, %v1196
      %v1209 = vsub.s32 %v1191, %v1196
      %v1210 = vsub.s32 %v1192, %v1196
      %v1211 = vsub.s32 %v1193, %v1196
      %v1212 = vsub.s32 %v1194, %v1196
      %s1213 = sadd.s32 %s30, 1
      // While loop
      $region77: #{tpu_custom_call.1} parent=75 // loop_pre_header
        _
      $region78: #{tpu_custom_call.1} parent=75 // loop_header
        %s1215 = sphi 0, %s1217
        %p1216 = scmp.ge.s32.totalorder %s1215, %s1213
        %v1220 = vphi -1e+30, %v1479
        %v1221 = vphi -1e+30, %v1480
        %v1222 = vphi -1e+30, %v1481
        %v1223 = vphi -1e+30, %v1482
        %v1224 = vphi -1e+30, %v1483
        %v1225 = vphi -1e+30, %v1484
        %v1226 = vphi -1e+30, %v1485
        %v1227 = vphi -1e+30, %v1486
        %v1228 = vphi -1e+30, %v1487
        %v1229 = vphi -1e+30, %v1488
        %v1230 = vphi -1e+30, %v1489
        %v1231 = vphi -1e+30, %v1490
        %v1232 = vphi -1e+30, %v1491
        %v1233 = vphi -1e+30, %v1492
        %v1234 = vphi -1e+30, %v1493
        %v1235 = vphi -1e+30, %v1494
        %v1236 = vphi 0.0, %v1639
        %v1237 = vphi 0.0, %v1640
        %v1238 = vphi 0.0, %v1641
        %v1239 = vphi 0.0, %v1642
        %v1240 = vphi 0.0, %v1643
        %v1241 = vphi 0.0, %v1644
        %v1242 = vphi 0.0, %v1645
        %v1243 = vphi 0.0, %v1646
        %v1244 = vphi 0.0, %v1647
        %v1245 = vphi 0.0, %v1648
        %v1246 = vphi 0.0, %v1649
        %v1247 = vphi 0.0, %v1650
        %v1248 = vphi 0.0, %v1651
        %v1249 = vphi 0.0, %v1652
        %v1250 = vphi 0.0, %v1653
        %v1251 = vphi 0.0, %v1654
        %v1252 = vphi 0.0, %v1776
        %v1253 = vphi 0.0, %v1777
        %v1254 = vphi 0.0, %v1778
        %v1255 = vphi 0.0, %v1779
        %v1256 = vphi 0.0, %v1780
        %v1257 = vphi 0.0, %v1781
        %v1258 = vphi 0.0, %v1782
        %v1259 = vphi 0.0, %v1783
        %v1260 = vphi 0.0, %v1784
        %v1261 = vphi 0.0, %v1785
        %v1262 = vphi 0.0, %v1786
        %v1263 = vphi 0.0, %v1787
        %v1264 = vphi 0.0, %v1788
        %v1265 = vphi 0.0, %v1789
        %v1266 = vphi 0.0, %v1790
        %v1267 = vphi 0.0, %v1791
      $region79: #{tpu_custom_call.1} parent=75 // loop_header_branch
        %1219 = sbr.rel (%p1216) target = $region83
      $region80: #{tpu_custom_call.1} parent=75 // loop_body
        %s1268 = smul.u32 %s1215, 128
        %s1269 = sshra.s32 %s1268, 7
        %s1270 = sand.u32 %s1268, 127
        %s1271 = smul.addr %s1269, 8
        %s1272 = scalar_lea.vmem [#allocation2], %s1271
        %v1273 = vld [vmem:[%s1272] sm:$0xf]
        %s1274 = sshra.s32 %s1268, 4
        %s1275 = sand.u32 %s1268, 15
        %s1276 = smul.addr %s1274, 8
        %s1277 = scalar_lea.vmem [#allocation3], %s1276
        %v1278 = vld [vmem:[%s1277] sm:$0xff]
        %v1279 = vld [vmem:[%s1277 + $0x8] sm:$0xff]
        %v1280 = vld [vmem:[%s1277 + $0x10] sm:$0xff]
        %v1281 = vld [vmem:[%s1277 + $0x18] sm:$0xff]
        %v1282 = vld [vmem:[%s1277 + $0x20] sm:$0xff]
        %v1283 = vld [vmem:[%s1277 + $0x28] sm:$0xff]
        %v1284 = vld [vmem:[%s1277 + $0x30] sm:$0xff]
        %v1285 = vld [vmem:[%s1277 + $0x38] sm:$0xff]
        %vm1286 = vcmask 64512
        %v1288 = vsel %vm1286, %v959, 0
        %v1291 = vsel %vm1286, %v960, 0
        %v1294 = vsel %vm1286, %v961, 0
        %v1297 = vsel %vm1286, %v962, 0
        %v1300 = vsel %vm1286, %v963, 0
        %v1303 = vsel %vm1286, %v964, 0
        %v1306 = vsel %vm1286, %v965, 0
        %v1309 = vsel %vm1286, %v966, 0
        %vm1311 = vcmask 1043456
        %v1313 = vsel %vm1311, %v1273, 0
        %1315 = vmatprep.subr.bf16.mxu0 0
        %1316 = vmatpush1.bf16.msra.mxu0 %v1313
        %1317 = vmatprep.subr.bf16.mxu0 0
        %1318 = vmatpush1.bf16.msra.mxu0 0
        %1319 = vmatprep.subr.bf16.mxu0 0
        %1320 = vmatpush1.bf16.msra.mxu0 0
        %1321 = vmatprep.subr.bf16.mxu0 0
        %1322 = vmatpush1.bf16.msra.mxu0 0
        %1323 = vmatprep.subr.bf16.mxu0 0
        %1324 = vmatpush1.bf16.msra.mxu0 0
        %1325 = vmatprep.subr.bf16.mxu0 0
        %1326 = vmatpush1.bf16.msra.mxu0 0
        %1327 = vmatprep.subr.bf16.mxu0 0
        %1328 = vmatpush1.bf16.msra.mxu0 0
        %1329 = vmatprep.subr.bf16.mxu0 0
        %1330 = vmatpush1.bf16.msra.mxu0 0
        %1331 = vmatprep.subr.bf16.mxu0 0
        %1332 = vmatpush1.bf16.msra.mxu0 0
        %1333 = vmatprep.subr.bf16.mxu0 0
        %1334 = vmatpush1.bf16.msra.mxu0 0
        %1335 = vmatprep.subr.bf16.mxu0 0
        %1336 = vmatpush1.bf16.msra.mxu0 0
        %1337 = vmatprep.subr.bf16.mxu0 0
        %1338 = vmatpush1.bf16.msra.mxu0 0
        %1339 = vmatprep.subr.bf16.mxu0 0
        %1340 = vmatpush1.bf16.msra.mxu0 0
        %1341 = vmatprep.subr.bf16.mxu0 0
        %1342 = vmatpush1.bf16.msra.mxu0 0
        %1343 = vmatprep.subr.bf16.mxu0 0
        %1344 = vmatpush1.bf16.msra.mxu0 0
        %1345 = vmatprep.subr.bf16.mxu0 0
        %1346 = vmatpush1.bf16.msra.mxu0 0
        %1347 = vmatprep.mubr.bf16.mxu0 0
        %1348 = vmatmul.mubr.bf16.gmra.mrb[0].mxu0 %v1288
        %v1349 = vpop.f32.mrb[0].mxu0
        %v1350 = vadd.f32 0.0, %v1349
        %v1351 = vpop.f32.mrb[0].mxu0
        %v1352 = vpop.f32.mrb[0].mxu0
        %v1353 = vadd.f32 0.0, %v1352
        %v1354 = vpop.f32.mrb[0].mxu0
        %1355 = vmatprep.mubr.bf16.mxu0 0
        %1356 = vmatmul.mubr.bf16.gmra.mrb[0].mxu0 %v1291
        %v1357 = vpop.f32.mrb[0].mxu0
        %v1358 = vadd.f32 0.0, %v1357
        %v1359 = vpop.f32.mrb[0].mxu0
        %v1360 = vpop.f32.mrb[0].mxu0
        %v1361 = vadd.f32 0.0, %v1360
        %v1362 = vpop.f32.mrb[0].mxu0
        %1363 = vmatprep.mubr.bf16.mxu0 0
        %1364 = vmatmul.mubr.bf16.gmra.mrb[0].mxu0 %v1294
        %v1365 = vpop.f32.mrb[0].mxu0
        %v1366 = vadd.f32 0.0, %v1365
        %v1367 = vpop.f32.mrb[0].mxu0
        %v1368 = vpop.f32.mrb[0].mxu0
        %v1369 = vadd.f32 0.0, %v1368
        %v1370 = vpop.f32.mrb[0].mxu0
        %1371 = vmatprep.mubr.bf16.mxu0 0
        %1372 = vmatmul.mubr.bf16.gmra.mrb[0].mxu0 %v1297
        %v1373 = vpop.f32.mrb[0].mxu0
        %v1374 = vadd.f32 0.0, %v1373
        %v1375 = vpop.f32.mrb[0].mxu0
        %v1376 = vpop.f32.mrb[0].mxu0
        %v1377 = vadd.f32 0.0, %v1376
        %v1378 = vpop.f32.mrb[0].mxu0
        %1379 = vmatprep.mubr.bf16.mxu0 0
        %1380 = vmatmul.mubr.bf16.gmra.mrb[0].mxu0 %v1300
        %v1381 = vpop.f32.mrb[0].mxu0
        %v1382 = vadd.f32 0.0, %v1381
        %v1383 = vpop.f32.mrb[0].mxu0
        %v1384 = vpop.f32.mrb[0].mxu0
        %v1385 = vadd.f32 0.0, %v1384
        %v1386 = vpop.f32.mrb[0].mxu0
        %1387 = vmatprep.mubr.bf16.mxu0 0
        %1388 = vmatmul.mubr.bf16.gmra.mrb[0].mxu0 %v1303
        %v1389 = vpop.f32.mrb[0].mxu0
        %v1390 = vadd.f32 0.0, %v1389
        %v1391 = vpop.f32.mrb[0].mxu0
        %v1392 = vpop.f32.mrb[0].mxu0
        %v1393 = vadd.f32 0.0, %v1392
        %v1394 = vpop.f32.mrb[0].mxu0
        %1395 = vmatprep.mubr.bf16.mxu0 0
        %1396 = vmatmul.mubr.bf16.gmra.mrb[0].mxu0 %v1306
        %v1397 = vpop.f32.mrb[0].mxu0
        %v1398 = vadd.f32 0.0, %v1397
        %v1399 = vpop.f32.mrb[0].mxu0
        %v1400 = vpop.f32.mrb[0].mxu0
        %v1401 = vadd.f32 0.0, %v1400
        %v1402 = vpop.f32.mrb[0].mxu0
        %1403 = vmatprep.mubr.bf16.mxu0 0
        %1404 = vmatmul.mubr.bf16.gmra.mrb[0].mxu0 %v1309
        %v1405 = vpop.f32.mrb[0].mxu0
        %v1406 = vadd.f32 0.0, %v1405
        %v1407 = vpop.f32.mrb[0].mxu0
        %v1408 = vpop.f32.mrb[0].mxu0
        %v1409 = vadd.f32 0.0, %v1408
        %v1410 = vpop.f32.mrb[0].mxu0
        %1411 = vdwg.mxu0
        %s1412 = ssub.s32 %s1215, %s30
        %s1413 = smul.u32 %s1412, 128
        %v1414 = vstv %s1413
        %vm1415 = vcmp.ge.s32.totalorder %v1197, %v1414
        %vm1416 = vcmp.ge.s32.totalorder %v1198, %v1414
        %vm1417 = vcmp.ge.s32.totalorder %v1199, %v1414
        %vm1418 = vcmp.ge.s32.totalorder %v1200, %v1414
        %vm1419 = vcmp.ge.s32.totalorder %v1201, %v1414
        %vm1420 = vcmp.ge.s32.totalorder %v1202, %v1414
        %vm1421 = vcmp.ge.s32.totalorder %v1203, %v1414
        %vm1422 = vcmp.ge.s32.totalorder %v1204, %v1414
        %vm1423 = vcmp.ge.s32.totalorder %v1205, %v1414
        %vm1424 = vcmp.ge.s32.totalorder %v1206, %v1414
        %vm1425 = vcmp.ge.s32.totalorder %v1207, %v1414
        %vm1426 = vcmp.ge.s32.totalorder %v1208, %v1414
        %vm1427 = vcmp.ge.s32.totalorder %v1209, %v1414
        %vm1428 = vcmp.ge.s32.totalorder %v1210, %v1414
        %vm1429 = vcmp.ge.s32.totalorder %v1211, %v1414
        %vm1430 = vcmp.ge.s32.totalorder %v1212, %v1414
        %v1431 = vsel %vm1415, %v1350, -1e+30
        %v1432 = vsel %vm1416, %v1353, -1e+30
        %v1433 = vsel %vm1417, %v1358, -1e+30
        %v1434 = vsel %vm1418, %v1361, -1e+30
        %v1435 = vsel %vm1419, %v1366, -1e+30
        %v1436 = vsel %vm1420, %v1369, -1e+30
        %v1437 = vsel %vm1421, %v1374, -1e+30
        %v1438 = vsel %vm1422, %v1377, -1e+30
        %v1439 = vsel %vm1423, %v1382, -1e+30
        %v1440 = vsel %vm1424, %v1385, -1e+30
        %v1441 = vsel %vm1425, %v1390, -1e+30
        %v1442 = vsel %vm1426, %v1393, -1e+30
        %v1443 = vsel %vm1427, %v1398, -1e+30
        %v1444 = vsel %vm1428, %v1401, -1e+30
        %v1445 = vsel %vm1429, %v1406, -1e+30
        %v1446 = vsel %vm1430, %v1409, -1e+30
        %1447 = vmax.xlane.f32.xlu0 %v1431
        %v1448 = vpop.xlane.xlu0 %1447
        %1449 = vmax.xlane.f32.xlu0 %v1432
        %v1450 = vpop.xlane.xlu0 %1449
        %1451 = vmax.xlane.f32.xlu0 %v1433
        %v1452 = vpop.xlane.xlu0 %1451
        %1453 = vmax.xlane.f32.xlu0 %v1434
        %v1454 = vpop.xlane.xlu0 %1453
        %1455 = vmax.xlane.f32.xlu0 %v1435
        %v1456 = vpop.xlane.xlu0 %1455
        %1457 = vmax.xlane.f32.xlu0 %v1436
        %v1458 = vpop.xlane.xlu0 %1457
        %1459 = vmax.xlane.f32.xlu0 %v1437
        %v1460 = vpop.xlane.xlu0 %1459
        %1461 = vmax.xlane.f32.xlu0 %v1438
        %v1462 = vpop.xlane.xlu0 %1461
        %1463 = vmax.xlane.f32.xlu0 %v1439
        %v1464 = vpop.xlane.xlu0 %1463
        %1465 = vmax.xlane.f32.xlu0 %v1440
        %v1466 = vpop.xlane.xlu0 %1465
        %1467 = vmax.xlane.f32.xlu0 %v1441
        %v1468 = vpop.xlane.xlu0 %1467
        %1469 = vmax.xlane.f32.xlu0 %v1442
        %v1470 = vpop.xlane.xlu0 %1469
        %1471 = vmax.xlane.f32.xlu0 %v1443
        %v1472 = vpop.xlane.xlu0 %1471
        %1473 = vmax.xlane.f32.xlu0 %v1444
        %v1474 = vpop.xlane.xlu0 %1473
        %1475 = vmax.xlane.f32.xlu0 %v1445
        %v1476 = vpop.xlane.xlu0 %1475
        %1477 = vmax.xlane.f32.xlu0 %v1446
        %v1478 = vpop.xlane.xlu0 %1477
        %v1479 = vmax.f32 %v1220, %v1448
        %v1480 = vmax.f32 %v1221, %v1450
        %v1481 = vmax.f32 %v1222, %v1452
        %v1482 = vmax.f32 %v1223, %v1454
        %v1483 = vmax.f32 %v1224, %v1456
        %v1484 = vmax.f32 %v1225, %v1458
        %v1485 = vmax.f32 %v1226, %v1460
        %v1486 = vmax.f32 %v1227, %v1462
        %v1487 = vmax.f32 %v1228, %v1464
        %v1488 = vmax.f32 %v1229, %v1466
        %v1489 = vmax.f32 %v1230, %v1468
        %v1490 = vmax.f32 %v1231, %v1470
        %v1491 = vmax.f32 %v1232, %v1472
        %v1492 = vmax.f32 %v1233, %v1474
        %v1493 = vmax.f32 %v1234, %v1476
        %v1494 = vmax.f32 %v1235, %v1478
        %v1495 = vsub.f32 %v1220, %v1479
        %v1496 = vsub.f32 %v1221, %v1480
        %v1497 = vsub.f32 %v1222, %v1481
        %v1498 = vsub.f32 %v1223, %v1482
        %v1499 = vsub.f32 %v1224, %v1483
        %v1500 = vsub.f32 %v1225, %v1484
        %v1501 = vsub.f32 %v1226, %v1485
        %v1502 = vsub.f32 %v1227, %v1486
        %v1503 = vsub.f32 %v1228, %v1487
        %v1504 = vsub.f32 %v1229, %v1488
        %v1505 = vsub.f32 %v1230, %v1489
        %v1506 = vsub.f32 %v1231, %v1490
        %v1507 = vsub.f32 %v1232, %v1491
        %v1508 = vsub.f32 %v1233, %v1492
        %v1509 = vsub.f32 %v1234, %v1493
        %v1510 = vsub.f32 %v1235, %v1494
        %v1511 = vmul.f32 %v1495, 1.442695
        %v1512 = vpow.pop %v1511
        %v1513 = vmul.f32 %v1496, 1.442695
        %v1514 = vpow.pop %v1513
        %v1515 = vmul.f32 %v1497, 1.442695
        %v1516 = vpow.pop %v1515
        %v1517 = vmul.f32 %v1498, 1.442695
        %v1518 = vpow.pop %v1517
        %v1519 = vmul.f32 %v1499, 1.442695
        %v1520 = vpow.pop %v1519
        %v1521 = vmul.f32 %v1500, 1.442695
        %v1522 = vpow.pop %v1521
        %v1523 = vmul.f32 %v1501, 1.442695
        %v1524 = vpow.pop %v1523
        %v1525 = vmul.f32 %v1502, 1.442695
        %v1526 = vpow.pop %v1525
        %v1527 = vmul.f32 %v1503, 1.442695
        %v1528 = vpow.pop %v1527
        %v1529 = vmul.f32 %v1504, 1.442695
        %v1530 = vpow.pop %v1529
        %v1531 = vmul.f32 %v1505, 1.442695
        %v1532 = vpow.pop %v1531
        %v1533 = vmul.f32 %v1506, 1.442695
        %v1534 = vpow.pop %v1533
        %v1535 = vmul.f32 %v1507, 1.442695
        %v1536 = vpow.pop %v1535
        %v1537 = vmul.f32 %v1508, 1.442695
        %v1538 = vpow.pop %v1537
        %v1539 = vmul.f32 %v1509, 1.442695
        %v1540 = vpow.pop %v1539
        %v1541 = vmul.f32 %v1510, 1.442695
        %v1542 = vpow.pop %v1541
        %v1543 = vsub.f32 %v1431, %v1479
        %v1544 = vsub.f32 %v1432, %v1480
        %v1545 = vsub.f32 %v1433, %v1481
        %v1546 = vsub.f32 %v1434, %v1482
        %v1547 = vsub.f32 %v1435, %v1483
        %v1548 = vsub.f32 %v1436, %v1484
        %v1549 = vsub.f32 %v1437, %v1485
        %v1550 = vsub.f32 %v1438, %v1486
        %v1551 = vsub.f32 %v1439, %v1487
        %v1552 = vsub.f32 %v1440, %v1488
        %v1553 = vsub.f32 %v1441, %v1489
        %v1554 = vsub.f32 %v1442, %v1490
        %v1555 = vsub.f32 %v1443, %v1491
        %v1556 = vsub.f32 %v1444, %v1492
        %v1557 = vsub.f32 %v1445, %v1493
        %v1558 = vsub.f32 %v1446, %v1494
        %v1559 = vmul.f32 %v1543, 1.442695
        %v1560 = vpow.pop %v1559
        %v1561 = vmul.f32 %v1544, 1.442695
        %v1562 = vpow.pop %v1561
        %v1563 = vmul.f32 %v1545, 1.442695
        %v1564 = vpow.pop %v1563
        %v1565 = vmul.f32 %v1546, 1.442695
        %v1566 = vpow.pop %v1565
        %v1567 = vmul.f32 %v1547, 1.442695
        %v1568 = vpow.pop %v1567
        %v1569 = vmul.f32 %v1548, 1.442695
        %v1570 = vpow.pop %v1569
        %v1571 = vmul.f32 %v1549, 1.442695
        %v1572 = vpow.pop %v1571
        %v1573 = vmul.f32 %v1550, 1.442695
        %v1574 = vpow.pop %v1573
        %v1575 = vmul.f32 %v1551, 1.442695
        %v1576 = vpow.pop %v1575
        %v1577 = vmul.f32 %v1552, 1.442695
        %v1578 = vpow.pop %v1577
        %v1579 = vmul.f32 %v1553, 1.442695
        %v1580 = vpow.pop %v1579
        %v1581 = vmul.f32 %v1554, 1.442695
        %v1582 = vpow.pop %v1581
        %v1583 = vmul.f32 %v1555, 1.442695
        %v1584 = vpow.pop %v1583
        %v1585 = vmul.f32 %v1556, 1.442695
        %v1586 = vpow.pop %v1585
        %v1587 = vmul.f32 %v1557, 1.442695
        %v1588 = vpow.pop %v1587
        %v1589 = vmul.f32 %v1558, 1.442695
        %v1590 = vpow.pop %v1589
        %v1591 = vmul.f32 %v1512, %v1236
        %v1592 = vmul.f32 %v1514, %v1237
        %v1593 = vmul.f32 %v1516, %v1238
        %v1594 = vmul.f32 %v1518, %v1239
        %v1595 = vmul.f32 %v1520, %v1240
        %v1596 = vmul.f32 %v1522, %v1241
        %v1597 = vmul.f32 %v1524, %v1242
        %v1598 = vmul.f32 %v1526, %v1243
        %v1599 = vmul.f32 %v1528, %v1244
        %v1600 = vmul.f32 %v1530, %v1245
        %v1601 = vmul.f32 %v1532, %v1246
        %v1602 = vmul.f32 %v1534, %v1247
        %v1603 = vmul.f32 %v1536, %v1248
        %v1604 = vmul.f32 %v1538, %v1249
        %v1605 = vmul.f32 %v1540, %v1250
        %v1606 = vmul.f32 %v1542, %v1251
        %1607 = vadd.xlane.f32.xlu0 %v1560
        %v1608 = vpop.xlane.xlu0 %1607
        %1609 = vadd.xlane.f32.xlu0 %v1562
        %v1610 = vpop.xlane.xlu0 %1609
        %1611 = vadd.xlane.f32.xlu0 %v1564
        %v1612 = vpop.xlane.xlu0 %1611
        %1613 = vadd.xlane.f32.xlu0 %v1566
        %v1614 = vpop.xlane.xlu0 %1613
        %1615 = vadd.xlane.f32.xlu0 %v1568
        %v1616 = vpop.xlane.xlu0 %1615
        %1617 = vadd.xlane.f32.xlu0 %v1570
        %v1618 = vpop.xlane.xlu0 %1617
        %1619 = vadd.xlane.f32.xlu0 %v1572
        %v1620 = vpop.xlane.xlu0 %1619
        %1621 = vadd.xlane.f32.xlu0 %v1574
        %v1622 = vpop.xlane.xlu0 %1621
        %1623 = vadd.xlane.f32.xlu0 %v1576
        %v1624 = vpop.xlane.xlu0 %1623
        %1625 = vadd.xlane.f32.xlu0 %v1578
        %v1626 = vpop.xlane.xlu0 %1625
        %1627 = vadd.xlane.f32.xlu0 %v1580
        %v1628 = vpop.xlane.xlu0 %1627
        %1629 = vadd.xlane.f32.xlu0 %v1582
        %v1630 = vpop.xlane.xlu0 %1629
        %1631 = vadd.xlane.f32.xlu0 %v1584
        %v1632 = vpop.xlane.xlu0 %1631
        %1633 = vadd.xlane.f32.xlu0 %v1586
        %v1634 = vpop.xlane.xlu0 %1633
        %1635 = vadd.xlane.f32.xlu0 %v1588
        %v1636 = vpop.xlane.xlu0 %1635
        %1637 = vadd.xlane.f32.xlu0 %v1590
        %v1638 = vpop.xlane.xlu0 %1637
        %v1639 = vadd.f32 %v1591, %v1608
        %v1640 = vadd.f32 %v1592, %v1610
        %v1641 = vadd.f32 %v1593, %v1612
        %v1642 = vadd.f32 %v1594, %v1614
        %v1643 = vadd.f32 %v1595, %v1616
        %v1644 = vadd.f32 %v1596, %v1618
        %v1645 = vadd.f32 %v1597, %v1620
        %v1646 = vadd.f32 %v1598, %v1622
        %v1647 = vadd.f32 %v1599, %v1624
        %v1648 = vadd.f32 %v1600, %v1626
        %v1649 = vadd.f32 %v1601, %v1628
        %v1650 = vadd.f32 %v1602, %v1630
        %v1651 = vadd.f32 %v1603, %v1632
        %v1652 = vadd.f32 %v1604, %v1634
        %v1653 = vadd.f32 %v1605, %v1636
        %v1654 = vadd.f32 %v1606, %v1638
        %v1655 = vmul.f32 %v1512, %v1252
        %v1656 = vmul.f32 %v1514, %v1253
        %v1657 = vmul.f32 %v1516, %v1254
        %v1658 = vmul.f32 %v1518, %v1255
        %v1659 = vmul.f32 %v1520, %v1256
        %v1660 = vmul.f32 %v1522, %v1257
        %v1661 = vmul.f32 %v1524, %v1258
        %v1662 = vmul.f32 %v1526, %v1259
        %v1663 = vmul.f32 %v1528, %v1260
        %v1664 = vmul.f32 %v1530, %v1261
        %v1665 = vmul.f32 %v1532, %v1262
        %v1666 = vmul.f32 %v1534, %v1263
        %v1667 = vmul.f32 %v1536, %v1264
        %v1668 = vmul.f32 %v1538, %v1265
        %v1669 = vmul.f32 %v1540, %v1266
        %v1670 = vmul.f32 %v1542, %v1267
        %v1671 = vpack.c.bf16 %v1562, %v1560
        %v1672 = vpack.c.bf16 %v1566, %v1564
        %v1673 = vpack.c.bf16 %v1570, %v1568
        %v1674 = vpack.c.bf16 %v1574, %v1572
        %v1675 = vpack.c.bf16 %v1578, %v1576
        %v1676 = vpack.c.bf16 %v1582, %v1580
        %v1677 = vpack.c.bf16 %v1586, %v1584
        %v1678 = vpack.c.bf16 %v1590, %v1588
        %1679 = vmatprep.subr.bf16.mxu0 0
        %1680 = vmatpush1.bf16.msra.mxu0 %v1278
        %1681 = vmatprep.subr.bf16.mxu0 0
        %1682 = vmatpush1.bf16.msra.mxu0 %v1279
        %1683 = vmatprep.subr.bf16.mxu0 0
        %1684 = vmatpush1.bf16.msra.mxu0 %v1280
        %1685 = vmatprep.subr.bf16.mxu0 0
        %1686 = vmatpush1.bf16.msra.mxu0 %v1281
        %1687 = vmatprep.subr.bf16.mxu0 0
        %1688 = vmatpush1.bf16.msra.mxu0 %v1282
        %1689 = vmatprep.subr.bf16.mxu0 0
        %1690 = vmatpush1.bf16.msra.mxu0 %v1283
        %1691 = vmatprep.subr.bf16.mxu0 0
        %1692 = vmatpush1.bf16.msra.mxu0 %v1284
        %1693 = vmatprep.subr.bf16.mxu0 0
        %1694 = vmatpush1.bf16.msra.mxu0 %v1285
        %1695 = vmatprep.subr.bf16.mxu0 0
        %1696 = vmatpush1.bf16.msra.mxu0 0
        %1697 = vmatprep.subr.bf16.mxu0 0
        %1698 = vmatpush1.bf16.msra.mxu0 0
        %1699 = vmatprep.subr.bf16.mxu0 0
        %1700 = vmatpush1.bf16.msra.mxu0 0
        %1701 = vmatprep.subr.bf16.mxu0 0
        %1702 = vmatpush1.bf16.msra.mxu0 0
        %1703 = vmatprep.subr.bf16.mxu0 0
        %1704 = vmatpush1.bf16.msra.mxu0 0
        %1705 = vmatprep.subr.bf16.mxu0 0
        %1706 = vmatpush1.bf16.msra.mxu0 0
        %1707 = vmatprep.subr.bf16.mxu0 0
        %1708 = vmatpush1.bf16.msra.mxu0 0
        %1709 = vmatprep.subr.bf16.mxu0 0
        %1710 = vmatpush1.bf16.msra.mxu0 0
        %1711 = vmatprep.mubr.bf16.mxu0 0
        %1712 = vmatmul.mubr.bf16.gmra.mrb[0].mxu0 %v1671
        %v1713 = vpop.f32.mrb[0].mxu0
        %v1714 = vadd.f32 0.0, %v1713
        %v1715 = vpop.f32.mrb[0].mxu0
        %v1716 = vpop.f32.mrb[0].mxu0
        %v1717 = vadd.f32 0.0, %v1716
        %v1718 = vpop.f32.mrb[0].mxu0
        %1719 = vmatprep.mubr.bf16.mxu0 0
        %1720 = vmatmul.mubr.bf16.gmra.mrb[0].mxu0 %v1672
        %v1721 = vpop.f32.mrb[0].mxu0
        %v1722 = vadd.f32 0.0, %v1721
        %v1723 = vpop.f32.mrb[0].mxu0
        %v1724 = vpop.f32.mrb[0].mxu0
        %v1725 = vadd.f32 0.0, %v1724
        %v1726 = vpop.f32.mrb[0].mxu0
        %1727 = vmatprep.mubr.bf16.mxu0 0
        %1728 = vmatmul.mubr.bf16.gmra.mrb[0].mxu0 %v1673
        %v1729 = vpop.f32.mrb[0].mxu0
        %v1730 = vadd.f32 0.0, %v1729
        %v1731 = vpop.f32.mrb[0].mxu0
        %v1732 = vpop.f32.mrb[0].mxu0
        %v1733 = vadd.f32 0.0, %v1732
        %v1734 = vpop.f32.mrb[0].mxu0
        %1735 = vmatprep.mubr.bf16.mxu0 0
        %1736 = vmatmul.mubr.bf16.gmra.mrb[0].mxu0 %v1674
        %v1737 = vpop.f32.mrb[0].mxu0
        %v1738 = vadd.f32 0.0, %v1737
        %v1739 = vpop.f32.mrb[0].mxu0
        %v1740 = vpop.f32.mrb[0].mxu0
        %v1741 = vadd.f32 0.0, %v1740
        %v1742 = vpop.f32.mrb[0].mxu0
        %1743 = vmatprep.mubr.bf16.mxu0 0
        %1744 = vmatmul.mubr.bf16.gmra.mrb[0].mxu0 %v1675
        %v1745 = vpop.f32.mrb[0].mxu0
        %v1746 = vadd.f32 0.0, %v1745
        %v1747 = vpop.f32.mrb[0].mxu0
        %v1748 = vpop.f32.mrb[0].mxu0
        %v1749 = vadd.f32 0.0, %v1748
        %v1750 = vpop.f32.mrb[0].mxu0
        %1751 = vmatprep.mubr.bf16.mxu0 0
        %1752 = vmatmul.mubr.bf16.gmra.mrb[0].mxu0 %v1676
        %v1753 = vpop.f32.mrb[0].mxu0
        %v1754 = vadd.f32 0.0, %v1753
        %v1755 = vpop.f32.mrb[0].mxu0
        %v1756 = vpop.f32.mrb[0].mxu0
        %v1757 = vadd.f32 0.0, %v1756
        %v1758 = vpop.f32.mrb[0].mxu0
        %1759 = vmatprep.mubr.bf16.mxu0 0
        %1760 = vmatmul.mubr.bf16.gmra.mrb[0].mxu0 %v1677
        %v1761 = vpop.f32.mrb[0].mxu0
        %v1762 = vadd.f32 0.0, %v1761
        %v1763 = vpop.f32.mrb[0].mxu0
        %v1764 = vpop.f32.mrb[0].mxu0
        %v1765 = vadd.f32 0.0, %v1764
        %v1766 = vpop.f32.mrb[0].mxu0
        %1767 = vmatprep.mubr.bf16.mxu0 0
        %1768 = vmatmul.mubr.bf16.gmra.mrb[0].mxu0 %v1678
        %v1769 = vpop.f32.mrb[0].mxu0
        %v1770 = vadd.f32 0.0, %v1769
        %v1771 = vpop.f32.mrb[0].mxu0
        %v1772 = vpop.f32.mrb[0].mxu0
        %v1773 = vadd.f32 0.0, %v1772
        %v1774 = vpop.f32.mrb[0].mxu0
        %1775 = vdwg.mxu0
        %v1776 = vadd.f32 %v1655, %v1714
        %v1777 = vadd.f32 %v1656, %v1717
        %v1778 = vadd.f32 %v1657, %v1722
        %v1779 = vadd.f32 %v1658, %v1725
        %v1780 = vadd.f32 %v1659, %v1730
        %v1781 = vadd.f32 %v1660, %v1733
        %v1782 = vadd.f32 %v1661, %v1738
        %v1783 = vadd.f32 %v1662, %v1741
        %v1784 = vadd.f32 %v1663, %v1746
        %v1785 = vadd.f32 %v1664, %v1749
        %v1786 = vadd.f32 %v1665, %v1754
        %v1787 = vadd.f32 %v1666, %v1757
        %v1788 = vadd.f32 %v1667, %v1762
        %v1789 = vadd.f32 %v1668, %v1765
        %v1790 = vadd.f32 %v1669, %v1770
        %v1791 = vadd.f32 %v1670, %v1773
      $region81: #{tpu_custom_call.1} parent=75 // loop_footer
        %s1217 = sadd.s32 %s1215, 1
      $region82: #{tpu_custom_call.1} parent=75 // loop_footer_branch
        %1214 = sbr.rel target = $region78
      $region83: #{tpu_custom_call.1} parent=75 // loop_exit
        _
      %v1792 = vrcp.pop %v1236
      %v1793 = vrcp.pop %v1237
      %v1794 = vrcp.pop %v1238
      %v1795 = vrcp.pop %v1239
      %v1796 = vrcp.pop %v1240
      %v1797 = vrcp.pop %v1241
      %v1798 = vrcp.pop %v1242
      %v1799 = vrcp.pop %v1243
      %v1800 = vrcp.pop %v1244
      %v1801 = vrcp.pop %v1245
      %v1802 = vrcp.pop %v1246
      %v1803 = vrcp.pop %v1247
      %v1804 = vrcp.pop %v1248
      %v1805 = vrcp.pop %v1249
      %v1806 = vrcp.pop %v1250
      %v1807 = vrcp.pop %v1251
      %v1808 = vmul.f32 %v1252, %v1792
      %v1809 = vmul.f32 %v1253, %v1793
      %v1810 = vmul.f32 %v1254, %v1794
      %v1811 = vmul.f32 %v1255, %v1795
      %v1812 = vmul.f32 %v1256, %v1796
      %v1813 = vmul.f32 %v1257, %v1797
      %v1814 = vmul.f32 %v1258, %v1798
      %v1815 = vmul.f32 %v1259, %v1799
      %v1816 = vmul.f32 %v1260, %v1800
      %v1817 = vmul.f32 %v1261, %v1801
      %v1818 = vmul.f32 %v1262, %v1802
      %v1819 = vmul.f32 %v1263, %v1803
      %v1820 = vmul.f32 %v1264, %v1804
      %v1821 = vmul.f32 %v1265, %v1805
      %v1822 = vmul.f32 %v1266, %v1806
      %v1823 = vmul.f32 %v1267, %v1807
      // While loop
      $region84: #{tpu_custom_call.1} parent=75 // loop_pre_header
        _
      $region85: #{tpu_custom_call.1} parent=75 // loop_header
        %s1825 = sphi 0, %s1827
        %p1826 = scmp.ge.s32.totalorder %s1825, %s1213
        %v1830 = vphi -1e+30, %v2115
        %v1831 = vphi -1e+30, %v2116
        %v1832 = vphi -1e+30, %v2117
        %v1833 = vphi -1e+30, %v2118
        %v1834 = vphi -1e+30, %v2119
        %v1835 = vphi -1e+30, %v2120
        %v1836 = vphi -1e+30, %v2121
        %v1837 = vphi -1e+30, %v2122
        %v1838 = vphi -1e+30, %v2123
        %v1839 = vphi -1e+30, %v2124
        %v1840 = vphi -1e+30, %v2125
        %v1841 = vphi -1e+30, %v2126
        %v1842 = vphi -1e+30, %v2127
        %v1843 = vphi -1e+30, %v2128
        %v1844 = vphi -1e+30, %v2129
        %v1845 = vphi -1e+30, %v2130
        %v1846 = vphi 0.0, %v2275
        %v1847 = vphi 0.0, %v2276
        %v1848 = vphi 0.0, %v2277
        %v1849 = vphi 0.0, %v2278
        %v1850 = vphi 0.0, %v2279
        %v1851 = vphi 0.0, %v2280
        %v1852 = vphi 0.0, %v2281
        %v1853 = vphi 0.0, %v2282
        %v1854 = vphi 0.0, %v2283
        %v1855 = vphi 0.0, %v2284
        %v1856 = vphi 0.0, %v2285
        %v1857 = vphi 0.0, %v2286
        %v1858 = vphi 0.0, %v2287
        %v1859 = vphi 0.0, %v2288
        %v1860 = vphi 0.0, %v2289
        %v1861 = vphi 0.0, %v2290
        %v1862 = vphi 0.0, %v2444
        %v1863 = vphi 0.0, %v2445
        %v1864 = vphi 0.0, %v2446
        %v1865 = vphi 0.0, %v2447
        %v1866 = vphi 0.0, %v2448
        %v1867 = vphi 0.0, %v2449
        %v1868 = vphi 0.0, %v2450
        %v1869 = vphi 0.0, %v2451
        %v1870 = vphi 0.0, %v2452
        %v1871 = vphi 0.0, %v2453
        %v1872 = vphi 0.0, %v2454
        %v1873 = vphi 0.0, %v2455
        %v1874 = vphi 0.0, %v2456
        %v1875 = vphi 0.0, %v2457
        %v1876 = vphi 0.0, %v2458
        %v1877 = vphi 0.0, %v2459
      $region86: #{tpu_custom_call.1} parent=75 // loop_header_branch
        %1829 = sbr.rel (%p1826) target = $region90
      $region87: #{tpu_custom_call.1} parent=75 // loop_body
        %s1878 = smul.u32 %s1825, 128
        %s1879 = sshra.s32 %s1878, 7
        %s1880 = sand.u32 %s1878, 127
        %s1881 = smul.addr %s1879, 8
        %s1882 = scalar_lea.vmem [#allocation2], %s1881
        %v1883 = vld [vmem:[%s1882] sm:$0xf0]
        %s1884 = sshra.s32 %s1878, 4
        %s1885 = sand.u32 %s1878, 15
        %s1886 = smul.addr %s1884, 8
        %s1887 = scalar_lea.vmem [#allocation3], %s1886
        %v1888 = vld [vmem:[%s1887] sm:$0xff]
        %v1889 = vld [vmem:[%s1887 + $0x8] sm:$0xff]
        %v1890 = vld [vmem:[%s1887 + $0x10] sm:$0xff]
        %v1891 = vld [vmem:[%s1887 + $0x18] sm:$0xff]
        %v1892 = vld [vmem:[%s1887 + $0x20] sm:$0xff]
        %v1893 = vld [vmem:[%s1887 + $0x28] sm:$0xff]
        %v1894 = vld [vmem:[%s1887 + $0x30] sm:$0xff]
        %v1895 = vld [vmem:[%s1887 + $0x38] sm:$0xff]
        %1904 = vrot.lane.b32.xlu0 %v959, 120
        %v1905 = vpop.permute.xlu0 %1904
        %1906 = vrot.lane.b32.xlu0 %v960, 120
        %v1907 = vpop.permute.xlu0 %1906
        %1908 = vrot.lane.b32.xlu0 %v961, 120
        %v1909 = vpop.permute.xlu0 %1908
        %1910 = vrot.lane.b32.xlu0 %v962, 120
        %v1911 = vpop.permute.xlu0 %1910
        %1912 = vrot.lane.b32.xlu0 %v963, 120
        %v1913 = vpop.permute.xlu0 %1912
        %1914 = vrot.lane.b32.xlu0 %v964, 120
        %v1915 = vpop.permute.xlu0 %1914
        %1916 = vrot.lane.b32.xlu0 %v965, 120
        %v1917 = vpop.permute.xlu0 %1916
        %1918 = vrot.lane.b32.xlu0 %v966, 120
        %v1919 = vpop.permute.xlu0 %1918
        %v1921 = vrot.slane %v1883, 4
        %vm1922 = vcmask 64512
        %v1924 = vsel %vm1922, %v1905, 0
        %v1927 = vsel %vm1922, %v1907, 0
        %v1930 = vsel %vm1922, %v1909, 0
        %v1933 = vsel %vm1922, %v1911, 0
        %v1936 = vsel %vm1922, %v1913, 0
        %v1939 = vsel %vm1922, %v1915, 0
        %v1942 = vsel %vm1922, %v1917, 0
        %v1945 = vsel %vm1922, %v1919, 0
        %vm1947 = vcmask 1043456
        %v1949 = vsel %vm1947, %v1921, 0
        %1951 = vmatprep.subr.bf16.mxu0 0
        %1952 = vmatpush1.bf16.msra.mxu0 %v1949
        %1953 = vmatprep.subr.bf16.mxu0 0
        %1954 = vmatpush1.bf16.msra.mxu0 0
        %1955 = vmatprep.subr.bf16.mxu0 0
        %1956 = vmatpush1.bf16.msra.mxu0 0
        %1957 = vmatprep.subr.bf16.mxu0 0
        %1958 = vmatpush1.bf16.msra.mxu0 0
        %1959 = vmatprep.subr.bf16.mxu0 0
        %1960 = vmatpush1.bf16.msra.mxu0 0
        %1961 = vmatprep.subr.bf16.mxu0 0
        %1962 = vmatpush1.bf16.msra.mxu0 0
        %1963 = vmatprep.subr.bf16.mxu0 0
        %1964 = vmatpush1.bf16.msra.mxu0 0
        %1965 = vmatprep.subr.bf16.mxu0 0
        %1966 = vmatpush1.bf16.msra.mxu0 0
        %1967 = vmatprep.subr.bf16.mxu0 0
        %1968 = vmatpush1.bf16.msra.mxu0 0
        %1969 = vmatprep.subr.bf16.mxu0 0
        %1970 = vmatpush1.bf16.msra.mxu0 0
        %1971 = vmatprep.subr.bf16.mxu0 0
        %1972 = vmatpush1.bf16.msra.mxu0 0
        %1973 = vmatprep.subr.bf16.mxu0 0
        %1974 = vmatpush1.bf16.msra.mxu0 0
        %1975 = vmatprep.subr.bf16.mxu0 0
        %1976 = vmatpush1.bf16.msra.mxu0 0
        %1977 = vmatprep.subr.bf16.mxu0 0
        %1978 = vmatpush1.bf16.msra.mxu0 0
        %1979 = vmatprep.subr.bf16.mxu0 0
        %1980 = vmatpush1.bf16.msra.mxu0 0
        %1981 = vmatprep.subr.bf16.mxu0 0
        %1982 = vmatpush1.bf16.msra.mxu0 0
        %1983 = vmatprep.mubr.bf16.mxu0 0
        %1984 = vmatmul.mubr.bf16.gmra.mrb[0].mxu0 %v1924
        %v1985 = vpop.f32.mrb[0].mxu0
        %v1986 = vadd.f32 0.0, %v1985
        %v1987 = vpop.f32.mrb[0].mxu0
        %v1988 = vpop.f32.mrb[0].mxu0
        %v1989 = vadd.f32 0.0, %v1988
        %v1990 = vpop.f32.mrb[0].mxu0
        %1991 = vmatprep.mubr.bf16.mxu0 0
        %1992 = vmatmul.mubr.bf16.gmra.mrb[0].mxu0 %v1927
        %v1993 = vpop.f32.mrb[0].mxu0
        %v1994 = vadd.f32 0.0, %v1993
        %v1995 = vpop.f32.mrb[0].mxu0
        %v1996 = vpop.f32.mrb[0].mxu0
        %v1997 = vadd.f32 0.0, %v1996
        %v1998 = vpop.f32.mrb[0].mxu0
        %1999 = vmatprep.mubr.bf16.mxu0 0
        %2000 = vmatmul.mubr.bf16.gmra.mrb[0].mxu0 %v1930
        %v2001 = vpop.f32.mrb[0].mxu0
        %v2002 = vadd.f32 0.0, %v2001
        %v2003 = vpop.f32.mrb[0].mxu0
        %v2004 = vpop.f32.mrb[0].mxu0
        %v2005 = vadd.f32 0.0, %v2004
        %v2006 = vpop.f32.mrb[0].mxu0
        %2007 = vmatprep.mubr.bf16.mxu0 0
        %2008 = vmatmul.mubr.bf16.gmra.mrb[0].mxu0 %v1933
        %v2009 = vpop.f32.mrb[0].mxu0
        %v2010 = vadd.f32 0.0, %v2009
        %v2011 = vpop.f32.mrb[0].mxu0
        %v2012 = vpop.f32.mrb[0].mxu0
        %v2013 = vadd.f32 0.0, %v2012
        %v2014 = vpop.f32.mrb[0].mxu0
        %2015 = vmatprep.mubr.bf16.mxu0 0
        %2016 = vmatmul.mubr.bf16.gmra.mrb[0].mxu0 %v1936
        %v2017 = vpop.f32.mrb[0].mxu0
        %v2018 = vadd.f32 0.0, %v2017
        %v2019 = vpop.f32.mrb[0].mxu0
        %v2020 = vpop.f32.mrb[0].mxu0
        %v2021 = vadd.f32 0.0, %v2020
        %v2022 = vpop.f32.mrb[0].mxu0
        %2023 = vmatprep.mubr.bf16.mxu0 0
        %2024 = vmatmul.mubr.bf16.gmra.mrb[0].mxu0 %v1939
        %v2025 = vpop.f32.mrb[0].mxu0
        %v2026 = vadd.f32 0.0, %v2025
        %v2027 = vpop.f32.mrb[0].mxu0
        %v2028 = vpop.f32.mrb[0].mxu0
        %v2029 = vadd.f32 0.0, %v2028
        %v2030 = vpop.f32.mrb[0].mxu0
        %2031 = vmatprep.mubr.bf16.mxu0 0
        %2032 = vmatmul.mubr.bf16.gmra.mrb[0].mxu0 %v1942
        %v2033 = vpop.f32.mrb[0].mxu0
        %v2034 = vadd.f32 0.0, %v2033
        %v2035 = vpop.f32.mrb[0].mxu0
        %v2036 = vpop.f32.mrb[0].mxu0
        %v2037 = vadd.f32 0.0, %v2036
        %v2038 = vpop.f32.mrb[0].mxu0
        %2039 = vmatprep.mubr.bf16.mxu0 0
        %2040 = vmatmul.mubr.bf16.gmra.mrb[0].mxu0 %v1945
        %v2041 = vpop.f32.mrb[0].mxu0
        %v2042 = vadd.f32 0.0, %v2041
        %v2043 = vpop.f32.mrb[0].mxu0
        %v2044 = vpop.f32.mrb[0].mxu0
        %v2045 = vadd.f32 0.0, %v2044
        %v2046 = vpop.f32.mrb[0].mxu0
        %2047 = vdwg.mxu0
        %s2048 = ssub.s32 %s1825, %s30
        %s2049 = smul.u32 %s2048, 128
        %v2050 = vstv %s2049
        %vm2051 = vcmp.ge.s32.totalorder %v1197, %v2050
        %vm2052 = vcmp.ge.s32.totalorder %v1198, %v2050
        %vm2053 = vcmp.ge.s32.totalorder %v1199, %v2050
        %vm2054 = vcmp.ge.s32.totalorder %v1200, %v2050
        %vm2055 = vcmp.ge.s32.totalorder %v1201, %v2050
        %vm2056 = vcmp.ge.s32.totalorder %v1202, %v2050
        %vm2057 = vcmp.ge.s32.totalorder %v1203, %v2050
        %vm2058 = vcmp.ge.s32.totalorder %v1204, %v2050
        %vm2059 = vcmp.ge.s32.totalorder %v1205, %v2050
        %vm2060 = vcmp.ge.s32.totalorder %v1206, %v2050
        %vm2061 = vcmp.ge.s32.totalorder %v1207, %v2050
        %vm2062 = vcmp.ge.s32.totalorder %v1208, %v2050
        %vm2063 = vcmp.ge.s32.totalorder %v1209, %v2050
        %vm2064 = vcmp.ge.s32.totalorder %v1210, %v2050
        %vm2065 = vcmp.ge.s32.totalorder %v1211, %v2050
        %vm2066 = vcmp.ge.s32.totalorder %v1212, %v2050
        %v2067 = vsel %vm2051, %v1986, -1e+30
        %v2068 = vsel %vm2052, %v1989, -1e+30
        %v2069 = vsel %vm2053, %v1994, -1e+30
        %v2070 = vsel %vm2054, %v1997, -1e+30
        %v2071 = vsel %vm2055, %v2002, -1e+30
        %v2072 = vsel %vm2056, %v2005, -1e+30
        %v2073 = vsel %vm2057, %v2010, -1e+30
        %v2074 = vsel %vm2058, %v2013, -1e+30
        %v2075 = vsel %vm2059, %v2018, -1e+30
        %v2076 = vsel %vm2060, %v2021, -1e+30
        %v2077 = vsel %vm2061, %v2026, -1e+30
        %v2078 = vsel %vm2062, %v2029, -1e+30
        %v2079 = vsel %vm2063, %v2034, -1e+30
        %v2080 = vsel %vm2064, %v2037, -1e+30
        %v2081 = vsel %vm2065, %v2042, -1e+30
        %v2082 = vsel %vm2066, %v2045, -1e+30
        %2083 = vmax.xlane.f32.xlu0 %v2067
        %v2084 = vpop.xlane.xlu0 %2083
        %2085 = vmax.xlane.f32.xlu0 %v2068
        %v2086 = vpop.xlane.xlu0 %2085
        %2087 = vmax.xlane.f32.xlu0 %v2069
        %v2088 = vpop.xlane.xlu0 %2087
        %2089 = vmax.xlane.f32.xlu0 %v2070
        %v2090 = vpop.xlane.xlu0 %2089
        %2091 = vmax.xlane.f32.xlu0 %v2071
        %v2092 = vpop.xlane.xlu0 %2091
        %2093 = vmax.xlane.f32.xlu0 %v2072
        %v2094 = vpop.xlane.xlu0 %2093
        %2095 = vmax.xlane.f32.xlu0 %v2073
        %v2096 = vpop.xlane.xlu0 %2095
        %2097 = vmax.xlane.f32.xlu0 %v2074
        %v2098 = vpop.xlane.xlu0 %2097
        %2099 = vmax.xlane.f32.xlu0 %v2075
        %v2100 = vpop.xlane.xlu0 %2099
        %2101 = vmax.xlane.f32.xlu0 %v2076
        %v2102 = vpop.xlane.xlu0 %2101
        %2103 = vmax.xlane.f32.xlu0 %v2077
        %v2104 = vpop.xlane.xlu0 %2103
        %2105 = vmax.xlane.f32.xlu0 %v2078
        %v2106 = vpop.xlane.xlu0 %2105
        %2107 = vmax.xlane.f32.xlu0 %v2079
        %v2108 = vpop.xlane.xlu0 %2107
        %2109 = vmax.xlane.f32.xlu0 %v2080
        %v2110 = vpop.xlane.xlu0 %2109
        %2111 = vmax.xlane.f32.xlu0 %v2081
        %v2112 = vpop.xlane.xlu0 %2111
        %2113 = vmax.xlane.f32.xlu0 %v2082
        %v2114 = vpop.xlane.xlu0 %2113
        %v2115 = vmax.f32 %v1830, %v2084
        %v2116 = vmax.f32 %v1831, %v2086
        %v2117 = vmax.f32 %v1832, %v2088
        %v2118 = vmax.f32 %v1833, %v2090
        %v2119 = vmax.f32 %v1834, %v2092
        %v2120 = vmax.f32 %v1835, %v2094
        %v2121 = vmax.f32 %v1836, %v2096
        %v2122 = vmax.f32 %v1837, %v2098
        %v2123 = vmax.f32 %v1838, %v2100
        %v2124 = vmax.f32 %v1839, %v2102
        %v2125 = vmax.f32 %v1840, %v2104
        %v2126 = vmax.f32 %v1841, %v2106
        %v2127 = vmax.f32 %v1842, %v2108
        %v2128 = vmax.f32 %v1843, %v2110
        %v2129 = vmax.f32 %v1844, %v2112
        %v2130 = vmax.f32 %v1845, %v2114
        %v2131 = vsub.f32 %v1830, %v2115
        %v2132 = vsub.f32 %v1831, %v2116
        %v2133 = vsub.f32 %v1832, %v2117
        %v2134 = vsub.f32 %v1833, %v2118
        %v2135 = vsub.f32 %v1834, %v2119
        %v2136 = vsub.f32 %v1835, %v2120
        %v2137 = vsub.f32 %v1836, %v2121
        %v2138 = vsub.f32 %v1837, %v2122
        %v2139 = vsub.f32 %v1838, %v2123
        %v2140 = vsub.f32 %v1839, %v2124
        %v2141 = vsub.f32 %v1840, %v2125
        %v2142 = vsub.f32 %v1841, %v2126
        %v2143 = vsub.f32 %v1842, %v2127
        %v2144 = vsub.f32 %v1843, %v2128
        %v2145 = vsub.f32 %v1844, %v2129
        %v2146 = vsub.f32 %v1845, %v2130
        %v2147 = vmul.f32 %v2131, 1.442695
        %v2148 = vpow.pop %v2147
        %v2149 = vmul.f32 %v2132, 1.442695
        %v2150 = vpow.pop %v2149
        %v2151 = vmul.f32 %v2133, 1.442695
        %v2152 = vpow.pop %v2151
        %v2153 = vmul.f32 %v2134, 1.442695
        %v2154 = vpow.pop %v2153
        %v2155 = vmul.f32 %v2135, 1.442695
        %v2156 = vpow.pop %v2155
        %v2157 = vmul.f32 %v2136, 1.442695
        %v2158 = vpow.pop %v2157
        %v2159 = vmul.f32 %v2137, 1.442695
        %v2160 = vpow.pop %v2159
        %v2161 = vmul.f32 %v2138, 1.442695
        %v2162 = vpow.pop %v2161
        %v2163 = vmul.f32 %v2139, 1.442695
        %v2164 = vpow.pop %v2163
        %v2165 = vmul.f32 %v2140, 1.442695
        %v2166 = vpow.pop %v2165
        %v2167 = vmul.f32 %v2141, 1.442695
        %v2168 = vpow.pop %v2167
        %v2169 = vmul.f32 %v2142, 1.442695
        %v2170 = vpow.pop %v2169
        %v2171 = vmul.f32 %v2143, 1.442695
        %v2172 = vpow.pop %v2171
        %v2173 = vmul.f32 %v2144, 1.442695
        %v2174 = vpow.pop %v2173
        %v2175 = vmul.f32 %v2145, 1.442695
        %v2176 = vpow.pop %v2175
        %v2177 = vmul.f32 %v2146, 1.442695
        %v2178 = vpow.pop %v2177
        %v2179 = vsub.f32 %v2067, %v2115
        %v2180 = vsub.f32 %v2068, %v2116
        %v2181 = vsub.f32 %v2069, %v2117
        %v2182 = vsub.f32 %v2070, %v2118
        %v2183 = vsub.f32 %v2071, %v2119
        %v2184 = vsub.f32 %v2072, %v2120
        %v2185 = vsub.f32 %v2073, %v2121
        %v2186 = vsub.f32 %v2074, %v2122
        %v2187 = vsub.f32 %v2075, %v2123
        %v2188 = vsub.f32 %v2076, %v2124
        %v2189 = vsub.f32 %v2077, %v2125
        %v2190 = vsub.f32 %v2078, %v2126
        %v2191 = vsub.f32 %v2079, %v2127
        %v2192 = vsub.f32 %v2080, %v2128
        %v2193 = vsub.f32 %v2081, %v2129
        %v2194 = vsub.f32 %v2082, %v2130
        %v2195 = vmul.f32 %v2179, 1.442695
        %v2196 = vpow.pop %v2195
        %v2197 = vmul.f32 %v2180, 1.442695
        %v2198 = vpow.pop %v2197
        %v2199 = vmul.f32 %v2181, 1.442695
        %v2200 = vpow.pop %v2199
        %v2201 = vmul.f32 %v2182, 1.442695
        %v2202 = vpow.pop %v2201
        %v2203 = vmul.f32 %v2183, 1.442695
        %v2204 = vpow.pop %v2203
        %v2205 = vmul.f32 %v2184, 1.442695
        %v2206 = vpow.pop %v2205
        %v2207 = vmul.f32 %v2185, 1.442695
        %v2208 = vpow.pop %v2207
        %v2209 = vmul.f32 %v2186, 1.442695
        %v2210 = vpow.pop %v2209
        %v2211 = vmul.f32 %v2187, 1.442695
        %v2212 = vpow.pop %v2211
        %v2213 = vmul.f32 %v2188, 1.442695
        %v2214 = vpow.pop %v2213
        %v2215 = vmul.f32 %v2189, 1.442695
        %v2216 = vpow.pop %v2215
        %v2217 = vmul.f32 %v2190, 1.442695
        %v2218 = vpow.pop %v2217
        %v2219 = vmul.f32 %v2191, 1.442695
        %v2220 = vpow.pop %v2219
        %v2221 = vmul.f32 %v2192, 1.442695
        %v2222 = vpow.pop %v2221
        %v2223 = vmul.f32 %v2193, 1.442695
        %v2224 = vpow.pop %v2223
        %v2225 = vmul.f32 %v2194, 1.442695
        %v2226 = vpow.pop %v2225
        %v2227 = vmul.f32 %v2148, %v1846
        %v2228 = vmul.f32 %v2150, %v1847
        %v2229 = vmul.f32 %v2152, %v1848
        %v2230 = vmul.f32 %v2154, %v1849
        %v2231 = vmul.f32 %v2156, %v1850
        %v2232 = vmul.f32 %v2158, %v1851
        %v2233 = vmul.f32 %v2160, %v1852
        %v2234 = vmul.f32 %v2162, %v1853
        %v2235 = vmul.f32 %v2164, %v1854
        %v2236 = vmul.f32 %v2166, %v1855
        %v2237 = vmul.f32 %v2168, %v1856
        %v2238 = vmul.f32 %v2170, %v1857
        %v2239 = vmul.f32 %v2172, %v1858
        %v2240 = vmul.f32 %v2174, %v1859
        %v2241 = vmul.f32 %v2176, %v1860
        %v2242 = vmul.f32 %v2178, %v1861
        %2243 = vadd.xlane.f32.xlu0 %v2196
        %v2244 = vpop.xlane.xlu0 %2243
        %2245 = vadd.xlane.f32.xlu0 %v2198
        %v2246 = vpop.xlane.xlu0 %2245
        %2247 = vadd.xlane.f32.xlu0 %v2200
        %v2248 = vpop.xlane.xlu0 %2247
        %2249 = vadd.xlane.f32.xlu0 %v2202
        %v2250 = vpop.xlane.xlu0 %2249
        %2251 = vadd.xlane.f32.xlu0 %v2204
        %v2252 = vpop.xlane.xlu0 %2251
        %2253 = vadd.xlane.f32.xlu0 %v2206
        %v2254 = vpop.xlane.xlu0 %2253
        %2255 = vadd.xlane.f32.xlu0 %v2208
        %v2256 = vpop.xlane.xlu0 %2255
        %2257 = vadd.xlane.f32.xlu0 %v2210
        %v2258 = vpop.xlane.xlu0 %2257
        %2259 = vadd.xlane.f32.xlu0 %v2212
        %v2260 = vpop.xlane.xlu0 %2259
        %2261 = vadd.xlane.f32.xlu0 %v2214
        %v2262 = vpop.xlane.xlu0 %2261
        %2263 = vadd.xlane.f32.xlu0 %v2216
        %v2264 = vpop.xlane.xlu0 %2263
        %2265 = vadd.xlane.f32.xlu0 %v2218
        %v2266 = vpop.xlane.xlu0 %2265
        %2267 = vadd.xlane.f32.xlu0 %v2220
        %v2268 = vpop.xlane.xlu0 %2267
        %2269 = vadd.xlane.f32.xlu0 %v2222
        %v2270 = vpop.xlane.xlu0 %2269
        %2271 = vadd.xlane.f32.xlu0 %v2224
        %v2272 = vpop.xlane.xlu0 %2271
        %2273 = vadd.xlane.f32.xlu0 %v2226
        %v2274 = vpop.xlane.xlu0 %2273
        %v2275 = vadd.f32 %v2227, %v2244
        %v2276 = vadd.f32 %v2228, %v2246
        %v2277 = vadd.f32 %v2229, %v2248
        %v2278 = vadd.f32 %v2230, %v2250
        %v2279 = vadd.f32 %v2231, %v2252
        %v2280 = vadd.f32 %v2232, %v2254
        %v2281 = vadd.f32 %v2233, %v2256
        %v2282 = vadd.f32 %v2234, %v2258
        %v2283 = vadd.f32 %v2235, %v2260
        %v2284 = vadd.f32 %v2236, %v2262
        %v2285 = vadd.f32 %v2237, %v2264
        %v2286 = vadd.f32 %v2238, %v2266
        %v2287 = vadd.f32 %v2239, %v2268
        %v2288 = vadd.f32 %v2240, %v2270
        %v2289 = vadd.f32 %v2241, %v2272
        %v2290 = vadd.f32 %v2242, %v2274
        %v2291 = vmul.f32 %v2148, %v1862
        %v2292 = vmul.f32 %v2150, %v1863
        %v2293 = vmul.f32 %v2152, %v1864
        %v2294 = vmul.f32 %v2154, %v1865
        %v2295 = vmul.f32 %v2156, %v1866
        %v2296 = vmul.f32 %v2158, %v1867
        %v2297 = vmul.f32 %v2160, %v1868
        %v2298 = vmul.f32 %v2162, %v1869
        %v2299 = vmul.f32 %v2164, %v1870
        %v2300 = vmul.f32 %v2166, %v1871
        %v2301 = vmul.f32 %v2168, %v1872
        %v2302 = vmul.f32 %v2170, %v1873
        %v2303 = vmul.f32 %v2172, %v1874
        %v2304 = vmul.f32 %v2174, %v1875
        %v2305 = vmul.f32 %v2176, %v1876
        %v2306 = vmul.f32 %v2178, %v1877
        %v2307 = vpack.c.bf16 %v2198, %v2196
        %v2308 = vpack.c.bf16 %v2202, %v2200
        %v2309 = vpack.c.bf16 %v2206, %v2204
        %v2310 = vpack.c.bf16 %v2210, %v2208
        %v2311 = vpack.c.bf16 %v2214, %v2212
        %v2312 = vpack.c.bf16 %v2218, %v2216
        %v2313 = vpack.c.bf16 %v2222, %v2220
        %v2314 = vpack.c.bf16 %v2226, %v2224
        %2323 = vrot.lane.b32.xlu0 %v1888, 120
        %v2324 = vpop.permute.xlu0 %2323
        %2325 = vrot.lane.b32.xlu0 %v1889, 120
        %v2326 = vpop.permute.xlu0 %2325
        %2327 = vrot.lane.b32.xlu0 %v1890, 120
        %v2328 = vpop.permute.xlu0 %2327
        %2329 = vrot.lane.b32.xlu0 %v1891, 120
        %v2330 = vpop.permute.xlu0 %2329
        %2331 = vrot.lane.b32.xlu0 %v1892, 120
        %v2332 = vpop.permute.xlu0 %2331
        %2333 = vrot.lane.b32.xlu0 %v1893, 120
        %v2334 = vpop.permute.xlu0 %2333
        %2335 = vrot.lane.b32.xlu0 %v1894, 120
        %v2336 = vpop.permute.xlu0 %2335
        %2337 = vrot.lane.b32.xlu0 %v1895, 120
        %v2338 = vpop.permute.xlu0 %2337
        %2347 = vmatprep.subr.bf16.mxu0 0
        %2348 = vmatpush1.bf16.msra.mxu0 %v2324
        %2349 = vmatprep.subr.bf16.mxu0 0
        %2350 = vmatpush1.bf16.msra.mxu0 %v2326
        %2351 = vmatprep.subr.bf16.mxu0 0
        %2352 = vmatpush1.bf16.msra.mxu0 %v2328
        %2353 = vmatprep.subr.bf16.mxu0 0
        %2354 = vmatpush1.bf16.msra.mxu0 %v2330
        %2355 = vmatprep.subr.bf16.mxu0 0
        %2356 = vmatpush1.bf16.msra.mxu0 %v2332
        %2357 = vmatprep.subr.bf16.mxu0 0
        %2358 = vmatpush1.bf16.msra.mxu0 %v2334
        %2359 = vmatprep.subr.bf16.mxu0 0
        %2360 = vmatpush1.bf16.msra.mxu0 %v2336
        %2361 = vmatprep.subr.bf16.mxu0 0
        %2362 = vmatpush1.bf16.msra.mxu0 %v2338
        %2363 = vmatprep.subr.bf16.mxu0 0
        %2364 = vmatpush1.bf16.msra.mxu0 0
        %2365 = vmatprep.subr.bf16.mxu0 0
        %2366 = vmatpush1.bf16.msra.mxu0 0
        %2367 = vmatprep.subr.bf16.mxu0 0
        %2368 = vmatpush1.bf16.msra.mxu0 0
        %2369 = vmatprep.subr.bf16.mxu0 0
        %2370 = vmatpush1.bf16.msra.mxu0 0
        %2371 = vmatprep.subr.bf16.mxu0 0
        %2372 = vmatpush1.bf16.msra.mxu0 0
        %2373 = vmatprep.subr.bf16.mxu0 0
        %2374 = vmatpush1.bf16.msra.mxu0 0
        %2375 = vmatprep.subr.bf16.mxu0 0
        %2376 = vmatpush1.bf16.msra.mxu0 0
        %2377 = vmatprep.subr.bf16.mxu0 0
        %2378 = vmatpush1.bf16.msra.mxu0 0
        %2379 = vmatprep.mubr.bf16.mxu0 0
        %2380 = vmatmul.mubr.bf16.gmra.mrb[0].mxu0 %v2307
        %v2381 = vpop.f32.mrb[0].mxu0
        %v2382 = vadd.f32 0.0, %v2381
        %v2383 = vpop.f32.mrb[0].mxu0
        %v2384 = vpop.f32.mrb[0].mxu0
        %v2385 = vadd.f32 0.0, %v2384
        %v2386 = vpop.f32.mrb[0].mxu0
        %2387 = vmatprep.mubr.bf16.mxu0 0
        %2388 = vmatmul.mubr.bf16.gmra.mrb[0].mxu0 %v2308
        %v2389 = vpop.f32.mrb[0].mxu0
        %v2390 = vadd.f32 0.0, %v2389
        %v2391 = vpop.f32.mrb[0].mxu0
        %v2392 = vpop.f32.mrb[0].mxu0
        %v2393 = vadd.f32 0.0, %v2392
        %v2394 = vpop.f32.mrb[0].mxu0
        %2395 = vmatprep.mubr.bf16.mxu0 0
        %2396 = vmatmul.mubr.bf16.gmra.mrb[0].mxu0 %v2309
        %v2397 = vpop.f32.mrb[0].mxu0
        %v2398 = vadd.f32 0.0, %v2397
        %v2399 = vpop.f32.mrb[0].mxu0
        %v2400 = vpop.f32.mrb[0].mxu0
        %v2401 = vadd.f32 0.0, %v2400
        %v2402 = vpop.f32.mrb[0].mxu0
        %2403 = vmatprep.mubr.bf16.mxu0 0
        %2404 = vmatmul.mubr.bf16.gmra.mrb[0].mxu0 %v2310
        %v2405 = vpop.f32.mrb[0].mxu0
        %v2406 = vadd.f32 0.0, %v2405
        %v2407 = vpop.f32.mrb[0].mxu0
        %v2408 = vpop.f32.mrb[0].mxu0
        %v2409 = vadd.f32 0.0, %v2408
        %v2410 = vpop.f32.mrb[0].mxu0
        %2411 = vmatprep.mubr.bf16.mxu0 0
        %2412 = vmatmul.mubr.bf16.gmra.mrb[0].mxu0 %v2311
        %v2413 = vpop.f32.mrb[0].mxu0
        %v2414 = vadd.f32 0.0, %v2413
        %v2415 = vpop.f32.mrb[0].mxu0
        %v2416 = vpop.f32.mrb[0].mxu0
        %v2417 = vadd.f32 0.0, %v2416
        %v2418 = vpop.f32.mrb[0].mxu0
        %2419 = vmatprep.mubr.bf16.mxu0 0
        %2420 = vmatmul.mubr.bf16.gmra.mrb[0].mxu0 %v2312
        %v2421 = vpop.f32.mrb[0].mxu0
        %v2422 = vadd.f32 0.0, %v2421
        %v2423 = vpop.f32.mrb[0].mxu0
        %v2424 = vpop.f32.mrb[0].mxu0
        %v2425 = vadd.f32 0.0, %v2424
        %v2426 = vpop.f32.mrb[0].mxu0
        %2427 = vmatprep.mubr.bf16.mxu0 0
        %2428 = vmatmul.mubr.bf16.gmra.mrb[0].mxu0 %v2313
        %v2429 = vpop.f32.mrb[0].mxu0
        %v2430 = vadd.f32 0.0, %v2429
        %v2431 = vpop.f32.mrb[0].mxu0
        %v2432 = vpop.f32.mrb[0].mxu0
        %v2433 = vadd.f32 0.0, %v2432
        %v2434 = vpop.f32.mrb[0].mxu0
        %2435 = vmatprep.mubr.bf16.mxu0 0
        %2436 = vmatmul.mubr.bf16.gmra.mrb[0].mxu0 %v2314
        %v2437 = vpop.f32.mrb[0].mxu0
        %v2438 = vadd.f32 0.0, %v2437
        %v2439 = vpop.f32.mrb[0].mxu0
        %v2440 = vpop.f32.mrb[0].mxu0
        %v2441 = vadd.f32 0.0, %v2440
        %v2442 = vpop.f32.mrb[0].mxu0
        %2443 = vdwg.mxu0
        %v2444 = vadd.f32 %v2291, %v2382
        %v2445 = vadd.f32 %v2292, %v2385
        %v2446 = vadd.f32 %v2293, %v2390
        %v2447 = vadd.f32 %v2294, %v2393
        %v2448 = vadd.f32 %v2295, %v2398
        %v2449 = vadd.f32 %v2296, %v2401
        %v2450 = vadd.f32 %v2297, %v2406
        %v2451 = vadd.f32 %v2298, %v2409
        %v2452 = vadd.f32 %v2299, %v2414
        %v2453 = vadd.f32 %v2300, %v2417
        %v2454 = vadd.f32 %v2301, %v2422
        %v2455 = vadd.f32 %v2302, %v2425
        %v2456 = vadd.f32 %v2303, %v2430
        %v2457 = vadd.f32 %v2304, %v2433
        %v2458 = vadd.f32 %v2305, %v2438
        %v2459 = vadd.f32 %v2306, %v2441
      $region88: #{tpu_custom_call.1} parent=75 // loop_footer
        %s1827 = sadd.s32 %s1825, 1
      $region89: #{tpu_custom_call.1} parent=75 // loop_footer_branch
        %1824 = sbr.rel target = $region85
      $region90: #{tpu_custom_call.1} parent=75 // loop_exit
        _
      %v2460 = vrcp.pop %v1846
      %v2461 = vrcp.pop %v1847
      %v2462 = vrcp.pop %v1848
      %v2463 = vrcp.pop %v1849
      %v2464 = vrcp.pop %v1850
      %v2465 = vrcp.pop %v1851
      %v2466 = vrcp.pop %v1852
      %v2467 = vrcp.pop %v1853
      %v2468 = vrcp.pop %v1854
      %v2469 = vrcp.pop %v1855
      %v2470 = vrcp.pop %v1856
      %v2471 = vrcp.pop %v1857
      %v2472 = vrcp.pop %v1858
      %v2473 = vrcp.pop %v1859
      %v2474 = vrcp.pop %v1860
      %v2475 = vrcp.pop %v1861
      %v2476 = vmul.f32 %v1862, %v2460
      %v2477 = vmul.f32 %v1863, %v2461
      %v2478 = vmul.f32 %v1864, %v2462
      %v2479 = vmul.f32 %v1865, %v2463
      %v2480 = vmul.f32 %v1866, %v2464
      %v2481 = vmul.f32 %v1867, %v2465
      %v2482 = vmul.f32 %v1868, %v2466
      %v2483 = vmul.f32 %v1869, %v2467
      %v2484 = vmul.f32 %v1870, %v2468
      %v2485 = vmul.f32 %v1871, %v2469
      %v2486 = vmul.f32 %v1872, %v2470
      %v2487 = vmul.f32 %v1873, %v2471
      %v2488 = vmul.f32 %v1874, %v2472
      %v2489 = vmul.f32 %v1875, %v2473
      %v2490 = vmul.f32 %v1876, %v2474
      %v2491 = vmul.f32 %v1877, %v2475
      // While loop
      $region91: #{tpu_custom_call.1} parent=75 // loop_pre_header
        _
      $region92: #{tpu_custom_call.1} parent=75 // loop_header
        %s2493 = sphi 0, %s2495
        %p2494 = scmp.ge.s32.totalorder %s2493, %s1213
        %v2498 = vphi -1e+30, %v2781
        %v2499 = vphi -1e+30, %v2782
        %v2500 = vphi -1e+30, %v2783
        %v2501 = vphi -1e+30, %v2784
        %v2502 = vphi -1e+30, %v2785
        %v2503 = vphi -1e+30, %v2786
        %v2504 = vphi -1e+30, %v2787
        %v2505 = vphi -1e+30, %v2788
        %v2506 = vphi -1e+30, %v2789
        %v2507 = vphi -1e+30, %v2790
        %v2508 = vphi -1e+30, %v2791
        %v2509 = vphi -1e+30, %v2792
        %v2510 = vphi -1e+30, %v2793
        %v2511 = vphi -1e+30, %v2794
        %v2512 = vphi -1e+30, %v2795
        %v2513 = vphi -1e+30, %v2796
        %v2514 = vphi 0.0, %v2941
        %v2515 = vphi 0.0, %v2942
        %v2516 = vphi 0.0, %v2943
        %v2517 = vphi 0.0, %v2944
        %v2518 = vphi 0.0, %v2945
        %v2519 = vphi 0.0, %v2946
        %v2520 = vphi 0.0, %v2947
        %v2521 = vphi 0.0, %v2948
        %v2522 = vphi 0.0, %v2949
        %v2523 = vphi 0.0, %v2950
        %v2524 = vphi 0.0, %v2951
        %v2525 = vphi 0.0, %v2952
        %v2526 = vphi 0.0, %v2953
        %v2527 = vphi 0.0, %v2954
        %v2528 = vphi 0.0, %v2955
        %v2529 = vphi 0.0, %v2956
        %v2530 = vphi 0.0, %v3110
        %v2531 = vphi 0.0, %v3111
        %v2532 = vphi 0.0, %v3112
        %v2533 = vphi 0.0, %v3113
        %v2534 = vphi 0.0, %v3114
        %v2535 = vphi 0.0, %v3115
        %v2536 = vphi 0.0, %v3116
        %v2537 = vphi 0.0, %v3117
        %v2538 = vphi 0.0, %v3118
        %v2539 = vphi 0.0, %v3119
        %v2540 = vphi 0.0, %v3120
        %v2541 = vphi 0.0, %v3121
        %v2542 = vphi 0.0, %v3122
        %v2543 = vphi 0.0, %v3123
        %v2544 = vphi 0.0, %v3124
        %v2545 = vphi 0.0, %v3125
      $region93: #{tpu_custom_call.1} parent=75 // loop_header_branch
        %2497 = sbr.rel (%p2494) target = $region97
      $region94: #{tpu_custom_call.1} parent=75 // loop_body
        %s2546 = smul.u32 %s2493, 128
        %s2547 = sshra.s32 %s2546, 7
        %s2548 = sand.u32 %s2546, 127
        %s2549 = smul.addr %s2547, 8
        %s2550 = scalar_lea.vmem [#allocation2], %s2549
        %v2551 = vld [vmem:[%s2550 + $0x8] sm:$0xf]
        %s2552 = sshra.s32 %s2546, 4
        %s2553 = sand.u32 %s2546, 15
        %s2554 = smul.addr %s2552, 8
        %s2555 = scalar_lea.vmem [#allocation3], %s2554
        %v2556 = vld [vmem:[%s2555] sm:$0xff]
        %v2557 = vld [vmem:[%s2555 + $0x8] sm:$0xff]
        %v2558 = vld [vmem:[%s2555 + $0x10] sm:$0xff]
        %v2559 = vld [vmem:[%s2555 + $0x18] sm:$0xff]
        %v2560 = vld [vmem:[%s2555 + $0x20] sm:$0xff]
        %v2561 = vld [vmem:[%s2555 + $0x28] sm:$0xff]
        %v2562 = vld [vmem:[%s2555 + $0x30] sm:$0xff]
        %v2563 = vld [vmem:[%s2555 + $0x38] sm:$0xff]
        %2572 = vrot.lane.b32.xlu0 %v959, 112
        %v2573 = vpop.permute.xlu0 %2572
        %2574 = vrot.lane.b32.xlu0 %v960, 112
        %v2575 = vpop.permute.xlu0 %2574
        %2576 = vrot.lane.b32.xlu0 %v961, 112
        %v2577 = vpop.permute.xlu0 %2576
        %2578 = vrot.lane.b32.xlu0 %v962, 112
        %v2579 = vpop.permute.xlu0 %2578
        %2580 = vrot.lane.b32.xlu0 %v963, 112
        %v2581 = vpop.permute.xlu0 %2580
        %2582 = vrot.lane.b32.xlu0 %v964, 112
        %v2583 = vpop.permute.xlu0 %2582
        %2584 = vrot.lane.b32.xlu0 %v965, 112
        %v2585 = vpop.permute.xlu0 %2584
        %2586 = vrot.lane.b32.xlu0 %v966, 112
        %v2587 = vpop.permute.xlu0 %2586
        %vm2588 = vcmask 64512
        %v2590 = vsel %vm2588, %v2573, 0
        %v2593 = vsel %vm2588, %v2575, 0
        %v2596 = vsel %vm2588, %v2577, 0
        %v2599 = vsel %vm2588, %v2579, 0
        %v2602 = vsel %vm2588, %v2581, 0
        %v2605 = vsel %vm2588, %v2583, 0
        %v2608 = vsel %vm2588, %v2585, 0
        %v2611 = vsel %vm2588, %v2587, 0
        %vm2613 = vcmask 1043456
        %v2615 = vsel %vm2613, %v2551, 0
        %2617 = vmatprep.subr.bf16.mxu0 0
        %2618 = vmatpush1.bf16.msra.mxu0 %v2615
        %2619 = vmatprep.subr.bf16.mxu0 0
        %2620 = vmatpush1.bf16.msra.mxu0 0
        %2621 = vmatprep.subr.bf16.mxu0 0
        %2622 = vmatpush1.bf16.msra.mxu0 0
        %2623 = vmatprep.subr.bf16.mxu0 0
        %2624 = vmatpush1.bf16.msra.mxu0 0
        %2625 = vmatprep.subr.bf16.mxu0 0
        %2626 = vmatpush1.bf16.msra.mxu0 0
        %2627 = vmatprep.subr.bf16.mxu0 0
        %2628 = vmatpush1.bf16.msra.mxu0 0
        %2629 = vmatprep.subr.bf16.mxu0 0
        %2630 = vmatpush1.bf16.msra.mxu0 0
        %2631 = vmatprep.subr.bf16.mxu0 0
        %2632 = vmatpush1.bf16.msra.mxu0 0
        %2633 = vmatprep.subr.bf16.mxu0 0
        %2634 = vmatpush1.bf16.msra.mxu0 0
        %2635 = vmatprep.subr.bf16.mxu0 0
        %2636 = vmatpush1.bf16.msra.mxu0 0
        %2637 = vmatprep.subr.bf16.mxu0 0
        %2638 = vmatpush1.bf16.msra.mxu0 0
        %2639 = vmatprep.subr.bf16.mxu0 0
        %2640 = vmatpush1.bf16.msra.mxu0 0
        %2641 = vmatprep.subr.bf16.mxu0 0
        %2642 = vmatpush1.bf16.msra.mxu0 0
        %2643 = vmatprep.subr.bf16.mxu0 0
        %2644 = vmatpush1.bf16.msra.mxu0 0
        %2645 = vmatprep.subr.bf16.mxu0 0
        %2646 = vmatpush1.bf16.msra.mxu0 0
        %2647 = vmatprep.subr.bf16.mxu0 0
        %2648 = vmatpush1.bf16.msra.mxu0 0
        %2649 = vmatprep.mubr.bf16.mxu0 0
        %2650 = vmatmul.mubr.bf16.gmra.mrb[0].mxu0 %v2590
        %v2651 = vpop.f32.mrb[0].mxu0
        %v2652 = vadd.f32 0.0, %v2651
        %v2653 = vpop.f32.mrb[0].mxu0
        %v2654 = vpop.f32.mrb[0].mxu0
        %v2655 = vadd.f32 0.0, %v2654
        %v2656 = vpop.f32.mrb[0].mxu0
        %2657 = vmatprep.mubr.bf16.mxu0 0
        %2658 = vmatmul.mubr.bf16.gmra.mrb[0].mxu0 %v2593
        %v2659 = vpop.f32.mrb[0].mxu0
        %v2660 = vadd.f32 0.0, %v2659
        %v2661 = vpop.f32.mrb[0].mxu0
        %v2662 = vpop.f32.mrb[0].mxu0
        %v2663 = vadd.f32 0.0, %v2662
        %v2664 = vpop.f32.mrb[0].mxu0
        %2665 = vmatprep.mubr.bf16.mxu0 0
        %2666 = vmatmul.mubr.bf16.gmra.mrb[0].mxu0 %v2596
        %v2667 = vpop.f32.mrb[0].mxu0
        %v2668 = vadd.f32 0.0, %v2667
        %v2669 = vpop.f32.mrb[0].mxu0
        %v2670 = vpop.f32.mrb[0].mxu0
        %v2671 = vadd.f32 0.0, %v2670
        %v2672 = vpop.f32.mrb[0].mxu0
        %2673 = vmatprep.mubr.bf16.mxu0 0
        %2674 = vmatmul.mubr.bf16.gmra.mrb[0].mxu0 %v2599
        %v2675 = vpop.f32.mrb[0].mxu0
        %v2676 = vadd.f32 0.0, %v2675
        %v2677 = vpop.f32.mrb[0].mxu0
        %v2678 = vpop.f32.mrb[0].mxu0
        %v2679 = vadd.f32 0.0, %v2678
        %v2680 = vpop.f32.mrb[0].mxu0
        %2681 = vmatprep.mubr.bf16.mxu0 0
        %2682 = vmatmul.mubr.bf16.gmra.mrb[0].mxu0 %v2602
        %v2683 = vpop.f32.mrb[0].mxu0
        %v2684 = vadd.f32 0.0, %v2683
        %v2685 = vpop.f32.mrb[0].mxu0
        %v2686 = vpop.f32.mrb[0].mxu0
        %v2687 = vadd.f32 0.0, %v2686
        %v2688 = vpop.f32.mrb[0].mxu0
        %2689 = vmatprep.mubr.bf16.mxu0 0
        %2690 = vmatmul.mubr.bf16.gmra.mrb[0].mxu0 %v2605
        %v2691 = vpop.f32.mrb[0].mxu0
        %v2692 = vadd.f32 0.0, %v2691
        %v2693 = vpop.f32.mrb[0].mxu0
        %v2694 = vpop.f32.mrb[0].mxu0
        %v2695 = vadd.f32 0.0, %v2694
        %v2696 = vpop.f32.mrb[0].mxu0
        %2697 = vmatprep.mubr.bf16.mxu0 0
        %2698 = vmatmul.mubr.bf16.gmra.mrb[0].mxu0 %v2608
        %v2699 = vpop.f32.mrb[0].mxu0
        %v2700 = vadd.f32 0.0, %v2699
        %v2701 = vpop.f32.mrb[0].mxu0
        %v2702 = vpop.f32.mrb[0].mxu0
        %v2703 = vadd.f32 0.0, %v2702
        %v2704 = vpop.f32.mrb[0].mxu0
        %2705 = vmatprep.mubr.bf16.mxu0 0
        %2706 = vmatmul.mubr.bf16.gmra.mrb[0].mxu0 %v2611
        %v2707 = vpop.f32.mrb[0].mxu0
        %v2708 = vadd.f32 0.0, %v2707
        %v2709 = vpop.f32.mrb[0].mxu0
        %v2710 = vpop.f32.mrb[0].mxu0
        %v2711 = vadd.f32 0.0, %v2710
        %v2712 = vpop.f32.mrb[0].mxu0
        %2713 = vdwg.mxu0
        %s2714 = ssub.s32 %s2493, %s30
        %s2715 = smul.u32 %s2714, 128
        %v2716 = vstv %s2715
        %vm2717 = vcmp.ge.s32.totalorder %v1197, %v2716
        %vm2718 = vcmp.ge.s32.totalorder %v1198, %v2716
        %vm2719 = vcmp.ge.s32.totalorder %v1199, %v2716
        %vm2720 = vcmp.ge.s32.totalorder %v1200, %v2716
        %vm2721 = vcmp.ge.s32.totalorder %v1201, %v2716
        %vm2722 = vcmp.ge.s32.totalorder %v1202, %v2716
        %vm2723 = vcmp.ge.s32.totalorder %v1203, %v2716
        %vm2724 = vcmp.ge.s32.totalorder %v1204, %v2716
        %vm2725 = vcmp.ge.s32.totalorder %v1205, %v2716
        %vm2726 = vcmp.ge.s32.totalorder %v1206, %v2716
        %vm2727 = vcmp.ge.s32.totalorder %v1207, %v2716
        %vm2728 = vcmp.ge.s32.totalorder %v1208, %v2716
        %vm2729 = vcmp.ge.s32.totalorder %v1209, %v2716
        %vm2730 = vcmp.ge.s32.totalorder %v1210, %v2716
        %vm2731 = vcmp.ge.s32.totalorder %v1211, %v2716
        %vm2732 = vcmp.ge.s32.totalorder %v1212, %v2716
        %v2733 = vsel %vm2717, %v2652, -1e+30
        %v2734 = vsel %vm2718, %v2655, -1e+30
        %v2735 = vsel %vm2719, %v2660, -1e+30
        %v2736 = vsel %vm2720, %v2663, -1e+30
        %v2737 = vsel %vm2721, %v2668, -1e+30
        %v2738 = vsel %vm2722, %v2671, -1e+30
        %v2739 = vsel %vm2723, %v2676, -1e+30
        %v2740 = vsel %vm2724, %v2679, -1e+30
        %v2741 = vsel %vm2725, %v2684, -1e+30
        %v2742 = vsel %vm2726, %v2687, -1e+30
        %v2743 = vsel %vm2727, %v2692, -1e+30
        %v2744 = vsel %vm2728, %v2695, -1e+30
        %v2745 = vsel %vm2729, %v2700, -1e+30
        %v2746 = vsel %vm2730, %v2703, -1e+30
        %v2747 = vsel %vm2731, %v2708, -1e+30
        %v2748 = vsel %vm2732, %v2711, -1e+30
        %2749 = vmax.xlane.f32.xlu0 %v2733
        %v2750 = vpop.xlane.xlu0 %2749
        %2751 = vmax.xlane.f32.xlu0 %v2734
        %v2752 = vpop.xlane.xlu0 %2751
        %2753 = vmax.xlane.f32.xlu0 %v2735
        %v2754 = vpop.xlane.xlu0 %2753
        %2755 = vmax.xlane.f32.xlu0 %v2736
        %v2756 = vpop.xlane.xlu0 %2755
        %2757 = vmax.xlane.f32.xlu0 %v2737
        %v2758 = vpop.xlane.xlu0 %2757
        %2759 = vmax.xlane.f32.xlu0 %v2738
        %v2760 = vpop.xlane.xlu0 %2759
        %2761 = vmax.xlane.f32.xlu0 %v2739
        %v2762 = vpop.xlane.xlu0 %2761
        %2763 = vmax.xlane.f32.xlu0 %v2740
        %v2764 = vpop.xlane.xlu0 %2763
        %2765 = vmax.xlane.f32.xlu0 %v2741
        %v2766 = vpop.xlane.xlu0 %2765
        %2767 = vmax.xlane.f32.xlu0 %v2742
        %v2768 = vpop.xlane.xlu0 %2767
        %2769 = vmax.xlane.f32.xlu0 %v2743
        %v2770 = vpop.xlane.xlu0 %2769
        %2771 = vmax.xlane.f32.xlu0 %v2744
        %v2772 = vpop.xlane.xlu0 %2771
        %2773 = vmax.xlane.f32.xlu0 %v2745
        %v2774 = vpop.xlane.xlu0 %2773
        %2775 = vmax.xlane.f32.xlu0 %v2746
        %v2776 = vpop.xlane.xlu0 %2775
        %2777 = vmax.xlane.f32.xlu0 %v2747
        %v2778 = vpop.xlane.xlu0 %2777
        %2779 = vmax.xlane.f32.xlu0 %v2748
        %v2780 = vpop.xlane.xlu0 %2779
        %v2781 = vmax.f32 %v2498, %v2750
        %v2782 = vmax.f32 %v2499, %v2752
        %v2783 = vmax.f32 %v2500, %v2754
        %v2784 = vmax.f32 %v2501, %v2756
        %v2785 = vmax.f32 %v2502, %v2758
        %v2786 = vmax.f32 %v2503, %v2760
        %v2787 = vmax.f32 %v2504, %v2762
        %v2788 = vmax.f32 %v2505, %v2764
        %v2789 = vmax.f32 %v2506, %v2766
        %v2790 = vmax.f32 %v2507, %v2768
        %v2791 = vmax.f32 %v2508, %v2770
        %v2792 = vmax.f32 %v2509, %v2772
        %v2793 = vmax.f32 %v2510, %v2774
        %v2794 = vmax.f32 %v2511, %v2776
        %v2795 = vmax.f32 %v2512, %v2778
        %v2796 = vmax.f32 %v2513, %v2780
        %v2797 = vsub.f32 %v2498, %v2781
        %v2798 = vsub.f32 %v2499, %v2782
        %v2799 = vsub.f32 %v2500, %v2783
        %v2800 = vsub.f32 %v2501, %v2784
        %v2801 = vsub.f32 %v2502, %v2785
        %v2802 = vsub.f32 %v2503, %v2786
        %v2803 = vsub.f32 %v2504, %v2787
        %v2804 = vsub.f32 %v2505, %v2788
        %v2805 = vsub.f32 %v2506, %v2789
        %v2806 = vsub.f32 %v2507, %v2790
        %v2807 = vsub.f32 %v2508, %v2791
        %v2808 = vsub.f32 %v2509, %v2792
        %v2809 = vsub.f32 %v2510, %v2793
        %v2810 = vsub.f32 %v2511, %v2794
        %v2811 = vsub.f32 %v2512, %v2795
        %v2812 = vsub.f32 %v2513, %v2796
        %v2813 = vmul.f32 %v2797, 1.442695
        %v2814 = vpow.pop %v2813
        %v2815 = vmul.f32 %v2798, 1.442695
        %v2816 = vpow.pop %v2815
        %v2817 = vmul.f32 %v2799, 1.442695
        %v2818 = vpow.pop %v2817
        %v2819 = vmul.f32 %v2800, 1.442695
        %v2820 = vpow.pop %v2819
        %v2821 = vmul.f32 %v2801, 1.442695
        %v2822 = vpow.pop %v2821
        %v2823 = vmul.f32 %v2802, 1.442695
        %v2824 = vpow.pop %v2823
        %v2825 = vmul.f32 %v2803, 1.442695
        %v2826 = vpow.pop %v2825
        %v2827 = vmul.f32 %v2804, 1.442695
        %v2828 = vpow.pop %v2827
        %v2829 = vmul.f32 %v2805, 1.442695
        %v2830 = vpow.pop %v2829
        %v2831 = vmul.f32 %v2806, 1.442695
        %v2832 = vpow.pop %v2831
        %v2833 = vmul.f32 %v2807, 1.442695
        %v2834 = vpow.pop %v2833
        %v2835 = vmul.f32 %v2808, 1.442695
        %v2836 = vpow.pop %v2835
        %v2837 = vmul.f32 %v2809, 1.442695
        %v2838 = vpow.pop %v2837
        %v2839 = vmul.f32 %v2810, 1.442695
        %v2840 = vpow.pop %v2839
        %v2841 = vmul.f32 %v2811, 1.442695
        %v2842 = vpow.pop %v2841
        %v2843 = vmul.f32 %v2812, 1.442695
        %v2844 = vpow.pop %v2843
        %v2845 = vsub.f32 %v2733, %v2781
        %v2846 = vsub.f32 %v2734, %v2782
        %v2847 = vsub.f32 %v2735, %v2783
        %v2848 = vsub.f32 %v2736, %v2784
        %v2849 = vsub.f32 %v2737, %v2785
        %v2850 = vsub.f32 %v2738, %v2786
        %v2851 = vsub.f32 %v2739, %v2787
        %v2852 = vsub.f32 %v2740, %v2788
        %v2853 = vsub.f32 %v2741, %v2789
        %v2854 = vsub.f32 %v2742, %v2790
        %v2855 = vsub.f32 %v2743, %v2791
        %v2856 = vsub.f32 %v2744, %v2792
        %v2857 = vsub.f32 %v2745, %v2793
        %v2858 = vsub.f32 %v2746, %v2794
        %v2859 = vsub.f32 %v2747, %v2795
        %v2860 = vsub.f32 %v2748, %v2796
        %v2861 = vmul.f32 %v2845, 1.442695
        %v2862 = vpow.pop %v2861
        %v2863 = vmul.f32 %v2846, 1.442695
        %v2864 = vpow.pop %v2863
        %v2865 = vmul.f32 %v2847, 1.442695
        %v2866 = vpow.pop %v2865
        %v2867 = vmul.f32 %v2848, 1.442695
        %v2868 = vpow.pop %v2867
        %v2869 = vmul.f32 %v2849, 1.442695
        %v2870 = vpow.pop %v2869
        %v2871 = vmul.f32 %v2850, 1.442695
        %v2872 = vpow.pop %v2871
        %v2873 = vmul.f32 %v2851, 1.442695
        %v2874 = vpow.pop %v2873
        %v2875 = vmul.f32 %v2852, 1.442695
        %v2876 = vpow.pop %v2875
        %v2877 = vmul.f32 %v2853, 1.442695
        %v2878 = vpow.pop %v2877
        %v2879 = vmul.f32 %v2854, 1.442695
        %v2880 = vpow.pop %v2879
        %v2881 = vmul.f32 %v2855, 1.442695
        %v2882 = vpow.pop %v2881
        %v2883 = vmul.f32 %v2856, 1.442695
        %v2884 = vpow.pop %v2883
        %v2885 = vmul.f32 %v2857, 1.442695
        %v2886 = vpow.pop %v2885
        %v2887 = vmul.f32 %v2858, 1.442695
        %v2888 = vpow.pop %v2887
        %v2889 = vmul.f32 %v2859, 1.442695
        %v2890 = vpow.pop %v2889
        %v2891 = vmul.f32 %v2860, 1.442695
        %v2892 = vpow.pop %v2891
        %v2893 = vmul.f32 %v2814, %v2514
        %v2894 = vmul.f32 %v2816, %v2515
        %v2895 = vmul.f32 %v2818, %v2516
        %v2896 = vmul.f32 %v2820, %v2517
        %v2897 = vmul.f32 %v2822, %v2518
        %v2898 = vmul.f32 %v2824, %v2519
        %v2899 = vmul.f32 %v2826, %v2520
        %v2900 = vmul.f32 %v2828, %v2521
        %v2901 = vmul.f32 %v2830, %v2522
        %v2902 = vmul.f32 %v2832, %v2523
        %v2903 = vmul.f32 %v2834, %v2524
        %v2904 = vmul.f32 %v2836, %v2525
        %v2905 = vmul.f32 %v2838, %v2526
        %v2906 = vmul.f32 %v2840, %v2527
        %v2907 = vmul.f32 %v2842, %v2528
        %v2908 = vmul.f32 %v2844, %v2529
        %2909 = vadd.xlane.f32.xlu0 %v2862
        %v2910 = vpop.xlane.xlu0 %2909
        %2911 = vadd.xlane.f32.xlu0 %v2864
        %v2912 = vpop.xlane.xlu0 %2911
        %2913 = vadd.xlane.f32.xlu0 %v2866
        %v2914 = vpop.xlane.xlu0 %2913
        %2915 = vadd.xlane.f32.xlu0 %v2868
        %v2916 = vpop.xlane.xlu0 %2915
        %2917 = vadd.xlane.f32.xlu0 %v2870
        %v2918 = vpop.xlane.xlu0 %2917
        %2919 = vadd.xlane.f32.xlu0 %v2872
        %v2920 = vpop.xlane.xlu0 %2919
        %2921 = vadd.xlane.f32.xlu0 %v2874
        %v2922 = vpop.xlane.xlu0 %2921
        %2923 = vadd.xlane.f32.xlu0 %v2876
        %v2924 = vpop.xlane.xlu0 %2923
        %2925 = vadd.xlane.f32.xlu0 %v2878
        %v2926 = vpop.xlane.xlu0 %2925
        %2927 = vadd.xlane.f32.xlu0 %v2880
        %v2928 = vpop.xlane.xlu0 %2927
        %2929 = vadd.xlane.f32.xlu0 %v2882
        %v2930 = vpop.xlane.xlu0 %2929
        %2931 = vadd.xlane.f32.xlu0 %v2884
        %v2932 = vpop.xlane.xlu0 %2931
        %2933 = vadd.xlane.f32.xlu0 %v2886
        %v2934 = vpop.xlane.xlu0 %2933
        %2935 = vadd.xlane.f32.xlu0 %v2888
        %v2936 = vpop.xlane.xlu0 %2935
        %2937 = vadd.xlane.f32.xlu0 %v2890
        %v2938 = vpop.xlane.xlu0 %2937
        %2939 = vadd.xlane.f32.xlu0 %v2892
        %v2940 = vpop.xlane.xlu0 %2939
        %v2941 = vadd.f32 %v2893, %v2910
        %v2942 = vadd.f32 %v2894, %v2912
        %v2943 = vadd.f32 %v2895, %v2914
        %v2944 = vadd.f32 %v2896, %v2916
        %v2945 = vadd.f32 %v2897, %v2918
        %v2946 = vadd.f32 %v2898, %v2920
        %v2947 = vadd.f32 %v2899, %v2922
        %v2948 = vadd.f32 %v2900, %v2924
        %v2949 = vadd.f32 %v2901, %v2926
        %v2950 = vadd.f32 %v2902, %v2928
        %v2951 = vadd.f32 %v2903, %v2930
        %v2952 = vadd.f32 %v2904, %v2932
        %v2953 = vadd.f32 %v2905, %v2934
        %v2954 = vadd.f32 %v2906, %v2936
        %v2955 = vadd.f32 %v2907, %v2938
        %v2956 = vadd.f32 %v2908, %v2940
        %v2957 = vmul.f32 %v2814, %v2530
        %v2958 = vmul.f32 %v2816, %v2531
        %v2959 = vmul.f32 %v2818, %v2532
        %v2960 = vmul.f32 %v2820, %v2533
        %v2961 = vmul.f32 %v2822, %v2534
        %v2962 = vmul.f32 %v2824, %v2535
        %v2963 = vmul.f32 %v2826, %v2536
        %v2964 = vmul.f32 %v2828, %v2537
        %v2965 = vmul.f32 %v2830, %v2538
        %v2966 = vmul.f32 %v2832, %v2539
        %v2967 = vmul.f32 %v2834, %v2540
        %v2968 = vmul.f32 %v2836, %v2541
        %v2969 = vmul.f32 %v2838, %v2542
        %v2970 = vmul.f32 %v2840, %v2543
        %v2971 = vmul.f32 %v2842, %v2544
        %v2972 = vmul.f32 %v2844, %v2545
        %v2973 = vpack.c.bf16 %v2864, %v2862
        %v2974 = vpack.c.bf16 %v2868, %v2866
        %v2975 = vpack.c.bf16 %v2872, %v2870
        %v2976 = vpack.c.bf16 %v2876, %v2874
        %v2977 = vpack.c.bf16 %v2880, %v2878
        %v2978 = vpack.c.bf16 %v2884, %v2882
        %v2979 = vpack.c.bf16 %v2888, %v2886
        %v2980 = vpack.c.bf16 %v2892, %v2890
        %2989 = vrot.lane.b32.xlu0 %v2556, 112
        %v2990 = vpop.permute.xlu0 %2989
        %2991 = vrot.lane.b32.xlu0 %v2557, 112
        %v2992 = vpop.permute.xlu0 %2991
        %2993 = vrot.lane.b32.xlu0 %v2558, 112
        %v2994 = vpop.permute.xlu0 %2993
        %2995 = vrot.lane.b32.xlu0 %v2559, 112
        %v2996 = vpop.permute.xlu0 %2995
        %2997 = vrot.lane.b32.xlu0 %v2560, 112
        %v2998 = vpop.permute.xlu0 %2997
        %2999 = vrot.lane.b32.xlu0 %v2561, 112
        %v3000 = vpop.permute.xlu0 %2999
        %3001 = vrot.lane.b32.xlu0 %v2562, 112
        %v3002 = vpop.permute.xlu0 %3001
        %3003 = vrot.lane.b32.xlu0 %v2563, 112
        %v3004 = vpop.permute.xlu0 %3003
        %3013 = vmatprep.subr.bf16.mxu0 0
        %3014 = vmatpush1.bf16.msra.mxu0 %v2990
        %3015 = vmatprep.subr.bf16.mxu0 0
        %3016 = vmatpush1.bf16.msra.mxu0 %v2992
        %3017 = vmatprep.subr.bf16.mxu0 0
        %3018 = vmatpush1.bf16.msra.mxu0 %v2994
        %3019 = vmatprep.subr.bf16.mxu0 0
        %3020 = vmatpush1.bf16.msra.mxu0 %v2996
        %3021 = vmatprep.subr.bf16.mxu0 0
        %3022 = vmatpush1.bf16.msra.mxu0 %v2998
        %3023 = vmatprep.subr.bf16.mxu0 0
        %3024 = vmatpush1.bf16.msra.mxu0 %v3000
        %3025 = vmatprep.subr.bf16.mxu0 0
        %3026 = vmatpush1.bf16.msra.mxu0 %v3002
        %3027 = vmatprep.subr.bf16.mxu0 0
        %3028 = vmatpush1.bf16.msra.mxu0 %v3004
        %3029 = vmatprep.subr.bf16.mxu0 0
        %3030 = vmatpush1.bf16.msra.mxu0 0
        %3031 = vmatprep.subr.bf16.mxu0 0
        %3032 = vmatpush1.bf16.msra.mxu0 0
        %3033 = vmatprep.subr.bf16.mxu0 0
        %3034 = vmatpush1.bf16.msra.mxu0 0
        %3035 = vmatprep.subr.bf16.mxu0 0
        %3036 = vmatpush1.bf16.msra.mxu0 0
        %3037 = vmatprep.subr.bf16.mxu0 0
        %3038 = vmatpush1.bf16.msra.mxu0 0
        %3039 = vmatprep.subr.bf16.mxu0 0
        %3040 = vmatpush1.bf16.msra.mxu0 0
        %3041 = vmatprep.subr.bf16.mxu0 0
        %3042 = vmatpush1.bf16.msra.mxu0 0
        %3043 = vmatprep.subr.bf16.mxu0 0
        %3044 = vmatpush1.bf16.msra.mxu0 0
        %3045 = vmatprep.mubr.bf16.mxu0 0
        %3046 = vmatmul.mubr.bf16.gmra.mrb[0].mxu0 %v2973
        %v3047 = vpop.f32.mrb[0].mxu0
        %v3048 = vadd.f32 0.0, %v3047
        %v3049 = vpop.f32.mrb[0].mxu0
        %v3050 = vpop.f32.mrb[0].mxu0
        %v3051 = vadd.f32 0.0, %v3050
        %v3052 = vpop.f32.mrb[0].mxu0
        %3053 = vmatprep.mubr.bf16.mxu0 0
        %3054 = vmatmul.mubr.bf16.gmra.mrb[0].mxu0 %v2974
        %v3055 = vpop.f32.mrb[0].mxu0
        %v3056 = vadd.f32 0.0, %v3055
        %v3057 = vpop.f32.mrb[0].mxu0
        %v3058 = vpop.f32.mrb[0].mxu0
        %v3059 = vadd.f32 0.0, %v3058
        %v3060 = vpop.f32.mrb[0].mxu0
        %3061 = vmatprep.mubr.bf16.mxu0 0
        %3062 = vmatmul.mubr.bf16.gmra.mrb[0].mxu0 %v2975
        %v3063 = vpop.f32.mrb[0].mxu0
        %v3064 = vadd.f32 0.0, %v3063
        %v3065 = vpop.f32.mrb[0].mxu0
        %v3066 = vpop.f32.mrb[0].mxu0
        %v3067 = vadd.f32 0.0, %v3066
        %v3068 = vpop.f32.mrb[0].mxu0
        %3069 = vmatprep.mubr.bf16.mxu0 0
        %3070 = vmatmul.mubr.bf16.gmra.mrb[0].mxu0 %v2976
        %v3071 = vpop.f32.mrb[0].mxu0
        %v3072 = vadd.f32 0.0, %v3071
        %v3073 = vpop.f32.mrb[0].mxu0
        %v3074 = vpop.f32.mrb[0].mxu0
        %v3075 = vadd.f32 0.0, %v3074
        %v3076 = vpop.f32.mrb[0].mxu0
        %3077 = vmatprep.mubr.bf16.mxu0 0
        %3078 = vmatmul.mubr.bf16.gmra.mrb[0].mxu0 %v2977
        %v3079 = vpop.f32.mrb[0].mxu0
        %v3080 = vadd.f32 0.0, %v3079
        %v3081 = vpop.f32.mrb[0].mxu0
        %v3082 = vpop.f32.mrb[0].mxu0
        %v3083 = vadd.f32 0.0, %v3082
        %v3084 = vpop.f32.mrb[0].mxu0
        %3085 = vmatprep.mubr.bf16.mxu0 0
        %3086 = vmatmul.mubr.bf16.gmra.mrb[0].mxu0 %v2978
        %v3087 = vpop.f32.mrb[0].mxu0
        %v3088 = vadd.f32 0.0, %v3087
        %v3089 = vpop.f32.mrb[0].mxu0
        %v3090 = vpop.f32.mrb[0].mxu0
        %v3091 = vadd.f32 0.0, %v3090
        %v3092 = vpop.f32.mrb[0].mxu0
        %3093 = vmatprep.mubr.bf16.mxu0 0
        %3094 = vmatmul.mubr.bf16.gmra.mrb[0].mxu0 %v2979
        %v3095 = vpop.f32.mrb[0].mxu0
        %v3096 = vadd.f32 0.0, %v3095
        %v3097 = vpop.f32.mrb[0].mxu0
        %v3098 = vpop.f32.mrb[0].mxu0
        %v3099 = vadd.f32 0.0, %v3098
        %v3100 = vpop.f32.mrb[0].mxu0
        %3101 = vmatprep.mubr.bf16.mxu0 0
        %3102 = vmatmul.mubr.bf16.gmra.mrb[0].mxu0 %v2980
        %v3103 = vpop.f32.mrb[0].mxu0
        %v3104 = vadd.f32 0.0, %v3103
        %v3105 = vpop.f32.mrb[0].mxu0
        %v3106 = vpop.f32.mrb[0].mxu0
        %v3107 = vadd.f32 0.0, %v3106
        %v3108 = vpop.f32.mrb[0].mxu0
        %3109 = vdwg.mxu0
        %v3110 = vadd.f32 %v2957, %v3048
        %v3111 = vadd.f32 %v2958, %v3051
        %v3112 = vadd.f32 %v2959, %v3056
        %v3113 = vadd.f32 %v2960, %v3059
        %v3114 = vadd.f32 %v2961, %v3064
        %v3115 = vadd.f32 %v2962, %v3067
        %v3116 = vadd.f32 %v2963, %v3072
        %v3117 = vadd.f32 %v2964, %v3075
        %v3118 = vadd.f32 %v2965, %v3080
        %v3119 = vadd.f32 %v2966, %v3083
        %v3120 = vadd.f32 %v2967, %v3088
        %v3121 = vadd.f32 %v2968, %v3091
        %v3122 = vadd.f32 %v2969, %v3096
        %v3123 = vadd.f32 %v2970, %v3099
        %v3124 = vadd.f32 %v2971, %v3104
        %v3125 = vadd.f32 %v2972, %v3107
      $region95: #{tpu_custom_call.1} parent=75 // loop_footer
        %s2495 = sadd.s32 %s2493, 1
      $region96: #{tpu_custom_call.1} parent=75 // loop_footer_branch
        %2492 = sbr.rel target = $region92
      $region97: #{tpu_custom_call.1} parent=75 // loop_exit
        _
      %v3126 = vrcp.pop %v2514
      %v3127 = vrcp.pop %v2515
      %v3128 = vrcp.pop %v2516
      %v3129 = vrcp.pop %v2517
      %v3130 = vrcp.pop %v2518
      %v3131 = vrcp.pop %v2519
      %v3132 = vrcp.pop %v2520
      %v3133 = vrcp.pop %v2521
      %v3134 = vrcp.pop %v2522
      %v3135 = vrcp.pop %v2523
      %v3136 = vrcp.pop %v2524
      %v3137 = vrcp.pop %v2525
      %v3138 = vrcp.pop %v2526
      %v3139 = vrcp.pop %v2527
      %v3140 = vrcp.pop %v2528
      %v3141 = vrcp.pop %v2529
      %v3142 = vmul.f32 %v2530, %v3126
      %v3143 = vmul.f32 %v2531, %v3127
      %v3144 = vmul.f32 %v2532, %v3128
      %v3145 = vmul.f32 %v2533, %v3129
      %v3146 = vmul.f32 %v2534, %v3130
      %v3147 = vmul.f32 %v2535, %v3131
      %v3148 = vmul.f32 %v2536, %v3132
      %v3149 = vmul.f32 %v2537, %v3133
      %v3150 = vmul.f32 %v2538, %v3134
      %v3151 = vmul.f32 %v2539, %v3135
      %v3152 = vmul.f32 %v2540, %v3136
      %v3153 = vmul.f32 %v2541, %v3137
      %v3154 = vmul.f32 %v2542, %v3138
      %v3155 = vmul.f32 %v2543, %v3139
      %v3156 = vmul.f32 %v2544, %v3140
      %v3157 = vmul.f32 %v2545, %v3141
      // While loop
      $region98: #{tpu_custom_call.1} parent=75 // loop_pre_header
        _
      $region99: #{tpu_custom_call.1} parent=75 // loop_header
        %s3159 = sphi 0, %s3161
        %p3160 = scmp.ge.s32.totalorder %s3159, %s1213
        %v3164 = vphi -1e+30, %v3449
        %v3165 = vphi -1e+30, %v3450
        %v3166 = vphi -1e+30, %v3451
        %v3167 = vphi -1e+30, %v3452
        %v3168 = vphi -1e+30, %v3453
        %v3169 = vphi -1e+30, %v3454
        %v3170 = vphi -1e+30, %v3455
        %v3171 = vphi -1e+30, %v3456
        %v3172 = vphi -1e+30, %v3457
        %v3173 = vphi -1e+30, %v3458
        %v3174 = vphi -1e+30, %v3459
        %v3175 = vphi -1e+30, %v3460
        %v3176 = vphi -1e+30, %v3461
        %v3177 = vphi -1e+30, %v3462
        %v3178 = vphi -1e+30, %v3463
        %v3179 = vphi -1e+30, %v3464
        %v3180 = vphi 0.0, %v3609
        %v3181 = vphi 0.0, %v3610
        %v3182 = vphi 0.0, %v3611
        %v3183 = vphi 0.0, %v3612
        %v3184 = vphi 0.0, %v3613
        %v3185 = vphi 0.0, %v3614
        %v3186 = vphi 0.0, %v3615
        %v3187 = vphi 0.0, %v3616
        %v3188 = vphi 0.0, %v3617
        %v3189 = vphi 0.0, %v3618
        %v3190 = vphi 0.0, %v3619
        %v3191 = vphi 0.0, %v3620
        %v3192 = vphi 0.0, %v3621
        %v3193 = vphi 0.0, %v3622
        %v3194 = vphi 0.0, %v3623
        %v3195 = vphi 0.0, %v3624
        %v3196 = vphi 0.0, %v3778
        %v3197 = vphi 0.0, %v3779
        %v3198 = vphi 0.0, %v3780
        %v3199 = vphi 0.0, %v3781
        %v3200 = vphi 0.0, %v3782
        %v3201 = vphi 0.0, %v3783
        %v3202 = vphi 0.0, %v3784
        %v3203 = vphi 0.0, %v3785
        %v3204 = vphi 0.0, %v3786
        %v3205 = vphi 0.0, %v3787
        %v3206 = vphi 0.0, %v3788
        %v3207 = vphi 0.0, %v3789
        %v3208 = vphi 0.0, %v3790
        %v3209 = vphi 0.0, %v3791
        %v3210 = vphi 0.0, %v3792
        %v3211 = vphi 0.0, %v3793
      $region100: #{tpu_custom_call.1} parent=75 // loop_header_branch
        %3163 = sbr.rel (%p3160) target = $region104
      $region101: #{tpu_custom_call.1} parent=75 // loop_body
        %s3212 = smul.u32 %s3159, 128
        %s3213 = sshra.s32 %s3212, 7
        %s3214 = sand.u32 %s3212, 127
        %s3215 = smul.addr %s3213, 8
        %s3216 = scalar_lea.vmem [#allocation2], %s3215
        %v3217 = vld [vmem:[%s3216 + $0x8] sm:$0xf0]
        %s3218 = sshra.s32 %s3212, 4
        %s3219 = sand.u32 %s3212, 15
        %s3220 = smul.addr %s3218, 8
        %s3221 = scalar_lea.vmem [#allocation3], %s3220
        %v3222 = vld [vmem:[%s3221] sm:$0xff]
        %v3223 = vld [vmem:[%s3221 + $0x8] sm:$0xff]
        %v3224 = vld [vmem:[%s3221 + $0x10] sm:$0xff]
        %v3225 = vld [vmem:[%s3221 + $0x18] sm:$0xff]
        %v3226 = vld [vmem:[%s3221 + $0x20] sm:$0xff]
        %v3227 = vld [vmem:[%s3221 + $0x28] sm:$0xff]
        %v3228 = vld [vmem:[%s3221 + $0x30] sm:$0xff]
        %v3229 = vld [vmem:[%s3221 + $0x38] sm:$0xff]
        %3238 = vrot.lane.b32.xlu0 %v959, 104
        %v3239 = vpop.permute.xlu0 %3238
        %3240 = vrot.lane.b32.xlu0 %v960, 104
        %v3241 = vpop.permute.xlu0 %3240
        %3242 = vrot.lane.b32.xlu0 %v961, 104
        %v3243 = vpop.permute.xlu0 %3242
        %3244 = vrot.lane.b32.xlu0 %v962, 104
        %v3245 = vpop.permute.xlu0 %3244
        %3246 = vrot.lane.b32.xlu0 %v963, 104
        %v3247 = vpop.permute.xlu0 %3246
        %3248 = vrot.lane.b32.xlu0 %v964, 104
        %v3249 = vpop.permute.xlu0 %3248
        %3250 = vrot.lane.b32.xlu0 %v965, 104
        %v3251 = vpop.permute.xlu0 %3250
        %3252 = vrot.lane.b32.xlu0 %v966, 104
        %v3253 = vpop.permute.xlu0 %3252
        %v3255 = vrot.slane %v3217, 4
        %vm3256 = vcmask 64512
        %v3258 = vsel %vm3256, %v3239, 0
        %v3261 = vsel %vm3256, %v3241, 0
        %v3264 = vsel %vm3256, %v3243, 0
        %v3267 = vsel %vm3256, %v3245, 0
        %v3270 = vsel %vm3256, %v3247, 0
        %v3273 = vsel %vm3256, %v3249, 0
        %v3276 = vsel %vm3256, %v3251, 0
        %v3279 = vsel %vm3256, %v3253, 0
        %vm3281 = vcmask 1043456
        %v3283 = vsel %vm3281, %v3255, 0
        %3285 = vmatprep.subr.bf16.mxu0 0
        %3286 = vmatpush1.bf16.msra.mxu0 %v3283
        %3287 = vmatprep.subr.bf16.mxu0 0
        %3288 = vmatpush1.bf16.msra.mxu0 0
        %3289 = vmatprep.subr.bf16.mxu0 0
        %3290 = vmatpush1.bf16.msra.mxu0 0
        %3291 = vmatprep.subr.bf16.mxu0 0
        %3292 = vmatpush1.bf16.msra.mxu0 0
        %3293 = vmatprep.subr.bf16.mxu0 0
        %3294 = vmatpush1.bf16.msra.mxu0 0
        %3295 = vmatprep.subr.bf16.mxu0 0
        %3296 = vmatpush1.bf16.msra.mxu0 0
        %3297 = vmatprep.subr.bf16.mxu0 0
        %3298 = vmatpush1.bf16.msra.mxu0 0
        %3299 = vmatprep.subr.bf16.mxu0 0
        %3300 = vmatpush1.bf16.msra.mxu0 0
        %3301 = vmatprep.subr.bf16.mxu0 0
        %3302 = vmatpush1.bf16.msra.mxu0 0
        %3303 = vmatprep.subr.bf16.mxu0 0
        %3304 = vmatpush1.bf16.msra.mxu0 0
        %3305 = vmatprep.subr.bf16.mxu0 0
        %3306 = vmatpush1.bf16.msra.mxu0 0
        %3307 = vmatprep.subr.bf16.mxu0 0
        %3308 = vmatpush1.bf16.msra.mxu0 0
        %3309 = vmatprep.subr.bf16.mxu0 0
        %3310 = vmatpush1.bf16.msra.mxu0 0
        %3311 = vmatprep.subr.bf16.mxu0 0
        %3312 = vmatpush1.bf16.msra.mxu0 0
        %3313 = vmatprep.subr.bf16.mxu0 0
        %3314 = vmatpush1.bf16.msra.mxu0 0
        %3315 = vmatprep.subr.bf16.mxu0 0
        %3316 = vmatpush1.bf16.msra.mxu0 0
        %3317 = vmatprep.mubr.bf16.mxu0 0
        %3318 = vmatmul.mubr.bf16.gmra.mrb[0].mxu0 %v3258
        %v3319 = vpop.f32.mrb[0].mxu0
        %v3320 = vadd.f32 0.0, %v3319
        %v3321 = vpop.f32.mrb[0].mxu0
        %v3322 = vpop.f32.mrb[0].mxu0
        %v3323 = vadd.f32 0.0, %v3322
        %v3324 = vpop.f32.mrb[0].mxu0
        %3325 = vmatprep.mubr.bf16.mxu0 0
        %3326 = vmatmul.mubr.bf16.gmra.mrb[0].mxu0 %v3261
        %v3327 = vpop.f32.mrb[0].mxu0
        %v3328 = vadd.f32 0.0, %v3327
        %v3329 = vpop.f32.mrb[0].mxu0
        %v3330 = vpop.f32.mrb[0].mxu0
        %v3331 = vadd.f32 0.0, %v3330
        %v3332 = vpop.f32.mrb[0].mxu0
        %3333 = vmatprep.mubr.bf16.mxu0 0
        %3334 = vmatmul.mubr.bf16.gmra.mrb[0].mxu0 %v3264
        %v3335 = vpop.f32.mrb[0].mxu0
        %v3336 = vadd.f32 0.0, %v3335
        %v3337 = vpop.f32.mrb[0].mxu0
        %v3338 = vpop.f32.mrb[0].mxu0
        %v3339 = vadd.f32 0.0, %v3338
        %v3340 = vpop.f32.mrb[0].mxu0
        %3341 = vmatprep.mubr.bf16.mxu0 0
        %3342 = vmatmul.mubr.bf16.gmra.mrb[0].mxu0 %v3267
        %v3343 = vpop.f32.mrb[0].mxu0
        %v3344 = vadd.f32 0.0, %v3343
        %v3345 = vpop.f32.mrb[0].mxu0
        %v3346 = vpop.f32.mrb[0].mxu0
        %v3347 = vadd.f32 0.0, %v3346
        %v3348 = vpop.f32.mrb[0].mxu0
        %3349 = vmatprep.mubr.bf16.mxu0 0
        %3350 = vmatmul.mubr.bf16.gmra.mrb[0].mxu0 %v3270
        %v3351 = vpop.f32.mrb[0].mxu0
        %v3352 = vadd.f32 0.0, %v3351
        %v3353 = vpop.f32.mrb[0].mxu0
        %v3354 = vpop.f32.mrb[0].mxu0
        %v3355 = vadd.f32 0.0, %v3354
        %v3356 = vpop.f32.mrb[0].mxu0
        %3357 = vmatprep.mubr.bf16.mxu0 0
        %3358 = vmatmul.mubr.bf16.gmra.mrb[0].mxu0 %v3273
        %v3359 = vpop.f32.mrb[0].mxu0
        %v3360 = vadd.f32 0.0, %v3359
        %v3361 = vpop.f32.mrb[0].mxu0
        %v3362 = vpop.f32.mrb[0].mxu0
        %v3363 = vadd.f32 0.0, %v3362
        %v3364 = vpop.f32.mrb[0].mxu0
        %3365 = vmatprep.mubr.bf16.mxu0 0
        %3366 = vmatmul.mubr.bf16.gmra.mrb[0].mxu0 %v3276
        %v3367 = vpop.f32.mrb[0].mxu0
        %v3368 = vadd.f32 0.0, %v3367
        %v3369 = vpop.f32.mrb[0].mxu0
        %v3370 = vpop.f32.mrb[0].mxu0
        %v3371 = vadd.f32 0.0, %v3370
        %v3372 = vpop.f32.mrb[0].mxu0
        %3373 = vmatprep.mubr.bf16.mxu0 0
        %3374 = vmatmul.mubr.bf16.gmra.mrb[0].mxu0 %v3279
        %v3375 = vpop.f32.mrb[0].mxu0
        %v3376 = vadd.f32 0.0, %v3375
        %v3377 = vpop.f32.mrb[0].mxu0
        %v3378 = vpop.f32.mrb[0].mxu0
        %v3379 = vadd.f32 0.0, %v3378
        %v3380 = vpop.f32.mrb[0].mxu0
        %3381 = vdwg.mxu0
        %s3382 = ssub.s32 %s3159, %s30
        %s3383 = smul.u32 %s3382, 128
        %v3384 = vstv %s3383
        %vm3385 = vcmp.ge.s32.totalorder %v1197, %v3384
        %vm3386 = vcmp.ge.s32.totalorder %v1198, %v3384
        %vm3387 = vcmp.ge.s32.totalorder %v1199, %v3384
        %vm3388 = vcmp.ge.s32.totalorder %v1200, %v3384
        %vm3389 = vcmp.ge.s32.totalorder %v1201, %v3384
        %vm3390 = vcmp.ge.s32.totalorder %v1202, %v3384
        %vm3391 = vcmp.ge.s32.totalorder %v1203, %v3384
        %vm3392 = vcmp.ge.s32.totalorder %v1204, %v3384
        %vm3393 = vcmp.ge.s32.totalorder %v1205, %v3384
        %vm3394 = vcmp.ge.s32.totalorder %v1206, %v3384
        %vm3395 = vcmp.ge.s32.totalorder %v1207, %v3384
        %vm3396 = vcmp.ge.s32.totalorder %v1208, %v3384
        %vm3397 = vcmp.ge.s32.totalorder %v1209, %v3384
        %vm3398 = vcmp.ge.s32.totalorder %v1210, %v3384
        %vm3399 = vcmp.ge.s32.totalorder %v1211, %v3384
        %vm3400 = vcmp.ge.s32.totalorder %v1212, %v3384
        %v3401 = vsel %vm3385, %v3320, -1e+30
        %v3402 = vsel %vm3386, %v3323, -1e+30
        %v3403 = vsel %vm3387, %v3328, -1e+30
        %v3404 = vsel %vm3388, %v3331, -1e+30
        %v3405 = vsel %vm3389, %v3336, -1e+30
        %v3406 = vsel %vm3390, %v3339, -1e+30
        %v3407 = vsel %vm3391, %v3344, -1e+30
        %v3408 = vsel %vm3392, %v3347, -1e+30
        %v3409 = vsel %vm3393, %v3352, -1e+30
        %v3410 = vsel %vm3394, %v3355, -1e+30
        %v3411 = vsel %vm3395, %v3360, -1e+30
        %v3412 = vsel %vm3396, %v3363, -1e+30
        %v3413 = vsel %vm3397, %v3368, -1e+30
        %v3414 = vsel %vm3398, %v3371, -1e+30
        %v3415 = vsel %vm3399, %v3376, -1e+30
        %v3416 = vsel %vm3400, %v3379, -1e+30
        %3417 = vmax.xlane.f32.xlu0 %v3401
        %v3418 = vpop.xlane.xlu0 %3417
        %3419 = vmax.xlane.f32.xlu0 %v3402
        %v3420 = vpop.xlane.xlu0 %3419
        %3421 = vmax.xlane.f32.xlu0 %v3403
        %v3422 = vpop.xlane.xlu0 %3421
        %3423 = vmax.xlane.f32.xlu0 %v3404
        %v3424 = vpop.xlane.xlu0 %3423
        %3425 = vmax.xlane.f32.xlu0 %v3405
        %v3426 = vpop.xlane.xlu0 %3425
        %3427 = vmax.xlane.f32.xlu0 %v3406
        %v3428 = vpop.xlane.xlu0 %3427
        %3429 = vmax.xlane.f32.xlu0 %v3407
        %v3430 = vpop.xlane.xlu0 %3429
        %3431 = vmax.xlane.f32.xlu0 %v3408
        %v3432 = vpop.xlane.xlu0 %3431
        %3433 = vmax.xlane.f32.xlu0 %v3409
        %v3434 = vpop.xlane.xlu0 %3433
        %3435 = vmax.xlane.f32.xlu0 %v3410
        %v3436 = vpop.xlane.xlu0 %3435
        %3437 = vmax.xlane.f32.xlu0 %v3411
        %v3438 = vpop.xlane.xlu0 %3437
        %3439 = vmax.xlane.f32.xlu0 %v3412
        %v3440 = vpop.xlane.xlu0 %3439
        %3441 = vmax.xlane.f32.xlu0 %v3413
        %v3442 = vpop.xlane.xlu0 %3441
        %3443 = vmax.xlane.f32.xlu0 %v3414
        %v3444 = vpop.xlane.xlu0 %3443
        %3445 = vmax.xlane.f32.xlu0 %v3415
        %v3446 = vpop.xlane.xlu0 %3445
        %3447 = vmax.xlane.f32.xlu0 %v3416
        %v3448 = vpop.xlane.xlu0 %3447
        %v3449 = vmax.f32 %v3164, %v3418
        %v3450 = vmax.f32 %v3165, %v3420
        %v3451 = vmax.f32 %v3166, %v3422
        %v3452 = vmax.f32 %v3167, %v3424
        %v3453 = vmax.f32 %v3168, %v3426
        %v3454 = vmax.f32 %v3169, %v3428
        %v3455 = vmax.f32 %v3170, %v3430
        %v3456 = vmax.f32 %v3171, %v3432
        %v3457 = vmax.f32 %v3172, %v3434
        %v3458 = vmax.f32 %v3173, %v3436
        %v3459 = vmax.f32 %v3174, %v3438
        %v3460 = vmax.f32 %v3175, %v3440
        %v3461 = vmax.f32 %v3176, %v3442
        %v3462 = vmax.f32 %v3177, %v3444
        %v3463 = vmax.f32 %v3178, %v3446
        %v3464 = vmax.f32 %v3179, %v3448
        %v3465 = vsub.f32 %v3164, %v3449
        %v3466 = vsub.f32 %v3165, %v3450
        %v3467 = vsub.f32 %v3166, %v3451
        %v3468 = vsub.f32 %v3167, %v3452
        %v3469 = vsub.f32 %v3168, %v3453
        %v3470 = vsub.f32 %v3169, %v3454
        %v3471 = vsub.f32 %v3170, %v3455
        %v3472 = vsub.f32 %v3171, %v3456
        %v3473 = vsub.f32 %v3172, %v3457
        %v3474 = vsub.f32 %v3173, %v3458
        %v3475 = vsub.f32 %v3174, %v3459
        %v3476 = vsub.f32 %v3175, %v3460
        %v3477 = vsub.f32 %v3176, %v3461
        %v3478 = vsub.f32 %v3177, %v3462
        %v3479 = vsub.f32 %v3178, %v3463
        %v3480 = vsub.f32 %v3179, %v3464
        %v3481 = vmul.f32 %v3465, 1.442695
        %v3482 = vpow.pop %v3481
        %v3483 = vmul.f32 %v3466, 1.442695
        %v3484 = vpow.pop %v3483
        %v3485 = vmul.f32 %v3467, 1.442695
        %v3486 = vpow.pop %v3485
        %v3487 = vmul.f32 %v3468, 1.442695
        %v3488 = vpow.pop %v3487
        %v3489 = vmul.f32 %v3469, 1.442695
        %v3490 = vpow.pop %v3489
        %v3491 = vmul.f32 %v3470, 1.442695
        %v3492 = vpow.pop %v3491
        %v3493 = vmul.f32 %v3471, 1.442695
        %v3494 = vpow.pop %v3493
        %v3495 = vmul.f32 %v3472, 1.442695
        %v3496 = vpow.pop %v3495
        %v3497 = vmul.f32 %v3473, 1.442695
        %v3498 = vpow.pop %v3497
        %v3499 = vmul.f32 %v3474, 1.442695
        %v3500 = vpow.pop %v3499
        %v3501 = vmul.f32 %v3475, 1.442695
        %v3502 = vpow.pop %v3501
        %v3503 = vmul.f32 %v3476, 1.442695
        %v3504 = vpow.pop %v3503
        %v3505 = vmul.f32 %v3477, 1.442695
        %v3506 = vpow.pop %v3505
        %v3507 = vmul.f32 %v3478, 1.442695
        %v3508 = vpow.pop %v3507
        %v3509 = vmul.f32 %v3479, 1.442695
        %v3510 = vpow.pop %v3509
        %v3511 = vmul.f32 %v3480, 1.442695
        %v3512 = vpow.pop %v3511
        %v3513 = vsub.f32 %v3401, %v3449
        %v3514 = vsub.f32 %v3402, %v3450
        %v3515 = vsub.f32 %v3403, %v3451
        %v3516 = vsub.f32 %v3404, %v3452
        %v3517 = vsub.f32 %v3405, %v3453
        %v3518 = vsub.f32 %v3406, %v3454
        %v3519 = vsub.f32 %v3407, %v3455
        %v3520 = vsub.f32 %v3408, %v3456
        %v3521 = vsub.f32 %v3409, %v3457
        %v3522 = vsub.f32 %v3410, %v3458
        %v3523 = vsub.f32 %v3411, %v3459
        %v3524 = vsub.f32 %v3412, %v3460
        %v3525 = vsub.f32 %v3413, %v3461
        %v3526 = vsub.f32 %v3414, %v3462
        %v3527 = vsub.f32 %v3415, %v3463
        %v3528 = vsub.f32 %v3416, %v3464
        %v3529 = vmul.f32 %v3513, 1.442695
        %v3530 = vpow.pop %v3529
        %v3531 = vmul.f32 %v3514, 1.442695
        %v3532 = vpow.pop %v3531
        %v3533 = vmul.f32 %v3515, 1.442695
        %v3534 = vpow.pop %v3533
        %v3535 = vmul.f32 %v3516, 1.442695
        %v3536 = vpow.pop %v3535
        %v3537 = vmul.f32 %v3517, 1.442695
        %v3538 = vpow.pop %v3537
        %v3539 = vmul.f32 %v3518, 1.442695
        %v3540 = vpow.pop %v3539
        %v3541 = vmul.f32 %v3519, 1.442695
        %v3542 = vpow.pop %v3541
        %v3543 = vmul.f32 %v3520, 1.442695
        %v3544 = vpow.pop %v3543
        %v3545 = vmul.f32 %v3521, 1.442695
        %v3546 = vpow.pop %v3545
        %v3547 = vmul.f32 %v3522, 1.442695
        %v3548 = vpow.pop %v3547
        %v3549 = vmul.f32 %v3523, 1.442695
        %v3550 = vpow.pop %v3549
        %v3551 = vmul.f32 %v3524, 1.442695
        %v3552 = vpow.pop %v3551
        %v3553 = vmul.f32 %v3525, 1.442695
        %v3554 = vpow.pop %v3553
        %v3555 = vmul.f32 %v3526, 1.442695
        %v3556 = vpow.pop %v3555
        %v3557 = vmul.f32 %v3527, 1.442695
        %v3558 = vpow.pop %v3557
        %v3559 = vmul.f32 %v3528, 1.442695
        %v3560 = vpow.pop %v3559
        %v3561 = vmul.f32 %v3482, %v3180
        %v3562 = vmul.f32 %v3484, %v3181
        %v3563 = vmul.f32 %v3486, %v3182
        %v3564 = vmul.f32 %v3488, %v3183
        %v3565 = vmul.f32 %v3490, %v3184
        %v3566 = vmul.f32 %v3492, %v3185
        %v3567 = vmul.f32 %v3494, %v3186
        %v3568 = vmul.f32 %v3496, %v3187
        %v3569 = vmul.f32 %v3498, %v3188
        %v3570 = vmul.f32 %v3500, %v3189
        %v3571 = vmul.f32 %v3502, %v3190
        %v3572 = vmul.f32 %v3504, %v3191
        %v3573 = vmul.f32 %v3506, %v3192
        %v3574 = vmul.f32 %v3508, %v3193
        %v3575 = vmul.f32 %v3510, %v3194
        %v3576 = vmul.f32 %v3512, %v3195
        %3577 = vadd.xlane.f32.xlu0 %v3530
        %v3578 = vpop.xlane.xlu0 %3577
        %3579 = vadd.xlane.f32.xlu0 %v3532
        %v3580 = vpop.xlane.xlu0 %3579
        %3581 = vadd.xlane.f32.xlu0 %v3534
        %v3582 = vpop.xlane.xlu0 %3581
        %3583 = vadd.xlane.f32.xlu0 %v3536
        %v3584 = vpop.xlane.xlu0 %3583
        %3585 = vadd.xlane.f32.xlu0 %v3538
        %v3586 = vpop.xlane.xlu0 %3585
        %3587 = vadd.xlane.f32.xlu0 %v3540
        %v3588 = vpop.xlane.xlu0 %3587
        %3589 = vadd.xlane.f32.xlu0 %v3542
        %v3590 = vpop.xlane.xlu0 %3589
        %3591 = vadd.xlane.f32.xlu0 %v3544
        %v3592 = vpop.xlane.xlu0 %3591
        %3593 = vadd.xlane.f32.xlu0 %v3546
        %v3594 = vpop.xlane.xlu0 %3593
        %3595 = vadd.xlane.f32.xlu0 %v3548
        %v3596 = vpop.xlane.xlu0 %3595
        %3597 = vadd.xlane.f32.xlu0 %v3550
        %v3598 = vpop.xlane.xlu0 %3597
        %3599 = vadd.xlane.f32.xlu0 %v3552
        %v3600 = vpop.xlane.xlu0 %3599
        %3601 = vadd.xlane.f32.xlu0 %v3554
        %v3602 = vpop.xlane.xlu0 %3601
        %3603 = vadd.xlane.f32.xlu0 %v3556
        %v3604 = vpop.xlane.xlu0 %3603
        %3605 = vadd.xlane.f32.xlu0 %v3558
        %v3606 = vpop.xlane.xlu0 %3605
        %3607 = vadd.xlane.f32.xlu0 %v3560
        %v3608 = vpop.xlane.xlu0 %3607
        %v3609 = vadd.f32 %v3561, %v3578
        %v3610 = vadd.f32 %v3562, %v3580
        %v3611 = vadd.f32 %v3563, %v3582
        %v3612 = vadd.f32 %v3564, %v3584
        %v3613 = vadd.f32 %v3565, %v3586
        %v3614 = vadd.f32 %v3566, %v3588
        %v3615 = vadd.f32 %v3567, %v3590
        %v3616 = vadd.f32 %v3568, %v3592
        %v3617 = vadd.f32 %v3569, %v3594
        %v3618 = vadd.f32 %v3570, %v3596
        %v3619 = vadd.f32 %v3571, %v3598
        %v3620 = vadd.f32 %v3572, %v3600
        %v3621 = vadd.f32 %v3573, %v3602
        %v3622 = vadd.f32 %v3574, %v3604
        %v3623 = vadd.f32 %v3575, %v3606
        %v3624 = vadd.f32 %v3576, %v3608
        %v3625 = vmul.f32 %v3482, %v3196
        %v3626 = vmul.f32 %v3484, %v3197
        %v3627 = vmul.f32 %v3486, %v3198
        %v3628 = vmul.f32 %v3488, %v3199
        %v3629 = vmul.f32 %v3490, %v3200
        %v3630 = vmul.f32 %v3492, %v3201
        %v3631 = vmul.f32 %v3494, %v3202
        %v3632 = vmul.f32 %v3496, %v3203
        %v3633 = vmul.f32 %v3498, %v3204
        %v3634 = vmul.f32 %v3500, %v3205
        %v3635 = vmul.f32 %v3502, %v3206
        %v3636 = vmul.f32 %v3504, %v3207
        %v3637 = vmul.f32 %v3506, %v3208
        %v3638 = vmul.f32 %v3508, %v3209
        %v3639 = vmul.f32 %v3510, %v3210
        %v3640 = vmul.f32 %v3512, %v3211
        %v3641 = vpack.c.bf16 %v3532, %v3530
        %v3642 = vpack.c.bf16 %v3536, %v3534
        %v3643 = vpack.c.bf16 %v3540, %v3538
        %v3644 = vpack.c.bf16 %v3544, %v3542
        %v3645 = vpack.c.bf16 %v3548, %v3546
        %v3646 = vpack.c.bf16 %v3552, %v3550
        %v3647 = vpack.c.bf16 %v3556, %v3554
        %v3648 = vpack.c.bf16 %v3560, %v3558
        %3657 = vrot.lane.b32.xlu0 %v3222, 104
        %v3658 = vpop.permute.xlu0 %3657
        %3659 = vrot.lane.b32.xlu0 %v3223, 104
        %v3660 = vpop.permute.xlu0 %3659
        %3661 = vrot.lane.b32.xlu0 %v3224, 104
        %v3662 = vpop.permute.xlu0 %3661
        %3663 = vrot.lane.b32.xlu0 %v3225, 104
        %v3664 = vpop.permute.xlu0 %3663
        %3665 = vrot.lane.b32.xlu0 %v3226, 104
        %v3666 = vpop.permute.xlu0 %3665
        %3667 = vrot.lane.b32.xlu0 %v3227, 104
        %v3668 = vpop.permute.xlu0 %3667
        %3669 = vrot.lane.b32.xlu0 %v3228, 104
        %v3670 = vpop.permute.xlu0 %3669
        %3671 = vrot.lane.b32.xlu0 %v3229, 104
        %v3672 = vpop.permute.xlu0 %3671
        %3681 = vmatprep.subr.bf16.mxu0 0
        %3682 = vmatpush1.bf16.msra.mxu0 %v3658
        %3683 = vmatprep.subr.bf16.mxu0 0
        %3684 = vmatpush1.bf16.msra.mxu0 %v3660
        %3685 = vmatprep.subr.bf16.mxu0 0
        %3686 = vmatpush1.bf16.msra.mxu0 %v3662
        %3687 = vmatprep.subr.bf16.mxu0 0
        %3688 = vmatpush1.bf16.msra.mxu0 %v3664
        %3689 = vmatprep.subr.bf16.mxu0 0
        %3690 = vmatpush1.bf16.msra.mxu0 %v3666
        %3691 = vmatprep.subr.bf16.mxu0 0
        %3692 = vmatpush1.bf16.msra.mxu0 %v3668
        %3693 = vmatprep.subr.bf16.mxu0 0
        %3694 = vmatpush1.bf16.msra.mxu0 %v3670
        %3695 = vmatprep.subr.bf16.mxu0 0
        %3696 = vmatpush1.bf16.msra.mxu0 %v3672
        %3697 = vmatprep.subr.bf16.mxu0 0
        %3698 = vmatpush1.bf16.msra.mxu0 0
        %3699 = vmatprep.subr.bf16.mxu0 0
        %3700 = vmatpush1.bf16.msra.mxu0 0
        %3701 = vmatprep.subr.bf16.mxu0 0
        %3702 = vmatpush1.bf16.msra.mxu0 0
        %3703 = vmatprep.subr.bf16.mxu0 0
        %3704 = vmatpush1.bf16.msra.mxu0 0
        %3705 = vmatprep.subr.bf16.mxu0 0
        %3706 = vmatpush1.bf16.msra.mxu0 0
        %3707 = vmatprep.subr.bf16.mxu0 0
        %3708 = vmatpush1.bf16.msra.mxu0 0
        %3709 = vmatprep.subr.bf16.mxu0 0
        %3710 = vmatpush1.bf16.msra.mxu0 0
        %3711 = vmatprep.subr.bf16.mxu0 0
        %3712 = vmatpush1.bf16.msra.mxu0 0
        %3713 = vmatprep.mubr.bf16.mxu0 0
        %3714 = vmatmul.mubr.bf16.gmra.mrb[0].mxu0 %v3641
        %v3715 = vpop.f32.mrb[0].mxu0
        %v3716 = vadd.f32 0.0, %v3715
        %v3717 = vpop.f32.mrb[0].mxu0
        %v3718 = vpop.f32.mrb[0].mxu0
        %v3719 = vadd.f32 0.0, %v3718
        %v3720 = vpop.f32.mrb[0].mxu0
        %3721 = vmatprep.mubr.bf16.mxu0 0
        %3722 = vmatmul.mubr.bf16.gmra.mrb[0].mxu0 %v3642
        %v3723 = vpop.f32.mrb[0].mxu0
        %v3724 = vadd.f32 0.0, %v3723
        %v3725 = vpop.f32.mrb[0].mxu0
        %v3726 = vpop.f32.mrb[0].mxu0
        %v3727 = vadd.f32 0.0, %v3726
        %v3728 = vpop.f32.mrb[0].mxu0
        %3729 = vmatprep.mubr.bf16.mxu0 0
        %3730 = vmatmul.mubr.bf16.gmra.mrb[0].mxu0 %v3643
        %v3731 = vpop.f32.mrb[0].mxu0
        %v3732 = vadd.f32 0.0, %v3731
        %v3733 = vpop.f32.mrb[0].mxu0
        %v3734 = vpop.f32.mrb[0].mxu0
        %v3735 = vadd.f32 0.0, %v3734
        %v3736 = vpop.f32.mrb[0].mxu0
        %3737 = vmatprep.mubr.bf16.mxu0 0
        %3738 = vmatmul.mubr.bf16.gmra.mrb[0].mxu0 %v3644
        %v3739 = vpop.f32.mrb[0].mxu0
        %v3740 = vadd.f32 0.0, %v3739
        %v3741 = vpop.f32.mrb[0].mxu0
        %v3742 = vpop.f32.mrb[0].mxu0
        %v3743 = vadd.f32 0.0, %v3742
        %v3744 = vpop.f32.mrb[0].mxu0
        %3745 = vmatprep.mubr.bf16.mxu0 0
        %3746 = vmatmul.mubr.bf16.gmra.mrb[0].mxu0 %v3645
        %v3747 = vpop.f32.mrb[0].mxu0
        %v3748 = vadd.f32 0.0, %v3747
        %v3749 = vpop.f32.mrb[0].mxu0
        %v3750 = vpop.f32.mrb[0].mxu0
        %v3751 = vadd.f32 0.0, %v3750
        %v3752 = vpop.f32.mrb[0].mxu0
        %3753 = vmatprep.mubr.bf16.mxu0 0
        %3754 = vmatmul.mubr.bf16.gmra.mrb[0].mxu0 %v3646
        %v3755 = vpop.f32.mrb[0].mxu0
        %v3756 = vadd.f32 0.0, %v3755
        %v3757 = vpop.f32.mrb[0].mxu0
        %v3758 = vpop.f32.mrb[0].mxu0
        %v3759 = vadd.f32 0.0, %v3758
        %v3760 = vpop.f32.mrb[0].mxu0
        %3761 = vmatprep.mubr.bf16.mxu0 0
        %3762 = vmatmul.mubr.bf16.gmra.mrb[0].mxu0 %v3647
        %v3763 = vpop.f32.mrb[0].mxu0
        %v3764 = vadd.f32 0.0, %v3763
        %v3765 = vpop.f32.mrb[0].mxu0
        %v3766 = vpop.f32.mrb[0].mxu0
        %v3767 = vadd.f32 0.0, %v3766
        %v3768 = vpop.f32.mrb[0].mxu0
        %3769 = vmatprep.mubr.bf16.mxu0 0
        %3770 = vmatmul.mubr.bf16.gmra.mrb[0].mxu0 %v3648
        %v3771 = vpop.f32.mrb[0].mxu0
        %v3772 = vadd.f32 0.0, %v3771
        %v3773 = vpop.f32.mrb[0].mxu0
        %v3774 = vpop.f32.mrb[0].mxu0
        %v3775 = vadd.f32 0.0, %v3774
        %v3776 = vpop.f32.mrb[0].mxu0
        %3777 = vdwg.mxu0
        %v3778 = vadd.f32 %v3625, %v3716
        %v3779 = vadd.f32 %v3626, %v3719
        %v3780 = vadd.f32 %v3627, %v3724
        %v3781 = vadd.f32 %v3628, %v3727
        %v3782 = vadd.f32 %v3629, %v3732
        %v3783 = vadd.f32 %v3630, %v3735
        %v3784 = vadd.f32 %v3631, %v3740
        %v3785 = vadd.f32 %v3632, %v3743
        %v3786 = vadd.f32 %v3633, %v3748
        %v3787 = vadd.f32 %v3634, %v3751
        %v3788 = vadd.f32 %v3635, %v3756
        %v3789 = vadd.f32 %v3636, %v3759
        %v3790 = vadd.f32 %v3637, %v3764
        %v3791 = vadd.f32 %v3638, %v3767
        %v3792 = vadd.f32 %v3639, %v3772
        %v3793 = vadd.f32 %v3640, %v3775
      $region102: #{tpu_custom_call.1} parent=75 // loop_footer
        %s3161 = sadd.s32 %s3159, 1
      $region103: #{tpu_custom_call.1} parent=75 // loop_footer_branch
        %3158 = sbr.rel target = $region99
      $region104: #{tpu_custom_call.1} parent=75 // loop_exit
        _
      %v3794 = vrcp.pop %v3180
      %v3795 = vrcp.pop %v3181
      %v3796 = vrcp.pop %v3182
      %v3797 = vrcp.pop %v3183
      %v3798 = vrcp.pop %v3184
      %v3799 = vrcp.pop %v3185
      %v3800 = vrcp.pop %v3186
      %v3801 = vrcp.pop %v3187
      %v3802 = vrcp.pop %v3188
      %v3803 = vrcp.pop %v3189
      %v3804 = vrcp.pop %v3190
      %v3805 = vrcp.pop %v3191
      %v3806 = vrcp.pop %v3192
      %v3807 = vrcp.pop %v3193
      %v3808 = vrcp.pop %v3194
      %v3809 = vrcp.pop %v3195
      %v3810 = vmul.f32 %v3196, %v3794
      %v3811 = vmul.f32 %v3197, %v3795
      %v3812 = vmul.f32 %v3198, %v3796
      %v3813 = vmul.f32 %v3199, %v3797
      %v3814 = vmul.f32 %v3200, %v3798
      %v3815 = vmul.f32 %v3201, %v3799
      %v3816 = vmul.f32 %v3202, %v3800
      %v3817 = vmul.f32 %v3203, %v3801
      %v3818 = vmul.f32 %v3204, %v3802
      %v3819 = vmul.f32 %v3205, %v3803
      %v3820 = vmul.f32 %v3206, %v3804
      %v3821 = vmul.f32 %v3207, %v3805
      %v3822 = vmul.f32 %v3208, %v3806
      %v3823 = vmul.f32 %v3209, %v3807
      %v3824 = vmul.f32 %v3210, %v3808
      %v3825 = vmul.f32 %v3211, %v3809
      %3842 = vrot.lane.b32.xlu0 %v2476, 8
      %v3843 = vpop.permute.xlu0 %3842
      %3844 = vrot.lane.b32.xlu0 %v2477, 8
      %v3845 = vpop.permute.xlu0 %3844
      %3846 = vrot.lane.b32.xlu0 %v2478, 8
      %v3847 = vpop.permute.xlu0 %3846
      %3848 = vrot.lane.b32.xlu0 %v2479, 8
      %v3849 = vpop.permute.xlu0 %3848
      %3850 = vrot.lane.b32.xlu0 %v2480, 8
      %v3851 = vpop.permute.xlu0 %3850
      %3852 = vrot.lane.b32.xlu0 %v2481, 8
      %v3853 = vpop.permute.xlu0 %3852
      %3854 = vrot.lane.b32.xlu0 %v2482, 8
      %v3855 = vpop.permute.xlu0 %3854
      %3856 = vrot.lane.b32.xlu0 %v2483, 8
      %v3857 = vpop.permute.xlu0 %3856
      %3858 = vrot.lane.b32.xlu0 %v2484, 8
      %v3859 = vpop.permute.xlu0 %3858
      %3860 = vrot.lane.b32.xlu0 %v2485, 8
      %v3861 = vpop.permute.xlu0 %3860
      %3862 = vrot.lane.b32.xlu0 %v2486, 8
      %v3863 = vpop.permute.xlu0 %3862
      %3864 = vrot.lane.b32.xlu0 %v2487, 8
      %v3865 = vpop.permute.xlu0 %3864
      %3866 = vrot.lane.b32.xlu0 %v2488, 8
      %v3867 = vpop.permute.xlu0 %3866
      %3868 = vrot.lane.b32.xlu0 %v2489, 8
      %v3869 = vpop.permute.xlu0 %3868
      %3870 = vrot.lane.b32.xlu0 %v2490, 8
      %v3871 = vpop.permute.xlu0 %3870
      %3872 = vrot.lane.b32.xlu0 %v2491, 8
      %v3873 = vpop.permute.xlu0 %3872
      %3906 = vrot.lane.b32.xlu0 %v3142, 16
      %v3907 = vpop.permute.xlu0 %3906
      %3908 = vrot.lane.b32.xlu0 %v3143, 16
      %v3909 = vpop.permute.xlu0 %3908
      %3910 = vrot.lane.b32.xlu0 %v3144, 16
      %v3911 = vpop.permute.xlu0 %3910
      %3912 = vrot.lane.b32.xlu0 %v3145, 16
      %v3913 = vpop.permute.xlu0 %3912
      %3914 = vrot.lane.b32.xlu0 %v3146, 16
      %v3915 = vpop.permute.xlu0 %3914
      %3916 = vrot.lane.b32.xlu0 %v3147, 16
      %v3917 = vpop.permute.xlu0 %3916
      %3918 = vrot.lane.b32.xlu0 %v3148, 16
      %v3919 = vpop.permute.xlu0 %3918
      %3920 = vrot.lane.b32.xlu0 %v3149, 16
      %v3921 = vpop.permute.xlu0 %3920
      %3922 = vrot.lane.b32.xlu0 %v3150, 16
      %v3923 = vpop.permute.xlu0 %3922
      %3924 = vrot.lane.b32.xlu0 %v3151, 16
      %v3925 = vpop.permute.xlu0 %3924
      %3926 = vrot.lane.b32.xlu0 %v3152, 16
      %v3927 = vpop.permute.xlu0 %3926
      %3928 = vrot.lane.b32.xlu0 %v3153, 16
      %v3929 = vpop.permute.xlu0 %3928
      %3930 = vrot.lane.b32.xlu0 %v3154, 16
      %v3931 = vpop.permute.xlu0 %3930
      %3932 = vrot.lane.b32.xlu0 %v3155, 16
      %v3933 = vpop.permute.xlu0 %3932
      %3934 = vrot.lane.b32.xlu0 %v3156, 16
      %v3935 = vpop.permute.xlu0 %3934
      %3936 = vrot.lane.b32.xlu0 %v3157, 16
      %v3937 = vpop.permute.xlu0 %3936
      %3970 = vrot.lane.b32.xlu0 %v3810, 24
      %v3971 = vpop.permute.xlu0 %3970
      %3972 = vrot.lane.b32.xlu0 %v3811, 24
      %v3973 = vpop.permute.xlu0 %3972
      %3974 = vrot.lane.b32.xlu0 %v3812, 24
      %v3975 = vpop.permute.xlu0 %3974
      %3976 = vrot.lane.b32.xlu0 %v3813, 24
      %v3977 = vpop.permute.xlu0 %3976
      %3978 = vrot.lane.b32.xlu0 %v3814, 24
      %v3979 = vpop.permute.xlu0 %3978
      %3980 = vrot.lane.b32.xlu0 %v3815, 24
      %v3981 = vpop.permute.xlu0 %3980
      %3982 = vrot.lane.b32.xlu0 %v3816, 24
      %v3983 = vpop.permute.xlu0 %3982
      %3984 = vrot.lane.b32.xlu0 %v3817, 24
      %v3985 = vpop.permute.xlu0 %3984
      %3986 = vrot.lane.b32.xlu0 %v3818, 24
      %v3987 = vpop.permute.xlu0 %3986
      %3988 = vrot.lane.b32.xlu0 %v3819, 24
      %v3989 = vpop.permute.xlu0 %3988
      %3990 = vrot.lane.b32.xlu0 %v3820, 24
      %v3991 = vpop.permute.xlu0 %3990
      %3992 = vrot.lane.b32.xlu0 %v3821, 24
      %v3993 = vpop.permute.xlu0 %3992
      %3994 = vrot.lane.b32.xlu0 %v3822, 24
      %v3995 = vpop.permute.xlu0 %3994
      %3996 = vrot.lane.b32.xlu0 %v3823, 24
      %v3997 = vpop.permute.xlu0 %3996
      %3998 = vrot.lane.b32.xlu0 %v3824, 24
      %v3999 = vpop.permute.xlu0 %3998
      %4000 = vrot.lane.b32.xlu0 %v3825, 24
      %v4001 = vpop.permute.xlu0 %4000
      %vm4018 = vcmask 64512
      %v4019 = vsel %vm4018, %v1808, %v3843
      %v4020 = vsel %vm4018, %v1809, %v3845
      %v4021 = vsel %vm4018, %v1810, %v3847
      %v4022 = vsel %vm4018, %v1811, %v3849
      %v4023 = vsel %vm4018, %v1812, %v3851
      %v4024 = vsel %vm4018, %v1813, %v3853
      %v4025 = vsel %vm4018, %v1814, %v3855
      %v4026 = vsel %vm4018, %v1815, %v3857
      %v4027 = vsel %vm4018, %v1816, %v3859
      %v4028 = vsel %vm4018, %v1817, %v3861
      %v4029 = vsel %vm4018, %v1818, %v3863
      %v4030 = vsel %vm4018, %v1819, %v3865
      %v4031 = vsel %vm4018, %v1820, %v3867
      %v4032 = vsel %vm4018, %v1821, %v3869
      %v4033 = vsel %vm4018, %v1822, %v3871
      %v4034 = vsel %vm4018, %v1823, %v3873
      %vm4035 = vcmask 130048
      %v4036 = vsel %vm4035, %v4019, %v3907
      %v4037 = vsel %vm4035, %v4020, %v3909
      %v4038 = vsel %vm4035, %v4021, %v3911
      %v4039 = vsel %vm4035, %v4022, %v3913
      %v4040 = vsel %vm4035, %v4023, %v3915
      %v4041 = vsel %vm4035, %v4024, %v3917
      %v4042 = vsel %vm4035, %v4025, %v3919
      %v4043 = vsel %vm4035, %v4026, %v3921
      %v4044 = vsel %vm4035, %v4027, %v3923
      %v4045 = vsel %vm4035, %v4028, %v3925
      %v4046 = vsel %vm4035, %v4029, %v3927
      %v4047 = vsel %vm4035, %v4030, %v3929
      %v4048 = vsel %vm4035, %v4031, %v3931
      %v4049 = vsel %vm4035, %v4032, %v3933
      %v4050 = vsel %vm4035, %v4033, %v3935
      %v4051 = vsel %vm4035, %v4034, %v3937
      %vm4052 = vcmask 195584
      %v4053 = vsel %vm4052, %v4036, %v3971
      %v4054 = vsel %vm4052, %v4037, %v3973
      %v4055 = vsel %vm4052, %v4038, %v3975
      %v4056 = vsel %vm4052, %v4039, %v3977
      %v4057 = vsel %vm4052, %v4040, %v3979
      %v4058 = vsel %vm4052, %v4041, %v3981
      %v4059 = vsel %vm4052, %v4042, %v3983
      %v4060 = vsel %vm4052, %v4043, %v3985
      %v4061 = vsel %vm4052, %v4044, %v3987
      %v4062 = vsel %vm4052, %v4045, %v3989
      %v4063 = vsel %vm4052, %v4046, %v3991
      %v4064 = vsel %vm4052, %v4047, %v3993
      %v4065 = vsel %vm4052, %v4048, %v3995
      %v4066 = vsel %vm4052, %v4049, %v3997
      %v4067 = vsel %vm4052, %v4050, %v3999
      %v4068 = vsel %vm4052, %v4051, %v4001
      %v4069 = vpack.c.bf16 %v4054, %v4053
      %v4070 = vpack.c.bf16 %v4056, %v4055
      %v4071 = vpack.c.bf16 %v4058, %v4057
      %v4072 = vpack.c.bf16 %v4060, %v4059
      %v4073 = vpack.c.bf16 %v4062, %v4061
      %v4074 = vpack.c.bf16 %v4064, %v4063
      %v4075 = vpack.c.bf16 %v4066, %v4065
      %v4076 = vpack.c.bf16 %v4068, %v4067
      %v4077 = vld [vmem:[%s6] sm:$0xf]
      %v4078 = vld [vmem:[%s6 + $0x4] sm:$0xf]
      %v4079 = vld [vmem:[%s6 + $0x8] sm:$0xf]
      %v4080 = vld [vmem:[%s6 + $0xc] sm:$0xf]
      %v4081 = vld [vmem:[%s7] sm:$0x1]
      %v4083 = vlaneseq
      %v4084 = vshrl.u32 %v4083, 7
      %v4085 = vsub.s32 0, %v4084
      %v4086 = vrot.slane %v4081, %v4085
      %v4092 = vunpack.c.l.b16 %v4077
      %v4093 = vunpack.c.l.b16 %v4078
      %v4094 = vunpack.c.l.b16 %v4079
      %v4095 = vunpack.c.l.b16 %v4080
      %v4096 = vpack.c.b16 %v4093, %v4092
      %v4097 = vpack.c.b16 %v4095, %v4094
      %v4101 = vsel %vm526, %v4069, 0
      %v4104 = vsel %vm526, %v4070, 0
      %v4107 = vsel %vm526, %v4071, 0
      %v4110 = vsel %vm526, %v4072, 0
      %v4113 = vsel %vm526, %v4073, 0
      %v4116 = vsel %vm526, %v4074, 0
      %v4119 = vsel %vm526, %v4075, 0
      %v4122 = vsel %vm526, %v4076, 0
      %4124 = vmatprep.subr.bf16.mxu0 0
      %4125 = vmatpush1.bf16.msra.mxu0 %v4096
      %4126 = vmatprep.subr.bf16.mxu0 0
      %4127 = vmatpush1.bf16.msra.mxu0 %v4097
      %4128 = vmatprep.subr.bf16.mxu0 0
      %4129 = vmatpush1.bf16.msra.mxu0 0
      %4130 = vmatprep.subr.bf16.mxu0 0
      %4131 = vmatpush1.bf16.msra.mxu0 0
      %4132 = vmatprep.subr.bf16.mxu0 0
      %4133 = vmatpush1.bf16.msra.mxu0 0
      %4134 = vmatprep.subr.bf16.mxu0 0
      %4135 = vmatpush1.bf16.msra.mxu0 0
      %4136 = vmatprep.subr.bf16.mxu0 0
      %4137 = vmatpush1.bf16.msra.mxu0 0
      %4138 = vmatprep.subr.bf16.mxu0 0
      %4139 = vmatpush1.bf16.msra.mxu0 0
      %4140 = vmatprep.subr.bf16.mxu0 0
      %4141 = vmatpush1.bf16.msra.mxu0 0
      %4142 = vmatprep.subr.bf16.mxu0 0
      %4143 = vmatpush1.bf16.msra.mxu0 0
      %4144 = vmatprep.subr.bf16.mxu0 0
      %4145 = vmatpush1.bf16.msra.mxu0 0
      %4146 = vmatprep.subr.bf16.mxu0 0
      %4147 = vmatpush1.bf16.msra.mxu0 0
      %4148 = vmatprep.subr.bf16.mxu0 0
      %4149 = vmatpush1.bf16.msra.mxu0 0
      %4150 = vmatprep.subr.bf16.mxu0 0
      %4151 = vmatpush1.bf16.msra.mxu0 0
      %4152 = vmatprep.subr.bf16.mxu0 0
      %4153 = vmatpush1.bf16.msra.mxu0 0
      %4154 = vmatprep.subr.bf16.mxu0 0
      %4155 = vmatpush1.bf16.msra.mxu0 0
      %4156 = vmatprep.mubr.bf16.mxu0 0
      %4157 = vmatmul.mubr.bf16.gmra.mrb[0].mxu0 %v4101
      %v4158 = vpop.f32.mrb[0].mxu0
      %v4159 = vadd.f32 %v4086, %v4158
      %v4160 = vpop.f32.mrb[0].mxu0
      %v4161 = vpop.f32.mrb[0].mxu0
      %v4162 = vadd.f32 %v4086, %v4161
      %v4163 = vpop.f32.mrb[0].mxu0
      %4164 = vmatprep.mubr.bf16.mxu0 0
      %4165 = vmatmul.mubr.bf16.gmra.mrb[0].mxu0 %v4104
      %v4166 = vpop.f32.mrb[0].mxu0
      %v4167 = vadd.f32 %v4086, %v4166
      %v4168 = vpop.f32.mrb[0].mxu0
      %v4169 = vpop.f32.mrb[0].mxu0
      %v4170 = vadd.f32 %v4086, %v4169
      %v4171 = vpop.f32.mrb[0].mxu0
      %4172 = vmatprep.mubr.bf16.mxu0 0
      %4173 = vmatmul.mubr.bf16.gmra.mrb[0].mxu0 %v4107
      %v4174 = vpop.f32.mrb[0].mxu0
      %v4175 = vadd.f32 %v4086, %v4174
      %v4176 = vpop.f32.mrb[0].mxu0
      %v4177 = vpop.f32.mrb[0].mxu0
      %v4178 = vadd.f32 %v4086, %v4177
      %v4179 = vpop.f32.mrb[0].mxu0
      %4180 = vmatprep.mubr.bf16.mxu0 0
      %4181 = vmatmul.mubr.bf16.gmra.mrb[0].mxu0 %v4110
      %v4182 = vpop.f32.mrb[0].mxu0
      %v4183 = vadd.f32 %v4086, %v4182
      %v4184 = vpop.f32.mrb[0].mxu0
      %v4185 = vpop.f32.mrb[0].mxu0
      %v4186 = vadd.f32 %v4086, %v4185
      %v4187 = vpop.f32.mrb[0].mxu0
      %4188 = vmatprep.mubr.bf16.mxu0 0
      %4189 = vmatmul.mubr.bf16.gmra.mrb[0].mxu0 %v4113
      %v4190 = vpop.f32.mrb[0].mxu0
      %v4191 = vadd.f32 %v4086, %v4190
      %v4192 = vpop.f32.mrb[0].mxu0
      %v4193 = vpop.f32.mrb[0].mxu0
      %v4194 = vadd.f32 %v4086, %v4193
      %v4195 = vpop.f32.mrb[0].mxu0
      %4196 = vmatprep.mubr.bf16.mxu0 0
      %4197 = vmatmul.mubr.bf16.gmra.mrb[0].mxu0 %v4116
      %v4198 = vpop.f32.mrb[0].mxu0
      %v4199 = vadd.f32 %v4086, %v4198
      %v4200 = vpop.f32.mrb[0].mxu0
      %v4201 = vpop.f32.mrb[0].mxu0
      %v4202 = vadd.f32 %v4086, %v4201
      %v4203 = vpop.f32.mrb[0].mxu0
      %4204 = vmatprep.mubr.bf16.mxu0 0
      %4205 = vmatmul.mubr.bf16.gmra.mrb[0].mxu0 %v4119
      %v4206 = vpop.f32.mrb[0].mxu0
      %v4207 = vadd.f32 %v4086, %v4206
      %v4208 = vpop.f32.mrb[0].mxu0
      %v4209 = vpop.f32.mrb[0].mxu0
      %v4210 = vadd.f32 %v4086, %v4209
      %v4211 = vpop.f32.mrb[0].mxu0
      %4212 = vmatprep.mubr.bf16.mxu0 0
      %4213 = vmatmul.mubr.bf16.gmra.mrb[0].mxu0 %v4122
      %v4214 = vpop.f32.mrb[0].mxu0
      %v4215 = vadd.f32 %v4086, %v4214
      %v4216 = vpop.f32.mrb[0].mxu0
      %v4217 = vpop.f32.mrb[0].mxu0
      %v4218 = vadd.f32 %v4086, %v4217
      %v4219 = vpop.f32.mrb[0].mxu0
      %4220 = vdwg.mxu0
      %v4221 = vadd.f32 %v508, %v4159
      %v4222 = vadd.f32 %v509, %v4162
      %v4223 = vadd.f32 %v510, %v4167
      %v4224 = vadd.f32 %v511, %v4170
      %v4225 = vadd.f32 %v512, %v4175
      %v4226 = vadd.f32 %v513, %v4178
      %v4227 = vadd.f32 %v514, %v4183
      %v4228 = vadd.f32 %v515, %v4186
      %v4229 = vadd.f32 %v516, %v4191
      %v4230 = vadd.f32 %v517, %v4194
      %v4231 = vadd.f32 %v518, %v4199
      %v4232 = vadd.f32 %v519, %v4202
      %v4233 = vadd.f32 %v520, %v4207
      %v4234 = vadd.f32 %v521, %v4210
      %v4235 = vadd.f32 %v522, %v4215
      %v4236 = vadd.f32 %v523, %v4218
      %v4237 = vld [vmem:[%s8] sm:$0x1]
      %v4238 = vld [vmem:[%s9] sm:$0x1]
      %v4239 = vsel %vm526, %v4221, 0.0
      %4240 = vadd.xlane.f32.xlu0 %v4239
      %v4241 = vpop.xlane.xlu0 %4240
      %v4242 = vsel %vm526, %v4222, 0.0
      %4243 = vadd.xlane.f32.xlu0 %v4242
      %v4244 = vpop.xlane.xlu0 %4243
      %v4245 = vsel %vm526, %v4223, 0.0
      %4246 = vadd.xlane.f32.xlu0 %v4245
      %v4247 = vpop.xlane.xlu0 %4246
      %v4248 = vsel %vm526, %v4224, 0.0
      %4249 = vadd.xlane.f32.xlu0 %v4248
      %v4250 = vpop.xlane.xlu0 %4249
      %v4251 = vsel %vm526, %v4225, 0.0
      %4252 = vadd.xlane.f32.xlu0 %v4251
      %v4253 = vpop.xlane.xlu0 %4252
      %v4254 = vsel %vm526, %v4226, 0.0
      %4255 = vadd.xlane.f32.xlu0 %v4254
      %v4256 = vpop.xlane.xlu0 %4255
      %v4257 = vsel %vm526, %v4227, 0.0
      %4258 = vadd.xlane.f32.xlu0 %v4257
      %v4259 = vpop.xlane.xlu0 %4258
      %v4260 = vsel %vm526, %v4228, 0.0
      %4261 = vadd.xlane.f32.xlu0 %v4260
      %v4262 = vpop.xlane.xlu0 %4261
      %v4263 = vsel %vm526, %v4229, 0.0
      %4264 = vadd.xlane.f32.xlu0 %v4263
      %v4265 = vpop.xlane.xlu0 %4264
      %v4266 = vsel %vm526, %v4230, 0.0
      %4267 = vadd.xlane.f32.xlu0 %v4266
      %v4268 = vpop.xlane.xlu0 %4267
      %v4269 = vsel %vm526, %v4231, 0.0
      %4270 = vadd.xlane.f32.xlu0 %v4269
      %v4271 = vpop.xlane.xlu0 %4270
      %v4272 = vsel %vm526, %v4232, 0.0
      %4273 = vadd.xlane.f32.xlu0 %v4272
      %v4274 = vpop.xlane.xlu0 %4273
      %v4275 = vsel %vm526, %v4233, 0.0
      %4276 = vadd.xlane.f32.xlu0 %v4275
      %v4277 = vpop.xlane.xlu0 %4276
      %v4278 = vsel %vm526, %v4234, 0.0
      %4279 = vadd.xlane.f32.xlu0 %v4278
      %v4280 = vpop.xlane.xlu0 %4279
      %v4281 = vsel %vm526, %v4235, 0.0
      %4282 = vadd.xlane.f32.xlu0 %v4281
      %v4283 = vpop.xlane.xlu0 %4282
      %v4284 = vsel %vm526, %v4236, 0.0
      %4285 = vadd.xlane.f32.xlu0 %v4284
      %v4286 = vpop.xlane.xlu0 %4285
      %v4287 = vmul.f32 %v4241, %v575
      %v4288 = vmul.f32 %v4244, %v575
      %v4289 = vmul.f32 %v4247, %v575
      %v4290 = vmul.f32 %v4250, %v575
      %v4291 = vmul.f32 %v4253, %v575
      %v4292 = vmul.f32 %v4256, %v575
      %v4293 = vmul.f32 %v4259, %v575
      %v4294 = vmul.f32 %v4262, %v575
      %v4295 = vmul.f32 %v4265, %v575
      %v4296 = vmul.f32 %v4268, %v575
      %v4297 = vmul.f32 %v4271, %v575
      %v4298 = vmul.f32 %v4274, %v575
      %v4299 = vmul.f32 %v4277, %v575
      %v4300 = vmul.f32 %v4280, %v575
      %v4301 = vmul.f32 %v4283, %v575
      %v4302 = vmul.f32 %v4286, %v575
      %v4303 = vsub.f32 %v4221, %v4287
      %v4304 = vsub.f32 %v4222, %v4288
      %v4305 = vsub.f32 %v4223, %v4289
      %v4306 = vsub.f32 %v4224, %v4290
      %v4307 = vsub.f32 %v4225, %v4291
      %v4308 = vsub.f32 %v4226, %v4292
      %v4309 = vsub.f32 %v4227, %v4293
      %v4310 = vsub.f32 %v4228, %v4294
      %v4311 = vsub.f32 %v4229, %v4295
      %v4312 = vsub.f32 %v4230, %v4296
      %v4313 = vsub.f32 %v4231, %v4297
      %v4314 = vsub.f32 %v4232, %v4298
      %v4315 = vsub.f32 %v4233, %v4299
      %v4316 = vsub.f32 %v4234, %v4300
      %v4317 = vsub.f32 %v4235, %v4301
      %v4318 = vsub.f32 %v4236, %v4302
      %v4319 = vmul.f32 %v4303, %v4303
      %v4320 = vmul.f32 %v4304, %v4304
      %v4321 = vmul.f32 %v4305, %v4305
      %v4322 = vmul.f32 %v4306, %v4306
      %v4323 = vmul.f32 %v4307, %v4307
      %v4324 = vmul.f32 %v4308, %v4308
      %v4325 = vmul.f32 %v4309, %v4309
      %v4326 = vmul.f32 %v4310, %v4310
      %v4327 = vmul.f32 %v4311, %v4311
      %v4328 = vmul.f32 %v4312, %v4312
      %v4329 = vmul.f32 %v4313, %v4313
      %v4330 = vmul.f32 %v4314, %v4314
      %v4331 = vmul.f32 %v4315, %v4315
      %v4332 = vmul.f32 %v4316, %v4316
      %v4333 = vmul.f32 %v4317, %v4317
      %v4334 = vmul.f32 %v4318, %v4318
      %v4335 = vsel %vm526, %v4319, 0.0
      %4336 = vadd.xlane.f32.xlu0 %v4335
      %v4337 = vpop.xlane.xlu0 %4336
      %v4338 = vsel %vm526, %v4320, 0.0
      %4339 = vadd.xlane.f32.xlu0 %v4338
      %v4340 = vpop.xlane.xlu0 %4339
      %v4341 = vsel %vm526, %v4321, 0.0
      %4342 = vadd.xlane.f32.xlu0 %v4341
      %v4343 = vpop.xlane.xlu0 %4342
      %v4344 = vsel %vm526, %v4322, 0.0
      %4345 = vadd.xlane.f32.xlu0 %v4344
      %v4346 = vpop.xlane.xlu0 %4345
      %v4347 = vsel %vm526, %v4323, 0.0
      %4348 = vadd.xlane.f32.xlu0 %v4347
      %v4349 = vpop.xlane.xlu0 %4348
      %v4350 = vsel %vm526, %v4324, 0.0
      %4351 = vadd.xlane.f32.xlu0 %v4350
      %v4352 = vpop.xlane.xlu0 %4351
      %v4353 = vsel %vm526, %v4325, 0.0
      %4354 = vadd.xlane.f32.xlu0 %v4353
      %v4355 = vpop.xlane.xlu0 %4354
      %v4356 = vsel %vm526, %v4326, 0.0
      %4357 = vadd.xlane.f32.xlu0 %v4356
      %v4358 = vpop.xlane.xlu0 %4357
      %v4359 = vsel %vm526, %v4327, 0.0
      %4360 = vadd.xlane.f32.xlu0 %v4359
      %v4361 = vpop.xlane.xlu0 %4360
      %v4362 = vsel %vm526, %v4328, 0.0
      %4363 = vadd.xlane.f32.xlu0 %v4362
      %v4364 = vpop.xlane.xlu0 %4363
      %v4365 = vsel %vm526, %v4329, 0.0
      %4366 = vadd.xlane.f32.xlu0 %v4365
      %v4367 = vpop.xlane.xlu0 %4366
      %v4368 = vsel %vm526, %v4330, 0.0
      %4369 = vadd.xlane.f32.xlu0 %v4368
      %v4370 = vpop.xlane.xlu0 %4369
      %v4371 = vsel %vm526, %v4331, 0.0
      %4372 = vadd.xlane.f32.xlu0 %v4371
      %v4373 = vpop.xlane.xlu0 %4372
      %v4374 = vsel %vm526, %v4332, 0.0
      %4375 = vadd.xlane.f32.xlu0 %v4374
      %v4376 = vpop.xlane.xlu0 %4375
      %v4377 = vsel %vm526, %v4333, 0.0
      %4378 = vadd.xlane.f32.xlu0 %v4377
      %v4379 = vpop.xlane.xlu0 %4378
      %v4380 = vsel %vm526, %v4334, 0.0
      %4381 = vadd.xlane.f32.xlu0 %v4380
      %v4382 = vpop.xlane.xlu0 %4381
      %v4383 = vmul.f32 %v4337, %v575
      %v4384 = vmul.f32 %v4340, %v575
      %v4385 = vmul.f32 %v4343, %v575
      %v4386 = vmul.f32 %v4346, %v575
      %v4387 = vmul.f32 %v4349, %v575
      %v4388 = vmul.f32 %v4352, %v575
      %v4389 = vmul.f32 %v4355, %v575
      %v4390 = vmul.f32 %v4358, %v575
      %v4391 = vmul.f32 %v4361, %v575
      %v4392 = vmul.f32 %v4364, %v575
      %v4393 = vmul.f32 %v4367, %v575
      %v4394 = vmul.f32 %v4370, %v575
      %v4395 = vmul.f32 %v4373, %v575
      %v4396 = vmul.f32 %v4376, %v575
      %v4397 = vmul.f32 %v4379, %v575
      %v4398 = vmul.f32 %v4382, %v575
      %v4399 = vadd.f32 %v4383, 1e-05
      %v4400 = vadd.f32 %v4384, 1e-05
      %v4401 = vadd.f32 %v4385, 1e-05
      %v4402 = vadd.f32 %v4386, 1e-05
      %v4403 = vadd.f32 %v4387, 1e-05
      %v4404 = vadd.f32 %v4388, 1e-05
      %v4405 = vadd.f32 %v4389, 1e-05
      %v4406 = vadd.f32 %v4390, 1e-05
      %v4407 = vadd.f32 %v4391, 1e-05
      %v4408 = vadd.f32 %v4392, 1e-05
      %v4409 = vadd.f32 %v4393, 1e-05
      %v4410 = vadd.f32 %v4394, 1e-05
      %v4411 = vadd.f32 %v4395, 1e-05
      %v4412 = vadd.f32 %v4396, 1e-05
      %v4413 = vadd.f32 %v4397, 1e-05
      %v4414 = vadd.f32 %v4398, 1e-05
      %v4415 = vrsqrt.pop %v4399
      %v4416 = vrsqrt.pop %v4400
      %v4417 = vrsqrt.pop %v4401
      %v4418 = vrsqrt.pop %v4402
      %v4419 = vrsqrt.pop %v4403
      %v4420 = vrsqrt.pop %v4404
      %v4421 = vrsqrt.pop %v4405
      %v4422 = vrsqrt.pop %v4406
      %v4423 = vrsqrt.pop %v4407
      %v4424 = vrsqrt.pop %v4408
      %v4425 = vrsqrt.pop %v4409
      %v4426 = vrsqrt.pop %v4410
      %v4427 = vrsqrt.pop %v4411
      %v4428 = vrsqrt.pop %v4412
      %v4429 = vrsqrt.pop %v4413
      %v4430 = vrsqrt.pop %v4414
      %v4431 = vmul.f32 %v4303, %v4415
      %v4432 = vmul.f32 %v4304, %v4416
      %v4433 = vmul.f32 %v4305, %v4417
      %v4434 = vmul.f32 %v4306, %v4418
      %v4435 = vmul.f32 %v4307, %v4419
      %v4436 = vmul.f32 %v4308, %v4420
      %v4437 = vmul.f32 %v4309, %v4421
      %v4438 = vmul.f32 %v4310, %v4422
      %v4439 = vmul.f32 %v4311, %v4423
      %v4440 = vmul.f32 %v4312, %v4424
      %v4441 = vmul.f32 %v4313, %v4425
      %v4442 = vmul.f32 %v4314, %v4426
      %v4443 = vmul.f32 %v4315, %v4427
      %v4444 = vmul.f32 %v4316, %v4428
      %v4445 = vmul.f32 %v4317, %v4429
      %v4446 = vmul.f32 %v4318, %v4430
      %v4448 = vlaneseq
      %v4449 = vshrl.u32 %v4448, 7
      %v4450 = vsub.s32 0, %v4449
      %v4451 = vrot.slane %v4237, %v4450
      %v4453 = vmul.f32 %v4431, %v4451
      %v4454 = vmul.f32 %v4432, %v4451
      %v4455 = vmul.f32 %v4433, %v4451
      %v4456 = vmul.f32 %v4434, %v4451
      %v4457 = vmul.f32 %v4435, %v4451
      %v4458 = vmul.f32 %v4436, %v4451
      %v4459 = vmul.f32 %v4437, %v4451
      %v4460 = vmul.f32 %v4438, %v4451
      %v4461 = vmul.f32 %v4439, %v4451
      %v4462 = vmul.f32 %v4440, %v4451
      %v4463 = vmul.f32 %v4441, %v4451
      %v4464 = vmul.f32 %v4442, %v4451
      %v4465 = vmul.f32 %v4443, %v4451
      %v4466 = vmul.f32 %v4444, %v4451
      %v4467 = vmul.f32 %v4445, %v4451
      %v4468 = vmul.f32 %v4446, %v4451
      %v4470 = vlaneseq
      %v4471 = vshrl.u32 %v4470, 7
      %v4472 = vsub.s32 0, %v4471
      %v4473 = vrot.slane %v4238, %v4472
      %v4475 = vadd.f32 %v4453, %v4473
      %v4476 = vadd.f32 %v4454, %v4473
      %v4477 = vadd.f32 %v4455, %v4473
      %v4478 = vadd.f32 %v4456, %v4473
      %v4479 = vadd.f32 %v4457, %v4473
      %v4480 = vadd.f32 %v4458, %v4473
      %v4481 = vadd.f32 %v4459, %v4473
      %v4482 = vadd.f32 %v4460, %v4473
      %v4483 = vadd.f32 %v4461, %v4473
      %v4484 = vadd.f32 %v4462, %v4473
      %v4485 = vadd.f32 %v4463, %v4473
      %v4486 = vadd.f32 %v4464, %v4473
      %v4487 = vadd.f32 %v4465, %v4473
      %v4488 = vadd.f32 %v4466, %v4473
      %v4489 = vadd.f32 %v4467, %v4473
      %v4490 = vadd.f32 %v4468, %v4473
      %v4491 = vpack.c.bf16 %v4476, %v4475
      %v4492 = vpack.c.bf16 %v4478, %v4477
      %v4493 = vpack.c.bf16 %v4480, %v4479
      %v4494 = vpack.c.bf16 %v4482, %v4481
      %v4495 = vpack.c.bf16 %v4484, %v4483
      %v4496 = vpack.c.bf16 %v4486, %v4485
      %v4497 = vpack.c.bf16 %v4488, %v4487
      %v4498 = vpack.c.bf16 %v4490, %v4489
      %v4499 = vld [vmem:[%s10] sm:$0xf]
      %v4500 = vld [vmem:[%s10 + $0x4] sm:$0xf]
      %v4501 = vld [vmem:[%s10 + $0x8] sm:$0xf]
      %v4502 = vld [vmem:[%s10 + $0xc] sm:$0xf]
      %v4503 = vld [vmem:[%s11] sm:$0x1]
      %v4505 = vlaneseq
      %v4506 = vshrl.u32 %v4505, 7
      %v4507 = vsub.s32 0, %v4506
      %v4508 = vrot.slane %v4503, %v4507
      %v4514 = vunpack.c.l.b16 %v4499
      %v4515 = vunpack.c.l.b16 %v4500
      %v4516 = vunpack.c.l.b16 %v4501
      %v4517 = vunpack.c.l.b16 %v4502
      %v4518 = vpack.c.b16 %v4515, %v4514
      %v4519 = vpack.c.b16 %v4517, %v4516
      %v4523 = vsel %vm526, %v4491, 0
      %v4526 = vsel %vm526, %v4492, 0
      %v4529 = vsel %vm526, %v4493, 0
      %v4532 = vsel %vm526, %v4494, 0
      %v4535 = vsel %vm526, %v4495, 0
      %v4538 = vsel %vm526, %v4496, 0
      %v4541 = vsel %vm526, %v4497, 0
      %v4544 = vsel %vm526, %v4498, 0
      %4546 = vmatprep.subr.bf16.mxu0 0
      %4547 = vmatpush1.bf16.msra.mxu0 %v4518
      %4548 = vmatprep.subr.bf16.mxu0 0
      %4549 = vmatpush1.bf16.msra.mxu0 %v4519
      %4550 = vmatprep.subr.bf16.mxu0 0
      %4551 = vmatpush1.bf16.msra.mxu0 0
      %4552 = vmatprep.subr.bf16.mxu0 0
      %4553 = vmatpush1.bf16.msra.mxu0 0
      %4554 = vmatprep.subr.bf16.mxu0 0
      %4555 = vmatpush1.bf16.msra.mxu0 0
      %4556 = vmatprep.subr.bf16.mxu0 0
      %4557 = vmatpush1.bf16.msra.mxu0 0
      %4558 = vmatprep.subr.bf16.mxu0 0
      %4559 = vmatpush1.bf16.msra.mxu0 0
      %4560 = vmatprep.subr.bf16.mxu0 0
      %4561 = vmatpush1.bf16.msra.mxu0 0
      %4562 = vmatprep.subr.bf16.mxu0 0
      %4563 = vmatpush1.bf16.msra.mxu0 0
      %4564 = vmatprep.subr.bf16.mxu0 0
      %4565 = vmatpush1.bf16.msra.mxu0 0
      %4566 = vmatprep.subr.bf16.mxu0 0
      %4567 = vmatpush1.bf16.msra.mxu0 0
      %4568 = vmatprep.subr.bf16.mxu0 0
      %4569 = vmatpush1.bf16.msra.mxu0 0
      %4570 = vmatprep.subr.bf16.mxu0 0
      %4571 = vmatpush1.bf16.msra.mxu0 0
      %4572 = vmatprep.subr.bf16.mxu0 0
      %4573 = vmatpush1.bf16.msra.mxu0 0
      %4574 = vmatprep.subr.bf16.mxu0 0
      %4575 = vmatpush1.bf16.msra.mxu0 0
      %4576 = vmatprep.subr.bf16.mxu0 0
      %4577 = vmatpush1.bf16.msra.mxu0 0
      %4578 = vmatprep.mubr.bf16.mxu0 0
      %4579 = vmatmul.mubr.bf16.gmra.mrb[0].mxu0 %v4523
      %v4580 = vpop.f32.mrb[0].mxu0
      %v4581 = vadd.f32 %v4508, %v4580
      %v4582 = vpop.f32.mrb[0].mxu0
      %v4583 = vpop.f32.mrb[0].mxu0
      %v4584 = vadd.f32 %v4508, %v4583
      %v4585 = vpop.f32.mrb[0].mxu0
      %4586 = vmatprep.mubr.bf16.mxu0 0
      %4587 = vmatmul.mubr.bf16.gmra.mrb[0].mxu0 %v4526
      %v4588 = vpop.f32.mrb[0].mxu0
      %v4589 = vadd.f32 %v4508, %v4588
      %v4590 = vpop.f32.mrb[0].mxu0
      %v4591 = vpop.f32.mrb[0].mxu0
      %v4592 = vadd.f32 %v4508, %v4591
      %v4593 = vpop.f32.mrb[0].mxu0
      %4594 = vmatprep.mubr.bf16.mxu0 0
      %4595 = vmatmul.mubr.bf16.gmra.mrb[0].mxu0 %v4529
      %v4596 = vpop.f32.mrb[0].mxu0
      %v4597 = vadd.f32 %v4508, %v4596
      %v4598 = vpop.f32.mrb[0].mxu0
      %v4599 = vpop.f32.mrb[0].mxu0
      %v4600 = vadd.f32 %v4508, %v4599
      %v4601 = vpop.f32.mrb[0].mxu0
      %4602 = vmatprep.mubr.bf16.mxu0 0
      %4603 = vmatmul.mubr.bf16.gmra.mrb[0].mxu0 %v4532
      %v4604 = vpop.f32.mrb[0].mxu0
      %v4605 = vadd.f32 %v4508, %v4604
      %v4606 = vpop.f32.mrb[0].mxu0
      %v4607 = vpop.f32.mrb[0].mxu0
      %v4608 = vadd.f32 %v4508, %v4607
      %v4609 = vpop.f32.mrb[0].mxu0
      %4610 = vmatprep.mubr.bf16.mxu0 0
      %4611 = vmatmul.mubr.bf16.gmra.mrb[0].mxu0 %v4535
      %v4612 = vpop.f32.mrb[0].mxu0
      %v4613 = vadd.f32 %v4508, %v4612
      %v4614 = vpop.f32.mrb[0].mxu0
      %v4615 = vpop.f32.mrb[0].mxu0
      %v4616 = vadd.f32 %v4508, %v4615
      %v4617 = vpop.f32.mrb[0].mxu0
      %4618 = vmatprep.mubr.bf16.mxu0 0
      %4619 = vmatmul.mubr.bf16.gmra.mrb[0].mxu0 %v4538
      %v4620 = vpop.f32.mrb[0].mxu0
      %v4621 = vadd.f32 %v4508, %v4620
      %v4622 = vpop.f32.mrb[0].mxu0
      %v4623 = vpop.f32.mrb[0].mxu0
      %v4624 = vadd.f32 %v4508, %v4623
      %v4625 = vpop.f32.mrb[0].mxu0
      %4626 = vmatprep.mubr.bf16.mxu0 0
      %4627 = vmatmul.mubr.bf16.gmra.mrb[0].mxu0 %v4541
      %v4628 = vpop.f32.mrb[0].mxu0
      %v4629 = vadd.f32 %v4508, %v4628
      %v4630 = vpop.f32.mrb[0].mxu0
      %v4631 = vpop.f32.mrb[0].mxu0
      %v4632 = vadd.f32 %v4508, %v4631
      %v4633 = vpop.f32.mrb[0].mxu0
      %4634 = vmatprep.mubr.bf16.mxu0 0
      %4635 = vmatmul.mubr.bf16.gmra.mrb[0].mxu0 %v4544
      %v4636 = vpop.f32.mrb[0].mxu0
      %v4637 = vadd.f32 %v4508, %v4636
      %v4638 = vpop.f32.mrb[0].mxu0
      %v4639 = vpop.f32.mrb[0].mxu0
      %v4640 = vadd.f32 %v4508, %v4639
      %v4641 = vpop.f32.mrb[0].mxu0
      %4642 = vdwg.mxu0
      %v4643 = vmul.f32 %v4581, 0.5
      %v4644 = vmul.f32 %v4584, 0.5
      %v4645 = vmul.f32 %v4589, 0.5
      %v4646 = vmul.f32 %v4592, 0.5
      %v4647 = vmul.f32 %v4597, 0.5
      %v4648 = vmul.f32 %v4600, 0.5
      %v4649 = vmul.f32 %v4605, 0.5
      %v4650 = vmul.f32 %v4608, 0.5
      %v4651 = vmul.f32 %v4613, 0.5
      %v4652 = vmul.f32 %v4616, 0.5
      %v4653 = vmul.f32 %v4621, 0.5
      %v4654 = vmul.f32 %v4624, 0.5
      %v4655 = vmul.f32 %v4629, 0.5
      %v4656 = vmul.f32 %v4632, 0.5
      %v4657 = vmul.f32 %v4637, 0.5
      %v4658 = vmul.f32 %v4640, 0.5
      %v4659 = vmul.f32 %v4581, 0.70710677
      %v4660 = vmul.f32 %v4584, 0.70710677
      %v4661 = vmul.f32 %v4589, 0.70710677
      %v4662 = vmul.f32 %v4592, 0.70710677
      %v4663 = vmul.f32 %v4597, 0.70710677
      %v4664 = vmul.f32 %v4600, 0.70710677
      %v4665 = vmul.f32 %v4605, 0.70710677
      %v4666 = vmul.f32 %v4608, 0.70710677
      %v4667 = vmul.f32 %v4613, 0.70710677
      %v4668 = vmul.f32 %v4616, 0.70710677
      %v4669 = vmul.f32 %v4621, 0.70710677
      %v4670 = vmul.f32 %v4624, 0.70710677
      %v4671 = vmul.f32 %v4629, 0.70710677
      %v4672 = vmul.f32 %v4632, 0.70710677
      %v4673 = vmul.f32 %v4637, 0.70710677
      %v4674 = vmul.f32 %v4640, 0.70710677
      %v4675 = verf.f32.pop %v4659
      %v4676 = verf.f32.pop %v4660
      %v4677 = verf.f32.pop %v4661
      %v4678 = verf.f32.pop %v4662
      %v4679 = verf.f32.pop %v4663
      %v4680 = verf.f32.pop %v4664
      %v4681 = verf.f32.pop %v4665
      %v4682 = verf.f32.pop %v4666
      %v4683 = verf.f32.pop %v4667
      %v4684 = verf.f32.pop %v4668
      %v4685 = verf.f32.pop %v4669
      %v4686 = verf.f32.pop %v4670
      %v4687 = verf.f32.pop %v4671
      %v4688 = verf.f32.pop %v4672
      %v4689 = verf.f32.pop %v4673
      %v4690 = verf.f32.pop %v4674
      %v4691 = vadd.f32 %v4675, 1.0
      %v4692 = vadd.f32 %v4676, 1.0
      %v4693 = vadd.f32 %v4677, 1.0
      %v4694 = vadd.f32 %v4678, 1.0
      %v4695 = vadd.f32 %v4679, 1.0
      %v4696 = vadd.f32 %v4680, 1.0
      %v4697 = vadd.f32 %v4681, 1.0
      %v4698 = vadd.f32 %v4682, 1.0
      %v4699 = vadd.f32 %v4683, 1.0
      %v4700 = vadd.f32 %v4684, 1.0
      %v4701 = vadd.f32 %v4685, 1.0
      %v4702 = vadd.f32 %v4686, 1.0
      %v4703 = vadd.f32 %v4687, 1.0
      %v4704 = vadd.f32 %v4688, 1.0
      %v4705 = vadd.f32 %v4689, 1.0
      %v4706 = vadd.f32 %v4690, 1.0
      %v4707 = vmul.f32 %v4643, %v4691
      %v4708 = vmul.f32 %v4644, %v4692
      %v4709 = vmul.f32 %v4645, %v4693
      %v4710 = vmul.f32 %v4646, %v4694
      %v4711 = vmul.f32 %v4647, %v4695
      %v4712 = vmul.f32 %v4648, %v4696
      %v4713 = vmul.f32 %v4649, %v4697
      %v4714 = vmul.f32 %v4650, %v4698
      %v4715 = vmul.f32 %v4651, %v4699
      %v4716 = vmul.f32 %v4652, %v4700
      %v4717 = vmul.f32 %v4653, %v4701
      %v4718 = vmul.f32 %v4654, %v4702
      %v4719 = vmul.f32 %v4655, %v4703
      %v4720 = vmul.f32 %v4656, %v4704
      %v4721 = vmul.f32 %v4657, %v4705
      %v4722 = vmul.f32 %v4658, %v4706
      %v4723 = vpack.c.bf16 %v4708, %v4707
      %v4724 = vpack.c.bf16 %v4710, %v4709
      %v4725 = vpack.c.bf16 %v4712, %v4711
      %v4726 = vpack.c.bf16 %v4714, %v4713
      %v4727 = vpack.c.bf16 %v4716, %v4715
      %v4728 = vpack.c.bf16 %v4718, %v4717
      %v4729 = vpack.c.bf16 %v4720, %v4719
      %v4730 = vpack.c.bf16 %v4722, %v4721
      %v4731 = vld [vmem:[%s12] sm:$0xf]
      %v4732 = vld [vmem:[%s12 + $0x4] sm:$0xf]
      %v4733 = vld [vmem:[%s12 + $0x8] sm:$0xf]
      %v4734 = vld [vmem:[%s12 + $0xc] sm:$0xf]
      %v4735 = vld [vmem:[%s12 + $0x10] sm:$0xf]
      %v4736 = vld [vmem:[%s12 + $0x14] sm:$0xf]
      %v4737 = vld [vmem:[%s12 + $0x18] sm:$0xf]
      %v4738 = vld [vmem:[%s12 + $0x1c] sm:$0xf]
      %v4739 = vld [vmem:[%s12 + $0x20] sm:$0xf]
      %v4740 = vld [vmem:[%s12 + $0x24] sm:$0xf]
      %v4741 = vld [vmem:[%s12 + $0x28] sm:$0xf]
      %v4742 = vld [vmem:[%s12 + $0x2c] sm:$0xf]
      %v4743 = vld [vmem:[%s12 + $0x30] sm:$0xf]
      %v4744 = vld [vmem:[%s12 + $0x34] sm:$0xf]
      %v4745 = vld [vmem:[%s12 + $0x38] sm:$0xf]
      %v4746 = vld [vmem:[%s12 + $0x3c] sm:$0xf]
      %v4747 = vld [vmem:[%s13] sm:$0x1]
      %v4749 = vlaneseq
      %v4750 = vshrl.u32 %v4749, 7
      %v4751 = vsub.s32 0, %v4750
      %v4752 = vrot.slane %v4747, %v4751
      %v4770 = vunpack.c.l.b16 %v4731
      %v4771 = vunpack.c.l.b16 %v4732
      %v4772 = vunpack.c.l.b16 %v4733
      %v4773 = vunpack.c.l.b16 %v4734
      %v4774 = vunpack.c.l.b16 %v4735
      %v4775 = vunpack.c.l.b16 %v4736
      %v4776 = vunpack.c.l.b16 %v4737
      %v4777 = vunpack.c.l.b16 %v4738
      %v4778 = vunpack.c.l.b16 %v4739
      %v4779 = vunpack.c.l.b16 %v4740
      %v4780 = vunpack.c.l.b16 %v4741
      %v4781 = vunpack.c.l.b16 %v4742
      %v4782 = vunpack.c.l.b16 %v4743
      %v4783 = vunpack.c.l.b16 %v4744
      %v4784 = vunpack.c.l.b16 %v4745
      %v4785 = vunpack.c.l.b16 %v4746
      %v4786 = vpack.c.b16 %v4771, %v4770
      %v4787 = vpack.c.b16 %v4773, %v4772
      %v4788 = vpack.c.b16 %v4775, %v4774
      %v4789 = vpack.c.b16 %v4777, %v4776
      %v4790 = vpack.c.b16 %v4779, %v4778
      %v4791 = vpack.c.b16 %v4781, %v4780
      %v4792 = vpack.c.b16 %v4783, %v4782
      %v4793 = vpack.c.b16 %v4785, %v4784
      %4802 = vmatprep.subr.bf16.mxu0 0
      %4803 = vmatpush1.bf16.msra.mxu0 %v4786
      %4804 = vmatprep.subr.bf16.mxu0 0
      %4805 = vmatpush1.bf16.msra.mxu0 %v4787
      %4806 = vmatprep.subr.bf16.mxu0 0
      %4807 = vmatpush1.bf16.msra.mxu0 %v4788
      %4808 = vmatprep.subr.bf16.mxu0 0
      %4809 = vmatpush1.bf16.msra.mxu0 %v4789
      %4810 = vmatprep.subr.bf16.mxu0 0
      %4811 = vmatpush1.bf16.msra.mxu0 %v4790
      %4812 = vmatprep.subr.bf16.mxu0 0
      %4813 = vmatpush1.bf16.msra.mxu0 %v4791
      %4814 = vmatprep.subr.bf16.mxu0 0
      %4815 = vmatpush1.bf16.msra.mxu0 %v4792
      %4816 = vmatprep.subr.bf16.mxu0 0
      %4817 = vmatpush1.bf16.msra.mxu0 %v4793
      %4818 = vmatprep.subr.bf16.mxu0 0
      %4819 = vmatpush1.bf16.msra.mxu0 0
      %4820 = vmatprep.subr.bf16.mxu0 0
      %4821 = vmatpush1.bf16.msra.mxu0 0
      %4822 = vmatprep.subr.bf16.mxu0 0
      %4823 = vmatpush1.bf16.msra.mxu0 0
      %4824 = vmatprep.subr.bf16.mxu0 0
      %4825 = vmatpush1.bf16.msra.mxu0 0
      %4826 = vmatprep.subr.bf16.mxu0 0
      %4827 = vmatpush1.bf16.msra.mxu0 0
      %4828 = vmatprep.subr.bf16.mxu0 0
      %4829 = vmatpush1.bf16.msra.mxu0 0
      %4830 = vmatprep.subr.bf16.mxu0 0
      %4831 = vmatpush1.bf16.msra.mxu0 0
      %4832 = vmatprep.subr.bf16.mxu0 0
      %4833 = vmatpush1.bf16.msra.mxu0 0
      %4834 = vmatprep.mubr.bf16.mxu0 0
      %4835 = vmatmul.mubr.bf16.gmra.mrb[0].mxu0 %v4723
      %v4836 = vpop.f32.mrb[0].mxu0
      %v4837 = vadd.f32 %v4752, %v4836
      %v4838 = vpop.f32.mrb[0].mxu0
      %v4839 = vpop.f32.mrb[0].mxu0
      %v4840 = vadd.f32 %v4752, %v4839
      %v4841 = vpop.f32.mrb[0].mxu0
      %4842 = vmatprep.mubr.bf16.mxu0 0
      %4843 = vmatmul.mubr.bf16.gmra.mrb[0].mxu0 %v4724
      %v4844 = vpop.f32.mrb[0].mxu0
      %v4845 = vadd.f32 %v4752, %v4844
      %v4846 = vpop.f32.mrb[0].mxu0
      %v4847 = vpop.f32.mrb[0].mxu0
      %v4848 = vadd.f32 %v4752, %v4847
      %v4849 = vpop.f32.mrb[0].mxu0
      %4850 = vmatprep.mubr.bf16.mxu0 0
      %4851 = vmatmul.mubr.bf16.gmra.mrb[0].mxu0 %v4725
      %v4852 = vpop.f32.mrb[0].mxu0
      %v4853 = vadd.f32 %v4752, %v4852
      %v4854 = vpop.f32.mrb[0].mxu0
      %v4855 = vpop.f32.mrb[0].mxu0
      %v4856 = vadd.f32 %v4752, %v4855
      %v4857 = vpop.f32.mrb[0].mxu0
      %4858 = vmatprep.mubr.bf16.mxu0 0
      %4859 = vmatmul.mubr.bf16.gmra.mrb[0].mxu0 %v4726
      %v4860 = vpop.f32.mrb[0].mxu0
      %v4861 = vadd.f32 %v4752, %v4860
      %v4862 = vpop.f32.mrb[0].mxu0
      %v4863 = vpop.f32.mrb[0].mxu0
      %v4864 = vadd.f32 %v4752, %v4863
      %v4865 = vpop.f32.mrb[0].mxu0
      %4866 = vmatprep.mubr.bf16.mxu0 0
      %4867 = vmatmul.mubr.bf16.gmra.mrb[0].mxu0 %v4727
      %v4868 = vpop.f32.mrb[0].mxu0
      %v4869 = vadd.f32 %v4752, %v4868
      %v4870 = vpop.f32.mrb[0].mxu0
      %v4871 = vpop.f32.mrb[0].mxu0
      %v4872 = vadd.f32 %v4752, %v4871
      %v4873 = vpop.f32.mrb[0].mxu0
      %4874 = vmatprep.mubr.bf16.mxu0 0
      %4875 = vmatmul.mubr.bf16.gmra.mrb[0].mxu0 %v4728
      %v4876 = vpop.f32.mrb[0].mxu0
      %v4877 = vadd.f32 %v4752, %v4876
      %v4878 = vpop.f32.mrb[0].mxu0
      %v4879 = vpop.f32.mrb[0].mxu0
      %v4880 = vadd.f32 %v4752, %v4879
      %v4881 = vpop.f32.mrb[0].mxu0
      %4882 = vmatprep.mubr.bf16.mxu0 0
      %4883 = vmatmul.mubr.bf16.gmra.mrb[0].mxu0 %v4729
      %v4884 = vpop.f32.mrb[0].mxu0
      %v4885 = vadd.f32 %v4752, %v4884
      %v4886 = vpop.f32.mrb[0].mxu0
      %v4887 = vpop.f32.mrb[0].mxu0
      %v4888 = vadd.f32 %v4752, %v4887
      %v4889 = vpop.f32.mrb[0].mxu0
      %4890 = vmatprep.mubr.bf16.mxu0 0
      %4891 = vmatmul.mubr.bf16.gmra.mrb[0].mxu0 %v4730
      %v4892 = vpop.f32.mrb[0].mxu0
      %v4893 = vadd.f32 %v4752, %v4892
      %v4894 = vpop.f32.mrb[0].mxu0
      %v4895 = vpop.f32.mrb[0].mxu0
      %v4896 = vadd.f32 %v4752, %v4895
      %v4897 = vpop.f32.mrb[0].mxu0
      %4898 = vdwg.mxu0
      %v4899 = vadd.f32 %v4221, %v4837
      %v4900 = vadd.f32 %v4222, %v4840
      %v4901 = vadd.f32 %v4223, %v4845
      %v4902 = vadd.f32 %v4224, %v4848
      %v4903 = vadd.f32 %v4225, %v4853
      %v4904 = vadd.f32 %v4226, %v4856
      %v4905 = vadd.f32 %v4227, %v4861
      %v4906 = vadd.f32 %v4228, %v4864
      %v4907 = vadd.f32 %v4229, %v4869
      %v4908 = vadd.f32 %v4230, %v4872
      %v4909 = vadd.f32 %v4231, %v4877
      %v4910 = vadd.f32 %v4232, %v4880
      %v4911 = vadd.f32 %v4233, %v4885
      %v4912 = vadd.f32 %v4234, %v4888
      %v4913 = vadd.f32 %v4235, %v4893
      %v4914 = vadd.f32 %v4236, %v4896
      %4915 = vst.msk [vmem:[%s505] sm:$0xff] %vm526, %v4899
      %4916 = vst.msk [vmem:[%s505 + $0x8] sm:$0xff] %vm526, %v4900
      %4917 = vst.msk [vmem:[%s505 + $0x10] sm:$0xff] %vm526, %v4901
      %4918 = vst.msk [vmem:[%s505 + $0x18] sm:$0xff] %vm526, %v4902
      %4919 = vst.msk [vmem:[%s505 + $0x20] sm:$0xff] %vm526, %v4903
      %4920 = vst.msk [vmem:[%s505 + $0x28] sm:$0xff] %vm526, %v4904
      %4921 = vst.msk [vmem:[%s505 + $0x30] sm:$0xff] %vm526, %v4905
      %4922 = vst.msk [vmem:[%s505 + $0x38] sm:$0xff] %vm526, %v4906
      %4923 = vst.msk [vmem:[%s505 + $0x40] sm:$0xff] %vm526, %v4907
      %4924 = vst.msk [vmem:[%s505 + $0x48] sm:$0xff] %vm526, %v4908
      %4925 = vst.msk [vmem:[%s505 + $0x50] sm:$0xff] %vm526, %v4909
      %4926 = vst.msk [vmem:[%s505 + $0x58] sm:$0xff] %vm526, %v4910
      %4927 = vst.msk [vmem:[%s505 + $0x60] sm:$0xff] %vm526, %v4911
      %4928 = vst.msk [vmem:[%s505 + $0x68] sm:$0xff] %vm526, %v4912
      %4929 = vst.msk [vmem:[%s505 + $0x70] sm:$0xff] %vm526, %v4913
      %4930 = vst.msk [vmem:[%s505 + $0x78] sm:$0xff] %vm526, %v4914
      %s4931 = smul.u32 16, %s30
      %p4932 = scmp.lt.s32.totalorder %s29, 1
      %s4933 = scalar_select %p4932, %s29, 1
      %p4934 = scmp.lt.s32.totalorder %s4931, 15
      %s4935 = scalar_select %p4934, %s4931, 15
      %s4936 = smul.addr %s4933, 16
      %s4937 = sadd.s32 %s4935, %s4936
      %s4938 = smul.addr %s4937, 8
      %s4939 = scalar_lea.vmem %s14, %s4938
      // Predicated region
      $region105: #{tpu_custom_call.1} parent=75 // pred_check
        %p4940 = pneg %p358
      $region106: #{tpu_custom_call.1} parent=75 // pred_check_branch
        %4942 = sbr.rel (%p4940) target = $region108
      $region107: #{tpu_custom_call.1} parent=75 // pred_region
        %s4943 = smul.u32 16, %s30
      $region108: #{tpu_custom_call.1} parent=75 // pred_fallthru
        _
    $region76: #{tpu_custom_call.1} parent=5 // pred_fallthru
      _
    %p4944 = scmp.le.s32.totalorder 2, %s20
    // Predicated region
    $region109: #{tpu_custom_call.1} parent=5 // pred_check
      %p4945 = pneg %p4944
    $region110: #{tpu_custom_call.1} parent=5 // pred_check_branch
      %4947 = sbr.rel (%p4945) target = $region112
    $region111: #{tpu_custom_call.1} parent=5 // pred_region
      %s4948 = ssub.s32 %s20, 2
      // Predicated region
      $region113: #{tpu_custom_call.1} parent=111 // pred_check
        %p4949 = pneg %p364
      $region114: #{tpu_custom_call.1} parent=111 // pred_check_branch
        %4951 = sbr.rel (%p4949) target = $region116
      $region115: #{tpu_custom_call.1} parent=111 // pred_region
        %s4952 = smul.u32 16, %s32
        %p4953 = scmp.lt.s32.totalorder %s31, 1
        %s4954 = scalar_select %p4953, %s31, 1
        %p4955 = scmp.lt.s32.totalorder %s4952, 15
        %s4956 = scalar_select %p4955, %s4952, 15
        %s4957 = smul.addr %s4954, 16
        %s4958 = sadd.s32 %s4956, %s4957
        %s4959 = smul.addr %s4958, 8
        %s4960 = scalar_lea.vmem %s14, %s4959
      $region116: #{tpu_custom_call.1} parent=111 // pred_fallthru
        _
    $region112: #{tpu_custom_call.1} parent=5 // pred_fallthru
      _
  $region6: #{tpu_custom_call.1} parent=0 // loop_footer
    %s24 = sadd.s32 1, %s20
  $region7: #{tpu_custom_call.1} parent=0 // loop_footer_branch
    %19 = sbr.rel target = $region3
  $region8: #{tpu_custom_call.1} parent=0 // loop_exit
    _

</llo_original>
